<compile_context>
chip_gen: v6e
topology: v6e:2x2x1
jax: 0.10.0
libtpu: 0.0.40
codegen_flags: <defaults>
</compile_context>

<pallas_src>
import jax
import jax.numpy as jnp
from jax.experimental import pallas as pl
from jax.experimental.pallas import tpu as pltpu


# --------------------------------------------------------------------------
# Per-generation configuration (review: BLOCK_B + vmem_limit_bytes sizing).
# --------------------------------------------------------------------------
def _select_config():
    try:
        vmem_cap = pltpu.get_tpu_info().vmem_capacity_bytes
    except Exception:
        vmem_cap = 64 * 1024 * 1024            # conservative: v7x per-TC VMEM
    if vmem_cap >= 96 * 1024 * 1024:           # v5e / v6e (128 MiB per TC)
        return 64, 48 * 1024 * 1024
    return 32, 32 * 1024 * 1024                # v7x (64 MiB per TC)


BLOCK_B, VMEM_LIMIT = _select_config()


# --------------------------------------------------------------------------
# Fused kernel: Conv2d(1,32,7)+Tanh+MaxPool(2,2) -> Conv2d(32,64,6)+Tanh
#               -> Linear(4096,128)+Tanh.  Everything stays in VMEM.
# --------------------------------------------------------------------------
def _tnet_fused_kernel(x_ref, w1_ref, b1_ref, w2_ref, b2_ref, wfc_ref, bfc_ref,
                       o_ref, acc2_ref, accf_ref):
    bb = x_ref.shape[0]                        # samples in this block

    # ---- Conv1 (1->32, k=7): ONE K=256 bf16 MXU matmul over bb*16 rows ----
    # x_ref[b, m, q*64 + s*32 + j] = image[b, 2(m+q)+s, j]; output columns are
    # (row-parity, col-parity, pooled-col, channel) -> 4 lane-aligned 512 groups.
    acc1 = jnp.dot(x_ref[...].reshape(bb * 16, 256), w1_ref[...],
                   preferred_element_type=jnp.float32)          # (bb*16, 2048) f32

    # ---- MaxPool(2,2) as a 4-way max of aligned lane groups, then bias+tanh
    # (pool before bias/tanh is valid: per-channel bias, monotone tanh) -------
    pooled = jnp.maximum(jnp.maximum(acc1[:, 0:512], acc1[:, 512:1024]),
                         jnp.maximum(acc1[:, 1024:1536], acc1[:, 1536:2048]))
    pooled = jnp.tanh(pooled + b1_ref[...])                     # fp32 epilogue
    pooled = pooled.astype(jnp.bfloat16).reshape(bb, 16, 512)   # rows=(b, y_pool)

    # ---- Conv2 (32->64, k=6): 6 banded bf16 matmuls into fp32 VMEM scratch --
    # Only pooled rows 0..12 are touched (kh+7 <= 12), so the 3 padded garbage
    # rows per sample never leak into the result.
    acc2_ref[...] = jnp.dot(pooled[:, 0:8, :].reshape(bb * 8, 512), w2_ref[0],
                            preferred_element_type=jnp.float32)
    for kh in range(1, 6):
        acc2_ref[...] += jnp.dot(pooled[:, kh:kh + 8, :].reshape(bb * 8, 512),
                                 w2_ref[kh], preferred_element_type=jnp.float32)
    feat = jnp.tanh(acc2_ref[...] + b2_ref[...])                # fp32 epilogue
    feat = feat.astype(jnp.bfloat16).reshape(bb, 8, 512)        # rows=(b,y), cols=(x,c)

    # ---- Linear(4096,128)+Tanh (torch flatten order folded into wfc) --------
    accf_ref[...] = jnp.dot(feat[:, 0, :], wfc_ref[0],
                            preferred_element_type=jnp.float32)
    for y in range(1, 8):
        accf_ref[...] += jnp.dot(feat[:, y, :], wfc_ref[y],
                                 preferred_element_type=jnp.float32)
    o_ref[...] = jnp.tanh(accf_ref[...] + bfc_ref[...])


# --------------------------------------------------------------------------
# Trace-time weight preparation (plain JAX): banded / permuted bf16 weights
# built once from the PyTorch-shaped parameters.
# --------------------------------------------------------------------------
def _prep_params(w1, b1, w2, b2, wfc, bfc):
    f32, bf16 = jnp.float32, jnp.bfloat16

    # Conv1 band: W1[(q, s_in, j), ((s,t,pi), c)] = K1[2q+s_in-s, j-2pi-t, c],
    # zero outside the 7x7 kernel or for padded pooled columns pi > 12.
    k1 = jnp.transpose(w1[:, 0, :, :].astype(f32), (1, 2, 0))      # (7,7,32) [kh,kw,c]
    q = jnp.arange(4).reshape(4, 1, 1, 1, 1, 1)
    s_in = jnp.arange(2).reshape(1, 2, 1, 1, 1, 1)
    j = jnp.arange(32).reshape(1, 1, 32, 1, 1, 1)
    s = jnp.arange(2).reshape(1, 1, 1, 2, 1, 1)
    t = jnp.arange(2).reshape(1, 1, 1, 1, 2, 1)
    pi = jnp.arange(16).reshape(1, 1, 1, 1, 1, 16)                 # pad 13 -> 16 cols
    kh = 2 * q + s_in - s
    kw = j - 2 * pi - t
    valid = (kh >= 0) & (kh <= 6) & (kw >= 0) & (kw <= 6) & (pi <= 12)
    vals = k1[jnp.clip(kh, 0, 6), jnp.clip(kw, 0, 6)]              # (4,2,32,2,2,16,32)
    w1b = jnp.where(valid[..., None], vals, 0.0)
    # Cast AFTER the masking so the structural zeros stay exact in bf16.
    w1c = w1b.reshape(256, 2048).astype(bf16)                      # K = q*64 + s_in*32 + j
    b1t = jnp.tile(b1.astype(f32), 16).reshape(1, 512)

    # Conv2 band: W2b[kh, jp*32 + c, i*64 + o] = K2[kh, jp-i, c, o]
    k2 = jnp.transpose(w2.astype(f32), (2, 3, 1, 0))               # (6,6,32,64) [kh,kw,c,o]
    jp = jnp.arange(16).reshape(16, 1)
    i2 = jnp.arange(8).reshape(1, 8)
    kwr = jp - i2
    valid2 = (kwr >= 0) & (kwr <= 5) & (jp <= 12)                  # zeroes padded pi>12 cols
    g = k2[:, jnp.clip(kwr, 0, 5)]                                 # (6,16,8,32,64)
    g = jnp.where(valid2[None, :, :, None, None], g, 0.0)
    w2b = jnp.transpose(g, (0, 1, 3, 2, 4)).reshape(6, 512, 512).astype(bf16)
    b2t = jnp.tile(b2.astype(f32), 8).reshape(1, 512)

    # FC: fold torch's (C,H,W) flatten order into the weight -> (8, 512, 128)
    wfc3d = jnp.transpose(wfc.astype(f32).T.reshape(64, 8, 8, 128),
                          (1, 2, 0, 3)).reshape(8, 512, 128).astype(bf16)
    bfct = bfc.astype(f32).reshape(1, 128)
    return w1c, b1t, w2b, b2t, wfc3d, bfct


# --------------------------------------------------------------------------
# Wrapper
# --------------------------------------------------------------------------
def _tnet_forward(x, w1, b1, w2, b2, wfc, bfc):
    # x: (B, 1, 32, 32) NCHW float32; weights in PyTorch layouts.
    B = x.shape[0]
    w1c, b1t, w2b, b2t, wfc3d, bfct = _prep_params(w1, b1, w2, b2, wfc, bfc)

    # Pack adjacent image rows in pairs: x_r[b, m, s*32 + j] = x[b, 0, 2m+s, j]
    # (free reshape), pad 3 zero rows, then im2col along height so conv1 is a
    # single K=256 matmul: x4[b, m, q*64 + col] = x_r[b, m+q, col].
    x_r = x.astype(jnp.float32).reshape(B, 16, 64)
    x_p = jnp.pad(x_r, ((0, 0), (0, 3), (0, 0)))
    x4 = jnp.concatenate([x_p[:, q:q + 16, :] for q in range(4)], axis=-1)
    x4 = x4.astype(jnp.bfloat16)                 # bf16 MXU operand, halves input DMA

    # Block-size / padding choice: multiple-of-8 block derived from the batch
    # (small padding waste), >= 2 grid steps when possible so both v7x TCs work.
    B8 = ((B + 7) // 8) * 8
    n_blk = -(-B8 // BLOCK_B)
    if B8 >= 16:
        n_blk = max(n_blk, 2)
    bb = ((-(-B8 // n_blk)) + 7) // 8 * 8
    b_pad = n_blk * bb
    if b_pad != B:
        x4 = jnp.pad(x4, ((0, b_pad - B), (0, 0), (0, 0)))

    out = pl.pallas_call(
        _tnet_fused_kernel,
        out_shape=jax.ShapeDtypeStruct((b_pad, 128), jnp.float32),
        grid=(n_blk,),
        in_specs=[
            pl.BlockSpec((bb, 16, 256), lambda g: (g, 0, 0)),     # input block (bf16)
            pl.BlockSpec((256, 2048), lambda g: (0, 0)),          # conv1 band (bf16)
            pl.BlockSpec((1, 512), lambda g: (0, 0)),             # conv1 bias (fp32, tiled)
            pl.BlockSpec((6, 512, 512), lambda g: (0, 0, 0)),     # conv2 band (bf16)
            pl.BlockSpec((1, 512), lambda g: (0, 0)),             # conv2 bias (fp32, tiled)
            pl.BlockSpec((8, 512, 128), lambda g: (0, 0, 0)),     # fc weight (bf16, permuted)
            pl.BlockSpec((1, 128), lambda g: (0, 0)),             # fc bias (fp32)
        ],
        out_specs=pl.BlockSpec((bb, 128), lambda g: (g, 0)),
        scratch_shapes=[pltpu.VMEM((bb * 8, 512), jnp.float32),   # conv2 accumulator
                        pltpu.VMEM((bb, 128), jnp.float32)],      # fc accumulator
        compiler_params=pltpu.CompilerParams(
            dimension_semantics=("parallel",),
            vmem_limit_bytes=VMEM_LIMIT),
    )(x4, w1c, b1t, w2b, b2t, wfc3d, bfct)
    return out[:B]


tnet_forward = jax.jit(_tnet_forward)


# --------------------------------------------------------------------------
# Pure-JAX reference (sanity check), using the PyTorch weight conventions.
# --------------------------------------------------------------------------
def reference_forward(x, w1, b1, w2, b2, wfc, bfc):
    hi = jax.lax.Precision.HIGHEST
    a = jax.lax.conv_general_dilated(x, w1, (1, 1), 'VALID',
                                     dimension_numbers=('NCHW', 'OIHW', 'NCHW'),
                                     precision=hi)
    a = jnp.tanh(a + b1.reshape(1, 32, 1, 1))
    a = jax.lax.reduce_window(a, -jnp.inf, jax.lax.max,
                              (1, 1, 2, 2), (1, 1, 2, 2), 'VALID')
    a = jax.lax.conv_general_dilated(a, w2, (1, 1), 'VALID',
                                     dimension_numbers=('NCHW', 'OIHW', 'NCHW'),
                                     precision=hi)
    a = jnp.tanh(a + b2.reshape(1, 64, 1, 1))
    a = a.reshape(a.shape[0], -1)                       # torch (C,H,W) flatten
    return jnp.tanh(jnp.dot(a, wfc.T, precision=hi) + bfc.reshape(1, 128))


if __name__ == "__main__":
    key = jax.random.PRNGKey(0)
    ks = jax.random.split(key, 7)
    B = 4
    # Input: 32x32 single-channel patches (required by Linear(64*8*8, 128)).
    x = jax.random.normal(ks[0], (B, 1, 32, 32), jnp.float32)
    # Deterministic synthetic parameters in PyTorch layouts (TNet.__init__).
    w1 = jax.random.normal(ks[1], (32, 1, 7, 7), jnp.float32) * 0.15
    b1 = jax.random.normal(ks[2], (32,), jnp.float32) * 0.1
    w2 = jax.random.normal(ks[3], (64, 32, 6, 6), jnp.float32) * 0.03
    b2 = jax.random.normal(ks[4], (64,), jnp.float32) * 0.1
    wfc = jax.random.normal(ks[5], (128, 64 * 8 * 8), jnp.float32) * 0.016
    bfc = jax.random.normal(ks[6], (128,), jnp.float32) * 0.1

    out = jax.block_until_ready(tnet_forward(x, w1, b1, w2, b2, wfc, bfc))
    assert out.shape == (B, 128) and out.dtype == jnp.float32

    ref = reference_forward(x, w1, b1, w2, b2, wfc, bfc)
    max_diff = float(jnp.max(jnp.abs(out - ref)))
    # Tolerance relaxed (bf16 MXU operands, fp32 accumulation) per review.
    assert max_diff < 5e-2, f"mismatch vs reference: max |diff| = {max_diff}"

    print("KERNEL_OK")
</pallas_src>

<mosaic_0001>
module attributes {stable_mosaic.version = 11 : i64} {
  func.func @_tnet_fused_kernel(%arg0: i32, %arg1: memref<8x16x256xbf16, #tpu.memory_space<vmem>>, %arg2: memref<256x2048xbf16, #tpu.memory_space<vmem>>, %arg3: memref<1x512xf32, #tpu.memory_space<vmem>>, %arg4: memref<6x512x512xbf16, #tpu.memory_space<vmem>>, %arg5: memref<1x512xf32, #tpu.memory_space<vmem>>, %arg6: memref<8x512x128xbf16, #tpu.memory_space<vmem>>, %arg7: memref<1x128xf32, #tpu.memory_space<vmem>>, %arg8: memref<8x128xf32, #tpu.memory_space<vmem>>, %arg9: memref<64x512xf32, #tpu.memory_space<vmem>>, %arg10: memref<8x128xf32, #tpu.memory_space<vmem>>) attributes {dimension_semantics = [#tpu.dimension_semantics<parallel>], iteration_bounds = array<i64: 1>, scalar_prefetch = 0 : i64, scratch_operands = 2 : i64, tpu.core_type = #tpu.core_type<tc>, window_params = [{transform_indices = @transform_0, window_bounds = array<i64: 8, 16, 256>}, {pipeline_mode = #tpu.pipeline_mode<synchronous>, transform_indices = @transform_1, window_bounds = array<i64: 256, 2048>}, {pipeline_mode = #tpu.pipeline_mode<synchronous>, transform_indices = @transform_2, window_bounds = array<i64: 1, 512>}, {pipeline_mode = #tpu.pipeline_mode<synchronous>, transform_indices = @transform_3, window_bounds = array<i64: 6, 512, 512>}, {pipeline_mode = #tpu.pipeline_mode<synchronous>, transform_indices = @transform_4, window_bounds = array<i64: 1, 512>}, {pipeline_mode = #tpu.pipeline_mode<synchronous>, transform_indices = @transform_5, window_bounds = array<i64: 8, 512, 128>}, {pipeline_mode = #tpu.pipeline_mode<synchronous>, transform_indices = @transform_6, window_bounds = array<i64: 1, 128>}, {transform_indices = @transform_7, window_bounds = array<i64: 8, 128>}]} {
    %c0 = arith.constant 0 : index
    %c0_0 = arith.constant 0 : index
    %c0_1 = arith.constant 0 : index
    %0 = vector.load %arg1[%c0, %c0_0, %c0_1] : memref<8x16x256xbf16, #tpu.memory_space<vmem>>, vector<8x16x256xbf16>
    %1 = vector.shape_cast %0 : vector<8x16x256xbf16> to vector<128x256xbf16>
    %c0_2 = arith.constant 0 : index
    %c0_3 = arith.constant 0 : index
    %2 = vector.load %arg2[%c0_2, %c0_3] : memref<256x2048xbf16, #tpu.memory_space<vmem>>, vector<256x2048xbf16>
    %cst = arith.constant dense<0.000000e+00> : vector<128x2048xf32>
    %3 = tpu.matmul %1, %2, %cst {dimension_numbers = #tpu.dot_dimension_numbers<[1], [0], [0], [1], [0, 0, 1, 1], [], []>} : vector<128x256xbf16>, vector<256x2048xbf16>, vector<128x2048xf32> -> vector<128x2048xf32>
    %4 = vector.extract_strided_slice %3 {offsets = [0, 0], sizes = [128, 512], strides = [1, 1]} : vector<128x2048xf32> to vector<128x512xf32>
    %5 = vector.extract_strided_slice %3 {offsets = [0, 512], sizes = [128, 512], strides = [1, 1]} : vector<128x2048xf32> to vector<128x512xf32>
    %6 = arith.maximumf %4, %5 : vector<128x512xf32>
    %7 = vector.extract_strided_slice %3 {offsets = [0, 1024], sizes = [128, 512], strides = [1, 1]} : vector<128x2048xf32> to vector<128x512xf32>
    %8 = vector.extract_strided_slice %3 {offsets = [0, 1536], sizes = [128, 512], strides = [1, 1]} : vector<128x2048xf32> to vector<128x512xf32>
    %9 = arith.maximumf %7, %8 : vector<128x512xf32>
    %10 = arith.maximumf %6, %9 : vector<128x512xf32>
    %c0_4 = arith.constant 0 : index
    %c0_5 = arith.constant 0 : index
    %11 = vector.load %arg3[%c0_4, %c0_5] : memref<1x512xf32, #tpu.memory_space<vmem>>, vector<1x512xf32>
    %12 = vector.broadcast %11 : vector<1x512xf32> to vector<128x512xf32>
    %13 = arith.addf %10, %12 : vector<128x512xf32>
    %14 = math.tanh %13 : vector<128x512xf32>
    %15 = arith.truncf %14 : vector<128x512xf32> to vector<128x512xbf16>
    %16 = vector.shape_cast %15 : vector<128x512xbf16> to vector<8x16x512xbf16>
    %17 = vector.extract_strided_slice %16 {offsets = [0, 0, 0], sizes = [8, 8, 512], strides = [1, 1, 1]} : vector<8x16x512xbf16> to vector<8x8x512xbf16>
    %18 = vector.shape_cast %17 : vector<8x8x512xbf16> to vector<64x512xbf16>
    %c0_6 = arith.constant 0 : index
    %c0_7 = arith.constant 0 : index
    %c0_8 = arith.constant 0 : index
    %19 = vector.load %arg4[%c0_6, %c0_7, %c0_8] : memref<6x512x512xbf16, #tpu.memory_space<vmem>>, vector<1x512x512xbf16>
    %20 = vector.shape_cast %19 : vector<1x512x512xbf16> to vector<512x512xbf16>
    %cst_9 = arith.constant dense<0.000000e+00> : vector<64x512xf32>
    %21 = tpu.matmul %18, %20, %cst_9 {dimension_numbers = #tpu.dot_dimension_numbers<[1], [0], [0], [1], [0, 0, 1, 1], [], []>} : vector<64x512xbf16>, vector<512x512xbf16>, vector<64x512xf32> -> vector<64x512xf32>
    %c0_10 = arith.constant 0 : index
    %c0_11 = arith.constant 0 : index
    %22 = vector.load %arg9[%c0_10, %c0_11] : memref<64x512xf32, #tpu.memory_space<vmem>>, vector<64x512xf32>
    tpu.vector_store %arg9[%c0_10, %c0_11], %21 {strides = array<i32>} : memref<64x512xf32, #tpu.memory_space<vmem>>, vector<64x512xf32>,
    %c0_12 = arith.constant 0 : index
    %c0_13 = arith.constant 0 : index
    %23 = vector.load %arg9[%c0_12, %c0_13] : memref<64x512xf32, #tpu.memory_space<vmem>>, vector<64x512xf32>
    %24 = vector.extract_strided_slice %16 {offsets = [0, 1, 0], sizes = [8, 8, 512], strides = [1, 1, 1]} : vector<8x16x512xbf16> to vector<8x8x512xbf16>
    %25 = vector.shape_cast %24 : vector<8x8x512xbf16> to vector<64x512xbf16>
    %c1 = arith.constant 1 : index
    %c0_14 = arith.constant 0 : index
    %c0_15 = arith.constant 0 : index
    %26 = vector.load %arg4[%c1, %c0_14, %c0_15] : memref<6x512x512xbf16, #tpu.memory_space<vmem>>, vector<1x512x512xbf16>
    %27 = vector.shape_cast %26 : vector<1x512x512xbf16> to vector<512x512xbf16>
    %cst_16 = arith.constant dense<0.000000e+00> : vector<64x512xf32>
    %28 = tpu.matmul %25, %27, %cst_16 {dimension_numbers = #tpu.dot_dimension_numbers<[1], [0], [0], [1], [0, 0, 1, 1], [], []>} : vector<64x512xbf16>, vector<512x512xbf16>, vector<64x512xf32> -> vector<64x512xf32>
    %29 = arith.addf %23, %28 : vector<64x512xf32>
    %c0_17 = arith.constant 0 : index
    %c0_18 = arith.constant 0 : index
    %30 = vector.load %arg9[%c0_17, %c0_18] : memref<64x512xf32, #tpu.memory_space<vmem>>, vector<64x512xf32>
    tpu.vector_store %arg9[%c0_17, %c0_18], %29 {strides = array<i32>} : memref<64x512xf32, #tpu.memory_space<vmem>>, vector<64x512xf32>,
    %c0_19 = arith.constant 0 : index
    %c0_20 = arith.constant 0 : index
    %31 = vector.load %arg9[%c0_19, %c0_20] : memref<64x512xf32, #tpu.memory_space<vmem>>, vector<64x512xf32>
    %32 = vector.extract_strided_slice %16 {offsets = [0, 2, 0], sizes = [8, 8, 512], strides = [1, 1, 1]} : vector<8x16x512xbf16> to vector<8x8x512xbf16>
    %33 = vector.shape_cast %32 : vector<8x8x512xbf16> to vector<64x512xbf16>
    %c2 = arith.constant 2 : index
    %c0_21 = arith.constant 0 : index
    %c0_22 = arith.constant 0 : index
    %34 = vector.load %arg4[%c2, %c0_21, %c0_22] : memref<6x512x512xbf16, #tpu.memory_space<vmem>>, vector<1x512x512xbf16>
    %35 = vector.shape_cast %34 : vector<1x512x512xbf16> to vector<512x512xbf16>
    %cst_23 = arith.constant dense<0.000000e+00> : vector<64x512xf32>
    %36 = tpu.matmul %33, %35, %cst_23 {dimension_numbers = #tpu.dot_dimension_numbers<[1], [0], [0], [1], [0, 0, 1, 1], [], []>} : vector<64x512xbf16>, vector<512x512xbf16>, vector<64x512xf32> -> vector<64x512xf32>
    %37 = arith.addf %31, %36 : vector<64x512xf32>
    %c0_24 = arith.constant 0 : index
    %c0_25 = arith.constant 0 : index
    %38 = vector.load %arg9[%c0_24, %c0_25] : memref<64x512xf32, #tpu.memory_space<vmem>>, vector<64x512xf32>
    tpu.vector_store %arg9[%c0_24, %c0_25], %37 {strides = array<i32>} : memref<64x512xf32, #tpu.memory_space<vmem>>, vector<64x512xf32>,
    %c0_26 = arith.constant 0 : index
    %c0_27 = arith.constant 0 : index
    %39 = vector.load %arg9[%c0_26, %c0_27] : memref<64x512xf32, #tpu.memory_space<vmem>>, vector<64x512xf32>
    %40 = vector.extract_strided_slice %16 {offsets = [0, 3, 0], sizes = [8, 8, 512], strides = [1, 1, 1]} : vector<8x16x512xbf16> to vector<8x8x512xbf16>
    %41 = vector.shape_cast %40 : vector<8x8x512xbf16> to vector<64x512xbf16>
    %c3 = arith.constant 3 : index
    %c0_28 = arith.constant 0 : index
    %c0_29 = arith.constant 0 : index
    %42 = vector.load %arg4[%c3, %c0_28, %c0_29] : memref<6x512x512xbf16, #tpu.memory_space<vmem>>, vector<1x512x512xbf16>
    %43 = vector.shape_cast %42 : vector<1x512x512xbf16> to vector<512x512xbf16>
    %cst_30 = arith.constant dense<0.000000e+00> : vector<64x512xf32>
    %44 = tpu.matmul %41, %43, %cst_30 {dimension_numbers = #tpu.dot_dimension_numbers<[1], [0], [0], [1], [0, 0, 1, 1], [], []>} : vector<64x512xbf16>, vector<512x512xbf16>, vector<64x512xf32> -> vector<64x512xf32>
    %45 = arith.addf %39, %44 : vector<64x512xf32>
    %c0_31 = arith.constant 0 : index
    %c0_32 = arith.constant 0 : index
    %46 = vector.load %arg9[%c0_31, %c0_32] : memref<64x512xf32, #tpu.memory_space<vmem>>, vector<64x512xf32>
    tpu.vector_store %arg9[%c0_31, %c0_32], %45 {strides = array<i32>} : memref<64x512xf32, #tpu.memory_space<vmem>>, vector<64x512xf32>,
    %c0_33 = arith.constant 0 : index
    %c0_34 = arith.constant 0 : index
    %47 = vector.load %arg9[%c0_33, %c0_34] : memref<64x512xf32, #tpu.memory_space<vmem>>, vector<64x512xf32>
    %48 = vector.extract_strided_slice %16 {offsets = [0, 4, 0], sizes = [8, 8, 512], strides = [1, 1, 1]} : vector<8x16x512xbf16> to vector<8x8x512xbf16>
    %49 = vector.shape_cast %48 : vector<8x8x512xbf16> to vector<64x512xbf16>
    %c4 = arith.constant 4 : index
    %c0_35 = arith.constant 0 : index
    %c0_36 = arith.constant 0 : index
    %50 = vector.load %arg4[%c4, %c0_35, %c0_36] : memref<6x512x512xbf16, #tpu.memory_space<vmem>>, vector<1x512x512xbf16>
    %51 = vector.shape_cast %50 : vector<1x512x512xbf16> to vector<512x512xbf16>
    %cst_37 = arith.constant dense<0.000000e+00> : vector<64x512xf32>
    %52 = tpu.matmul %49, %51, %cst_37 {dimension_numbers = #tpu.dot_dimension_numbers<[1], [0], [0], [1], [0, 0, 1, 1], [], []>} : vector<64x512xbf16>, vector<512x512xbf16>, vector<64x512xf32> -> vector<64x512xf32>
    %53 = arith.addf %47, %52 : vector<64x512xf32>
    %c0_38 = arith.constant 0 : index
    %c0_39 = arith.constant 0 : index
    %54 = vector.load %arg9[%c0_38, %c0_39] : memref<64x512xf32, #tpu.memory_space<vmem>>, vector<64x512xf32>
    tpu.vector_store %arg9[%c0_38, %c0_39], %53 {strides = array<i32>} : memref<64x512xf32, #tpu.memory_space<vmem>>, vector<64x512xf32>,
    %c0_40 = arith.constant 0 : index
    %c0_41 = arith.constant 0 : index
    %55 = vector.load %arg9[%c0_40, %c0_41] : memref<64x512xf32, #tpu.memory_space<vmem>>, vector<64x512xf32>
    %56 = vector.extract_strided_slice %16 {offsets = [0, 5, 0], sizes = [8, 8, 512], strides = [1, 1, 1]} : vector<8x16x512xbf16> to vector<8x8x512xbf16>
    %57 = vector.shape_cast %56 : vector<8x8x512xbf16> to vector<64x512xbf16>
    %c5 = arith.constant 5 : index
    %c0_42 = arith.constant 0 : index
    %c0_43 = arith.constant 0 : index
    %58 = vector.load %arg4[%c5, %c0_42, %c0_43] : memref<6x512x512xbf16, #tpu.memory_space<vmem>>, vector<1x512x512xbf16>
    %59 = vector.shape_cast %58 : vector<1x512x512xbf16> to vector<512x512xbf16>
    %cst_44 = arith.constant dense<0.000000e+00> : vector<64x512xf32>
    %60 = tpu.matmul %57, %59, %cst_44 {dimension_numbers = #tpu.dot_dimension_numbers<[1], [0], [0], [1], [0, 0, 1, 1], [], []>} : vector<64x512xbf16>, vector<512x512xbf16>, vector<64x512xf32> -> vector<64x512xf32>
    %61 = arith.addf %55, %60 : vector<64x512xf32>
    %c0_45 = arith.constant 0 : index
    %c0_46 = arith.constant 0 : index
    %62 = vector.load %arg9[%c0_45, %c0_46] : memref<64x512xf32, #tpu.memory_space<vmem>>, vector<64x512xf32>
    tpu.vector_store %arg9[%c0_45, %c0_46], %61 {strides = array<i32>} : memref<64x512xf32, #tpu.memory_space<vmem>>, vector<64x512xf32>,
    %c0_47 = arith.constant 0 : index
    %c0_48 = arith.constant 0 : index
    %63 = vector.load %arg9[%c0_47, %c0_48] : memref<64x512xf32, #tpu.memory_space<vmem>>, vector<64x512xf32>
    %c0_49 = arith.constant 0 : index
    %c0_50 = arith.constant 0 : index
    %64 = vector.load %arg5[%c0_49, %c0_50] : memref<1x512xf32, #tpu.memory_space<vmem>>, vector<1x512xf32>
    %65 = vector.broadcast %64 : vector<1x512xf32> to vector<64x512xf32>
    %66 = arith.addf %63, %65 : vector<64x512xf32>
    %67 = math.tanh %66 : vector<64x512xf32>
    %68 = arith.truncf %67 : vector<64x512xf32> to vector<64x512xbf16>
    %69 = vector.shape_cast %68 : vector<64x512xbf16> to vector<8x8x512xbf16>
    %70 = vector.extract_strided_slice %69 {offsets = [0, 0, 0], sizes = [8, 1, 512], strides = [1, 1, 1]} : vector<8x8x512xbf16> to vector<8x1x512xbf16>
    %71 = vector.shape_cast %70 : vector<8x1x512xbf16> to vector<8x512xbf16>
    %c0_51 = arith.constant 0 : index
    %c0_52 = arith.constant 0 : index
    %c0_53 = arith.constant 0 : index
    %72 = vector.load %arg6[%c0_51, %c0_52, %c0_53] : memref<8x512x128xbf16, #tpu.memory_space<vmem>>, vector<1x512x128xbf16>
    %73 = vector.shape_cast %72 : vector<1x512x128xbf16> to vector<512x128xbf16>
    %cst_54 = arith.constant dense<0.000000e+00> : vector<8x128xf32>
    %74 = tpu.matmul %71, %73, %cst_54 {dimension_numbers = #tpu.dot_dimension_numbers<[1], [0], [0], [1], [0, 0, 1, 1], [], []>} : vector<8x512xbf16>, vector<512x128xbf16>, vector<8x128xf32> -> vector<8x128xf32>
    %c0_55 = arith.constant 0 : index
    %c0_56 = arith.constant 0 : index
    %75 = vector.load %arg10[%c0_55, %c0_56] : memref<8x128xf32, #tpu.memory_space<vmem>>, vector<8x128xf32>
    tpu.vector_store %arg10[%c0_55, %c0_56], %74 {strides = array<i32>} : memref<8x128xf32, #tpu.memory_space<vmem>>, vector<8x128xf32>,
    %c0_57 = arith.constant 0 : index
    %c0_58 = arith.constant 0 : index
    %76 = vector.load %arg10[%c0_57, %c0_58] : memref<8x128xf32, #tpu.memory_space<vmem>>, vector<8x128xf32>
    %77 = vector.extract_strided_slice %69 {offsets = [0, 1, 0], sizes = [8, 1, 512], strides = [1, 1, 1]} : vector<8x8x512xbf16> to vector<8x1x512xbf16>
    %78 = vector.shape_cast %77 : vector<8x1x512xbf16> to vector<8x512xbf16>
    %c1_59 = arith.constant 1 : index
    %c0_60 = arith.constant 0 : index
    %c0_61 = arith.constant 0 : index
    %79 = vector.load %arg6[%c1_59, %c0_60, %c0_61] : memref<8x512x128xbf16, #tpu.memory_space<vmem>>, vector<1x512x128xbf16>
    %80 = vector.shape_cast %79 : vector<1x512x128xbf16> to vector<512x128xbf16>
    %cst_62 = arith.constant dense<0.000000e+00> : vector<8x128xf32>
    %81 = tpu.matmul %78, %80, %cst_62 {dimension_numbers = #tpu.dot_dimension_numbers<[1], [0], [0], [1], [0, 0, 1, 1], [], []>} : vector<8x512xbf16>, vector<512x128xbf16>, vector<8x128xf32> -> vector<8x128xf32>
    %82 = arith.addf %76, %81 : vector<8x128xf32>
    %c0_63 = arith.constant 0 : index
    %c0_64 = arith.constant 0 : index
    %83 = vector.load %arg10[%c0_63, %c0_64] : memref<8x128xf32, #tpu.memory_space<vmem>>, vector<8x128xf32>
    tpu.vector_store %arg10[%c0_63, %c0_64], %82 {strides = array<i32>} : memref<8x128xf32, #tpu.memory_space<vmem>>, vector<8x128xf32>,
    %c0_65 = arith.constant 0 : index
    %c0_66 = arith.constant 0 : index
    %84 = vector.load %arg10[%c0_65, %c0_66] : memref<8x128xf32, #tpu.memory_space<vmem>>, vector<8x128xf32>
    %85 = vector.extract_strided_slice %69 {offsets = [0, 2, 0], sizes = [8, 1, 512], strides = [1, 1, 1]} : vector<8x8x512xbf16> to vector<8x1x512xbf16>
    %86 = vector.shape_cast %85 : vector<8x1x512xbf16> to vector<8x512xbf16>
    %c2_67 = arith.constant 2 : index
    %c0_68 = arith.constant 0 : index
    %c0_69 = arith.constant 0 : index
    %87 = vector.load %arg6[%c2_67, %c0_68, %c0_69] : memref<8x512x128xbf16, #tpu.memory_space<vmem>>, vector<1x512x128xbf16>
    %88 = vector.shape_cast %87 : vector<1x512x128xbf16> to vector<512x128xbf16>
    %cst_70 = arith.constant dense<0.000000e+00> : vector<8x128xf32>
    %89 = tpu.matmul %86, %88, %cst_70 {dimension_numbers = #tpu.dot_dimension_numbers<[1], [0], [0], [1], [0, 0, 1, 1], [], []>} : vector<8x512xbf16>, vector<512x128xbf16>, vector<8x128xf32> -> vector<8x128xf32>
    %90 = arith.addf %84, %89 : vector<8x128xf32>
    %c0_71 = arith.constant 0 : index
    %c0_72 = arith.constant 0 : index
    %91 = vector.load %arg10[%c0_71, %c0_72] : memref<8x128xf32, #tpu.memory_space<vmem>>, vector<8x128xf32>
    tpu.vector_store %arg10[%c0_71, %c0_72], %90 {strides = array<i32>} : memref<8x128xf32, #tpu.memory_space<vmem>>, vector<8x128xf32>,
    %c0_73 = arith.constant 0 : index
    %c0_74 = arith.constant 0 : index
    %92 = vector.load %arg10[%c0_73, %c0_74] : memref<8x128xf32, #tpu.memory_space<vmem>>, vector<8x128xf32>
    %93 = vector.extract_strided_slice %69 {offsets = [0, 3, 0], sizes = [8, 1, 512], strides = [1, 1, 1]} : vector<8x8x512xbf16> to vector<8x1x512xbf16>
    %94 = vector.shape_cast %93 : vector<8x1x512xbf16> to vector<8x512xbf16>
    %c3_75 = arith.constant 3 : index
    %c0_76 = arith.constant 0 : index
    %c0_77 = arith.constant 0 : index
    %95 = vector.load %arg6[%c3_75, %c0_76, %c0_77] : memref<8x512x128xbf16, #tpu.memory_space<vmem>>, vector<1x512x128xbf16>
    %96 = vector.shape_cast %95 : vector<1x512x128xbf16> to vector<512x128xbf16>
    %cst_78 = arith.constant dense<0.000000e+00> : vector<8x128xf32>
    %97 = tpu.matmul %94, %96, %cst_78 {dimension_numbers = #tpu.dot_dimension_numbers<[1], [0], [0], [1], [0, 0, 1, 1], [], []>} : vector<8x512xbf16>, vector<512x128xbf16>, vector<8x128xf32> -> vector<8x128xf32>
    %98 = arith.addf %92, %97 : vector<8x128xf32>
    %c0_79 = arith.constant 0 : index
    %c0_80 = arith.constant 0 : index
    %99 = vector.load %arg10[%c0_79, %c0_80] : memref<8x128xf32, #tpu.memory_space<vmem>>, vector<8x128xf32>
    tpu.vector_store %arg10[%c0_79, %c0_80], %98 {strides = array<i32>} : memref<8x128xf32, #tpu.memory_space<vmem>>, vector<8x128xf32>,
    %c0_81 = arith.constant 0 : index
    %c0_82 = arith.constant 0 : index
    %100 = vector.load %arg10[%c0_81, %c0_82] : memref<8x128xf32, #tpu.memory_space<vmem>>, vector<8x128xf32>
    %101 = vector.extract_strided_slice %69 {offsets = [0, 4, 0], sizes = [8, 1, 512], strides = [1, 1, 1]} : vector<8x8x512xbf16> to vector<8x1x512xbf16>
    %102 = vector.shape_cast %101 : vector<8x1x512xbf16> to vector<8x512xbf16>
    %c4_83 = arith.constant 4 : index
    %c0_84 = arith.constant 0 : index
    %c0_85 = arith.constant 0 : index
    %103 = vector.load %arg6[%c4_83, %c0_84, %c0_85] : memref<8x512x128xbf16, #tpu.memory_space<vmem>>, vector<1x512x128xbf16>
    %104 = vector.shape_cast %103 : vector<1x512x128xbf16> to vector<512x128xbf16>
    %cst_86 = arith.constant dense<0.000000e+00> : vector<8x128xf32>
    %105 = tpu.matmul %102, %104, %cst_86 {dimension_numbers = #tpu.dot_dimension_numbers<[1], [0], [0], [1], [0, 0, 1, 1], [], []>} : vector<8x512xbf16>, vector<512x128xbf16>, vector<8x128xf32> -> vector<8x128xf32>
    %106 = arith.addf %100, %105 : vector<8x128xf32>
    %c0_87 = arith.constant 0 : index
    %c0_88 = arith.constant 0 : index
    %107 = vector.load %arg10[%c0_87, %c0_88] : memref<8x128xf32, #tpu.memory_space<vmem>>, vector<8x128xf32>
    tpu.vector_store %arg10[%c0_87, %c0_88], %106 {strides = array<i32>} : memref<8x128xf32, #tpu.memory_space<vmem>>, vector<8x128xf32>,
    %c0_89 = arith.constant 0 : index
    %c0_90 = arith.constant 0 : index
    %108 = vector.load %arg10[%c0_89, %c0_90] : memref<8x128xf32, #tpu.memory_space<vmem>>, vector<8x128xf32>
    %109 = vector.extract_strided_slice %69 {offsets = [0, 5, 0], sizes = [8, 1, 512], strides = [1, 1, 1]} : vector<8x8x512xbf16> to vector<8x1x512xbf16>
    %110 = vector.shape_cast %109 : vector<8x1x512xbf16> to vector<8x512xbf16>
    %c5_91 = arith.constant 5 : index
    %c0_92 = arith.constant 0 : index
    %c0_93 = arith.constant 0 : index
    %111 = vector.load %arg6[%c5_91, %c0_92, %c0_93] : memref<8x512x128xbf16, #tpu.memory_space<vmem>>, vector<1x512x128xbf16>
    %112 = vector.shape_cast %111 : vector<1x512x128xbf16> to vector<512x128xbf16>
    %cst_94 = arith.constant dense<0.000000e+00> : vector<8x128xf32>
    %113 = tpu.matmul %110, %112, %cst_94 {dimension_numbers = #tpu.dot_dimension_numbers<[1], [0], [0], [1], [0, 0, 1, 1], [], []>} : vector<8x512xbf16>, vector<512x128xbf16>, vector<8x128xf32> -> vector<8x128xf32>
    %114 = arith.addf %108, %113 : vector<8x128xf32>
    %c0_95 = arith.constant 0 : index
    %c0_96 = arith.constant 0 : index
    %115 = vector.load %arg10[%c0_95, %c0_96] : memref<8x128xf32, #tpu.memory_space<vmem>>, vector<8x128xf32>
    tpu.vector_store %arg10[%c0_95, %c0_96], %114 {strides = array<i32>} : memref<8x128xf32, #tpu.memory_space<vmem>>, vector<8x128xf32>,
    %c0_97 = arith.constant 0 : index
    %c0_98 = arith.constant 0 : index
    %116 = vector.load %arg10[%c0_97, %c0_98] : memref<8x128xf32, #tpu.memory_space<vmem>>, vector<8x128xf32>
    %117 = vector.extract_strided_slice %69 {offsets = [0, 6, 0], sizes = [8, 1, 512], strides = [1, 1, 1]} : vector<8x8x512xbf16> to vector<8x1x512xbf16>
    %118 = vector.shape_cast %117 : vector<8x1x512xbf16> to vector<8x512xbf16>
    %c6 = arith.constant 6 : index
    %c0_99 = arith.constant 0 : index
    %c0_100 = arith.constant 0 : index
    %119 = vector.load %arg6[%c6, %c0_99, %c0_100] : memref<8x512x128xbf16, #tpu.memory_space<vmem>>, vector<1x512x128xbf16>
    %120 = vector.shape_cast %119 : vector<1x512x128xbf16> to vector<512x128xbf16>
    %cst_101 = arith.constant dense<0.000000e+00> : vector<8x128xf32>
    %121 = tpu.matmul %118, %120, %cst_101 {dimension_numbers = #tpu.dot_dimension_numbers<[1], [0], [0], [1], [0, 0, 1, 1], [], []>} : vector<8x512xbf16>, vector<512x128xbf16>, vector<8x128xf32> -> vector<8x128xf32>
    %122 = arith.addf %116, %121 : vector<8x128xf32>
    %c0_102 = arith.constant 0 : index
    %c0_103 = arith.constant 0 : index
    %123 = vector.load %arg10[%c0_102, %c0_103] : memref<8x128xf32, #tpu.memory_space<vmem>>, vector<8x128xf32>
    tpu.vector_store %arg10[%c0_102, %c0_103], %122 {strides = array<i32>} : memref<8x128xf32, #tpu.memory_space<vmem>>, vector<8x128xf32>,
    %c0_104 = arith.constant 0 : index
    %c0_105 = arith.constant 0 : index
    %124 = vector.load %arg10[%c0_104, %c0_105] : memref<8x128xf32, #tpu.memory_space<vmem>>, vector<8x128xf32>
    %125 = vector.extract_strided_slice %69 {offsets = [0, 7, 0], sizes = [8, 1, 512], strides = [1, 1, 1]} : vector<8x8x512xbf16> to vector<8x1x512xbf16>
    %126 = vector.shape_cast %125 : vector<8x1x512xbf16> to vector<8x512xbf16>
    %c7 = arith.constant 7 : index
    %c0_106 = arith.constant 0 : index
    %c0_107 = arith.constant 0 : index
    %127 = vector.load %arg6[%c7, %c0_106, %c0_107] : memref<8x512x128xbf16, #tpu.memory_space<vmem>>, vector<1x512x128xbf16>
    %128 = vector.shape_cast %127 : vector<1x512x128xbf16> to vector<512x128xbf16>
    %cst_108 = arith.constant dense<0.000000e+00> : vector<8x128xf32>
    %129 = tpu.matmul %126, %128, %cst_108 {dimension_numbers = #tpu.dot_dimension_numbers<[1], [0], [0], [1], [0, 0, 1, 1], [], []>} : vector<8x512xbf16>, vector<512x128xbf16>, vector<8x128xf32> -> vector<8x128xf32>
    %130 = arith.addf %124, %129 : vector<8x128xf32>
    %c0_109 = arith.constant 0 : index
    %c0_110 = arith.constant 0 : index
    %131 = vector.load %arg10[%c0_109, %c0_110] : memref<8x128xf32, #tpu.memory_space<vmem>>, vector<8x128xf32>
    tpu.vector_store %arg10[%c0_109, %c0_110], %130 {strides = array<i32>} : memref<8x128xf32, #tpu.memory_space<vmem>>, vector<8x128xf32>,
    %c0_111 = arith.constant 0 : index
    %c0_112 = arith.constant 0 : index
    %132 = vector.load %arg10[%c0_111, %c0_112] : memref<8x128xf32, #tpu.memory_space<vmem>>, vector<8x128xf32>
    %c0_113 = arith.constant 0 : index
    %c0_114 = arith.constant 0 : index
    %133 = vector.load %arg7[%c0_113, %c0_114] : memref<1x128xf32, #tpu.memory_space<vmem>>, vector<1x128xf32>
    %134 = vector.broadcast %133 : vector<1x128xf32> to vector<8x128xf32>
    %135 = arith.addf %132, %134 : vector<8x128xf32>
    %136 = math.tanh %135 : vector<8x128xf32>
    %c0_115 = arith.constant 0 : index
    %c0_116 = arith.constant 0 : index
    %137 = vector.load %arg8[%c0_115, %c0_116] : memref<8x128xf32, #tpu.memory_space<vmem>>, vector<8x128xf32>
    tpu.vector_store %arg8[%c0_115, %c0_116], %136 {strides = array<i32>} : memref<8x128xf32, #tpu.memory_space<vmem>>, vector<8x128xf32>,
    return
  }
  func.func @transform_0(%arg0: i32) -> (i32, i32, i32) {
    %c0_i32 = arith.constant 0 : i32
    %c0_i32_0 = arith.constant 0 : i32
    %c0_i32_1 = arith.constant 0 : i32
    return %arg0, %c0_i32, %c0_i32_0 : i32, i32, i32
  }
  func.func @transform_1(%arg0: i32) -> (i32, i32) {
    %c0_i32 = arith.constant 0 : i32
    %c0_i32_0 = arith.constant 0 : i32
    %c0_i32_1 = arith.constant 0 : i32
    return %c0_i32, %c0_i32_0 : i32, i32
  }
  func.func @transform_2(%arg0: i32) -> (i32, i32) {
    %c0_i32 = arith.constant 0 : i32
    %c0_i32_0 = arith.constant 0 : i32
    %c0_i32_1 = arith.constant 0 : i32
    return %c0_i32, %c0_i32_0 : i32, i32
  }
  func.func @transform_3(%arg0: i32) -> (i32, i32, i32) {
    %c0_i32 = arith.constant 0 : i32
    %c0_i32_0 = arith.constant 0 : i32
    %c0_i32_1 = arith.constant 0 : i32
    %c0_i32_2 = arith.constant 0 : i32
    return %c0_i32, %c0_i32_0, %c0_i32_1 : i32, i32, i32
  }
  func.func @transform_4(%arg0: i32) -> (i32, i32) {
    %c0_i32 = arith.constant 0 : i32
    %c0_i32_0 = arith.constant 0 : i32
    %c0_i32_1 = arith.constant 0 : i32
    return %c0_i32, %c0_i32_0 : i32, i32
  }
  func.func @transform_5(%arg0: i32) -> (i32, i32, i32) {
    %c0_i32 = arith.constant 0 : i32
    %c0_i32_0 = arith.constant 0 : i32
    %c0_i32_1 = arith.constant 0 : i32
    %c0_i32_2 = arith.constant 0 : i32
    return %c0_i32, %c0_i32_0, %c0_i32_1 : i32, i32, i32
  }
  func.func @transform_6(%arg0: i32) -> (i32, i32) {
    %c0_i32 = arith.constant 0 : i32
    %c0_i32_0 = arith.constant 0 : i32
    %c0_i32_1 = arith.constant 0 : i32
    return %c0_i32, %c0_i32_0 : i32, i32
  }
  func.func @transform_7(%arg0: i32) -> (i32, i32) {
    %c0_i32 = arith.constant 0 : i32
    %c0_i32_0 = arith.constant 0 : i32
    return %arg0, %c0_i32 : i32, i32
  }
}

</mosaic_0001>

<llo_original>
// kernel: tile.13
$region0: #{tile.13}
  #allocation0 [shape = 's32[1]{0}', space=sflag, size = 0x4, scoped, tag = 'scoped memory for tile.13']
  %s0 = inlined_call_operand.vmem [shape: f32[32], index: 0, kind: input, shape index: {}]
  %s1 = inlined_call_operand.vmem [shape: f32[16,32], index: 1, kind: output, shape index: {}]
  // Predicated region
  $region2: #{tile.13} parent=0 // pred_check
    _
  $region3: #{tile.13} parent=0 // pred_check_branch
    %3 = sbr.rel (0) target = $region5
  $region4: #{tile.13} parent=0 // pred_region
    _
  $region5: #{tile.13} parent=0 // pred_fallthru
    _
  %v4 = vld [vmem:[%s0] ss:$0 sm:$0xff]
  %5 = vst [vmem:[%s1] sm:$0xff] %v4
  %s6 = scalar_lea.vmem %s1, 8
  %7 = vst [vmem:[%s6] sm:$0xff] %v4

// kernel: tile.14
$region0: #{tile.14}
  %s0 = inlined_call_operand.vmem [shape: f32[16,32], index: 0, kind: input, shape index: {}]
  %s1 = inlined_call_operand.vmem [shape: f32[1,512], index: 1, kind: output, shape index: {}]
  $region1: #{tile.14} parent=0
    #allocation0 [shape = 'u8[16384]{0}', space=vmem, size = 0x4000, scoped, tag = 'scoped mem for output reshape']
    %v2 = vld [vmem:[%s0] ss:$4 sm:$0xf]
    %vm3 = vcmask 261120
    %4 = vst.msk [vmem:[#allocation0] ss:$8 sm:$0xf] %vm3, %v2
    %s5 = scalar_lea.vmem %s0, 3
    %v6 = vld [vmem:[%s5] ss:$4 sm:$0xf]
    %7 = vrot.lane.b32.xlu0 %v6, 96
    %v8 = vpop.permute.xlu0 %7
    %vm9 = vcmask 1048320
    %10 = vst.msk [vmem:[#allocation0] ss:$8 sm:$0xf] %vm9, %v8
    %s11 = scalar_lea.vmem %s0, 2
    %v12 = vld [vmem:[%s11] ss:$4 sm:$0xf]
    %13 = vrot.lane.b32.xlu0 %v12, 64
    %v14 = vpop.permute.xlu0 %13
    %vm15 = vcmask 785920
    %16 = vst.msk [vmem:[#allocation0] ss:$8 sm:$0xf] %vm15, %v14
    %s17 = scalar_lea.vmem %s0, 1
    %v18 = vld [vmem:[%s17] ss:$4 sm:$0xf]
    %19 = vrot.lane.b32.xlu0 %v18, 32
    %v20 = vpop.permute.xlu0 %19
    %vm21 = vcmask 523520
    %22 = vst.msk [vmem:[#allocation0] ss:$8 sm:$0xf] %vm21, %v20
    %s24 = sshll.u32 1, 1
    %s25 = ssub.s32 %s24, 1
    %v27 = vld [vmem:[#allocation0] sm:%s25]
    %s28 = sshll.u32 1, 1
    %s29 = ssub.s32 %s28, 1
    %30 = vst [vmem:[%s1] sm:%s29] %v27
    %s31 = scalar_lea.vmem [#allocation0], 8
    %v32 = vld [vmem:[%s31] sm:%s25]
    %s33 = sshll.u32 1, 1
    %s34 = ssub.s32 %s33, 1
    %s35 = scalar_lea.vmem %s1, 1
    %36 = vst [vmem:[%s35] sm:%s34] %v32
    %s37 = scalar_lea.vmem [#allocation0], 16
    %v38 = vld [vmem:[%s37] sm:%s25]
    %s39 = sshll.u32 1, 1
    %s40 = ssub.s32 %s39, 1
    %s41 = smul.addr 1, 2
    %s42 = scalar_lea.vmem %s1, %s41
    %43 = vst [vmem:[%s42] sm:%s40] %v38
    %s44 = scalar_lea.vmem [#allocation0], 24
    %v45 = vld [vmem:[%s44] sm:%s25]
    %s46 = sshll.u32 1, 1
    %s47 = ssub.s32 %s46, 1
    %s48 = smul.addr 1, 3
    %s49 = scalar_lea.vmem %s1, %s48
    %50 = vst [vmem:[%s49] sm:%s47] %v45

// kernel: tile.18
$region0: #{tile.18}
  #allocation0 [shape = 's32[1]{0}', space=sflag, size = 0x4, scoped, tag = 'scoped memory for tile.18']
  %s0 = inlined_call_operand.vmem [shape: f32[64], index: 0, kind: input, shape index: {}]
  %s1 = inlined_call_operand.vmem [shape: f32[8,64], index: 1, kind: output, shape index: {}]
  // Predicated region
  $region2: #{tile.18} parent=0 // pred_check
    _
  $region3: #{tile.18} parent=0 // pred_check_branch
    %3 = sbr.rel (0) target = $region5
  $region4: #{tile.18} parent=0 // pred_region
    _
  $region5: #{tile.18} parent=0 // pred_fallthru
    _
  %v4 = vld [vmem:[%s0] ss:$0 sm:$0xff]
  %5 = vst [vmem:[%s1] sm:$0xff] %v4

// kernel: tile.19
$region0: #{tile.19}
  %s0 = inlined_call_operand.vmem [shape: f32[8,64], index: 0, kind: input, shape index: {}]
  %s1 = inlined_call_operand.vmem [shape: f32[1,512], index: 1, kind: output, shape index: {}]
  $region1: #{tile.19} parent=0
    #allocation0 [shape = 'u8[16384]{0}', space=vmem, size = 0x4000, scoped, tag = 'scoped mem for output reshape']
    %v2 = vld [vmem:[%s0] ss:$2 sm:$0xf]
    %vm3 = vcmask 523264
    %4 = vst.msk [vmem:[#allocation0] ss:$8 sm:$0xf] %vm3, %v2
    %s5 = scalar_lea.vmem %s0, 1
    %v6 = vld [vmem:[%s5] ss:$2 sm:$0xf]
    %7 = vrot.lane.b32.xlu0 %v6, 64
    %v8 = vpop.permute.xlu0 %7
    %vm9 = vcmask 1048064
    %10 = vst.msk [vmem:[#allocation0] ss:$8 sm:$0xf] %vm9, %v8
    %s12 = sshll.u32 1, 1
    %s13 = ssub.s32 %s12, 1
    %v15 = vld [vmem:[#allocation0] sm:%s13]
    %s16 = sshll.u32 1, 1
    %s17 = ssub.s32 %s16, 1
    %18 = vst [vmem:[%s1] sm:%s17] %v15
    %s19 = scalar_lea.vmem [#allocation0], 8
    %v20 = vld [vmem:[%s19] sm:%s13]
    %s21 = sshll.u32 1, 1
    %s22 = ssub.s32 %s21, 1
    %s23 = scalar_lea.vmem %s1, 1
    %24 = vst [vmem:[%s23] sm:%s22] %v20
    %s25 = scalar_lea.vmem [#allocation0], 16
    %v26 = vld [vmem:[%s25] sm:%s13]
    %s27 = sshll.u32 1, 1
    %s28 = ssub.s32 %s27, 1
    %s29 = smul.addr 1, 2
    %s30 = scalar_lea.vmem %s1, %s29
    %31 = vst [vmem:[%s30] sm:%s28] %v26
    %s32 = scalar_lea.vmem [#allocation0], 24
    %v33 = vld [vmem:[%s32] sm:%s13]
    %s34 = sshll.u32 1, 1
    %s35 = ssub.s32 %s34, 1
    %s36 = smul.addr 1, 3
    %s37 = scalar_lea.vmem %s1, %s36
    %38 = vst [vmem:[%s37] sm:%s35] %v33

// kernel: _tnet_forward.1
$region0: #{_tnet_forward.1}
  #allocation0 [shape = 'u32[]', space=smem, size = 0x4, offset = 0x4, fixed_abs, tag = 'smem constant byte address 0x4 - core index']
  #allocation1 [shape = 'u32[144,128]{1,0:T(1,128)}', space=vmem, size = 0x12000, scoped, tag = 'internal scratch']
  #allocation2 [shape = 'f32[64,512]{1,0:T(8,128)}', space=vmem, size = 0x20000, scoped, tag = 'scratch operand']
  #allocation3 [shape = 'f32[8,128]{1,0:T(8,128)}', space=vmem, size = 0x1000, scoped, tag = 'scratch operand']
  %s0 = inlined_call_operand.vmem [shape: bf16[8,16,256], index: 0, kind: input, shape index: {}]
  %s1 = inlined_call_operand.vmem [shape: bf16[256,2048], index: 1, kind: input, shape index: {}]
  %s2 = inlined_call_operand.vmem [shape: f32[1,512], index: 2, kind: input, shape index: {}]
  %s3 = inlined_call_operand.vmem [shape: bf16[6,512,512], index: 3, kind: input, shape index: {}]
  %s4 = inlined_call_operand.vmem [shape: f32[1,512], index: 4, kind: input, shape index: {}]
  %s5 = inlined_call_operand.vmem [shape: bf16[8,512,128], index: 5, kind: input, shape index: {}]
  %s6 = inlined_call_operand.vmem [shape: f32[1,128], index: 6, kind: input, shape index: {}]
  %s7 = inlined_call_operand.vmem [shape: f32[8,128], index: 7, kind: output, shape index: {}]
  %s8 = sld [smem:[#allocation0]]
  $region38: #{_tnet_forward.1} parent=0
    _
  %s10 = ssub.s32 1, %s8
  %s11 = scalar_select 0, %s10, %s8
  // Predicated region
  $region2: #{_tnet_forward.1} parent=0 // pred_check
    _
  $region3: #{_tnet_forward.1} parent=0 // pred_check_branch
    %13 = sbr.rel (0) target = $region5
  $region4: #{_tnet_forward.1} parent=0 // pred_region
    _
  $region5: #{_tnet_forward.1} parent=0 // pred_fallthru
    _
  // Predicated region
  $region6: #{_tnet_forward.1} parent=0 // pred_check
    _
  $region7: #{_tnet_forward.1} parent=0 // pred_check_branch
    %15 = sbr.rel (0) target = $region9
  $region8: #{_tnet_forward.1} parent=0 // pred_region
    _
  $region9: #{_tnet_forward.1} parent=0 // pred_fallthru
    _
  // Predicated region
  $region10: #{_tnet_forward.1} parent=0 // pred_check
    _
  $region11: #{_tnet_forward.1} parent=0 // pred_check_branch
    %17 = sbr.rel (0) target = $region13
  $region12: #{_tnet_forward.1} parent=0 // pred_region
    _
  $region13: #{_tnet_forward.1} parent=0 // pred_fallthru
    _
  // Predicated region
  $region14: #{_tnet_forward.1} parent=0 // pred_check
    _
  $region15: #{_tnet_forward.1} parent=0 // pred_check_branch
    %19 = sbr.rel (0) target = $region17
  $region16: #{_tnet_forward.1} parent=0 // pred_region
    _
  $region17: #{_tnet_forward.1} parent=0 // pred_fallthru
    _
  // Predicated region
  $region18: #{_tnet_forward.1} parent=0 // pred_check
    _
  $region19: #{_tnet_forward.1} parent=0 // pred_check_branch
    %21 = sbr.rel (0) target = $region21
  $region20: #{_tnet_forward.1} parent=0 // pred_region
    _
  $region21: #{_tnet_forward.1} parent=0 // pred_fallthru
    _
  // Predicated region
  $region22: #{_tnet_forward.1} parent=0 // pred_check
    _
  $region23: #{_tnet_forward.1} parent=0 // pred_check_branch
    %23 = sbr.rel (0) target = $region25
  $region24: #{_tnet_forward.1} parent=0 // pred_region
    _
  $region25: #{_tnet_forward.1} parent=0 // pred_fallthru
    _
  // Predicated region
  $region26: #{_tnet_forward.1} parent=0 // pred_check
    _
  $region27: #{_tnet_forward.1} parent=0 // pred_check_branch
    %25 = sbr.rel (0) target = $region29
  $region28: #{_tnet_forward.1} parent=0 // pred_region
    _
  $region29: #{_tnet_forward.1} parent=0 // pred_fallthru
    _
  %v27 = vld [vmem:[%s0] sm:$0xff]
  %v28 = vld [vmem:[%s0 + $0x8] sm:$0xff]
  %v29 = vld [vmem:[%s0 + $0x10] sm:$0xff]
  %v30 = vld [vmem:[%s0 + $0x18] sm:$0xff]
  %v31 = vld [vmem:[%s0 + $0x20] sm:$0xff]
  %v32 = vld [vmem:[%s0 + $0x28] sm:$0xff]
  %v33 = vld [vmem:[%s0 + $0x30] sm:$0xff]
  %v34 = vld [vmem:[%s0 + $0x38] sm:$0xff]
  %v35 = vld [vmem:[%s0 + $0x40] sm:$0xff]
  %v36 = vld [vmem:[%s0 + $0x48] sm:$0xff]
  %v37 = vld [vmem:[%s0 + $0x50] sm:$0xff]
  %v38 = vld [vmem:[%s0 + $0x58] sm:$0xff]
  %v39 = vld [vmem:[%s0 + $0x60] sm:$0xff]
  %v40 = vld [vmem:[%s0 + $0x68] sm:$0xff]
  %v41 = vld [vmem:[%s0 + $0x70] sm:$0xff]
  %v42 = vld [vmem:[%s0 + $0x78] sm:$0xff]
  %v43 = vld [vmem:[%s1] sm:$0xff]
  %v44 = vld [vmem:[%s1 + $0x8] sm:$0xff]
  %v45 = vld [vmem:[%s1 + $0x10] sm:$0xff]
  %v46 = vld [vmem:[%s1 + $0x18] sm:$0xff]
  %v47 = vld [vmem:[%s1 + $0x20] sm:$0xff]
  %v48 = vld [vmem:[%s1 + $0x28] sm:$0xff]
  %v49 = vld [vmem:[%s1 + $0x30] sm:$0xff]
  %v50 = vld [vmem:[%s1 + $0x38] sm:$0xff]
  %v51 = vld [vmem:[%s1 + $0x40] sm:$0xff]
  %v52 = vld [vmem:[%s1 + $0x48] sm:$0xff]
  %v53 = vld [vmem:[%s1 + $0x50] sm:$0xff]
  %v54 = vld [vmem:[%s1 + $0x58] sm:$0xff]
  %v55 = vld [vmem:[%s1 + $0x60] sm:$0xff]
  %v56 = vld [vmem:[%s1 + $0x68] sm:$0xff]
  %v57 = vld [vmem:[%s1 + $0x70] sm:$0xff]
  %v58 = vld [vmem:[%s1 + $0x78] sm:$0xff]
  %v59 = vld [vmem:[%s1 + $0x80] sm:$0xff]
  %v60 = vld [vmem:[%s1 + $0x88] sm:$0xff]
  %v61 = vld [vmem:[%s1 + $0x90] sm:$0xff]
  %v62 = vld [vmem:[%s1 + $0x98] sm:$0xff]
  %v63 = vld [vmem:[%s1 + $0xa0] sm:$0xff]
  %v64 = vld [vmem:[%s1 + $0xa8] sm:$0xff]
  %v65 = vld [vmem:[%s1 + $0xb0] sm:$0xff]
  %v66 = vld [vmem:[%s1 + $0xb8] sm:$0xff]
  %v67 = vld [vmem:[%s1 + $0xc0] sm:$0xff]
  %v68 = vld [vmem:[%s1 + $0xc8] sm:$0xff]
  %v69 = vld [vmem:[%s1 + $0xd0] sm:$0xff]
  %v70 = vld [vmem:[%s1 + $0xd8] sm:$0xff]
  %v71 = vld [vmem:[%s1 + $0xe0] sm:$0xff]
  %v72 = vld [vmem:[%s1 + $0xe8] sm:$0xff]
  %v73 = vld [vmem:[%s1 + $0xf0] sm:$0xff]
  %v74 = vld [vmem:[%s1 + $0xf8] sm:$0xff]
  %v75 = vld [vmem:[%s1 + $0x100] sm:$0xff]
  %v76 = vld [vmem:[%s1 + $0x108] sm:$0xff]
  %v77 = vld [vmem:[%s1 + $0x110] sm:$0xff]
  %v78 = vld [vmem:[%s1 + $0x118] sm:$0xff]
  %v79 = vld [vmem:[%s1 + $0x120] sm:$0xff]
  %v80 = vld [vmem:[%s1 + $0x128] sm:$0xff]
  %v81 = vld [vmem:[%s1 + $0x130] sm:$0xff]
  %v82 = vld [vmem:[%s1 + $0x138] sm:$0xff]
  %v83 = vld [vmem:[%s1 + $0x140] sm:$0xff]
  %v84 = vld [vmem:[%s1 + $0x148] sm:$0xff]
  %v85 = vld [vmem:[%s1 + $0x150] sm:$0xff]
  %v86 = vld [vmem:[%s1 + $0x158] sm:$0xff]
  %v87 = vld [vmem:[%s1 + $0x160] sm:$0xff]
  %v88 = vld [vmem:[%s1 + $0x168] sm:$0xff]
  %v89 = vld [vmem:[%s1 + $0x170] sm:$0xff]
  %v90 = vld [vmem:[%s1 + $0x178] sm:$0xff]
  %v91 = vld [vmem:[%s1 + $0x180] sm:$0xff]
  %v92 = vld [vmem:[%s1 + $0x188] sm:$0xff]
  %v93 = vld [vmem:[%s1 + $0x190] sm:$0xff]
  %v94 = vld [vmem:[%s1 + $0x198] sm:$0xff]
  %v95 = vld [vmem:[%s1 + $0x1a0] sm:$0xff]
  %v96 = vld [vmem:[%s1 + $0x1a8] sm:$0xff]
  %v97 = vld [vmem:[%s1 + $0x1b0] sm:$0xff]
  %v98 = vld [vmem:[%s1 + $0x1b8] sm:$0xff]
  %v99 = vld [vmem:[%s1 + $0x1c0] sm:$0xff]
  %v100 = vld [vmem:[%s1 + $0x1c8] sm:$0xff]
  %v101 = vld [vmem:[%s1 + $0x1d0] sm:$0xff]
  %v102 = vld [vmem:[%s1 + $0x1d8] sm:$0xff]
  %v103 = vld [vmem:[%s1 + $0x1e0] sm:$0xff]
  %v104 = vld [vmem:[%s1 + $0x1e8] sm:$0xff]
  %v105 = vld [vmem:[%s1 + $0x1f0] sm:$0xff]
  %v106 = vld [vmem:[%s1 + $0x1f8] sm:$0xff]
  %v107 = vld [vmem:[%s1 + $0x200] sm:$0xff]
  %v108 = vld [vmem:[%s1 + $0x208] sm:$0xff]
  %v109 = vld [vmem:[%s1 + $0x210] sm:$0xff]
  %v110 = vld [vmem:[%s1 + $0x218] sm:$0xff]
  %v111 = vld [vmem:[%s1 + $0x220] sm:$0xff]
  %v112 = vld [vmem:[%s1 + $0x228] sm:$0xff]
  %v113 = vld [vmem:[%s1 + $0x230] sm:$0xff]
  %v114 = vld [vmem:[%s1 + $0x238] sm:$0xff]
  %v115 = vld [vmem:[%s1 + $0x240] sm:$0xff]
  %v116 = vld [vmem:[%s1 + $0x248] sm:$0xff]
  %v117 = vld [vmem:[%s1 + $0x250] sm:$0xff]
  %v118 = vld [vmem:[%s1 + $0x258] sm:$0xff]
  %v119 = vld [vmem:[%s1 + $0x260] sm:$0xff]
  %v120 = vld [vmem:[%s1 + $0x268] sm:$0xff]
  %v121 = vld [vmem:[%s1 + $0x270] sm:$0xff]
  %v122 = vld [vmem:[%s1 + $0x278] sm:$0xff]
  %v123 = vld [vmem:[%s1 + $0x280] sm:$0xff]
  %v124 = vld [vmem:[%s1 + $0x288] sm:$0xff]
  %v125 = vld [vmem:[%s1 + $0x290] sm:$0xff]
  %v126 = vld [vmem:[%s1 + $0x298] sm:$0xff]
  %v127 = vld [vmem:[%s1 + $0x2a0] sm:$0xff]
  %v128 = vld [vmem:[%s1 + $0x2a8] sm:$0xff]
  %v129 = vld [vmem:[%s1 + $0x2b0] sm:$0xff]
  %v130 = vld [vmem:[%s1 + $0x2b8] sm:$0xff]
  %v131 = vld [vmem:[%s1 + $0x2c0] sm:$0xff]
  %v132 = vld [vmem:[%s1 + $0x2c8] sm:$0xff]
  %v133 = vld [vmem:[%s1 + $0x2d0] sm:$0xff]
  %v134 = vld [vmem:[%s1 + $0x2d8] sm:$0xff]
  %v135 = vld [vmem:[%s1 + $0x2e0] sm:$0xff]
  %v136 = vld [vmem:[%s1 + $0x2e8] sm:$0xff]
  %v137 = vld [vmem:[%s1 + $0x2f0] sm:$0xff]
  %v138 = vld [vmem:[%s1 + $0x2f8] sm:$0xff]
  %v139 = vld [vmem:[%s1 + $0x300] sm:$0xff]
  %v140 = vld [vmem:[%s1 + $0x308] sm:$0xff]
  %v141 = vld [vmem:[%s1 + $0x310] sm:$0xff]
  %v142 = vld [vmem:[%s1 + $0x318] sm:$0xff]
  %v143 = vld [vmem:[%s1 + $0x320] sm:$0xff]
  %v144 = vld [vmem:[%s1 + $0x328] sm:$0xff]
  %v145 = vld [vmem:[%s1 + $0x330] sm:$0xff]
  %v146 = vld [vmem:[%s1 + $0x338] sm:$0xff]
  %v147 = vld [vmem:[%s1 + $0x340] sm:$0xff]
  %v148 = vld [vmem:[%s1 + $0x348] sm:$0xff]
  %v149 = vld [vmem:[%s1 + $0x350] sm:$0xff]
  %v150 = vld [vmem:[%s1 + $0x358] sm:$0xff]
  %v151 = vld [vmem:[%s1 + $0x360] sm:$0xff]
  %v152 = vld [vmem:[%s1 + $0x368] sm:$0xff]
  %v153 = vld [vmem:[%s1 + $0x370] sm:$0xff]
  %v154 = vld [vmem:[%s1 + $0x378] sm:$0xff]
  %v155 = vld [vmem:[%s1 + $0x380] sm:$0xff]
  %v156 = vld [vmem:[%s1 + $0x388] sm:$0xff]
  %v157 = vld [vmem:[%s1 + $0x390] sm:$0xff]
  %v158 = vld [vmem:[%s1 + $0x398] sm:$0xff]
  %v159 = vld [vmem:[%s1 + $0x3a0] sm:$0xff]
  %v160 = vld [vmem:[%s1 + $0x3a8] sm:$0xff]
  %v161 = vld [vmem:[%s1 + $0x3b0] sm:$0xff]
  %v162 = vld [vmem:[%s1 + $0x3b8] sm:$0xff]
  %v163 = vld [vmem:[%s1 + $0x3c0] sm:$0xff]
  %v164 = vld [vmem:[%s1 + $0x3c8] sm:$0xff]
  %v165 = vld [vmem:[%s1 + $0x3d0] sm:$0xff]
  %v166 = vld [vmem:[%s1 + $0x3d8] sm:$0xff]
  %v167 = vld [vmem:[%s1 + $0x3e0] sm:$0xff]
  %v168 = vld [vmem:[%s1 + $0x3e8] sm:$0xff]
  %v169 = vld [vmem:[%s1 + $0x3f0] sm:$0xff]
  %v170 = vld [vmem:[%s1 + $0x3f8] sm:$0xff]
  %v171 = vld [vmem:[%s1 + $0x400] sm:$0xff]
  %v172 = vld [vmem:[%s1 + $0x408] sm:$0xff]
  %v173 = vld [vmem:[%s1 + $0x410] sm:$0xff]
  %v174 = vld [vmem:[%s1 + $0x418] sm:$0xff]
  %v175 = vld [vmem:[%s1 + $0x420] sm:$0xff]
  %v176 = vld [vmem:[%s1 + $0x428] sm:$0xff]
  %v177 = vld [vmem:[%s1 + $0x430] sm:$0xff]
  %v178 = vld [vmem:[%s1 + $0x438] sm:$0xff]
  %v179 = vld [vmem:[%s1 + $0x440] sm:$0xff]
  %v180 = vld [vmem:[%s1 + $0x448] sm:$0xff]
  %v181 = vld [vmem:[%s1 + $0x450] sm:$0xff]
  %v182 = vld [vmem:[%s1 + $0x458] sm:$0xff]
  %v183 = vld [vmem:[%s1 + $0x460] sm:$0xff]
  %v184 = vld [vmem:[%s1 + $0x468] sm:$0xff]
  %v185 = vld [vmem:[%s1 + $0x470] sm:$0xff]
  %v186 = vld [vmem:[%s1 + $0x478] sm:$0xff]
  %v187 = vld [vmem:[%s1 + $0x480] sm:$0xff]
  %v188 = vld [vmem:[%s1 + $0x488] sm:$0xff]
  %v189 = vld [vmem:[%s1 + $0x490] sm:$0xff]
  %v190 = vld [vmem:[%s1 + $0x498] sm:$0xff]
  %v191 = vld [vmem:[%s1 + $0x4a0] sm:$0xff]
  %v192 = vld [vmem:[%s1 + $0x4a8] sm:$0xff]
  %v193 = vld [vmem:[%s1 + $0x4b0] sm:$0xff]
  %v194 = vld [vmem:[%s1 + $0x4b8] sm:$0xff]
  %v195 = vld [vmem:[%s1 + $0x4c0] sm:$0xff]
  %v196 = vld [vmem:[%s1 + $0x4c8] sm:$0xff]
  %v197 = vld [vmem:[%s1 + $0x4d0] sm:$0xff]
  %v198 = vld [vmem:[%s1 + $0x4d8] sm:$0xff]
  %v199 = vld [vmem:[%s1 + $0x4e0] sm:$0xff]
  %v200 = vld [vmem:[%s1 + $0x4e8] sm:$0xff]
  %v201 = vld [vmem:[%s1 + $0x4f0] sm:$0xff]
  %v202 = vld [vmem:[%s1 + $0x4f8] sm:$0xff]
  %v203 = vld [vmem:[%s1 + $0x500] sm:$0xff]
  %v204 = vld [vmem:[%s1 + $0x508] sm:$0xff]
  %v205 = vld [vmem:[%s1 + $0x510] sm:$0xff]
  %v206 = vld [vmem:[%s1 + $0x518] sm:$0xff]
  %v207 = vld [vmem:[%s1 + $0x520] sm:$0xff]
  %v208 = vld [vmem:[%s1 + $0x528] sm:$0xff]
  %v209 = vld [vmem:[%s1 + $0x530] sm:$0xff]
  %v210 = vld [vmem:[%s1 + $0x538] sm:$0xff]
  %v211 = vld [vmem:[%s1 + $0x540] sm:$0xff]
  %v212 = vld [vmem:[%s1 + $0x548] sm:$0xff]
  %v213 = vld [vmem:[%s1 + $0x550] sm:$0xff]
  %v214 = vld [vmem:[%s1 + $0x558] sm:$0xff]
  %v215 = vld [vmem:[%s1 + $0x560] sm:$0xff]
  %v216 = vld [vmem:[%s1 + $0x568] sm:$0xff]
  %v217 = vld [vmem:[%s1 + $0x570] sm:$0xff]
  %v218 = vld [vmem:[%s1 + $0x578] sm:$0xff]
  %v219 = vld [vmem:[%s1 + $0x580] sm:$0xff]
  %v220 = vld [vmem:[%s1 + $0x588] sm:$0xff]
  %v221 = vld [vmem:[%s1 + $0x590] sm:$0xff]
  %v222 = vld [vmem:[%s1 + $0x598] sm:$0xff]
  %v223 = vld [vmem:[%s1 + $0x5a0] sm:$0xff]
  %v224 = vld [vmem:[%s1 + $0x5a8] sm:$0xff]
  %v225 = vld [vmem:[%s1 + $0x5b0] sm:$0xff]
  %v226 = vld [vmem:[%s1 + $0x5b8] sm:$0xff]
  %v227 = vld [vmem:[%s1 + $0x5c0] sm:$0xff]
  %v228 = vld [vmem:[%s1 + $0x5c8] sm:$0xff]
  %v229 = vld [vmem:[%s1 + $0x5d0] sm:$0xff]
  %v230 = vld [vmem:[%s1 + $0x5d8] sm:$0xff]
  %v231 = vld [vmem:[%s1 + $0x5e0] sm:$0xff]
  %v232 = vld [vmem:[%s1 + $0x5e8] sm:$0xff]
  %v233 = vld [vmem:[%s1 + $0x5f0] sm:$0xff]
  %v234 = vld [vmem:[%s1 + $0x5f8] sm:$0xff]
  %v235 = vld [vmem:[%s1 + $0x600] sm:$0xff]
  %v236 = vld [vmem:[%s1 + $0x608] sm:$0xff]
  %v237 = vld [vmem:[%s1 + $0x610] sm:$0xff]
  %v238 = vld [vmem:[%s1 + $0x618] sm:$0xff]
  %v239 = vld [vmem:[%s1 + $0x620] sm:$0xff]
  %v240 = vld [vmem:[%s1 + $0x628] sm:$0xff]
  %v241 = vld [vmem:[%s1 + $0x630] sm:$0xff]
  %v242 = vld [vmem:[%s1 + $0x638] sm:$0xff]
  %v243 = vld [vmem:[%s1 + $0x640] sm:$0xff]
  %v244 = vld [vmem:[%s1 + $0x648] sm:$0xff]
  %v245 = vld [vmem:[%s1 + $0x650] sm:$0xff]
  %v246 = vld [vmem:[%s1 + $0x658] sm:$0xff]
  %v247 = vld [vmem:[%s1 + $0x660] sm:$0xff]
  %v248 = vld [vmem:[%s1 + $0x668] sm:$0xff]
  %v249 = vld [vmem:[%s1 + $0x670] sm:$0xff]
  %v250 = vld [vmem:[%s1 + $0x678] sm:$0xff]
  %v251 = vld [vmem:[%s1 + $0x680] sm:$0xff]
  %v252 = vld [vmem:[%s1 + $0x688] sm:$0xff]
  %v253 = vld [vmem:[%s1 + $0x690] sm:$0xff]
  %v254 = vld [vmem:[%s1 + $0x698] sm:$0xff]
  %v255 = vld [vmem:[%s1 + $0x6a0] sm:$0xff]
  %v256 = vld [vmem:[%s1 + $0x6a8] sm:$0xff]
  %v257 = vld [vmem:[%s1 + $0x6b0] sm:$0xff]
  %v258 = vld [vmem:[%s1 + $0x6b8] sm:$0xff]
  %v259 = vld [vmem:[%s1 + $0x6c0] sm:$0xff]
  %v260 = vld [vmem:[%s1 + $0x6c8] sm:$0xff]
  %v261 = vld [vmem:[%s1 + $0x6d0] sm:$0xff]
  %v262 = vld [vmem:[%s1 + $0x6d8] sm:$0xff]
  %v263 = vld [vmem:[%s1 + $0x6e0] sm:$0xff]
  %v264 = vld [vmem:[%s1 + $0x6e8] sm:$0xff]
  %v265 = vld [vmem:[%s1 + $0x6f0] sm:$0xff]
  %v266 = vld [vmem:[%s1 + $0x6f8] sm:$0xff]
  %v267 = vld [vmem:[%s1 + $0x700] sm:$0xff]
  %v268 = vld [vmem:[%s1 + $0x708] sm:$0xff]
  %v269 = vld [vmem:[%s1 + $0x710] sm:$0xff]
  %v270 = vld [vmem:[%s1 + $0x718] sm:$0xff]
  %v271 = vld [vmem:[%s1 + $0x720] sm:$0xff]
  %v272 = vld [vmem:[%s1 + $0x728] sm:$0xff]
  %v273 = vld [vmem:[%s1 + $0x730] sm:$0xff]
  %v274 = vld [vmem:[%s1 + $0x738] sm:$0xff]
  %v275 = vld [vmem:[%s1 + $0x740] sm:$0xff]
  %v276 = vld [vmem:[%s1 + $0x748] sm:$0xff]
  %v277 = vld [vmem:[%s1 + $0x750] sm:$0xff]
  %v278 = vld [vmem:[%s1 + $0x758] sm:$0xff]
  %v279 = vld [vmem:[%s1 + $0x760] sm:$0xff]
  %v280 = vld [vmem:[%s1 + $0x768] sm:$0xff]
  %v281 = vld [vmem:[%s1 + $0x770] sm:$0xff]
  %v282 = vld [vmem:[%s1 + $0x778] sm:$0xff]
  %v283 = vld [vmem:[%s1 + $0x780] sm:$0xff]
  %v284 = vld [vmem:[%s1 + $0x788] sm:$0xff]
  %v285 = vld [vmem:[%s1 + $0x790] sm:$0xff]
  %v286 = vld [vmem:[%s1 + $0x798] sm:$0xff]
  %v287 = vld [vmem:[%s1 + $0x7a0] sm:$0xff]
  %v288 = vld [vmem:[%s1 + $0x7a8] sm:$0xff]
  %v289 = vld [vmem:[%s1 + $0x7b0] sm:$0xff]
  %v290 = vld [vmem:[%s1 + $0x7b8] sm:$0xff]
  %v291 = vld [vmem:[%s1 + $0x7c0] sm:$0xff]
  %v292 = vld [vmem:[%s1 + $0x7c8] sm:$0xff]
  %v293 = vld [vmem:[%s1 + $0x7d0] sm:$0xff]
  %v294 = vld [vmem:[%s1 + $0x7d8] sm:$0xff]
  %v295 = vld [vmem:[%s1 + $0x7e0] sm:$0xff]
  %v296 = vld [vmem:[%s1 + $0x7e8] sm:$0xff]
  %v297 = vld [vmem:[%s1 + $0x7f0] sm:$0xff]
  %v298 = vld [vmem:[%s1 + $0x7f8] sm:$0xff]
  %v315 = vunpack.c.l.b16 %v27
  %v316 = vunpack.c.h.b16 %v27
  %v317 = vunpack.c.l.b16 %v28
  %v318 = vunpack.c.h.b16 %v28
  %v319 = vunpack.c.l.b16 %v29
  %v320 = vunpack.c.h.b16 %v29
  %v321 = vunpack.c.l.b16 %v30
  %v322 = vunpack.c.h.b16 %v30
  %v323 = vunpack.c.l.b16 %v31
  %v324 = vunpack.c.h.b16 %v31
  %v325 = vunpack.c.l.b16 %v32
  %v326 = vunpack.c.h.b16 %v32
  %v327 = vunpack.c.l.b16 %v33
  %v328 = vunpack.c.h.b16 %v33
  %v329 = vunpack.c.l.b16 %v34
  %v330 = vunpack.c.h.b16 %v34
  %v331 = vunpack.c.l.b16 %v35
  %v332 = vunpack.c.h.b16 %v35
  %v333 = vunpack.c.l.b16 %v36
  %v334 = vunpack.c.h.b16 %v36
  %v335 = vunpack.c.l.b16 %v37
  %v336 = vunpack.c.h.b16 %v37
  %v337 = vunpack.c.l.b16 %v38
  %v338 = vunpack.c.h.b16 %v38
  %v339 = vunpack.c.l.b16 %v39
  %v340 = vunpack.c.h.b16 %v39
  %v341 = vunpack.c.l.b16 %v40
  %v342 = vunpack.c.h.b16 %v40
  %v343 = vunpack.c.l.b16 %v41
  %v344 = vunpack.c.h.b16 %v41
  %v345 = vunpack.c.l.b16 %v42
  %v346 = vunpack.c.h.b16 %v42
  %v347 = vpack.c.b16 %v317, %v315
  %v348 = vpack.c.b16 %v318, %v316
  %v349 = vpack.c.b16 %v321, %v319
  %v350 = vpack.c.b16 %v322, %v320
  %v351 = vpack.c.b16 %v325, %v323
  %v352 = vpack.c.b16 %v326, %v324
  %v353 = vpack.c.b16 %v329, %v327
  %v354 = vpack.c.b16 %v330, %v328
  %v355 = vpack.c.b16 %v333, %v331
  %v356 = vpack.c.b16 %v334, %v332
  %v357 = vpack.c.b16 %v337, %v335
  %v358 = vpack.c.b16 %v338, %v336
  %v359 = vpack.c.b16 %v341, %v339
  %v360 = vpack.c.b16 %v342, %v340
  %v361 = vpack.c.b16 %v345, %v343
  %v362 = vpack.c.b16 %v346, %v344
  %v635 = vunpack.c.l.b16 %v43
  %v636 = vunpack.c.h.b16 %v43
  %v637 = vunpack.c.l.b16 %v44
  %v638 = vunpack.c.h.b16 %v44
  %v639 = vunpack.c.l.b16 %v45
  %v640 = vunpack.c.h.b16 %v45
  %v641 = vunpack.c.l.b16 %v46
  %v642 = vunpack.c.h.b16 %v46
  %v643 = vunpack.c.l.b16 %v47
  %v644 = vunpack.c.h.b16 %v47
  %v645 = vunpack.c.l.b16 %v48
  %v646 = vunpack.c.h.b16 %v48
  %v647 = vunpack.c.l.b16 %v49
  %v648 = vunpack.c.h.b16 %v49
  %v649 = vunpack.c.l.b16 %v50
  %v650 = vunpack.c.h.b16 %v50
  %v651 = vunpack.c.l.b16 %v51
  %v652 = vunpack.c.h.b16 %v51
  %v653 = vunpack.c.l.b16 %v52
  %v654 = vunpack.c.h.b16 %v52
  %v655 = vunpack.c.l.b16 %v53
  %v656 = vunpack.c.h.b16 %v53
  %v657 = vunpack.c.l.b16 %v54
  %v658 = vunpack.c.h.b16 %v54
  %v659 = vunpack.c.l.b16 %v55
  %v660 = vunpack.c.h.b16 %v55
  %v661 = vunpack.c.l.b16 %v56
  %v662 = vunpack.c.h.b16 %v56
  %v663 = vunpack.c.l.b16 %v57
  %v664 = vunpack.c.h.b16 %v57
  %v665 = vunpack.c.l.b16 %v58
  %v666 = vunpack.c.h.b16 %v58
  %v667 = vunpack.c.l.b16 %v59
  %v668 = vunpack.c.h.b16 %v59
  %v669 = vunpack.c.l.b16 %v60
  %v670 = vunpack.c.h.b16 %v60
  %v671 = vunpack.c.l.b16 %v61
  %v672 = vunpack.c.h.b16 %v61
  %v673 = vunpack.c.l.b16 %v62
  %v674 = vunpack.c.h.b16 %v62
  %v675 = vunpack.c.l.b16 %v63
  %v676 = vunpack.c.h.b16 %v63
  %v677 = vunpack.c.l.b16 %v64
  %v678 = vunpack.c.h.b16 %v64
  %v679 = vunpack.c.l.b16 %v65
  %v680 = vunpack.c.h.b16 %v65
  %v681 = vunpack.c.l.b16 %v66
  %v682 = vunpack.c.h.b16 %v66
  %v683 = vunpack.c.l.b16 %v67
  %v684 = vunpack.c.h.b16 %v67
  %v685 = vunpack.c.l.b16 %v68
  %v686 = vunpack.c.h.b16 %v68
  %v687 = vunpack.c.l.b16 %v69
  %v688 = vunpack.c.h.b16 %v69
  %v689 = vunpack.c.l.b16 %v70
  %v690 = vunpack.c.h.b16 %v70
  %v691 = vunpack.c.l.b16 %v71
  %v692 = vunpack.c.h.b16 %v71
  %v693 = vunpack.c.l.b16 %v72
  %v694 = vunpack.c.h.b16 %v72
  %v695 = vunpack.c.l.b16 %v73
  %v696 = vunpack.c.h.b16 %v73
  %v697 = vunpack.c.l.b16 %v74
  %v698 = vunpack.c.h.b16 %v74
  %v699 = vunpack.c.l.b16 %v75
  %v700 = vunpack.c.h.b16 %v75
  %v701 = vunpack.c.l.b16 %v76
  %v702 = vunpack.c.h.b16 %v76
  %v703 = vunpack.c.l.b16 %v77
  %v704 = vunpack.c.h.b16 %v77
  %v705 = vunpack.c.l.b16 %v78
  %v706 = vunpack.c.h.b16 %v78
  %v707 = vunpack.c.l.b16 %v79
  %v708 = vunpack.c.h.b16 %v79
  %v709 = vunpack.c.l.b16 %v80
  %v710 = vunpack.c.h.b16 %v80
  %v711 = vunpack.c.l.b16 %v81
  %v712 = vunpack.c.h.b16 %v81
  %v713 = vunpack.c.l.b16 %v82
  %v714 = vunpack.c.h.b16 %v82
  %v715 = vunpack.c.l.b16 %v83
  %v716 = vunpack.c.h.b16 %v83
  %v717 = vunpack.c.l.b16 %v84
  %v718 = vunpack.c.h.b16 %v84
  %v719 = vunpack.c.l.b16 %v85
  %v720 = vunpack.c.h.b16 %v85
  %v721 = vunpack.c.l.b16 %v86
  %v722 = vunpack.c.h.b16 %v86
  %v723 = vunpack.c.l.b16 %v87
  %v724 = vunpack.c.h.b16 %v87
  %v725 = vunpack.c.l.b16 %v88
  %v726 = vunpack.c.h.b16 %v88
  %v727 = vunpack.c.l.b16 %v89
  %v728 = vunpack.c.h.b16 %v89
  %v729 = vunpack.c.l.b16 %v90
  %v730 = vunpack.c.h.b16 %v90
  %v731 = vunpack.c.l.b16 %v91
  %v732 = vunpack.c.h.b16 %v91
  %v733 = vunpack.c.l.b16 %v92
  %v734 = vunpack.c.h.b16 %v92
  %v735 = vunpack.c.l.b16 %v93
  %v736 = vunpack.c.h.b16 %v93
  %v737 = vunpack.c.l.b16 %v94
  %v738 = vunpack.c.h.b16 %v94
  %v739 = vunpack.c.l.b16 %v95
  %v740 = vunpack.c.h.b16 %v95
  %v741 = vunpack.c.l.b16 %v96
  %v742 = vunpack.c.h.b16 %v96
  %v743 = vunpack.c.l.b16 %v97
  %v744 = vunpack.c.h.b16 %v97
  %v745 = vunpack.c.l.b16 %v98
  %v746 = vunpack.c.h.b16 %v98
  %v747 = vunpack.c.l.b16 %v99
  %v748 = vunpack.c.h.b16 %v99
  %v749 = vunpack.c.l.b16 %v100
  %v750 = vunpack.c.h.b16 %v100
  %v751 = vunpack.c.l.b16 %v101
  %v752 = vunpack.c.h.b16 %v101
  %v753 = vunpack.c.l.b16 %v102
  %v754 = vunpack.c.h.b16 %v102
  %v755 = vunpack.c.l.b16 %v103
  %v756 = vunpack.c.h.b16 %v103
  %v757 = vunpack.c.l.b16 %v104
  %v758 = vunpack.c.h.b16 %v104
  %v759 = vunpack.c.l.b16 %v105
  %v760 = vunpack.c.h.b16 %v105
  %v761 = vunpack.c.l.b16 %v106
  %v762 = vunpack.c.h.b16 %v106
  %v763 = vunpack.c.l.b16 %v107
  %v764 = vunpack.c.h.b16 %v107
  %v765 = vunpack.c.l.b16 %v108
  %v766 = vunpack.c.h.b16 %v108
  %v767 = vunpack.c.l.b16 %v109
  %v768 = vunpack.c.h.b16 %v109
  %v769 = vunpack.c.l.b16 %v110
  %v770 = vunpack.c.h.b16 %v110
  %v771 = vunpack.c.l.b16 %v111
  %v772 = vunpack.c.h.b16 %v111
  %v773 = vunpack.c.l.b16 %v112
  %v774 = vunpack.c.h.b16 %v112
  %v775 = vunpack.c.l.b16 %v113
  %v776 = vunpack.c.h.b16 %v113
  %v777 = vunpack.c.l.b16 %v114
  %v778 = vunpack.c.h.b16 %v114
  %v779 = vunpack.c.l.b16 %v115
  %v780 = vunpack.c.h.b16 %v115
  %v781 = vunpack.c.l.b16 %v116
  %v782 = vunpack.c.h.b16 %v116
  %v783 = vunpack.c.l.b16 %v117
  %v784 = vunpack.c.h.b16 %v117
  %v785 = vunpack.c.l.b16 %v118
  %v786 = vunpack.c.h.b16 %v118
  %v787 = vunpack.c.l.b16 %v119
  %v788 = vunpack.c.h.b16 %v119
  %v789 = vunpack.c.l.b16 %v120
  %v790 = vunpack.c.h.b16 %v120
  %v791 = vunpack.c.l.b16 %v121
  %v792 = vunpack.c.h.b16 %v121
  %v793 = vunpack.c.l.b16 %v122
  %v794 = vunpack.c.h.b16 %v122
  %v795 = vunpack.c.l.b16 %v123
  %v796 = vunpack.c.h.b16 %v123
  %v797 = vunpack.c.l.b16 %v124
  %v798 = vunpack.c.h.b16 %v124
  %v799 = vunpack.c.l.b16 %v125
  %v800 = vunpack.c.h.b16 %v125
  %v801 = vunpack.c.l.b16 %v126
  %v802 = vunpack.c.h.b16 %v126
  %v803 = vunpack.c.l.b16 %v127
  %v804 = vunpack.c.h.b16 %v127
  %v805 = vunpack.c.l.b16 %v128
  %v806 = vunpack.c.h.b16 %v128
  %v807 = vunpack.c.l.b16 %v129
  %v808 = vunpack.c.h.b16 %v129
  %v809 = vunpack.c.l.b16 %v130
  %v810 = vunpack.c.h.b16 %v130
  %v811 = vunpack.c.l.b16 %v131
  %v812 = vunpack.c.h.b16 %v131
  %v813 = vunpack.c.l.b16 %v132
  %v814 = vunpack.c.h.b16 %v132
  %v815 = vunpack.c.l.b16 %v133
  %v816 = vunpack.c.h.b16 %v133
  %v817 = vunpack.c.l.b16 %v134
  %v818 = vunpack.c.h.b16 %v134
  %v819 = vunpack.c.l.b16 %v135
  %v820 = vunpack.c.h.b16 %v135
  %v821 = vunpack.c.l.b16 %v136
  %v822 = vunpack.c.h.b16 %v136
  %v823 = vunpack.c.l.b16 %v137
  %v824 = vunpack.c.h.b16 %v137
  %v825 = vunpack.c.l.b16 %v138
  %v826 = vunpack.c.h.b16 %v138
  %v827 = vunpack.c.l.b16 %v139
  %v828 = vunpack.c.h.b16 %v139
  %v829 = vunpack.c.l.b16 %v140
  %v830 = vunpack.c.h.b16 %v140
  %v831 = vunpack.c.l.b16 %v141
  %v832 = vunpack.c.h.b16 %v141
  %v833 = vunpack.c.l.b16 %v142
  %v834 = vunpack.c.h.b16 %v142
  %v835 = vunpack.c.l.b16 %v143
  %v836 = vunpack.c.h.b16 %v143
  %v837 = vunpack.c.l.b16 %v144
  %v838 = vunpack.c.h.b16 %v144
  %v839 = vunpack.c.l.b16 %v145
  %v840 = vunpack.c.h.b16 %v145
  %v841 = vunpack.c.l.b16 %v146
  %v842 = vunpack.c.h.b16 %v146
  %v843 = vunpack.c.l.b16 %v147
  %v844 = vunpack.c.h.b16 %v147
  %v845 = vunpack.c.l.b16 %v148
  %v846 = vunpack.c.h.b16 %v148
  %v847 = vunpack.c.l.b16 %v149
  %v848 = vunpack.c.h.b16 %v149
  %v849 = vunpack.c.l.b16 %v150
  %v850 = vunpack.c.h.b16 %v150
  %v851 = vunpack.c.l.b16 %v151
  %v852 = vunpack.c.h.b16 %v151
  %v853 = vunpack.c.l.b16 %v152
  %v854 = vunpack.c.h.b16 %v152
  %v855 = vunpack.c.l.b16 %v153
  %v856 = vunpack.c.h.b16 %v153
  %v857 = vunpack.c.l.b16 %v154
  %v858 = vunpack.c.h.b16 %v154
  %v859 = vunpack.c.l.b16 %v155
  %v860 = vunpack.c.h.b16 %v155
  %v861 = vunpack.c.l.b16 %v156
  %v862 = vunpack.c.h.b16 %v156
  %v863 = vunpack.c.l.b16 %v157
  %v864 = vunpack.c.h.b16 %v157
  %v865 = vunpack.c.l.b16 %v158
  %v866 = vunpack.c.h.b16 %v158
  %v867 = vunpack.c.l.b16 %v159
  %v868 = vunpack.c.h.b16 %v159
  %v869 = vunpack.c.l.b16 %v160
  %v870 = vunpack.c.h.b16 %v160
  %v871 = vunpack.c.l.b16 %v161
  %v872 = vunpack.c.h.b16 %v161
  %v873 = vunpack.c.l.b16 %v162
  %v874 = vunpack.c.h.b16 %v162
  %v875 = vunpack.c.l.b16 %v163
  %v876 = vunpack.c.h.b16 %v163
  %v877 = vunpack.c.l.b16 %v164
  %v878 = vunpack.c.h.b16 %v164
  %v879 = vunpack.c.l.b16 %v165
  %v880 = vunpack.c.h.b16 %v165
  %v881 = vunpack.c.l.b16 %v166
  %v882 = vunpack.c.h.b16 %v166
  %v883 = vunpack.c.l.b16 %v167
  %v884 = vunpack.c.h.b16 %v167
  %v885 = vunpack.c.l.b16 %v168
  %v886 = vunpack.c.h.b16 %v168
  %v887 = vunpack.c.l.b16 %v169
  %v888 = vunpack.c.h.b16 %v169
  %v889 = vunpack.c.l.b16 %v170
  %v890 = vunpack.c.h.b16 %v170
  %v891 = vunpack.c.l.b16 %v171
  %v892 = vunpack.c.h.b16 %v171
  %v893 = vunpack.c.l.b16 %v172
  %v894 = vunpack.c.h.b16 %v172
  %v895 = vunpack.c.l.b16 %v173
  %v896 = vunpack.c.h.b16 %v173
  %v897 = vunpack.c.l.b16 %v174
  %v898 = vunpack.c.h.b16 %v174
  %v899 = vunpack.c.l.b16 %v175
  %v900 = vunpack.c.h.b16 %v175
  %v901 = vunpack.c.l.b16 %v176
  %v902 = vunpack.c.h.b16 %v176
  %v903 = vunpack.c.l.b16 %v177
  %v904 = vunpack.c.h.b16 %v177
  %v905 = vunpack.c.l.b16 %v178
  %v906 = vunpack.c.h.b16 %v178
  %v907 = vunpack.c.l.b16 %v179
  %v908 = vunpack.c.h.b16 %v179
  %v909 = vunpack.c.l.b16 %v180
  %v910 = vunpack.c.h.b16 %v180
  %v911 = vunpack.c.l.b16 %v181
  %v912 = vunpack.c.h.b16 %v181
  %v913 = vunpack.c.l.b16 %v182
  %v914 = vunpack.c.h.b16 %v182
  %v915 = vunpack.c.l.b16 %v183
  %v916 = vunpack.c.h.b16 %v183
  %v917 = vunpack.c.l.b16 %v184
  %v918 = vunpack.c.h.b16 %v184
  %v919 = vunpack.c.l.b16 %v185
  %v920 = vunpack.c.h.b16 %v185
  %v921 = vunpack.c.l.b16 %v186
  %v922 = vunpack.c.h.b16 %v186
  %v923 = vunpack.c.l.b16 %v187
  %v924 = vunpack.c.h.b16 %v187
  %v925 = vunpack.c.l.b16 %v188
  %v926 = vunpack.c.h.b16 %v188
  %v927 = vunpack.c.l.b16 %v189
  %v928 = vunpack.c.h.b16 %v189
  %v929 = vunpack.c.l.b16 %v190
  %v930 = vunpack.c.h.b16 %v190
  %v931 = vunpack.c.l.b16 %v191
  %v932 = vunpack.c.h.b16 %v191
  %v933 = vunpack.c.l.b16 %v192
  %v934 = vunpack.c.h.b16 %v192
  %v935 = vunpack.c.l.b16 %v193
  %v936 = vunpack.c.h.b16 %v193
  %v937 = vunpack.c.l.b16 %v194
  %v938 = vunpack.c.h.b16 %v194
  %v939 = vunpack.c.l.b16 %v195
  %v940 = vunpack.c.h.b16 %v195
  %v941 = vunpack.c.l.b16 %v196
  %v942 = vunpack.c.h.b16 %v196
  %v943 = vunpack.c.l.b16 %v197
  %v944 = vunpack.c.h.b16 %v197
  %v945 = vunpack.c.l.b16 %v198
  %v946 = vunpack.c.h.b16 %v198
  %v947 = vunpack.c.l.b16 %v199
  %v948 = vunpack.c.h.b16 %v199
  %v949 = vunpack.c.l.b16 %v200
  %v950 = vunpack.c.h.b16 %v200
  %v951 = vunpack.c.l.b16 %v201
  %v952 = vunpack.c.h.b16 %v201
  %v953 = vunpack.c.l.b16 %v202
  %v954 = vunpack.c.h.b16 %v202
  %v955 = vunpack.c.l.b16 %v203
  %v956 = vunpack.c.h.b16 %v203
  %v957 = vunpack.c.l.b16 %v204
  %v958 = vunpack.c.h.b16 %v204
  %v959 = vunpack.c.l.b16 %v205
  %v960 = vunpack.c.h.b16 %v205
  %v961 = vunpack.c.l.b16 %v206
  %v962 = vunpack.c.h.b16 %v206
  %v963 = vunpack.c.l.b16 %v207
  %v964 = vunpack.c.h.b16 %v207
  %v965 = vunpack.c.l.b16 %v208
  %v966 = vunpack.c.h.b16 %v208
  %v967 = vunpack.c.l.b16 %v209
  %v968 = vunpack.c.h.b16 %v209
  %v969 = vunpack.c.l.b16 %v210
  %v970 = vunpack.c.h.b16 %v210
  %v971 = vunpack.c.l.b16 %v211
  %v972 = vunpack.c.h.b16 %v211
  %v973 = vunpack.c.l.b16 %v212
  %v974 = vunpack.c.h.b16 %v212
  %v975 = vunpack.c.l.b16 %v213
  %v976 = vunpack.c.h.b16 %v213
  %v977 = vunpack.c.l.b16 %v214
  %v978 = vunpack.c.h.b16 %v214
  %v979 = vunpack.c.l.b16 %v215
  %v980 = vunpack.c.h.b16 %v215
  %v981 = vunpack.c.l.b16 %v216
  %v982 = vunpack.c.h.b16 %v216
  %v983 = vunpack.c.l.b16 %v217
  %v984 = vunpack.c.h.b16 %v217
  %v985 = vunpack.c.l.b16 %v218
  %v986 = vunpack.c.h.b16 %v218
  %v987 = vunpack.c.l.b16 %v219
  %v988 = vunpack.c.h.b16 %v219
  %v989 = vunpack.c.l.b16 %v220
  %v990 = vunpack.c.h.b16 %v220
  %v991 = vunpack.c.l.b16 %v221
  %v992 = vunpack.c.h.b16 %v221
  %v993 = vunpack.c.l.b16 %v222
  %v994 = vunpack.c.h.b16 %v222
  %v995 = vunpack.c.l.b16 %v223
  %v996 = vunpack.c.h.b16 %v223
  %v997 = vunpack.c.l.b16 %v224
  %v998 = vunpack.c.h.b16 %v224
  %v999 = vunpack.c.l.b16 %v225
  %v1000 = vunpack.c.h.b16 %v225
  %v1001 = vunpack.c.l.b16 %v226
  %v1002 = vunpack.c.h.b16 %v226
  %v1003 = vunpack.c.l.b16 %v227
  %v1004 = vunpack.c.h.b16 %v227
  %v1005 = vunpack.c.l.b16 %v228
  %v1006 = vunpack.c.h.b16 %v228
  %v1007 = vunpack.c.l.b16 %v229
  %v1008 = vunpack.c.h.b16 %v229
  %v1009 = vunpack.c.l.b16 %v230
  %v1010 = vunpack.c.h.b16 %v230
  %v1011 = vunpack.c.l.b16 %v231
  %v1012 = vunpack.c.h.b16 %v231
  %v1013 = vunpack.c.l.b16 %v232
  %v1014 = vunpack.c.h.b16 %v232
  %v1015 = vunpack.c.l.b16 %v233
  %v1016 = vunpack.c.h.b16 %v233
  %v1017 = vunpack.c.l.b16 %v234
  %v1018 = vunpack.c.h.b16 %v234
  %v1019 = vunpack.c.l.b16 %v235
  %v1020 = vunpack.c.h.b16 %v235
  %v1021 = vunpack.c.l.b16 %v236
  %v1022 = vunpack.c.h.b16 %v236
  %v1023 = vunpack.c.l.b16 %v237
  %v1024 = vunpack.c.h.b16 %v237
  %v1025 = vunpack.c.l.b16 %v238
  %v1026 = vunpack.c.h.b16 %v238
  %v1027 = vunpack.c.l.b16 %v239
  %v1028 = vunpack.c.h.b16 %v239
  %v1029 = vunpack.c.l.b16 %v240
  %v1030 = vunpack.c.h.b16 %v240
  %v1031 = vunpack.c.l.b16 %v241
  %v1032 = vunpack.c.h.b16 %v241
  %v1033 = vunpack.c.l.b16 %v242
  %v1034 = vunpack.c.h.b16 %v242
  %v1035 = vunpack.c.l.b16 %v243
  %v1036 = vunpack.c.h.b16 %v243
  %v1037 = vunpack.c.l.b16 %v244
  %v1038 = vunpack.c.h.b16 %v244
  %v1039 = vunpack.c.l.b16 %v245
  %v1040 = vunpack.c.h.b16 %v245
  %v1041 = vunpack.c.l.b16 %v246
  %v1042 = vunpack.c.h.b16 %v246
  %v1043 = vunpack.c.l.b16 %v247
  %v1044 = vunpack.c.h.b16 %v247
  %v1045 = vunpack.c.l.b16 %v248
  %v1046 = vunpack.c.h.b16 %v248
  %v1047 = vunpack.c.l.b16 %v249
  %v1048 = vunpack.c.h.b16 %v249
  %v1049 = vunpack.c.l.b16 %v250
  %v1050 = vunpack.c.h.b16 %v250
  %v1051 = vunpack.c.l.b16 %v251
  %v1052 = vunpack.c.h.b16 %v251
  %v1053 = vunpack.c.l.b16 %v252
  %v1054 = vunpack.c.h.b16 %v252
  %v1055 = vunpack.c.l.b16 %v253
  %v1056 = vunpack.c.h.b16 %v253
  %v1057 = vunpack.c.l.b16 %v254
  %v1058 = vunpack.c.h.b16 %v254
  %v1059 = vunpack.c.l.b16 %v255
  %v1060 = vunpack.c.h.b16 %v255
  %v1061 = vunpack.c.l.b16 %v256
  %v1062 = vunpack.c.h.b16 %v256
  %v1063 = vunpack.c.l.b16 %v257
  %v1064 = vunpack.c.h.b16 %v257
  %v1065 = vunpack.c.l.b16 %v258
  %v1066 = vunpack.c.h.b16 %v258
  %v1067 = vunpack.c.l.b16 %v259
  %v1068 = vunpack.c.h.b16 %v259
  %v1069 = vunpack.c.l.b16 %v260
  %v1070 = vunpack.c.h.b16 %v260
  %v1071 = vunpack.c.l.b16 %v261
  %v1072 = vunpack.c.h.b16 %v261
  %v1073 = vunpack.c.l.b16 %v262
  %v1074 = vunpack.c.h.b16 %v262
  %v1075 = vunpack.c.l.b16 %v263
  %v1076 = vunpack.c.h.b16 %v263
  %v1077 = vunpack.c.l.b16 %v264
  %v1078 = vunpack.c.h.b16 %v264
  %v1079 = vunpack.c.l.b16 %v265
  %v1080 = vunpack.c.h.b16 %v265
  %v1081 = vunpack.c.l.b16 %v266
  %v1082 = vunpack.c.h.b16 %v266
  %v1083 = vunpack.c.l.b16 %v267
  %v1084 = vunpack.c.h.b16 %v267
  %v1085 = vunpack.c.l.b16 %v268
  %v1086 = vunpack.c.h.b16 %v268
  %v1087 = vunpack.c.l.b16 %v269
  %v1088 = vunpack.c.h.b16 %v269
  %v1089 = vunpack.c.l.b16 %v270
  %v1090 = vunpack.c.h.b16 %v270
  %v1091 = vunpack.c.l.b16 %v271
  %v1092 = vunpack.c.h.b16 %v271
  %v1093 = vunpack.c.l.b16 %v272
  %v1094 = vunpack.c.h.b16 %v272
  %v1095 = vunpack.c.l.b16 %v273
  %v1096 = vunpack.c.h.b16 %v273
  %v1097 = vunpack.c.l.b16 %v274
  %v1098 = vunpack.c.h.b16 %v274
  %v1099 = vunpack.c.l.b16 %v275
  %v1100 = vunpack.c.h.b16 %v275
  %v1101 = vunpack.c.l.b16 %v276
  %v1102 = vunpack.c.h.b16 %v276
  %v1103 = vunpack.c.l.b16 %v277
  %v1104 = vunpack.c.h.b16 %v277
  %v1105 = vunpack.c.l.b16 %v278
  %v1106 = vunpack.c.h.b16 %v278
  %v1107 = vunpack.c.l.b16 %v279
  %v1108 = vunpack.c.h.b16 %v279
  %v1109 = vunpack.c.l.b16 %v280
  %v1110 = vunpack.c.h.b16 %v280
  %v1111 = vunpack.c.l.b16 %v281
  %v1112 = vunpack.c.h.b16 %v281
  %v1113 = vunpack.c.l.b16 %v282
  %v1114 = vunpack.c.h.b16 %v282
  %v1115 = vunpack.c.l.b16 %v283
  %v1116 = vunpack.c.h.b16 %v283
  %v1117 = vunpack.c.l.b16 %v284
  %v1118 = vunpack.c.h.b16 %v284
  %v1119 = vunpack.c.l.b16 %v285
  %v1120 = vunpack.c.h.b16 %v285
  %v1121 = vunpack.c.l.b16 %v286
  %v1122 = vunpack.c.h.b16 %v286
  %v1123 = vunpack.c.l.b16 %v287
  %v1124 = vunpack.c.h.b16 %v287
  %v1125 = vunpack.c.l.b16 %v288
  %v1126 = vunpack.c.h.b16 %v288
  %v1127 = vunpack.c.l.b16 %v289
  %v1128 = vunpack.c.h.b16 %v289
  %v1129 = vunpack.c.l.b16 %v290
  %v1130 = vunpack.c.h.b16 %v290
  %v1131 = vunpack.c.l.b16 %v291
  %v1132 = vunpack.c.h.b16 %v291
  %v1133 = vunpack.c.l.b16 %v292
  %v1134 = vunpack.c.h.b16 %v292
  %v1135 = vunpack.c.l.b16 %v293
  %v1136 = vunpack.c.h.b16 %v293
  %v1137 = vunpack.c.l.b16 %v294
  %v1138 = vunpack.c.h.b16 %v294
  %v1139 = vunpack.c.l.b16 %v295
  %v1140 = vunpack.c.h.b16 %v295
  %v1141 = vunpack.c.l.b16 %v296
  %v1142 = vunpack.c.h.b16 %v296
  %v1143 = vunpack.c.l.b16 %v297
  %v1144 = vunpack.c.h.b16 %v297
  %v1145 = vunpack.c.l.b16 %v298
  %v1146 = vunpack.c.h.b16 %v298
  %v1147 = vpack.c.b16 %v651, %v635
  %v1148 = vpack.c.b16 %v652, %v636
  %v1149 = vpack.c.b16 %v653, %v637
  %v1150 = vpack.c.b16 %v654, %v638
  %v1151 = vpack.c.b16 %v655, %v639
  %v1152 = vpack.c.b16 %v656, %v640
  %v1153 = vpack.c.b16 %v657, %v641
  %v1154 = vpack.c.b16 %v658, %v642
  %v1155 = vpack.c.b16 %v659, %v643
  %v1156 = vpack.c.b16 %v660, %v644
  %v1157 = vpack.c.b16 %v661, %v645
  %v1158 = vpack.c.b16 %v662, %v646
  %v1159 = vpack.c.b16 %v663, %v647
  %v1160 = vpack.c.b16 %v664, %v648
  %v1161 = vpack.c.b16 %v665, %v649
  %v1162 = vpack.c.b16 %v666, %v650
  %v1163 = vpack.c.b16 %v683, %v667
  %v1164 = vpack.c.b16 %v684, %v668
  %v1165 = vpack.c.b16 %v685, %v669
  %v1166 = vpack.c.b16 %v686, %v670
  %v1167 = vpack.c.b16 %v687, %v671
  %v1168 = vpack.c.b16 %v688, %v672
  %v1169 = vpack.c.b16 %v689, %v673
  %v1170 = vpack.c.b16 %v690, %v674
  %v1171 = vpack.c.b16 %v691, %v675
  %v1172 = vpack.c.b16 %v692, %v676
  %v1173 = vpack.c.b16 %v693, %v677
  %v1174 = vpack.c.b16 %v694, %v678
  %v1175 = vpack.c.b16 %v695, %v679
  %v1176 = vpack.c.b16 %v696, %v680
  %v1177 = vpack.c.b16 %v697, %v681
  %v1178 = vpack.c.b16 %v698, %v682
  %v1179 = vpack.c.b16 %v715, %v699
  %v1180 = vpack.c.b16 %v716, %v700
  %v1181 = vpack.c.b16 %v717, %v701
  %v1182 = vpack.c.b16 %v718, %v702
  %v1183 = vpack.c.b16 %v719, %v703
  %v1184 = vpack.c.b16 %v720, %v704
  %v1185 = vpack.c.b16 %v721, %v705
  %v1186 = vpack.c.b16 %v722, %v706
  %v1187 = vpack.c.b16 %v723, %v707
  %v1188 = vpack.c.b16 %v724, %v708
  %v1189 = vpack.c.b16 %v725, %v709
  %v1190 = vpack.c.b16 %v726, %v710
  %v1191 = vpack.c.b16 %v727, %v711
  %v1192 = vpack.c.b16 %v728, %v712
  %v1193 = vpack.c.b16 %v729, %v713
  %v1194 = vpack.c.b16 %v730, %v714
  %v1195 = vpack.c.b16 %v747, %v731
  %v1196 = vpack.c.b16 %v748, %v732
  %v1197 = vpack.c.b16 %v749, %v733
  %v1198 = vpack.c.b16 %v750, %v734
  %v1199 = vpack.c.b16 %v751, %v735
  %v1200 = vpack.c.b16 %v752, %v736
  %v1201 = vpack.c.b16 %v753, %v737
  %v1202 = vpack.c.b16 %v754, %v738
  %v1203 = vpack.c.b16 %v755, %v739
  %v1204 = vpack.c.b16 %v756, %v740
  %v1205 = vpack.c.b16 %v757, %v741
  %v1206 = vpack.c.b16 %v758, %v742
  %v1207 = vpack.c.b16 %v759, %v743
  %v1208 = vpack.c.b16 %v760, %v744
  %v1209 = vpack.c.b16 %v761, %v745
  %v1210 = vpack.c.b16 %v762, %v746
  %v1211 = vpack.c.b16 %v779, %v763
  %v1212 = vpack.c.b16 %v780, %v764
  %v1213 = vpack.c.b16 %v781, %v765
  %v1214 = vpack.c.b16 %v782, %v766
  %v1215 = vpack.c.b16 %v783, %v767
  %v1216 = vpack.c.b16 %v784, %v768
  %v1217 = vpack.c.b16 %v785, %v769
  %v1218 = vpack.c.b16 %v786, %v770
  %v1219 = vpack.c.b16 %v787, %v771
  %v1220 = vpack.c.b16 %v788, %v772
  %v1221 = vpack.c.b16 %v789, %v773
  %v1222 = vpack.c.b16 %v790, %v774
  %v1223 = vpack.c.b16 %v791, %v775
  %v1224 = vpack.c.b16 %v792, %v776
  %v1225 = vpack.c.b16 %v793, %v777
  %v1226 = vpack.c.b16 %v794, %v778
  %v1227 = vpack.c.b16 %v811, %v795
  %v1228 = vpack.c.b16 %v812, %v796
  %v1229 = vpack.c.b16 %v813, %v797
  %v1230 = vpack.c.b16 %v814, %v798
  %v1231 = vpack.c.b16 %v815, %v799
  %v1232 = vpack.c.b16 %v816, %v800
  %v1233 = vpack.c.b16 %v817, %v801
  %v1234 = vpack.c.b16 %v818, %v802
  %v1235 = vpack.c.b16 %v819, %v803
  %v1236 = vpack.c.b16 %v820, %v804
  %v1237 = vpack.c.b16 %v821, %v805
  %v1238 = vpack.c.b16 %v822, %v806
  %v1239 = vpack.c.b16 %v823, %v807
  %v1240 = vpack.c.b16 %v824, %v808
  %v1241 = vpack.c.b16 %v825, %v809
  %v1242 = vpack.c.b16 %v826, %v810
  %v1243 = vpack.c.b16 %v843, %v827
  %v1244 = vpack.c.b16 %v844, %v828
  %v1245 = vpack.c.b16 %v845, %v829
  %v1246 = vpack.c.b16 %v846, %v830
  %v1247 = vpack.c.b16 %v847, %v831
  %v1248 = vpack.c.b16 %v848, %v832
  %v1249 = vpack.c.b16 %v849, %v833
  %v1250 = vpack.c.b16 %v850, %v834
  %v1251 = vpack.c.b16 %v851, %v835
  %v1252 = vpack.c.b16 %v852, %v836
  %v1253 = vpack.c.b16 %v853, %v837
  %v1254 = vpack.c.b16 %v854, %v838
  %v1255 = vpack.c.b16 %v855, %v839
  %v1256 = vpack.c.b16 %v856, %v840
  %v1257 = vpack.c.b16 %v857, %v841
  %v1258 = vpack.c.b16 %v858, %v842
  %v1259 = vpack.c.b16 %v875, %v859
  %v1260 = vpack.c.b16 %v876, %v860
  %v1261 = vpack.c.b16 %v877, %v861
  %v1262 = vpack.c.b16 %v878, %v862
  %v1263 = vpack.c.b16 %v879, %v863
  %v1264 = vpack.c.b16 %v880, %v864
  %v1265 = vpack.c.b16 %v881, %v865
  %v1266 = vpack.c.b16 %v882, %v866
  %v1267 = vpack.c.b16 %v883, %v867
  %v1268 = vpack.c.b16 %v884, %v868
  %v1269 = vpack.c.b16 %v885, %v869
  %v1270 = vpack.c.b16 %v886, %v870
  %v1271 = vpack.c.b16 %v887, %v871
  %v1272 = vpack.c.b16 %v888, %v872
  %v1273 = vpack.c.b16 %v889, %v873
  %v1274 = vpack.c.b16 %v890, %v874
  %v1275 = vpack.c.b16 %v907, %v891
  %v1276 = vpack.c.b16 %v908, %v892
  %v1277 = vpack.c.b16 %v909, %v893
  %v1278 = vpack.c.b16 %v910, %v894
  %v1279 = vpack.c.b16 %v911, %v895
  %v1280 = vpack.c.b16 %v912, %v896
  %v1281 = vpack.c.b16 %v913, %v897
  %v1282 = vpack.c.b16 %v914, %v898
  %v1283 = vpack.c.b16 %v915, %v899
  %v1284 = vpack.c.b16 %v916, %v900
  %v1285 = vpack.c.b16 %v917, %v901
  %v1286 = vpack.c.b16 %v918, %v902
  %v1287 = vpack.c.b16 %v919, %v903
  %v1288 = vpack.c.b16 %v920, %v904
  %v1289 = vpack.c.b16 %v921, %v905
  %v1290 = vpack.c.b16 %v922, %v906
  %v1291 = vpack.c.b16 %v939, %v923
  %v1292 = vpack.c.b16 %v940, %v924
  %v1293 = vpack.c.b16 %v941, %v925
  %v1294 = vpack.c.b16 %v942, %v926
  %v1295 = vpack.c.b16 %v943, %v927
  %v1296 = vpack.c.b16 %v944, %v928
  %v1297 = vpack.c.b16 %v945, %v929
  %v1298 = vpack.c.b16 %v946, %v930
  %v1299 = vpack.c.b16 %v947, %v931
  %v1300 = vpack.c.b16 %v948, %v932
  %v1301 = vpack.c.b16 %v949, %v933
  %v1302 = vpack.c.b16 %v950, %v934
  %v1303 = vpack.c.b16 %v951, %v935
  %v1304 = vpack.c.b16 %v952, %v936
  %v1305 = vpack.c.b16 %v953, %v937
  %v1306 = vpack.c.b16 %v954, %v938
  %v1307 = vpack.c.b16 %v971, %v955
  %v1308 = vpack.c.b16 %v972, %v956
  %v1309 = vpack.c.b16 %v973, %v957
  %v1310 = vpack.c.b16 %v974, %v958
  %v1311 = vpack.c.b16 %v975, %v959
  %v1312 = vpack.c.b16 %v976, %v960
  %v1313 = vpack.c.b16 %v977, %v961
  %v1314 = vpack.c.b16 %v978, %v962
  %v1315 = vpack.c.b16 %v979, %v963
  %v1316 = vpack.c.b16 %v980, %v964
  %v1317 = vpack.c.b16 %v981, %v965
  %v1318 = vpack.c.b16 %v982, %v966
  %v1319 = vpack.c.b16 %v983, %v967
  %v1320 = vpack.c.b16 %v984, %v968
  %v1321 = vpack.c.b16 %v985, %v969
  %v1322 = vpack.c.b16 %v986, %v970
  %v1323 = vpack.c.b16 %v1003, %v987
  %v1324 = vpack.c.b16 %v1004, %v988
  %v1325 = vpack.c.b16 %v1005, %v989
  %v1326 = vpack.c.b16 %v1006, %v990
  %v1327 = vpack.c.b16 %v1007, %v991
  %v1328 = vpack.c.b16 %v1008, %v992
  %v1329 = vpack.c.b16 %v1009, %v993
  %v1330 = vpack.c.b16 %v1010, %v994
  %v1331 = vpack.c.b16 %v1011, %v995
  %v1332 = vpack.c.b16 %v1012, %v996
  %v1333 = vpack.c.b16 %v1013, %v997
  %v1334 = vpack.c.b16 %v1014, %v998
  %v1335 = vpack.c.b16 %v1015, %v999
  %v1336 = vpack.c.b16 %v1016, %v1000
  %v1337 = vpack.c.b16 %v1017, %v1001
  %v1338 = vpack.c.b16 %v1018, %v1002
  %v1339 = vpack.c.b16 %v1035, %v1019
  %v1340 = vpack.c.b16 %v1036, %v1020
  %v1341 = vpack.c.b16 %v1037, %v1021
  %v1342 = vpack.c.b16 %v1038, %v1022
  %v1343 = vpack.c.b16 %v1039, %v1023
  %v1344 = vpack.c.b16 %v1040, %v1024
  %v1345 = vpack.c.b16 %v1041, %v1025
  %v1346 = vpack.c.b16 %v1042, %v1026
  %v1347 = vpack.c.b16 %v1043, %v1027
  %v1348 = vpack.c.b16 %v1044, %v1028
  %v1349 = vpack.c.b16 %v1045, %v1029
  %v1350 = vpack.c.b16 %v1046, %v1030
  %v1351 = vpack.c.b16 %v1047, %v1031
  %v1352 = vpack.c.b16 %v1048, %v1032
  %v1353 = vpack.c.b16 %v1049, %v1033
  %v1354 = vpack.c.b16 %v1050, %v1034
  %v1355 = vpack.c.b16 %v1067, %v1051
  %v1356 = vpack.c.b16 %v1068, %v1052
  %v1357 = vpack.c.b16 %v1069, %v1053
  %v1358 = vpack.c.b16 %v1070, %v1054
  %v1359 = vpack.c.b16 %v1071, %v1055
  %v1360 = vpack.c.b16 %v1072, %v1056
  %v1361 = vpack.c.b16 %v1073, %v1057
  %v1362 = vpack.c.b16 %v1074, %v1058
  %v1363 = vpack.c.b16 %v1075, %v1059
  %v1364 = vpack.c.b16 %v1076, %v1060
  %v1365 = vpack.c.b16 %v1077, %v1061
  %v1366 = vpack.c.b16 %v1078, %v1062
  %v1367 = vpack.c.b16 %v1079, %v1063
  %v1368 = vpack.c.b16 %v1080, %v1064
  %v1369 = vpack.c.b16 %v1081, %v1065
  %v1370 = vpack.c.b16 %v1082, %v1066
  %v1371 = vpack.c.b16 %v1099, %v1083
  %v1372 = vpack.c.b16 %v1100, %v1084
  %v1373 = vpack.c.b16 %v1101, %v1085
  %v1374 = vpack.c.b16 %v1102, %v1086
  %v1375 = vpack.c.b16 %v1103, %v1087
  %v1376 = vpack.c.b16 %v1104, %v1088
  %v1377 = vpack.c.b16 %v1105, %v1089
  %v1378 = vpack.c.b16 %v1106, %v1090
  %v1379 = vpack.c.b16 %v1107, %v1091
  %v1380 = vpack.c.b16 %v1108, %v1092
  %v1381 = vpack.c.b16 %v1109, %v1093
  %v1382 = vpack.c.b16 %v1110, %v1094
  %v1383 = vpack.c.b16 %v1111, %v1095
  %v1384 = vpack.c.b16 %v1112, %v1096
  %v1385 = vpack.c.b16 %v1113, %v1097
  %v1386 = vpack.c.b16 %v1114, %v1098
  %v1387 = vpack.c.b16 %v1131, %v1115
  %v1388 = vpack.c.b16 %v1132, %v1116
  %v1389 = vpack.c.b16 %v1133, %v1117
  %v1390 = vpack.c.b16 %v1134, %v1118
  %v1391 = vpack.c.b16 %v1135, %v1119
  %v1392 = vpack.c.b16 %v1136, %v1120
  %v1393 = vpack.c.b16 %v1137, %v1121
  %v1394 = vpack.c.b16 %v1138, %v1122
  %v1395 = vpack.c.b16 %v1139, %v1123
  %v1396 = vpack.c.b16 %v1140, %v1124
  %v1397 = vpack.c.b16 %v1141, %v1125
  %v1398 = vpack.c.b16 %v1142, %v1126
  %v1399 = vpack.c.b16 %v1143, %v1127
  %v1400 = vpack.c.b16 %v1144, %v1128
  %v1401 = vpack.c.b16 %v1145, %v1129
  %v1402 = vpack.c.b16 %v1146, %v1130
  %1659 = vmatprep.subr.bf16.mxu0 %v1260
  %1660 = vmatpush1.bf16.msra.mxu0 %v1259
  %1661 = vmatprep.subr.bf16.mxu0 %v1244
  %1662 = vmatpush1.bf16.msra.mxu0 %v1243
  %1663 = vmatprep.subr.bf16.mxu0 %v1228
  %1664 = vmatpush1.bf16.msra.mxu0 %v1227
  %1665 = vmatprep.subr.bf16.mxu0 %v1212
  %1666 = vmatpush1.bf16.msra.mxu0 %v1211
  %1667 = vmatprep.subr.bf16.mxu0 %v1196
  %1668 = vmatpush1.bf16.msra.mxu0 %v1195
  %1669 = vmatprep.subr.bf16.mxu0 %v1180
  %1670 = vmatpush1.bf16.msra.mxu0 %v1179
  %1671 = vmatprep.subr.bf16.mxu0 %v1164
  %1672 = vmatpush1.bf16.msra.mxu0 %v1163
  %1673 = vmatprep.subr.bf16.mxu0 %v1148
  %1674 = vmatpush1.bf16.msra.mxu0 %v1147
  %1675 = vmatprep.subr.bf16.mxu0 %v1388
  %1676 = vmatpush2.bf16.msra.mxu0 %v1387
  %1677 = vmatprep.subr.bf16.mxu0 %v1372
  %1678 = vmatpush2.bf16.msra.mxu0 %v1371
  %1679 = vmatprep.subr.bf16.mxu0 %v1356
  %1680 = vmatpush2.bf16.msra.mxu0 %v1355
  %1681 = vmatprep.subr.bf16.mxu0 %v1340
  %1682 = vmatpush2.bf16.msra.mxu0 %v1339
  %1683 = vmatprep.subr.bf16.mxu0 %v1324
  %1684 = vmatpush2.bf16.msra.mxu0 %v1323
  %1685 = vmatprep.subr.bf16.mxu0 %v1308
  %1686 = vmatpush2.bf16.msra.mxu0 %v1307
  %1687 = vmatprep.subr.bf16.mxu0 %v1292
  %1688 = vmatpush2.bf16.msra.mxu0 %v1291
  %1689 = vmatprep.subr.bf16.mxu0 %v1276
  %1690 = vmatpush2.bf16.msra.mxu0 %v1275
  %1691 = vmatprep.mubr.bf16.mxu0 %v348
  %1692 = vmatmul.mubr.bf16.gmra.mxu0 %v347
  %v1693 = vpop.f32.mrf.mxu0
  %v1694 = vadd.f32 0.0, %v1693
  %v1695 = vpop.f32.mrf.mxu0
  %v1696 = vadd.f32 0.0, %v1695
  %v1697 = vpop.f32.mrf.mxu0
  %v1698 = vadd.f32 0.0, %v1697
  %v1699 = vpop.f32.mrf.mxu0
  %v1700 = vadd.f32 0.0, %v1699
  %1701 = vmatprep.mubr.bf16.mxu0 %v350
  %1702 = vmatmul.mubr.bf16.gmra.mxu0 %v349
  %v1703 = vpop.f32.mrf.mxu0
  %v1704 = vadd.f32 0.0, %v1703
  %v1705 = vpop.f32.mrf.mxu0
  %v1706 = vadd.f32 0.0, %v1705
  %v1707 = vpop.f32.mrf.mxu0
  %v1708 = vadd.f32 0.0, %v1707
  %v1709 = vpop.f32.mrf.mxu0
  %v1710 = vadd.f32 0.0, %v1709
  %1711 = vmatprep.mubr.bf16.mxu0 %v352
  %1712 = vmatmul.mubr.bf16.gmra.mxu0 %v351
  %v1713 = vpop.f32.mrf.mxu0
  %v1714 = vadd.f32 0.0, %v1713
  %v1715 = vpop.f32.mrf.mxu0
  %v1716 = vadd.f32 0.0, %v1715
  %v1717 = vpop.f32.mrf.mxu0
  %v1718 = vadd.f32 0.0, %v1717
  %v1719 = vpop.f32.mrf.mxu0
  %v1720 = vadd.f32 0.0, %v1719
  %1721 = vmatprep.mubr.bf16.mxu0 %v354
  %1722 = vmatmul.mubr.bf16.gmra.mxu0 %v353
  %v1723 = vpop.f32.mrf.mxu0
  %v1724 = vadd.f32 0.0, %v1723
  %v1725 = vpop.f32.mrf.mxu0
  %v1726 = vadd.f32 0.0, %v1725
  %v1727 = vpop.f32.mrf.mxu0
  %v1728 = vadd.f32 0.0, %v1727
  %v1729 = vpop.f32.mrf.mxu0
  %v1730 = vadd.f32 0.0, %v1729
  %1731 = vmatprep.mubr.bf16.mxu0 %v356
  %1732 = vmatmul.mubr.bf16.gmra.mxu0 %v355
  %v1733 = vpop.f32.mrf.mxu0
  %v1734 = vadd.f32 0.0, %v1733
  %v1735 = vpop.f32.mrf.mxu0
  %v1736 = vadd.f32 0.0, %v1735
  %v1737 = vpop.f32.mrf.mxu0
  %v1738 = vadd.f32 0.0, %v1737
  %v1739 = vpop.f32.mrf.mxu0
  %v1740 = vadd.f32 0.0, %v1739
  %1741 = vmatprep.mubr.bf16.mxu0 %v358
  %1742 = vmatmul.mubr.bf16.gmra.mxu0 %v357
  %v1743 = vpop.f32.mrf.mxu0
  %v1744 = vadd.f32 0.0, %v1743
  %v1745 = vpop.f32.mrf.mxu0
  %v1746 = vadd.f32 0.0, %v1745
  %v1747 = vpop.f32.mrf.mxu0
  %v1748 = vadd.f32 0.0, %v1747
  %v1749 = vpop.f32.mrf.mxu0
  %v1750 = vadd.f32 0.0, %v1749
  %1751 = vmatprep.mubr.bf16.mxu0 %v360
  %1752 = vmatmul.mubr.bf16.gmra.mxu0 %v359
  %v1753 = vpop.f32.mrf.mxu0
  %v1754 = vadd.f32 0.0, %v1753
  %v1755 = vpop.f32.mrf.mxu0
  %v1756 = vadd.f32 0.0, %v1755
  %v1757 = vpop.f32.mrf.mxu0
  %v1758 = vadd.f32 0.0, %v1757
  %v1759 = vpop.f32.mrf.mxu0
  %v1760 = vadd.f32 0.0, %v1759
  %1761 = vmatprep.mubr.bf16.mxu0 %v362
  %1762 = vmatmul.mubr.bf16.gmra.mxu0 %v361
  %v1763 = vpop.f32.mrf.mxu0
  %v1764 = vadd.f32 0.0, %v1763
  %v1765 = vpop.f32.mrf.mxu0
  %v1766 = vadd.f32 0.0, %v1765
  %v1767 = vpop.f32.mrf.mxu0
  %v1768 = vadd.f32 0.0, %v1767
  %v1769 = vpop.f32.mrf.mxu0
  %v1770 = vadd.f32 0.0, %v1769
  %1771 = vdwg.mxu0
  %1772 = vmatprep.subr.bf16.mxu0 %v1262
  %1773 = vmatpush1.bf16.msra.mxu0 %v1261
  %1774 = vmatprep.subr.bf16.mxu0 %v1246
  %1775 = vmatpush1.bf16.msra.mxu0 %v1245
  %1776 = vmatprep.subr.bf16.mxu0 %v1230
  %1777 = vmatpush1.bf16.msra.mxu0 %v1229
  %1778 = vmatprep.subr.bf16.mxu0 %v1214
  %1779 = vmatpush1.bf16.msra.mxu0 %v1213
  %1780 = vmatprep.subr.bf16.mxu0 %v1198
  %1781 = vmatpush1.bf16.msra.mxu0 %v1197
  %1782 = vmatprep.subr.bf16.mxu0 %v1182
  %1783 = vmatpush1.bf16.msra.mxu0 %v1181
  %1784 = vmatprep.subr.bf16.mxu0 %v1166
  %1785 = vmatpush1.bf16.msra.mxu0 %v1165
  %1786 = vmatprep.subr.bf16.mxu0 %v1150
  %1787 = vmatpush1.bf16.msra.mxu0 %v1149
  %1788 = vmatprep.subr.bf16.mxu0 %v1390
  %1789 = vmatpush2.bf16.msra.mxu0 %v1389
  %1790 = vmatprep.subr.bf16.mxu0 %v1374
  %1791 = vmatpush2.bf16.msra.mxu0 %v1373
  %1792 = vmatprep.subr.bf16.mxu0 %v1358
  %1793 = vmatpush2.bf16.msra.mxu0 %v1357
  %1794 = vmatprep.subr.bf16.mxu0 %v1342
  %1795 = vmatpush2.bf16.msra.mxu0 %v1341
  %1796 = vmatprep.subr.bf16.mxu0 %v1326
  %1797 = vmatpush2.bf16.msra.mxu0 %v1325
  %1798 = vmatprep.subr.bf16.mxu0 %v1310
  %1799 = vmatpush2.bf16.msra.mxu0 %v1309
  %1800 = vmatprep.subr.bf16.mxu0 %v1294
  %1801 = vmatpush2.bf16.msra.mxu0 %v1293
  %1802 = vmatprep.subr.bf16.mxu0 %v1278
  %1803 = vmatpush2.bf16.msra.mxu0 %v1277
  %1804 = vmatprep.mubr.bf16.mxu0 %v348
  %1805 = vmatmul.mubr.bf16.gmra.mxu0 %v347
  %v1806 = vpop.f32.mrf.mxu0
  %v1807 = vadd.f32 0.0, %v1806
  %v1808 = vpop.f32.mrf.mxu0
  %v1809 = vadd.f32 0.0, %v1808
  %v1810 = vpop.f32.mrf.mxu0
  %v1811 = vadd.f32 0.0, %v1810
  %v1812 = vpop.f32.mrf.mxu0
  %v1813 = vadd.f32 0.0, %v1812
  %1814 = vmatprep.mubr.bf16.mxu0 %v350
  %1815 = vmatmul.mubr.bf16.gmra.mxu0 %v349
  %v1816 = vpop.f32.mrf.mxu0
  %v1817 = vadd.f32 0.0, %v1816
  %v1818 = vpop.f32.mrf.mxu0
  %v1819 = vadd.f32 0.0, %v1818
  %v1820 = vpop.f32.mrf.mxu0
  %v1821 = vadd.f32 0.0, %v1820
  %v1822 = vpop.f32.mrf.mxu0
  %v1823 = vadd.f32 0.0, %v1822
  %1824 = vmatprep.mubr.bf16.mxu0 %v352
  %1825 = vmatmul.mubr.bf16.gmra.mxu0 %v351
  %v1826 = vpop.f32.mrf.mxu0
  %v1827 = vadd.f32 0.0, %v1826
  %v1828 = vpop.f32.mrf.mxu0
  %v1829 = vadd.f32 0.0, %v1828
  %v1830 = vpop.f32.mrf.mxu0
  %v1831 = vadd.f32 0.0, %v1830
  %v1832 = vpop.f32.mrf.mxu0
  %v1833 = vadd.f32 0.0, %v1832
  %1834 = vmatprep.mubr.bf16.mxu0 %v354
  %1835 = vmatmul.mubr.bf16.gmra.mxu0 %v353
  %v1836 = vpop.f32.mrf.mxu0
  %v1837 = vadd.f32 0.0, %v1836
  %v1838 = vpop.f32.mrf.mxu0
  %v1839 = vadd.f32 0.0, %v1838
  %v1840 = vpop.f32.mrf.mxu0
  %v1841 = vadd.f32 0.0, %v1840
  %v1842 = vpop.f32.mrf.mxu0
  %v1843 = vadd.f32 0.0, %v1842
  %1844 = vmatprep.mubr.bf16.mxu0 %v356
  %1845 = vmatmul.mubr.bf16.gmra.mxu0 %v355
  %v1846 = vpop.f32.mrf.mxu0
  %v1847 = vadd.f32 0.0, %v1846
  %v1848 = vpop.f32.mrf.mxu0
  %v1849 = vadd.f32 0.0, %v1848
  %v1850 = vpop.f32.mrf.mxu0
  %v1851 = vadd.f32 0.0, %v1850
  %v1852 = vpop.f32.mrf.mxu0
  %v1853 = vadd.f32 0.0, %v1852
  %1854 = vmatprep.mubr.bf16.mxu0 %v358
  %1855 = vmatmul.mubr.bf16.gmra.mxu0 %v357
  %v1856 = vpop.f32.mrf.mxu0
  %v1857 = vadd.f32 0.0, %v1856
  %v1858 = vpop.f32.mrf.mxu0
  %v1859 = vadd.f32 0.0, %v1858
  %v1860 = vpop.f32.mrf.mxu0
  %v1861 = vadd.f32 0.0, %v1860
  %v1862 = vpop.f32.mrf.mxu0
  %v1863 = vadd.f32 0.0, %v1862
  %1864 = vmatprep.mubr.bf16.mxu0 %v360
  %1865 = vmatmul.mubr.bf16.gmra.mxu0 %v359
  %v1866 = vpop.f32.mrf.mxu0
  %v1867 = vadd.f32 0.0, %v1866
  %v1868 = vpop.f32.mrf.mxu0
  %v1869 = vadd.f32 0.0, %v1868
  %v1870 = vpop.f32.mrf.mxu0
  %v1871 = vadd.f32 0.0, %v1870
  %v1872 = vpop.f32.mrf.mxu0
  %v1873 = vadd.f32 0.0, %v1872
  %1874 = vmatprep.mubr.bf16.mxu0 %v362
  %1875 = vmatmul.mubr.bf16.gmra.mxu0 %v361
  %v1876 = vpop.f32.mrf.mxu0
  %v1877 = vadd.f32 0.0, %v1876
  %v1878 = vpop.f32.mrf.mxu0
  %v1879 = vadd.f32 0.0, %v1878
  %v1880 = vpop.f32.mrf.mxu0
  %v1881 = vadd.f32 0.0, %v1880
  %v1882 = vpop.f32.mrf.mxu0
  %v1883 = vadd.f32 0.0, %v1882
  %1884 = vdwg.mxu0
  %1885 = vmatprep.subr.bf16.mxu0 %v1264
  %1886 = vmatpush1.bf16.msra.mxu0 %v1263
  %1887 = vmatprep.subr.bf16.mxu0 %v1248
  %1888 = vmatpush1.bf16.msra.mxu0 %v1247
  %1889 = vmatprep.subr.bf16.mxu0 %v1232
  %1890 = vmatpush1.bf16.msra.mxu0 %v1231
  %1891 = vmatprep.subr.bf16.mxu0 %v1216
  %1892 = vmatpush1.bf16.msra.mxu0 %v1215
  %1893 = vmatprep.subr.bf16.mxu0 %v1200
  %1894 = vmatpush1.bf16.msra.mxu0 %v1199
  %1895 = vmatprep.subr.bf16.mxu0 %v1184
  %1896 = vmatpush1.bf16.msra.mxu0 %v1183
  %1897 = vmatprep.subr.bf16.mxu0 %v1168
  %1898 = vmatpush1.bf16.msra.mxu0 %v1167
  %1899 = vmatprep.subr.bf16.mxu0 %v1152
  %1900 = vmatpush1.bf16.msra.mxu0 %v1151
  %1901 = vmatprep.subr.bf16.mxu0 %v1392
  %1902 = vmatpush2.bf16.msra.mxu0 %v1391
  %1903 = vmatprep.subr.bf16.mxu0 %v1376
  %1904 = vmatpush2.bf16.msra.mxu0 %v1375
  %1905 = vmatprep.subr.bf16.mxu0 %v1360
  %1906 = vmatpush2.bf16.msra.mxu0 %v1359
  %1907 = vmatprep.subr.bf16.mxu0 %v1344
  %1908 = vmatpush2.bf16.msra.mxu0 %v1343
  %1909 = vmatprep.subr.bf16.mxu0 %v1328
  %1910 = vmatpush2.bf16.msra.mxu0 %v1327
  %1911 = vmatprep.subr.bf16.mxu0 %v1312
  %1912 = vmatpush2.bf16.msra.mxu0 %v1311
  %1913 = vmatprep.subr.bf16.mxu0 %v1296
  %1914 = vmatpush2.bf16.msra.mxu0 %v1295
  %1915 = vmatprep.subr.bf16.mxu0 %v1280
  %1916 = vmatpush2.bf16.msra.mxu0 %v1279
  %1917 = vmatprep.mubr.bf16.mxu0 %v348
  %1918 = vmatmul.mubr.bf16.gmra.mxu0 %v347
  %v1919 = vpop.f32.mrf.mxu0
  %v1920 = vadd.f32 0.0, %v1919
  %v1921 = vpop.f32.mrf.mxu0
  %v1922 = vadd.f32 0.0, %v1921
  %v1923 = vpop.f32.mrf.mxu0
  %v1924 = vadd.f32 0.0, %v1923
  %v1925 = vpop.f32.mrf.mxu0
  %v1926 = vadd.f32 0.0, %v1925
  %1927 = vmatprep.mubr.bf16.mxu0 %v350
  %1928 = vmatmul.mubr.bf16.gmra.mxu0 %v349
  %v1929 = vpop.f32.mrf.mxu0
  %v1930 = vadd.f32 0.0, %v1929
  %v1931 = vpop.f32.mrf.mxu0
  %v1932 = vadd.f32 0.0, %v1931
  %v1933 = vpop.f32.mrf.mxu0
  %v1934 = vadd.f32 0.0, %v1933
  %v1935 = vpop.f32.mrf.mxu0
  %v1936 = vadd.f32 0.0, %v1935
  %1937 = vmatprep.mubr.bf16.mxu0 %v352
  %1938 = vmatmul.mubr.bf16.gmra.mxu0 %v351
  %v1939 = vpop.f32.mrf.mxu0
  %v1940 = vadd.f32 0.0, %v1939
  %v1941 = vpop.f32.mrf.mxu0
  %v1942 = vadd.f32 0.0, %v1941
  %v1943 = vpop.f32.mrf.mxu0
  %v1944 = vadd.f32 0.0, %v1943
  %v1945 = vpop.f32.mrf.mxu0
  %v1946 = vadd.f32 0.0, %v1945
  %1947 = vmatprep.mubr.bf16.mxu0 %v354
  %1948 = vmatmul.mubr.bf16.gmra.mxu0 %v353
  %v1949 = vpop.f32.mrf.mxu0
  %v1950 = vadd.f32 0.0, %v1949
  %v1951 = vpop.f32.mrf.mxu0
  %v1952 = vadd.f32 0.0, %v1951
  %v1953 = vpop.f32.mrf.mxu0
  %v1954 = vadd.f32 0.0, %v1953
  %v1955 = vpop.f32.mrf.mxu0
  %v1956 = vadd.f32 0.0, %v1955
  %1957 = vmatprep.mubr.bf16.mxu0 %v356
  %1958 = vmatmul.mubr.bf16.gmra.mxu0 %v355
  %v1959 = vpop.f32.mrf.mxu0
  %v1960 = vadd.f32 0.0, %v1959
  %v1961 = vpop.f32.mrf.mxu0
  %v1962 = vadd.f32 0.0, %v1961
  %v1963 = vpop.f32.mrf.mxu0
  %v1964 = vadd.f32 0.0, %v1963
  %v1965 = vpop.f32.mrf.mxu0
  %v1966 = vadd.f32 0.0, %v1965
  %1967 = vmatprep.mubr.bf16.mxu0 %v358
  %1968 = vmatmul.mubr.bf16.gmra.mxu0 %v357
  %v1969 = vpop.f32.mrf.mxu0
  %v1970 = vadd.f32 0.0, %v1969
  %v1971 = vpop.f32.mrf.mxu0
  %v1972 = vadd.f32 0.0, %v1971
  %v1973 = vpop.f32.mrf.mxu0
  %v1974 = vadd.f32 0.0, %v1973
  %v1975 = vpop.f32.mrf.mxu0
  %v1976 = vadd.f32 0.0, %v1975
  %1977 = vmatprep.mubr.bf16.mxu0 %v360
  %1978 = vmatmul.mubr.bf16.gmra.mxu0 %v359
  %v1979 = vpop.f32.mrf.mxu0
  %v1980 = vadd.f32 0.0, %v1979
  %v1981 = vpop.f32.mrf.mxu0
  %v1982 = vadd.f32 0.0, %v1981
  %v1983 = vpop.f32.mrf.mxu0
  %v1984 = vadd.f32 0.0, %v1983
  %v1985 = vpop.f32.mrf.mxu0
  %v1986 = vadd.f32 0.0, %v1985
  %1987 = vmatprep.mubr.bf16.mxu0 %v362
  %1988 = vmatmul.mubr.bf16.gmra.mxu0 %v361
  %v1989 = vpop.f32.mrf.mxu0
  %v1990 = vadd.f32 0.0, %v1989
  %v1991 = vpop.f32.mrf.mxu0
  %v1992 = vadd.f32 0.0, %v1991
  %v1993 = vpop.f32.mrf.mxu0
  %v1994 = vadd.f32 0.0, %v1993
  %v1995 = vpop.f32.mrf.mxu0
  %v1996 = vadd.f32 0.0, %v1995
  %1997 = vdwg.mxu0
  %1998 = vmatprep.subr.bf16.mxu0 %v1266
  %1999 = vmatpush1.bf16.msra.mxu0 %v1265
  %2000 = vmatprep.subr.bf16.mxu0 %v1250
  %2001 = vmatpush1.bf16.msra.mxu0 %v1249
  %2002 = vmatprep.subr.bf16.mxu0 %v1234
  %2003 = vmatpush1.bf16.msra.mxu0 %v1233
  %2004 = vmatprep.subr.bf16.mxu0 %v1218
  %2005 = vmatpush1.bf16.msra.mxu0 %v1217
  %2006 = vmatprep.subr.bf16.mxu0 %v1202
  %2007 = vmatpush1.bf16.msra.mxu0 %v1201
  %2008 = vmatprep.subr.bf16.mxu0 %v1186
  %2009 = vmatpush1.bf16.msra.mxu0 %v1185
  %2010 = vmatprep.subr.bf16.mxu0 %v1170
  %2011 = vmatpush1.bf16.msra.mxu0 %v1169
  %2012 = vmatprep.subr.bf16.mxu0 %v1154
  %2013 = vmatpush1.bf16.msra.mxu0 %v1153
  %2014 = vmatprep.subr.bf16.mxu0 %v1394
  %2015 = vmatpush2.bf16.msra.mxu0 %v1393
  %2016 = vmatprep.subr.bf16.mxu0 %v1378
  %2017 = vmatpush2.bf16.msra.mxu0 %v1377
  %2018 = vmatprep.subr.bf16.mxu0 %v1362
  %2019 = vmatpush2.bf16.msra.mxu0 %v1361
  %2020 = vmatprep.subr.bf16.mxu0 %v1346
  %2021 = vmatpush2.bf16.msra.mxu0 %v1345
  %2022 = vmatprep.subr.bf16.mxu0 %v1330
  %2023 = vmatpush2.bf16.msra.mxu0 %v1329
  %2024 = vmatprep.subr.bf16.mxu0 %v1314
  %2025 = vmatpush2.bf16.msra.mxu0 %v1313
  %2026 = vmatprep.subr.bf16.mxu0 %v1298
  %2027 = vmatpush2.bf16.msra.mxu0 %v1297
  %2028 = vmatprep.subr.bf16.mxu0 %v1282
  %2029 = vmatpush2.bf16.msra.mxu0 %v1281
  %2030 = vmatprep.mubr.bf16.mxu0 %v348
  %2031 = vmatmul.mubr.bf16.gmra.mxu0 %v347
  %v2032 = vpop.f32.mrf.mxu0
  %v2033 = vadd.f32 0.0, %v2032
  %v2034 = vpop.f32.mrf.mxu0
  %v2035 = vadd.f32 0.0, %v2034
  %v2036 = vpop.f32.mrf.mxu0
  %v2037 = vadd.f32 0.0, %v2036
  %v2038 = vpop.f32.mrf.mxu0
  %v2039 = vadd.f32 0.0, %v2038
  %2040 = vmatprep.mubr.bf16.mxu0 %v350
  %2041 = vmatmul.mubr.bf16.gmra.mxu0 %v349
  %v2042 = vpop.f32.mrf.mxu0
  %v2043 = vadd.f32 0.0, %v2042
  %v2044 = vpop.f32.mrf.mxu0
  %v2045 = vadd.f32 0.0, %v2044
  %v2046 = vpop.f32.mrf.mxu0
  %v2047 = vadd.f32 0.0, %v2046
  %v2048 = vpop.f32.mrf.mxu0
  %v2049 = vadd.f32 0.0, %v2048
  %2050 = vmatprep.mubr.bf16.mxu0 %v352
  %2051 = vmatmul.mubr.bf16.gmra.mxu0 %v351
  %v2052 = vpop.f32.mrf.mxu0
  %v2053 = vadd.f32 0.0, %v2052
  %v2054 = vpop.f32.mrf.mxu0
  %v2055 = vadd.f32 0.0, %v2054
  %v2056 = vpop.f32.mrf.mxu0
  %v2057 = vadd.f32 0.0, %v2056
  %v2058 = vpop.f32.mrf.mxu0
  %v2059 = vadd.f32 0.0, %v2058
  %2060 = vmatprep.mubr.bf16.mxu0 %v354
  %2061 = vmatmul.mubr.bf16.gmra.mxu0 %v353
  %v2062 = vpop.f32.mrf.mxu0
  %v2063 = vadd.f32 0.0, %v2062
  %v2064 = vpop.f32.mrf.mxu0
  %v2065 = vadd.f32 0.0, %v2064
  %v2066 = vpop.f32.mrf.mxu0
  %v2067 = vadd.f32 0.0, %v2066
  %v2068 = vpop.f32.mrf.mxu0
  %v2069 = vadd.f32 0.0, %v2068
  %2070 = vmatprep.mubr.bf16.mxu0 %v356
  %2071 = vmatmul.mubr.bf16.gmra.mxu0 %v355
  %v2072 = vpop.f32.mrf.mxu0
  %v2073 = vadd.f32 0.0, %v2072
  %v2074 = vpop.f32.mrf.mxu0
  %v2075 = vadd.f32 0.0, %v2074
  %v2076 = vpop.f32.mrf.mxu0
  %v2077 = vadd.f32 0.0, %v2076
  %v2078 = vpop.f32.mrf.mxu0
  %v2079 = vadd.f32 0.0, %v2078
  %2080 = vmatprep.mubr.bf16.mxu0 %v358
  %2081 = vmatmul.mubr.bf16.gmra.mxu0 %v357
  %v2082 = vpop.f32.mrf.mxu0
  %v2083 = vadd.f32 0.0, %v2082
  %v2084 = vpop.f32.mrf.mxu0
  %v2085 = vadd.f32 0.0, %v2084
  %v2086 = vpop.f32.mrf.mxu0
  %v2087 = vadd.f32 0.0, %v2086
  %v2088 = vpop.f32.mrf.mxu0
  %v2089 = vadd.f32 0.0, %v2088
  %2090 = vmatprep.mubr.bf16.mxu0 %v360
  %2091 = vmatmul.mubr.bf16.gmra.mxu0 %v359
  %v2092 = vpop.f32.mrf.mxu0
  %v2093 = vadd.f32 0.0, %v2092
  %v2094 = vpop.f32.mrf.mxu0
  %v2095 = vadd.f32 0.0, %v2094
  %v2096 = vpop.f32.mrf.mxu0
  %v2097 = vadd.f32 0.0, %v2096
  %v2098 = vpop.f32.mrf.mxu0
  %v2099 = vadd.f32 0.0, %v2098
  %2100 = vmatprep.mubr.bf16.mxu0 %v362
  %2101 = vmatmul.mubr.bf16.gmra.mxu0 %v361
  %v2102 = vpop.f32.mrf.mxu0
  %v2103 = vadd.f32 0.0, %v2102
  %v2104 = vpop.f32.mrf.mxu0
  %v2105 = vadd.f32 0.0, %v2104
  %v2106 = vpop.f32.mrf.mxu0
  %v2107 = vadd.f32 0.0, %v2106
  %v2108 = vpop.f32.mrf.mxu0
  %v2109 = vadd.f32 0.0, %v2108
  %2110 = vdwg.mxu0
  %2111 = vmatprep.subr.bf16.mxu0 %v1268
  %2112 = vmatpush1.bf16.msra.mxu0 %v1267
  %2113 = vmatprep.subr.bf16.mxu0 %v1252
  %2114 = vmatpush1.bf16.msra.mxu0 %v1251
  %2115 = vmatprep.subr.bf16.mxu0 %v1236
  %2116 = vmatpush1.bf16.msra.mxu0 %v1235
  %2117 = vmatprep.subr.bf16.mxu0 %v1220
  %2118 = vmatpush1.bf16.msra.mxu0 %v1219
  %2119 = vmatprep.subr.bf16.mxu0 %v1204
  %2120 = vmatpush1.bf16.msra.mxu0 %v1203
  %2121 = vmatprep.subr.bf16.mxu0 %v1188
  %2122 = vmatpush1.bf16.msra.mxu0 %v1187
  %2123 = vmatprep.subr.bf16.mxu0 %v1172
  %2124 = vmatpush1.bf16.msra.mxu0 %v1171
  %2125 = vmatprep.subr.bf16.mxu0 %v1156
  %2126 = vmatpush1.bf16.msra.mxu0 %v1155
  %2127 = vmatprep.subr.bf16.mxu0 %v1396
  %2128 = vmatpush2.bf16.msra.mxu0 %v1395
  %2129 = vmatprep.subr.bf16.mxu0 %v1380
  %2130 = vmatpush2.bf16.msra.mxu0 %v1379
  %2131 = vmatprep.subr.bf16.mxu0 %v1364
  %2132 = vmatpush2.bf16.msra.mxu0 %v1363
  %2133 = vmatprep.subr.bf16.mxu0 %v1348
  %2134 = vmatpush2.bf16.msra.mxu0 %v1347
  %2135 = vmatprep.subr.bf16.mxu0 %v1332
  %2136 = vmatpush2.bf16.msra.mxu0 %v1331
  %2137 = vmatprep.subr.bf16.mxu0 %v1316
  %2138 = vmatpush2.bf16.msra.mxu0 %v1315
  %2139 = vmatprep.subr.bf16.mxu0 %v1300
  %2140 = vmatpush2.bf16.msra.mxu0 %v1299
  %2141 = vmatprep.subr.bf16.mxu0 %v1284
  %2142 = vmatpush2.bf16.msra.mxu0 %v1283
  %2143 = vmatprep.mubr.bf16.mxu0 %v348
  %2144 = vmatmul.mubr.bf16.gmra.mxu0 %v347
  %v2145 = vpop.f32.mrf.mxu0
  %v2146 = vadd.f32 0.0, %v2145
  %v2147 = vpop.f32.mrf.mxu0
  %v2148 = vadd.f32 0.0, %v2147
  %v2149 = vpop.f32.mrf.mxu0
  %v2150 = vadd.f32 0.0, %v2149
  %v2151 = vpop.f32.mrf.mxu0
  %v2152 = vadd.f32 0.0, %v2151
  %2153 = vmatprep.mubr.bf16.mxu0 %v350
  %2154 = vmatmul.mubr.bf16.gmra.mxu0 %v349
  %v2155 = vpop.f32.mrf.mxu0
  %v2156 = vadd.f32 0.0, %v2155
  %v2157 = vpop.f32.mrf.mxu0
  %v2158 = vadd.f32 0.0, %v2157
  %v2159 = vpop.f32.mrf.mxu0
  %v2160 = vadd.f32 0.0, %v2159
  %v2161 = vpop.f32.mrf.mxu0
  %v2162 = vadd.f32 0.0, %v2161
  %2163 = vmatprep.mubr.bf16.mxu0 %v352
  %2164 = vmatmul.mubr.bf16.gmra.mxu0 %v351
  %v2165 = vpop.f32.mrf.mxu0
  %v2166 = vadd.f32 0.0, %v2165
  %v2167 = vpop.f32.mrf.mxu0
  %v2168 = vadd.f32 0.0, %v2167
  %v2169 = vpop.f32.mrf.mxu0
  %v2170 = vadd.f32 0.0, %v2169
  %v2171 = vpop.f32.mrf.mxu0
  %v2172 = vadd.f32 0.0, %v2171
  %2173 = vmatprep.mubr.bf16.mxu0 %v354
  %2174 = vmatmul.mubr.bf16.gmra.mxu0 %v353
  %v2175 = vpop.f32.mrf.mxu0
  %v2176 = vadd.f32 0.0, %v2175
  %v2177 = vpop.f32.mrf.mxu0
  %v2178 = vadd.f32 0.0, %v2177
  %v2179 = vpop.f32.mrf.mxu0
  %v2180 = vadd.f32 0.0, %v2179
  %v2181 = vpop.f32.mrf.mxu0
  %v2182 = vadd.f32 0.0, %v2181
  %2183 = vmatprep.mubr.bf16.mxu0 %v356
  %2184 = vmatmul.mubr.bf16.gmra.mxu0 %v355
  %v2185 = vpop.f32.mrf.mxu0
  %v2186 = vadd.f32 0.0, %v2185
  %v2187 = vpop.f32.mrf.mxu0
  %v2188 = vadd.f32 0.0, %v2187
  %v2189 = vpop.f32.mrf.mxu0
  %v2190 = vadd.f32 0.0, %v2189
  %v2191 = vpop.f32.mrf.mxu0
  %v2192 = vadd.f32 0.0, %v2191
  %2193 = vmatprep.mubr.bf16.mxu0 %v358
  %2194 = vmatmul.mubr.bf16.gmra.mxu0 %v357
  %v2195 = vpop.f32.mrf.mxu0
  %v2196 = vadd.f32 0.0, %v2195
  %v2197 = vpop.f32.mrf.mxu0
  %v2198 = vadd.f32 0.0, %v2197
  %v2199 = vpop.f32.mrf.mxu0
  %v2200 = vadd.f32 0.0, %v2199
  %v2201 = vpop.f32.mrf.mxu0
  %v2202 = vadd.f32 0.0, %v2201
  %2203 = vmatprep.mubr.bf16.mxu0 %v360
  %2204 = vmatmul.mubr.bf16.gmra.mxu0 %v359
  %v2205 = vpop.f32.mrf.mxu0
  %v2206 = vadd.f32 0.0, %v2205
  %v2207 = vpop.f32.mrf.mxu0
  %v2208 = vadd.f32 0.0, %v2207
  %v2209 = vpop.f32.mrf.mxu0
  %v2210 = vadd.f32 0.0, %v2209
  %v2211 = vpop.f32.mrf.mxu0
  %v2212 = vadd.f32 0.0, %v2211
  %2213 = vmatprep.mubr.bf16.mxu0 %v362
  %2214 = vmatmul.mubr.bf16.gmra.mxu0 %v361
  %v2215 = vpop.f32.mrf.mxu0
  %v2216 = vadd.f32 0.0, %v2215
  %v2217 = vpop.f32.mrf.mxu0
  %v2218 = vadd.f32 0.0, %v2217
  %v2219 = vpop.f32.mrf.mxu0
  %v2220 = vadd.f32 0.0, %v2219
  %v2221 = vpop.f32.mrf.mxu0
  %v2222 = vadd.f32 0.0, %v2221
  %2223 = vdwg.mxu0
  %2224 = vmatprep.subr.bf16.mxu0 %v1270
  %2225 = vmatpush1.bf16.msra.mxu0 %v1269
  %2226 = vmatprep.subr.bf16.mxu0 %v1254
  %2227 = vmatpush1.bf16.msra.mxu0 %v1253
  %2228 = vmatprep.subr.bf16.mxu0 %v1238
  %2229 = vmatpush1.bf16.msra.mxu0 %v1237
  %2230 = vmatprep.subr.bf16.mxu0 %v1222
  %2231 = vmatpush1.bf16.msra.mxu0 %v1221
  %2232 = vmatprep.subr.bf16.mxu0 %v1206
  %2233 = vmatpush1.bf16.msra.mxu0 %v1205
  %2234 = vmatprep.subr.bf16.mxu0 %v1190
  %2235 = vmatpush1.bf16.msra.mxu0 %v1189
  %2236 = vmatprep.subr.bf16.mxu0 %v1174
  %2237 = vmatpush1.bf16.msra.mxu0 %v1173
  %2238 = vmatprep.subr.bf16.mxu0 %v1158
  %2239 = vmatpush1.bf16.msra.mxu0 %v1157
  %2240 = vmatprep.subr.bf16.mxu0 %v1398
  %2241 = vmatpush2.bf16.msra.mxu0 %v1397
  %2242 = vmatprep.subr.bf16.mxu0 %v1382
  %2243 = vmatpush2.bf16.msra.mxu0 %v1381
  %2244 = vmatprep.subr.bf16.mxu0 %v1366
  %2245 = vmatpush2.bf16.msra.mxu0 %v1365
  %2246 = vmatprep.subr.bf16.mxu0 %v1350
  %2247 = vmatpush2.bf16.msra.mxu0 %v1349
  %2248 = vmatprep.subr.bf16.mxu0 %v1334
  %2249 = vmatpush2.bf16.msra.mxu0 %v1333
  %2250 = vmatprep.subr.bf16.mxu0 %v1318
  %2251 = vmatpush2.bf16.msra.mxu0 %v1317
  %2252 = vmatprep.subr.bf16.mxu0 %v1302
  %2253 = vmatpush2.bf16.msra.mxu0 %v1301
  %2254 = vmatprep.subr.bf16.mxu0 %v1286
  %2255 = vmatpush2.bf16.msra.mxu0 %v1285
  %2256 = vmatprep.mubr.bf16.mxu0 %v348
  %2257 = vmatmul.mubr.bf16.gmra.mxu0 %v347
  %v2258 = vpop.f32.mrf.mxu0
  %v2259 = vadd.f32 0.0, %v2258
  %v2260 = vpop.f32.mrf.mxu0
  %v2261 = vadd.f32 0.0, %v2260
  %v2262 = vpop.f32.mrf.mxu0
  %v2263 = vadd.f32 0.0, %v2262
  %v2264 = vpop.f32.mrf.mxu0
  %v2265 = vadd.f32 0.0, %v2264
  %2266 = vmatprep.mubr.bf16.mxu0 %v350
  %2267 = vmatmul.mubr.bf16.gmra.mxu0 %v349
  %v2268 = vpop.f32.mrf.mxu0
  %v2269 = vadd.f32 0.0, %v2268
  %v2270 = vpop.f32.mrf.mxu0
  %v2271 = vadd.f32 0.0, %v2270
  %v2272 = vpop.f32.mrf.mxu0
  %v2273 = vadd.f32 0.0, %v2272
  %v2274 = vpop.f32.mrf.mxu0
  %v2275 = vadd.f32 0.0, %v2274
  %2276 = vmatprep.mubr.bf16.mxu0 %v352
  %2277 = vmatmul.mubr.bf16.gmra.mxu0 %v351
  %v2278 = vpop.f32.mrf.mxu0
  %v2279 = vadd.f32 0.0, %v2278
  %v2280 = vpop.f32.mrf.mxu0
  %v2281 = vadd.f32 0.0, %v2280
  %v2282 = vpop.f32.mrf.mxu0
  %v2283 = vadd.f32 0.0, %v2282
  %v2284 = vpop.f32.mrf.mxu0
  %v2285 = vadd.f32 0.0, %v2284
  %2286 = vmatprep.mubr.bf16.mxu0 %v354
  %2287 = vmatmul.mubr.bf16.gmra.mxu0 %v353
  %v2288 = vpop.f32.mrf.mxu0
  %v2289 = vadd.f32 0.0, %v2288
  %v2290 = vpop.f32.mrf.mxu0
  %v2291 = vadd.f32 0.0, %v2290
  %v2292 = vpop.f32.mrf.mxu0
  %v2293 = vadd.f32 0.0, %v2292
  %v2294 = vpop.f32.mrf.mxu0
  %v2295 = vadd.f32 0.0, %v2294
  %2296 = vmatprep.mubr.bf16.mxu0 %v356
  %2297 = vmatmul.mubr.bf16.gmra.mxu0 %v355
  %v2298 = vpop.f32.mrf.mxu0
  %v2299 = vadd.f32 0.0, %v2298
  %v2300 = vpop.f32.mrf.mxu0
  %v2301 = vadd.f32 0.0, %v2300
  %v2302 = vpop.f32.mrf.mxu0
  %v2303 = vadd.f32 0.0, %v2302
  %v2304 = vpop.f32.mrf.mxu0
  %v2305 = vadd.f32 0.0, %v2304
  %2306 = vmatprep.mubr.bf16.mxu0 %v358
  %2307 = vmatmul.mubr.bf16.gmra.mxu0 %v357
  %v2308 = vpop.f32.mrf.mxu0
  %v2309 = vadd.f32 0.0, %v2308
  %v2310 = vpop.f32.mrf.mxu0
  %v2311 = vadd.f32 0.0, %v2310
  %v2312 = vpop.f32.mrf.mxu0
  %v2313 = vadd.f32 0.0, %v2312
  %v2314 = vpop.f32.mrf.mxu0
  %v2315 = vadd.f32 0.0, %v2314
  %2316 = vmatprep.mubr.bf16.mxu0 %v360
  %2317 = vmatmul.mubr.bf16.gmra.mxu0 %v359
  %v2318 = vpop.f32.mrf.mxu0
  %v2319 = vadd.f32 0.0, %v2318
  %v2320 = vpop.f32.mrf.mxu0
  %v2321 = vadd.f32 0.0, %v2320
  %v2322 = vpop.f32.mrf.mxu0
  %v2323 = vadd.f32 0.0, %v2322
  %v2324 = vpop.f32.mrf.mxu0
  %v2325 = vadd.f32 0.0, %v2324
  %2326 = vmatprep.mubr.bf16.mxu0 %v362
  %2327 = vmatmul.mubr.bf16.gmra.mxu0 %v361
  %v2328 = vpop.f32.mrf.mxu0
  %v2329 = vadd.f32 0.0, %v2328
  %v2330 = vpop.f32.mrf.mxu0
  %v2331 = vadd.f32 0.0, %v2330
  %v2332 = vpop.f32.mrf.mxu0
  %v2333 = vadd.f32 0.0, %v2332
  %v2334 = vpop.f32.mrf.mxu0
  %v2335 = vadd.f32 0.0, %v2334
  %2336 = vdwg.mxu0
  %2337 = vmatprep.subr.bf16.mxu0 %v1272
  %2338 = vmatpush1.bf16.msra.mxu0 %v1271
  %2339 = vmatprep.subr.bf16.mxu0 %v1256
  %2340 = vmatpush1.bf16.msra.mxu0 %v1255
  %2341 = vmatprep.subr.bf16.mxu0 %v1240
  %2342 = vmatpush1.bf16.msra.mxu0 %v1239
  %2343 = vmatprep.subr.bf16.mxu0 %v1224
  %2344 = vmatpush1.bf16.msra.mxu0 %v1223
  %2345 = vmatprep.subr.bf16.mxu0 %v1208
  %2346 = vmatpush1.bf16.msra.mxu0 %v1207
  %2347 = vmatprep.subr.bf16.mxu0 %v1192
  %2348 = vmatpush1.bf16.msra.mxu0 %v1191
  %2349 = vmatprep.subr.bf16.mxu0 %v1176
  %2350 = vmatpush1.bf16.msra.mxu0 %v1175
  %2351 = vmatprep.subr.bf16.mxu0 %v1160
  %2352 = vmatpush1.bf16.msra.mxu0 %v1159
  %2353 = vmatprep.subr.bf16.mxu0 %v1400
  %2354 = vmatpush2.bf16.msra.mxu0 %v1399
  %2355 = vmatprep.subr.bf16.mxu0 %v1384
  %2356 = vmatpush2.bf16.msra.mxu0 %v1383
  %2357 = vmatprep.subr.bf16.mxu0 %v1368
  %2358 = vmatpush2.bf16.msra.mxu0 %v1367
  %2359 = vmatprep.subr.bf16.mxu0 %v1352
  %2360 = vmatpush2.bf16.msra.mxu0 %v1351
  %2361 = vmatprep.subr.bf16.mxu0 %v1336
  %2362 = vmatpush2.bf16.msra.mxu0 %v1335
  %2363 = vmatprep.subr.bf16.mxu0 %v1320
  %2364 = vmatpush2.bf16.msra.mxu0 %v1319
  %2365 = vmatprep.subr.bf16.mxu0 %v1304
  %2366 = vmatpush2.bf16.msra.mxu0 %v1303
  %2367 = vmatprep.subr.bf16.mxu0 %v1288
  %2368 = vmatpush2.bf16.msra.mxu0 %v1287
  %2369 = vmatprep.mubr.bf16.mxu0 %v348
  %2370 = vmatmul.mubr.bf16.gmra.mxu0 %v347
  %v2371 = vpop.f32.mrf.mxu0
  %v2372 = vadd.f32 0.0, %v2371
  %v2373 = vpop.f32.mrf.mxu0
  %v2374 = vadd.f32 0.0, %v2373
  %v2375 = vpop.f32.mrf.mxu0
  %v2376 = vadd.f32 0.0, %v2375
  %v2377 = vpop.f32.mrf.mxu0
  %v2378 = vadd.f32 0.0, %v2377
  %2379 = vmatprep.mubr.bf16.mxu0 %v350
  %2380 = vmatmul.mubr.bf16.gmra.mxu0 %v349
  %v2381 = vpop.f32.mrf.mxu0
  %v2382 = vadd.f32 0.0, %v2381
  %v2383 = vpop.f32.mrf.mxu0
  %v2384 = vadd.f32 0.0, %v2383
  %v2385 = vpop.f32.mrf.mxu0
  %v2386 = vadd.f32 0.0, %v2385
  %v2387 = vpop.f32.mrf.mxu0
  %v2388 = vadd.f32 0.0, %v2387
  %2389 = vmatprep.mubr.bf16.mxu0 %v352
  %2390 = vmatmul.mubr.bf16.gmra.mxu0 %v351
  %v2391 = vpop.f32.mrf.mxu0
  %v2392 = vadd.f32 0.0, %v2391
  %v2393 = vpop.f32.mrf.mxu0
  %v2394 = vadd.f32 0.0, %v2393
  %v2395 = vpop.f32.mrf.mxu0
  %v2396 = vadd.f32 0.0, %v2395
  %v2397 = vpop.f32.mrf.mxu0
  %v2398 = vadd.f32 0.0, %v2397
  %2399 = vmatprep.mubr.bf16.mxu0 %v354
  %2400 = vmatmul.mubr.bf16.gmra.mxu0 %v353
  %v2401 = vpop.f32.mrf.mxu0
  %v2402 = vadd.f32 0.0, %v2401
  %v2403 = vpop.f32.mrf.mxu0
  %v2404 = vadd.f32 0.0, %v2403
  %v2405 = vpop.f32.mrf.mxu0
  %v2406 = vadd.f32 0.0, %v2405
  %v2407 = vpop.f32.mrf.mxu0
  %v2408 = vadd.f32 0.0, %v2407
  %2409 = vmatprep.mubr.bf16.mxu0 %v356
  %2410 = vmatmul.mubr.bf16.gmra.mxu0 %v355
  %v2411 = vpop.f32.mrf.mxu0
  %v2412 = vadd.f32 0.0, %v2411
  %v2413 = vpop.f32.mrf.mxu0
  %v2414 = vadd.f32 0.0, %v2413
  %v2415 = vpop.f32.mrf.mxu0
  %v2416 = vadd.f32 0.0, %v2415
  %v2417 = vpop.f32.mrf.mxu0
  %v2418 = vadd.f32 0.0, %v2417
  %2419 = vmatprep.mubr.bf16.mxu0 %v358
  %2420 = vmatmul.mubr.bf16.gmra.mxu0 %v357
  %v2421 = vpop.f32.mrf.mxu0
  %v2422 = vadd.f32 0.0, %v2421
  %v2423 = vpop.f32.mrf.mxu0
  %v2424 = vadd.f32 0.0, %v2423
  %v2425 = vpop.f32.mrf.mxu0
  %v2426 = vadd.f32 0.0, %v2425
  %v2427 = vpop.f32.mrf.mxu0
  %v2428 = vadd.f32 0.0, %v2427
  %2429 = vmatprep.mubr.bf16.mxu0 %v360
  %2430 = vmatmul.mubr.bf16.gmra.mxu0 %v359
  %v2431 = vpop.f32.mrf.mxu0
  %v2432 = vadd.f32 0.0, %v2431
  %v2433 = vpop.f32.mrf.mxu0
  %v2434 = vadd.f32 0.0, %v2433
  %v2435 = vpop.f32.mrf.mxu0
  %v2436 = vadd.f32 0.0, %v2435
  %v2437 = vpop.f32.mrf.mxu0
  %v2438 = vadd.f32 0.0, %v2437
  %2439 = vmatprep.mubr.bf16.mxu0 %v362
  %2440 = vmatmul.mubr.bf16.gmra.mxu0 %v361
  %v2441 = vpop.f32.mrf.mxu0
  %v2442 = vadd.f32 0.0, %v2441
  %v2443 = vpop.f32.mrf.mxu0
  %v2444 = vadd.f32 0.0, %v2443
  %v2445 = vpop.f32.mrf.mxu0
  %v2446 = vadd.f32 0.0, %v2445
  %v2447 = vpop.f32.mrf.mxu0
  %v2448 = vadd.f32 0.0, %v2447
  %2449 = vdwg.mxu0
  %2450 = vmatprep.subr.bf16.mxu0 %v1274
  %2451 = vmatpush1.bf16.msra.mxu0 %v1273
  %2452 = vmatprep.subr.bf16.mxu0 %v1258
  %2453 = vmatpush1.bf16.msra.mxu0 %v1257
  %2454 = vmatprep.subr.bf16.mxu0 %v1242
  %2455 = vmatpush1.bf16.msra.mxu0 %v1241
  %2456 = vmatprep.subr.bf16.mxu0 %v1226
  %2457 = vmatpush1.bf16.msra.mxu0 %v1225
  %2458 = vmatprep.subr.bf16.mxu0 %v1210
  %2459 = vmatpush1.bf16.msra.mxu0 %v1209
  %2460 = vmatprep.subr.bf16.mxu0 %v1194
  %2461 = vmatpush1.bf16.msra.mxu0 %v1193
  %2462 = vmatprep.subr.bf16.mxu0 %v1178
  %2463 = vmatpush1.bf16.msra.mxu0 %v1177
  %2464 = vmatprep.subr.bf16.mxu0 %v1162
  %2465 = vmatpush1.bf16.msra.mxu0 %v1161
  %2466 = vmatprep.subr.bf16.mxu0 %v1402
  %2467 = vmatpush2.bf16.msra.mxu0 %v1401
  %2468 = vmatprep.subr.bf16.mxu0 %v1386
  %2469 = vmatpush2.bf16.msra.mxu0 %v1385
  %2470 = vmatprep.subr.bf16.mxu0 %v1370
  %2471 = vmatpush2.bf16.msra.mxu0 %v1369
  %2472 = vmatprep.subr.bf16.mxu0 %v1354
  %2473 = vmatpush2.bf16.msra.mxu0 %v1353
  %2474 = vmatprep.subr.bf16.mxu0 %v1338
  %2475 = vmatpush2.bf16.msra.mxu0 %v1337
  %2476 = vmatprep.subr.bf16.mxu0 %v1322
  %2477 = vmatpush2.bf16.msra.mxu0 %v1321
  %2478 = vmatprep.subr.bf16.mxu0 %v1306
  %2479 = vmatpush2.bf16.msra.mxu0 %v1305
  %2480 = vmatprep.subr.bf16.mxu0 %v1290
  %2481 = vmatpush2.bf16.msra.mxu0 %v1289
  %2482 = vmatprep.mubr.bf16.mxu0 %v348
  %2483 = vmatmul.mubr.bf16.gmra.mxu0 %v347
  %v2484 = vpop.f32.mrf.mxu0
  %v2485 = vadd.f32 0.0, %v2484
  %v2486 = vpop.f32.mrf.mxu0
  %v2487 = vadd.f32 0.0, %v2486
  %v2488 = vpop.f32.mrf.mxu0
  %v2489 = vadd.f32 0.0, %v2488
  %v2490 = vpop.f32.mrf.mxu0
  %v2491 = vadd.f32 0.0, %v2490
  %2492 = vmatprep.mubr.bf16.mxu0 %v350
  %2493 = vmatmul.mubr.bf16.gmra.mxu0 %v349
  %v2494 = vpop.f32.mrf.mxu0
  %v2495 = vadd.f32 0.0, %v2494
  %v2496 = vpop.f32.mrf.mxu0
  %v2497 = vadd.f32 0.0, %v2496
  %v2498 = vpop.f32.mrf.mxu0
  %v2499 = vadd.f32 0.0, %v2498
  %v2500 = vpop.f32.mrf.mxu0
  %v2501 = vadd.f32 0.0, %v2500
  %2502 = vmatprep.mubr.bf16.mxu0 %v352
  %2503 = vmatmul.mubr.bf16.gmra.mxu0 %v351
  %v2504 = vpop.f32.mrf.mxu0
  %v2505 = vadd.f32 0.0, %v2504
  %v2506 = vpop.f32.mrf.mxu0
  %v2507 = vadd.f32 0.0, %v2506
  %v2508 = vpop.f32.mrf.mxu0
  %v2509 = vadd.f32 0.0, %v2508
  %v2510 = vpop.f32.mrf.mxu0
  %v2511 = vadd.f32 0.0, %v2510
  %2512 = vmatprep.mubr.bf16.mxu0 %v354
  %2513 = vmatmul.mubr.bf16.gmra.mxu0 %v353
  %v2514 = vpop.f32.mrf.mxu0
  %v2515 = vadd.f32 0.0, %v2514
  %v2516 = vpop.f32.mrf.mxu0
  %v2517 = vadd.f32 0.0, %v2516
  %v2518 = vpop.f32.mrf.mxu0
  %v2519 = vadd.f32 0.0, %v2518
  %v2520 = vpop.f32.mrf.mxu0
  %v2521 = vadd.f32 0.0, %v2520
  %2522 = vmatprep.mubr.bf16.mxu0 %v356
  %2523 = vmatmul.mubr.bf16.gmra.mxu0 %v355
  %v2524 = vpop.f32.mrf.mxu0
  %v2525 = vadd.f32 0.0, %v2524
  %v2526 = vpop.f32.mrf.mxu0
  %v2527 = vadd.f32 0.0, %v2526
  %v2528 = vpop.f32.mrf.mxu0
  %v2529 = vadd.f32 0.0, %v2528
  %v2530 = vpop.f32.mrf.mxu0
  %v2531 = vadd.f32 0.0, %v2530
  %2532 = vmatprep.mubr.bf16.mxu0 %v358
  %2533 = vmatmul.mubr.bf16.gmra.mxu0 %v357
  %v2534 = vpop.f32.mrf.mxu0
  %v2535 = vadd.f32 0.0, %v2534
  %v2536 = vpop.f32.mrf.mxu0
  %v2537 = vadd.f32 0.0, %v2536
  %v2538 = vpop.f32.mrf.mxu0
  %v2539 = vadd.f32 0.0, %v2538
  %v2540 = vpop.f32.mrf.mxu0
  %v2541 = vadd.f32 0.0, %v2540
  %2542 = vmatprep.mubr.bf16.mxu0 %v360
  %2543 = vmatmul.mubr.bf16.gmra.mxu0 %v359
  %v2544 = vpop.f32.mrf.mxu0
  %v2545 = vadd.f32 0.0, %v2544
  %v2546 = vpop.f32.mrf.mxu0
  %v2547 = vadd.f32 0.0, %v2546
  %v2548 = vpop.f32.mrf.mxu0
  %v2549 = vadd.f32 0.0, %v2548
  %v2550 = vpop.f32.mrf.mxu0
  %v2551 = vadd.f32 0.0, %v2550
  %2552 = vmatprep.mubr.bf16.mxu0 %v362
  %2553 = vmatmul.mubr.bf16.gmra.mxu0 %v361
  %v2554 = vpop.f32.mrf.mxu0
  %v2555 = vadd.f32 0.0, %v2554
  %v2556 = vpop.f32.mrf.mxu0
  %v2557 = vadd.f32 0.0, %v2556
  %v2558 = vpop.f32.mrf.mxu0
  %v2559 = vadd.f32 0.0, %v2558
  %v2560 = vpop.f32.mrf.mxu0
  %v2561 = vadd.f32 0.0, %v2560
  %2562 = vdwg.mxu0
  %v2563 = vmax.f32 %v1694, %v1920
  %v2564 = vmax.f32 %v1696, %v1922
  %v2565 = vmax.f32 %v1807, %v2033
  %v2566 = vmax.f32 %v1809, %v2035
  %v2567 = vmax.f32 %v1698, %v1924
  %v2568 = vmax.f32 %v1700, %v1926
  %v2569 = vmax.f32 %v1811, %v2037
  %v2570 = vmax.f32 %v1813, %v2039
  %v2571 = vmax.f32 %v1704, %v1930
  %v2572 = vmax.f32 %v1706, %v1932
  %v2573 = vmax.f32 %v1817, %v2043
  %v2574 = vmax.f32 %v1819, %v2045
  %v2575 = vmax.f32 %v1708, %v1934
  %v2576 = vmax.f32 %v1710, %v1936
  %v2577 = vmax.f32 %v1821, %v2047
  %v2578 = vmax.f32 %v1823, %v2049
  %v2579 = vmax.f32 %v1714, %v1940
  %v2580 = vmax.f32 %v1716, %v1942
  %v2581 = vmax.f32 %v1827, %v2053
  %v2582 = vmax.f32 %v1829, %v2055
  %v2583 = vmax.f32 %v1718, %v1944
  %v2584 = vmax.f32 %v1720, %v1946
  %v2585 = vmax.f32 %v1831, %v2057
  %v2586 = vmax.f32 %v1833, %v2059
  %v2587 = vmax.f32 %v1724, %v1950
  %v2588 = vmax.f32 %v1726, %v1952
  %v2589 = vmax.f32 %v1837, %v2063
  %v2590 = vmax.f32 %v1839, %v2065
  %v2591 = vmax.f32 %v1728, %v1954
  %v2592 = vmax.f32 %v1730, %v1956
  %v2593 = vmax.f32 %v1841, %v2067
  %v2594 = vmax.f32 %v1843, %v2069
  %v2595 = vmax.f32 %v1734, %v1960
  %v2596 = vmax.f32 %v1736, %v1962
  %v2597 = vmax.f32 %v1847, %v2073
  %v2598 = vmax.f32 %v1849, %v2075
  %v2599 = vmax.f32 %v1738, %v1964
  %v2600 = vmax.f32 %v1740, %v1966
  %v2601 = vmax.f32 %v1851, %v2077
  %v2602 = vmax.f32 %v1853, %v2079
  %v2603 = vmax.f32 %v1744, %v1970
  %v2604 = vmax.f32 %v1746, %v1972
  %v2605 = vmax.f32 %v1857, %v2083
  %v2606 = vmax.f32 %v1859, %v2085
  %v2607 = vmax.f32 %v1748, %v1974
  %v2608 = vmax.f32 %v1750, %v1976
  %v2609 = vmax.f32 %v1861, %v2087
  %v2610 = vmax.f32 %v1863, %v2089
  %v2611 = vmax.f32 %v1754, %v1980
  %v2612 = vmax.f32 %v1756, %v1982
  %v2613 = vmax.f32 %v1867, %v2093
  %v2614 = vmax.f32 %v1869, %v2095
  %v2615 = vmax.f32 %v1758, %v1984
  %v2616 = vmax.f32 %v1760, %v1986
  %v2617 = vmax.f32 %v1871, %v2097
  %v2618 = vmax.f32 %v1873, %v2099
  %v2619 = vmax.f32 %v1764, %v1990
  %v2620 = vmax.f32 %v1766, %v1992
  %v2621 = vmax.f32 %v1877, %v2103
  %v2622 = vmax.f32 %v1879, %v2105
  %v2623 = vmax.f32 %v1768, %v1994
  %v2624 = vmax.f32 %v1770, %v1996
  %v2625 = vmax.f32 %v1881, %v2107
  %v2626 = vmax.f32 %v1883, %v2109
  %v2627 = vmax.f32 %v2146, %v2372
  %v2628 = vmax.f32 %v2148, %v2374
  %v2629 = vmax.f32 %v2259, %v2485
  %v2630 = vmax.f32 %v2261, %v2487
  %v2631 = vmax.f32 %v2150, %v2376
  %v2632 = vmax.f32 %v2152, %v2378
  %v2633 = vmax.f32 %v2263, %v2489
  %v2634 = vmax.f32 %v2265, %v2491
  %v2635 = vmax.f32 %v2156, %v2382
  %v2636 = vmax.f32 %v2158, %v2384
  %v2637 = vmax.f32 %v2269, %v2495
  %v2638 = vmax.f32 %v2271, %v2497
  %v2639 = vmax.f32 %v2160, %v2386
  %v2640 = vmax.f32 %v2162, %v2388
  %v2641 = vmax.f32 %v2273, %v2499
  %v2642 = vmax.f32 %v2275, %v2501
  %v2643 = vmax.f32 %v2166, %v2392
  %v2644 = vmax.f32 %v2168, %v2394
  %v2645 = vmax.f32 %v2279, %v2505
  %v2646 = vmax.f32 %v2281, %v2507
  %v2647 = vmax.f32 %v2170, %v2396
  %v2648 = vmax.f32 %v2172, %v2398
  %v2649 = vmax.f32 %v2283, %v2509
  %v2650 = vmax.f32 %v2285, %v2511
  %v2651 = vmax.f32 %v2176, %v2402
  %v2652 = vmax.f32 %v2178, %v2404
  %v2653 = vmax.f32 %v2289, %v2515
  %v2654 = vmax.f32 %v2291, %v2517
  %v2655 = vmax.f32 %v2180, %v2406
  %v2656 = vmax.f32 %v2182, %v2408
  %v2657 = vmax.f32 %v2293, %v2519
  %v2658 = vmax.f32 %v2295, %v2521
  %v2659 = vmax.f32 %v2186, %v2412
  %v2660 = vmax.f32 %v2188, %v2414
  %v2661 = vmax.f32 %v2299, %v2525
  %v2662 = vmax.f32 %v2301, %v2527
  %v2663 = vmax.f32 %v2190, %v2416
  %v2664 = vmax.f32 %v2192, %v2418
  %v2665 = vmax.f32 %v2303, %v2529
  %v2666 = vmax.f32 %v2305, %v2531
  %v2667 = vmax.f32 %v2196, %v2422
  %v2668 = vmax.f32 %v2198, %v2424
  %v2669 = vmax.f32 %v2309, %v2535
  %v2670 = vmax.f32 %v2311, %v2537
  %v2671 = vmax.f32 %v2200, %v2426
  %v2672 = vmax.f32 %v2202, %v2428
  %v2673 = vmax.f32 %v2313, %v2539
  %v2674 = vmax.f32 %v2315, %v2541
  %v2675 = vmax.f32 %v2206, %v2432
  %v2676 = vmax.f32 %v2208, %v2434
  %v2677 = vmax.f32 %v2319, %v2545
  %v2678 = vmax.f32 %v2321, %v2547
  %v2679 = vmax.f32 %v2210, %v2436
  %v2680 = vmax.f32 %v2212, %v2438
  %v2681 = vmax.f32 %v2323, %v2549
  %v2682 = vmax.f32 %v2325, %v2551
  %v2683 = vmax.f32 %v2216, %v2442
  %v2684 = vmax.f32 %v2218, %v2444
  %v2685 = vmax.f32 %v2329, %v2555
  %v2686 = vmax.f32 %v2331, %v2557
  %v2687 = vmax.f32 %v2220, %v2446
  %v2688 = vmax.f32 %v2222, %v2448
  %v2689 = vmax.f32 %v2333, %v2559
  %v2690 = vmax.f32 %v2335, %v2561
  %v2691 = vmax.f32 %v2563, %v2627
  %v2692 = vmax.f32 %v2564, %v2628
  %v2693 = vmax.f32 %v2565, %v2629
  %v2694 = vmax.f32 %v2566, %v2630
  %v2695 = vmax.f32 %v2567, %v2631
  %v2696 = vmax.f32 %v2568, %v2632
  %v2697 = vmax.f32 %v2569, %v2633
  %v2698 = vmax.f32 %v2570, %v2634
  %v2699 = vmax.f32 %v2571, %v2635
  %v2700 = vmax.f32 %v2572, %v2636
  %v2701 = vmax.f32 %v2573, %v2637
  %v2702 = vmax.f32 %v2574, %v2638
  %v2703 = vmax.f32 %v2575, %v2639
  %v2704 = vmax.f32 %v2576, %v2640
  %v2705 = vmax.f32 %v2577, %v2641
  %v2706 = vmax.f32 %v2578, %v2642
  %v2707 = vmax.f32 %v2579, %v2643
  %v2708 = vmax.f32 %v2580, %v2644
  %v2709 = vmax.f32 %v2581, %v2645
  %v2710 = vmax.f32 %v2582, %v2646
  %v2711 = vmax.f32 %v2583, %v2647
  %v2712 = vmax.f32 %v2584, %v2648
  %v2713 = vmax.f32 %v2585, %v2649
  %v2714 = vmax.f32 %v2586, %v2650
  %v2715 = vmax.f32 %v2587, %v2651
  %v2716 = vmax.f32 %v2588, %v2652
  %v2717 = vmax.f32 %v2589, %v2653
  %v2718 = vmax.f32 %v2590, %v2654
  %v2719 = vmax.f32 %v2591, %v2655
  %v2720 = vmax.f32 %v2592, %v2656
  %v2721 = vmax.f32 %v2593, %v2657
  %v2722 = vmax.f32 %v2594, %v2658
  %v2723 = vmax.f32 %v2595, %v2659
  %v2724 = vmax.f32 %v2596, %v2660
  %v2725 = vmax.f32 %v2597, %v2661
  %v2726 = vmax.f32 %v2598, %v2662
  %v2727 = vmax.f32 %v2599, %v2663
  %v2728 = vmax.f32 %v2600, %v2664
  %v2729 = vmax.f32 %v2601, %v2665
  %v2730 = vmax.f32 %v2602, %v2666
  %v2731 = vmax.f32 %v2603, %v2667
  %v2732 = vmax.f32 %v2604, %v2668
  %v2733 = vmax.f32 %v2605, %v2669
  %v2734 = vmax.f32 %v2606, %v2670
  %v2735 = vmax.f32 %v2607, %v2671
  %v2736 = vmax.f32 %v2608, %v2672
  %v2737 = vmax.f32 %v2609, %v2673
  %v2738 = vmax.f32 %v2610, %v2674
  %v2739 = vmax.f32 %v2611, %v2675
  %v2740 = vmax.f32 %v2612, %v2676
  %v2741 = vmax.f32 %v2613, %v2677
  %v2742 = vmax.f32 %v2614, %v2678
  %v2743 = vmax.f32 %v2615, %v2679
  %v2744 = vmax.f32 %v2616, %v2680
  %v2745 = vmax.f32 %v2617, %v2681
  %v2746 = vmax.f32 %v2618, %v2682
  %v2747 = vmax.f32 %v2619, %v2683
  %v2748 = vmax.f32 %v2620, %v2684
  %v2749 = vmax.f32 %v2621, %v2685
  %v2750 = vmax.f32 %v2622, %v2686
  %v2751 = vmax.f32 %v2623, %v2687
  %v2752 = vmax.f32 %v2624, %v2688
  %v2753 = vmax.f32 %v2625, %v2689
  %v2754 = vmax.f32 %v2626, %v2690
  %v2755 = vld [vmem:[%s2] sm:$0xf]
  %v2757 = vlaneseq
  %v2758 = vshrl.u32 %v2757, 7
  %v2759 = vsub.s32 0, %v2758
  %v2760 = vrot.slane %v2755, %v2759
  %v2761 = vlaneseq
  %v2762 = vshrl.u32 %v2761, 7
  %v2763 = vsub.s32 1, %v2762
  %v2764 = vrot.slane %v2755, %v2763
  %v2765 = vlaneseq
  %v2766 = vshrl.u32 %v2765, 7
  %v2767 = vsub.s32 2, %v2766
  %v2768 = vrot.slane %v2755, %v2767
  %v2769 = vlaneseq
  %v2770 = vshrl.u32 %v2769, 7
  %v2771 = vsub.s32 3, %v2770
  %v2772 = vrot.slane %v2755, %v2771
  %v2777 = vadd.f32 %v2691, %v2760
  %v2778 = vadd.f32 %v2692, %v2764
  %v2779 = vadd.f32 %v2693, %v2768
  %v2780 = vadd.f32 %v2694, %v2772
  %v2781 = vadd.f32 %v2695, %v2760
  %v2782 = vadd.f32 %v2696, %v2764
  %v2783 = vadd.f32 %v2697, %v2768
  %v2784 = vadd.f32 %v2698, %v2772
  %v2785 = vadd.f32 %v2699, %v2760
  %v2786 = vadd.f32 %v2700, %v2764
  %v2787 = vadd.f32 %v2701, %v2768
  %v2788 = vadd.f32 %v2702, %v2772
  %v2789 = vadd.f32 %v2703, %v2760
  %v2790 = vadd.f32 %v2704, %v2764
  %v2791 = vadd.f32 %v2705, %v2768
  %v2792 = vadd.f32 %v2706, %v2772
  %v2793 = vadd.f32 %v2707, %v2760
  %v2794 = vadd.f32 %v2708, %v2764
  %v2795 = vadd.f32 %v2709, %v2768
  %v2796 = vadd.f32 %v2710, %v2772
  %v2797 = vadd.f32 %v2711, %v2760
  %v2798 = vadd.f32 %v2712, %v2764
  %v2799 = vadd.f32 %v2713, %v2768
  %v2800 = vadd.f32 %v2714, %v2772
  %v2801 = vadd.f32 %v2715, %v2760
  %v2802 = vadd.f32 %v2716, %v2764
  %v2803 = vadd.f32 %v2717, %v2768
  %v2804 = vadd.f32 %v2718, %v2772
  %v2805 = vadd.f32 %v2719, %v2760
  %v2806 = vadd.f32 %v2720, %v2764
  %v2807 = vadd.f32 %v2721, %v2768
  %v2808 = vadd.f32 %v2722, %v2772
  %v2809 = vadd.f32 %v2723, %v2760
  %v2810 = vadd.f32 %v2724, %v2764
  %v2811 = vadd.f32 %v2725, %v2768
  %v2812 = vadd.f32 %v2726, %v2772
  %v2813 = vadd.f32 %v2727, %v2760
  %v2814 = vadd.f32 %v2728, %v2764
  %v2815 = vadd.f32 %v2729, %v2768
  %v2816 = vadd.f32 %v2730, %v2772
  %v2817 = vadd.f32 %v2731, %v2760
  %v2818 = vadd.f32 %v2732, %v2764
  %v2819 = vadd.f32 %v2733, %v2768
  %v2820 = vadd.f32 %v2734, %v2772
  %v2821 = vadd.f32 %v2735, %v2760
  %v2822 = vadd.f32 %v2736, %v2764
  %v2823 = vadd.f32 %v2737, %v2768
  %v2824 = vadd.f32 %v2738, %v2772
  %v2825 = vadd.f32 %v2739, %v2760
  %v2826 = vadd.f32 %v2740, %v2764
  %v2827 = vadd.f32 %v2741, %v2768
  %v2828 = vadd.f32 %v2742, %v2772
  %v2829 = vadd.f32 %v2743, %v2760
  %v2830 = vadd.f32 %v2744, %v2764
  %v2831 = vadd.f32 %v2745, %v2768
  %v2832 = vadd.f32 %v2746, %v2772
  %v2833 = vadd.f32 %v2747, %v2760
  %v2834 = vadd.f32 %v2748, %v2764
  %v2835 = vadd.f32 %v2749, %v2768
  %v2836 = vadd.f32 %v2750, %v2772
  %v2837 = vadd.f32 %v2751, %v2760
  %v2838 = vadd.f32 %v2752, %v2764
  %v2839 = vadd.f32 %v2753, %v2768
  %v2840 = vadd.f32 %v2754, %v2772
  %v2841 = vtanh.pop %v2777
  %v2842 = vtanh.pop %v2778
  %v2843 = vtanh.pop %v2779
  %v2844 = vtanh.pop %v2780
  %v2845 = vtanh.pop %v2781
  %v2846 = vtanh.pop %v2782
  %v2847 = vtanh.pop %v2783
  %v2848 = vtanh.pop %v2784
  %v2849 = vtanh.pop %v2785
  %v2850 = vtanh.pop %v2786
  %v2851 = vtanh.pop %v2787
  %v2852 = vtanh.pop %v2788
  %v2853 = vtanh.pop %v2789
  %v2854 = vtanh.pop %v2790
  %v2855 = vtanh.pop %v2791
  %v2856 = vtanh.pop %v2792
  %v2857 = vtanh.pop %v2793
  %v2858 = vtanh.pop %v2794
  %v2859 = vtanh.pop %v2795
  %v2860 = vtanh.pop %v2796
  %v2861 = vtanh.pop %v2797
  %v2862 = vtanh.pop %v2798
  %v2863 = vtanh.pop %v2799
  %v2864 = vtanh.pop %v2800
  %v2865 = vtanh.pop %v2801
  %v2866 = vtanh.pop %v2802
  %v2867 = vtanh.pop %v2803
  %v2868 = vtanh.pop %v2804
  %v2869 = vtanh.pop %v2805
  %v2870 = vtanh.pop %v2806
  %v2871 = vtanh.pop %v2807
  %v2872 = vtanh.pop %v2808
  %v2873 = vtanh.pop %v2809
  %v2874 = vtanh.pop %v2810
  %v2875 = vtanh.pop %v2811
  %v2876 = vtanh.pop %v2812
  %v2877 = vtanh.pop %v2813
  %v2878 = vtanh.pop %v2814
  %v2879 = vtanh.pop %v2815
  %v2880 = vtanh.pop %v2816
  %v2881 = vtanh.pop %v2817
  %v2882 = vtanh.pop %v2818
  %v2883 = vtanh.pop %v2819
  %v2884 = vtanh.pop %v2820
  %v2885 = vtanh.pop %v2821
  %v2886 = vtanh.pop %v2822
  %v2887 = vtanh.pop %v2823
  %v2888 = vtanh.pop %v2824
  %v2889 = vtanh.pop %v2825
  %v2890 = vtanh.pop %v2826
  %v2891 = vtanh.pop %v2827
  %v2892 = vtanh.pop %v2828
  %v2893 = vtanh.pop %v2829
  %v2894 = vtanh.pop %v2830
  %v2895 = vtanh.pop %v2831
  %v2896 = vtanh.pop %v2832
  %v2897 = vtanh.pop %v2833
  %v2898 = vtanh.pop %v2834
  %v2899 = vtanh.pop %v2835
  %v2900 = vtanh.pop %v2836
  %v2901 = vtanh.pop %v2837
  %v2902 = vtanh.pop %v2838
  %v2903 = vtanh.pop %v2839
  %v2904 = vtanh.pop %v2840
  %v2905 = vpack.c.bf16 %v2845, %v2841
  %v2906 = vpack.c.bf16 %v2846, %v2842
  %v2907 = vpack.c.bf16 %v2847, %v2843
  %v2908 = vpack.c.bf16 %v2848, %v2844
  %v2909 = vpack.c.bf16 %v2853, %v2849
  %v2910 = vpack.c.bf16 %v2854, %v2850
  %v2911 = vpack.c.bf16 %v2855, %v2851
  %v2912 = vpack.c.bf16 %v2856, %v2852
  %v2913 = vpack.c.bf16 %v2861, %v2857
  %v2914 = vpack.c.bf16 %v2862, %v2858
  %v2915 = vpack.c.bf16 %v2863, %v2859
  %v2916 = vpack.c.bf16 %v2864, %v2860
  %v2917 = vpack.c.bf16 %v2869, %v2865
  %v2918 = vpack.c.bf16 %v2870, %v2866
  %v2919 = vpack.c.bf16 %v2871, %v2867
  %v2920 = vpack.c.bf16 %v2872, %v2868
  %v2921 = vpack.c.bf16 %v2877, %v2873
  %v2922 = vpack.c.bf16 %v2878, %v2874
  %v2923 = vpack.c.bf16 %v2879, %v2875
  %v2924 = vpack.c.bf16 %v2880, %v2876
  %v2925 = vpack.c.bf16 %v2885, %v2881
  %v2926 = vpack.c.bf16 %v2886, %v2882
  %v2927 = vpack.c.bf16 %v2887, %v2883
  %v2928 = vpack.c.bf16 %v2888, %v2884
  %v2929 = vpack.c.bf16 %v2893, %v2889
  %v2930 = vpack.c.bf16 %v2894, %v2890
  %v2931 = vpack.c.bf16 %v2895, %v2891
  %v2932 = vpack.c.bf16 %v2896, %v2892
  %v2933 = vpack.c.bf16 %v2901, %v2897
  %v2934 = vpack.c.bf16 %v2902, %v2898
  %v2935 = vpack.c.bf16 %v2903, %v2899
  %v2936 = vpack.c.bf16 %v2904, %v2900
  %v2969 = vunpack.c.l.b16 %v2905
  %v2970 = vunpack.c.l.b16 %v2906
  %v2971 = vunpack.c.l.b16 %v2907
  %v2972 = vunpack.c.l.b16 %v2908
  %v2973 = vunpack.c.l.b16 %v2909
  %v2974 = vunpack.c.l.b16 %v2910
  %v2975 = vunpack.c.l.b16 %v2911
  %v2976 = vunpack.c.l.b16 %v2912
  %v2977 = vunpack.c.l.b16 %v2913
  %v2978 = vunpack.c.l.b16 %v2914
  %v2979 = vunpack.c.l.b16 %v2915
  %v2980 = vunpack.c.l.b16 %v2916
  %v2981 = vunpack.c.l.b16 %v2917
  %v2982 = vunpack.c.l.b16 %v2918
  %v2983 = vunpack.c.l.b16 %v2919
  %v2984 = vunpack.c.l.b16 %v2920
  %v2985 = vunpack.c.l.b16 %v2921
  %v2986 = vunpack.c.l.b16 %v2922
  %v2987 = vunpack.c.l.b16 %v2923
  %v2988 = vunpack.c.l.b16 %v2924
  %v2989 = vunpack.c.l.b16 %v2925
  %v2990 = vunpack.c.l.b16 %v2926
  %v2991 = vunpack.c.l.b16 %v2927
  %v2992 = vunpack.c.l.b16 %v2928
  %v2993 = vunpack.c.l.b16 %v2929
  %v2994 = vunpack.c.l.b16 %v2930
  %v2995 = vunpack.c.l.b16 %v2931
  %v2996 = vunpack.c.l.b16 %v2932
  %v2997 = vunpack.c.l.b16 %v2933
  %v2998 = vunpack.c.l.b16 %v2934
  %v2999 = vunpack.c.l.b16 %v2935
  %v3000 = vunpack.c.l.b16 %v2936
  %v3001 = vld [vmem:[%s3] sm:$0xff]
  %v3002 = vld [vmem:[%s3 + $0x8] sm:$0xff]
  %v3003 = vld [vmem:[%s3 + $0x10] sm:$0xff]
  %v3004 = vld [vmem:[%s3 + $0x18] sm:$0xff]
  %v3005 = vld [vmem:[%s3 + $0x20] sm:$0xff]
  %v3006 = vld [vmem:[%s3 + $0x28] sm:$0xff]
  %v3007 = vld [vmem:[%s3 + $0x30] sm:$0xff]
  %v3008 = vld [vmem:[%s3 + $0x38] sm:$0xff]
  %v3009 = vld [vmem:[%s3 + $0x40] sm:$0xff]
  %v3010 = vld [vmem:[%s3 + $0x48] sm:$0xff]
  %v3011 = vld [vmem:[%s3 + $0x50] sm:$0xff]
  %v3012 = vld [vmem:[%s3 + $0x58] sm:$0xff]
  %v3013 = vld [vmem:[%s3 + $0x60] sm:$0xff]
  %v3014 = vld [vmem:[%s3 + $0x68] sm:$0xff]
  %v3015 = vld [vmem:[%s3 + $0x70] sm:$0xff]
  %v3016 = vld [vmem:[%s3 + $0x78] sm:$0xff]
  %v3017 = vld [vmem:[%s3 + $0x80] sm:$0xff]
  %v3018 = vld [vmem:[%s3 + $0x88] sm:$0xff]
  %v3019 = vld [vmem:[%s3 + $0x90] sm:$0xff]
  %v3020 = vld [vmem:[%s3 + $0x98] sm:$0xff]
  %v3021 = vld [vmem:[%s3 + $0xa0] sm:$0xff]
  %v3022 = vld [vmem:[%s3 + $0xa8] sm:$0xff]
  %v3023 = vld [vmem:[%s3 + $0xb0] sm:$0xff]
  %v3024 = vld [vmem:[%s3 + $0xb8] sm:$0xff]
  %v3025 = vld [vmem:[%s3 + $0xc0] sm:$0xff]
  %v3026 = vld [vmem:[%s3 + $0xc8] sm:$0xff]
  %v3027 = vld [vmem:[%s3 + $0xd0] sm:$0xff]
  %v3028 = vld [vmem:[%s3 + $0xd8] sm:$0xff]
  %v3029 = vld [vmem:[%s3 + $0xe0] sm:$0xff]
  %v3030 = vld [vmem:[%s3 + $0xe8] sm:$0xff]
  %v3031 = vld [vmem:[%s3 + $0xf0] sm:$0xff]
  %v3032 = vld [vmem:[%s3 + $0xf8] sm:$0xff]
  %v3033 = vld [vmem:[%s3 + $0x100] sm:$0xff]
  %v3034 = vld [vmem:[%s3 + $0x108] sm:$0xff]
  %v3035 = vld [vmem:[%s3 + $0x110] sm:$0xff]
  %v3036 = vld [vmem:[%s3 + $0x118] sm:$0xff]
  %v3037 = vld [vmem:[%s3 + $0x120] sm:$0xff]
  %v3038 = vld [vmem:[%s3 + $0x128] sm:$0xff]
  %v3039 = vld [vmem:[%s3 + $0x130] sm:$0xff]
  %v3040 = vld [vmem:[%s3 + $0x138] sm:$0xff]
  %v3041 = vld [vmem:[%s3 + $0x140] sm:$0xff]
  %v3042 = vld [vmem:[%s3 + $0x148] sm:$0xff]
  %v3043 = vld [vmem:[%s3 + $0x150] sm:$0xff]
  %v3044 = vld [vmem:[%s3 + $0x158] sm:$0xff]
  %v3045 = vld [vmem:[%s3 + $0x160] sm:$0xff]
  %v3046 = vld [vmem:[%s3 + $0x168] sm:$0xff]
  %v3047 = vld [vmem:[%s3 + $0x170] sm:$0xff]
  %v3048 = vld [vmem:[%s3 + $0x178] sm:$0xff]
  %v3049 = vld [vmem:[%s3 + $0x180] sm:$0xff]
  %v3050 = vld [vmem:[%s3 + $0x188] sm:$0xff]
  %v3051 = vld [vmem:[%s3 + $0x190] sm:$0xff]
  %v3052 = vld [vmem:[%s3 + $0x198] sm:$0xff]
  %v3053 = vld [vmem:[%s3 + $0x1a0] sm:$0xff]
  %v3054 = vld [vmem:[%s3 + $0x1a8] sm:$0xff]
  %v3055 = vld [vmem:[%s3 + $0x1b0] sm:$0xff]
  %v3056 = vld [vmem:[%s3 + $0x1b8] sm:$0xff]
  %v3057 = vld [vmem:[%s3 + $0x1c0] sm:$0xff]
  %v3058 = vld [vmem:[%s3 + $0x1c8] sm:$0xff]
  %v3059 = vld [vmem:[%s3 + $0x1d0] sm:$0xff]
  %v3060 = vld [vmem:[%s3 + $0x1d8] sm:$0xff]
  %v3061 = vld [vmem:[%s3 + $0x1e0] sm:$0xff]
  %v3062 = vld [vmem:[%s3 + $0x1e8] sm:$0xff]
  %v3063 = vld [vmem:[%s3 + $0x1f0] sm:$0xff]
  %v3064 = vld [vmem:[%s3 + $0x1f8] sm:$0xff]
  %v3065 = vld [vmem:[%s3 + $0x200] sm:$0xff]
  %v3066 = vld [vmem:[%s3 + $0x208] sm:$0xff]
  %v3067 = vld [vmem:[%s3 + $0x210] sm:$0xff]
  %v3068 = vld [vmem:[%s3 + $0x218] sm:$0xff]
  %v3069 = vld [vmem:[%s3 + $0x220] sm:$0xff]
  %v3070 = vld [vmem:[%s3 + $0x228] sm:$0xff]
  %v3071 = vld [vmem:[%s3 + $0x230] sm:$0xff]
  %v3072 = vld [vmem:[%s3 + $0x238] sm:$0xff]
  %v3073 = vld [vmem:[%s3 + $0x240] sm:$0xff]
  %v3074 = vld [vmem:[%s3 + $0x248] sm:$0xff]
  %v3075 = vld [vmem:[%s3 + $0x250] sm:$0xff]
  %v3076 = vld [vmem:[%s3 + $0x258] sm:$0xff]
  %v3077 = vld [vmem:[%s3 + $0x260] sm:$0xff]
  %v3078 = vld [vmem:[%s3 + $0x268] sm:$0xff]
  %v3079 = vld [vmem:[%s3 + $0x270] sm:$0xff]
  %v3080 = vld [vmem:[%s3 + $0x278] sm:$0xff]
  %v3081 = vld [vmem:[%s3 + $0x280] sm:$0xff]
  %v3082 = vld [vmem:[%s3 + $0x288] sm:$0xff]
  %v3083 = vld [vmem:[%s3 + $0x290] sm:$0xff]
  %v3084 = vld [vmem:[%s3 + $0x298] sm:$0xff]
  %v3085 = vld [vmem:[%s3 + $0x2a0] sm:$0xff]
  %v3086 = vld [vmem:[%s3 + $0x2a8] sm:$0xff]
  %v3087 = vld [vmem:[%s3 + $0x2b0] sm:$0xff]
  %v3088 = vld [vmem:[%s3 + $0x2b8] sm:$0xff]
  %v3089 = vld [vmem:[%s3 + $0x2c0] sm:$0xff]
  %v3090 = vld [vmem:[%s3 + $0x2c8] sm:$0xff]
  %v3091 = vld [vmem:[%s3 + $0x2d0] sm:$0xff]
  %v3092 = vld [vmem:[%s3 + $0x2d8] sm:$0xff]
  %v3093 = vld [vmem:[%s3 + $0x2e0] sm:$0xff]
  %v3094 = vld [vmem:[%s3 + $0x2e8] sm:$0xff]
  %v3095 = vld [vmem:[%s3 + $0x2f0] sm:$0xff]
  %v3096 = vld [vmem:[%s3 + $0x2f8] sm:$0xff]
  %v3097 = vld [vmem:[%s3 + $0x300] sm:$0xff]
  %v3098 = vld [vmem:[%s3 + $0x308] sm:$0xff]
  %v3099 = vld [vmem:[%s3 + $0x310] sm:$0xff]
  %v3100 = vld [vmem:[%s3 + $0x318] sm:$0xff]
  %v3101 = vld [vmem:[%s3 + $0x320] sm:$0xff]
  %v3102 = vld [vmem:[%s3 + $0x328] sm:$0xff]
  %v3103 = vld [vmem:[%s3 + $0x330] sm:$0xff]
  %v3104 = vld [vmem:[%s3 + $0x338] sm:$0xff]
  %v3105 = vld [vmem:[%s3 + $0x340] sm:$0xff]
  %v3106 = vld [vmem:[%s3 + $0x348] sm:$0xff]
  %v3107 = vld [vmem:[%s3 + $0x350] sm:$0xff]
  %v3108 = vld [vmem:[%s3 + $0x358] sm:$0xff]
  %v3109 = vld [vmem:[%s3 + $0x360] sm:$0xff]
  %v3110 = vld [vmem:[%s3 + $0x368] sm:$0xff]
  %v3111 = vld [vmem:[%s3 + $0x370] sm:$0xff]
  %v3112 = vld [vmem:[%s3 + $0x378] sm:$0xff]
  %v3113 = vld [vmem:[%s3 + $0x380] sm:$0xff]
  %v3114 = vld [vmem:[%s3 + $0x388] sm:$0xff]
  %v3115 = vld [vmem:[%s3 + $0x390] sm:$0xff]
  %v3116 = vld [vmem:[%s3 + $0x398] sm:$0xff]
  %v3117 = vld [vmem:[%s3 + $0x3a0] sm:$0xff]
  %v3118 = vld [vmem:[%s3 + $0x3a8] sm:$0xff]
  %v3119 = vld [vmem:[%s3 + $0x3b0] sm:$0xff]
  %v3120 = vld [vmem:[%s3 + $0x3b8] sm:$0xff]
  %v3121 = vld [vmem:[%s3 + $0x3c0] sm:$0xff]
  %v3122 = vld [vmem:[%s3 + $0x3c8] sm:$0xff]
  %v3123 = vld [vmem:[%s3 + $0x3d0] sm:$0xff]
  %v3124 = vld [vmem:[%s3 + $0x3d8] sm:$0xff]
  %v3125 = vld [vmem:[%s3 + $0x3e0] sm:$0xff]
  %v3126 = vld [vmem:[%s3 + $0x3e8] sm:$0xff]
  %v3127 = vld [vmem:[%s3 + $0x3f0] sm:$0xff]
  %v3128 = vld [vmem:[%s3 + $0x3f8] sm:$0xff]
  %v3129 = vpack.c.b16 %v2973, %v2969
  %v3130 = vpack.c.b16 %v2974, %v2970
  %v3131 = vpack.c.b16 %v2975, %v2971
  %v3132 = vpack.c.b16 %v2976, %v2972
  %v3133 = vpack.c.b16 %v2981, %v2977
  %v3134 = vpack.c.b16 %v2982, %v2978
  %v3135 = vpack.c.b16 %v2983, %v2979
  %v3136 = vpack.c.b16 %v2984, %v2980
  %v3137 = vpack.c.b16 %v2989, %v2985
  %v3138 = vpack.c.b16 %v2990, %v2986
  %v3139 = vpack.c.b16 %v2991, %v2987
  %v3140 = vpack.c.b16 %v2992, %v2988
  %v3141 = vpack.c.b16 %v2997, %v2993
  %v3142 = vpack.c.b16 %v2998, %v2994
  %v3143 = vpack.c.b16 %v2999, %v2995
  %v3144 = vpack.c.b16 %v3000, %v2996
  %v3289 = vunpack.c.l.b16 %v3001
  %v3290 = vunpack.c.h.b16 %v3001
  %v3291 = vunpack.c.l.b16 %v3002
  %v3292 = vunpack.c.h.b16 %v3002
  %v3293 = vunpack.c.l.b16 %v3003
  %v3294 = vunpack.c.h.b16 %v3003
  %v3295 = vunpack.c.l.b16 %v3004
  %v3296 = vunpack.c.h.b16 %v3004
  %v3297 = vunpack.c.l.b16 %v3005
  %v3298 = vunpack.c.h.b16 %v3005
  %v3299 = vunpack.c.l.b16 %v3006
  %v3300 = vunpack.c.h.b16 %v3006
  %v3301 = vunpack.c.l.b16 %v3007
  %v3302 = vunpack.c.h.b16 %v3007
  %v3303 = vunpack.c.l.b16 %v3008
  %v3304 = vunpack.c.h.b16 %v3008
  %v3305 = vunpack.c.l.b16 %v3009
  %v3306 = vunpack.c.h.b16 %v3009
  %v3307 = vunpack.c.l.b16 %v3010
  %v3308 = vunpack.c.h.b16 %v3010
  %v3309 = vunpack.c.l.b16 %v3011
  %v3310 = vunpack.c.h.b16 %v3011
  %v3311 = vunpack.c.l.b16 %v3012
  %v3312 = vunpack.c.h.b16 %v3012
  %v3313 = vunpack.c.l.b16 %v3013
  %v3314 = vunpack.c.h.b16 %v3013
  %v3315 = vunpack.c.l.b16 %v3014
  %v3316 = vunpack.c.h.b16 %v3014
  %v3317 = vunpack.c.l.b16 %v3015
  %v3318 = vunpack.c.h.b16 %v3015
  %v3319 = vunpack.c.l.b16 %v3016
  %v3320 = vunpack.c.h.b16 %v3016
  %v3321 = vunpack.c.l.b16 %v3017
  %v3322 = vunpack.c.h.b16 %v3017
  %v3323 = vunpack.c.l.b16 %v3018
  %v3324 = vunpack.c.h.b16 %v3018
  %v3325 = vunpack.c.l.b16 %v3019
  %v3326 = vunpack.c.h.b16 %v3019
  %v3327 = vunpack.c.l.b16 %v3020
  %v3328 = vunpack.c.h.b16 %v3020
  %v3329 = vunpack.c.l.b16 %v3021
  %v3330 = vunpack.c.h.b16 %v3021
  %v3331 = vunpack.c.l.b16 %v3022
  %v3332 = vunpack.c.h.b16 %v3022
  %v3333 = vunpack.c.l.b16 %v3023
  %v3334 = vunpack.c.h.b16 %v3023
  %v3335 = vunpack.c.l.b16 %v3024
  %v3336 = vunpack.c.h.b16 %v3024
  %v3337 = vunpack.c.l.b16 %v3025
  %v3338 = vunpack.c.h.b16 %v3025
  %v3339 = vunpack.c.l.b16 %v3026
  %v3340 = vunpack.c.h.b16 %v3026
  %v3341 = vunpack.c.l.b16 %v3027
  %v3342 = vunpack.c.h.b16 %v3027
  %v3343 = vunpack.c.l.b16 %v3028
  %v3344 = vunpack.c.h.b16 %v3028
  %v3345 = vunpack.c.l.b16 %v3029
  %v3346 = vunpack.c.h.b16 %v3029
  %v3347 = vunpack.c.l.b16 %v3030
  %v3348 = vunpack.c.h.b16 %v3030
  %v3349 = vunpack.c.l.b16 %v3031
  %v3350 = vunpack.c.h.b16 %v3031
  %v3351 = vunpack.c.l.b16 %v3032
  %v3352 = vunpack.c.h.b16 %v3032
  %v3353 = vunpack.c.l.b16 %v3033
  %v3354 = vunpack.c.h.b16 %v3033
  %v3355 = vunpack.c.l.b16 %v3034
  %v3356 = vunpack.c.h.b16 %v3034
  %v3357 = vunpack.c.l.b16 %v3035
  %v3358 = vunpack.c.h.b16 %v3035
  %v3359 = vunpack.c.l.b16 %v3036
  %v3360 = vunpack.c.h.b16 %v3036
  %v3361 = vunpack.c.l.b16 %v3037
  %v3362 = vunpack.c.h.b16 %v3037
  %v3363 = vunpack.c.l.b16 %v3038
  %v3364 = vunpack.c.h.b16 %v3038
  %v3365 = vunpack.c.l.b16 %v3039
  %v3366 = vunpack.c.h.b16 %v3039
  %v3367 = vunpack.c.l.b16 %v3040
  %v3368 = vunpack.c.h.b16 %v3040
  %v3369 = vunpack.c.l.b16 %v3041
  %v3370 = vunpack.c.h.b16 %v3041
  %v3371 = vunpack.c.l.b16 %v3042
  %v3372 = vunpack.c.h.b16 %v3042
  %v3373 = vunpack.c.l.b16 %v3043
  %v3374 = vunpack.c.h.b16 %v3043
  %v3375 = vunpack.c.l.b16 %v3044
  %v3376 = vunpack.c.h.b16 %v3044
  %v3377 = vunpack.c.l.b16 %v3045
  %v3378 = vunpack.c.h.b16 %v3045
  %v3379 = vunpack.c.l.b16 %v3046
  %v3380 = vunpack.c.h.b16 %v3046
  %v3381 = vunpack.c.l.b16 %v3047
  %v3382 = vunpack.c.h.b16 %v3047
  %v3383 = vunpack.c.l.b16 %v3048
  %v3384 = vunpack.c.h.b16 %v3048
  %v3385 = vunpack.c.l.b16 %v3049
  %v3386 = vunpack.c.h.b16 %v3049
  %v3387 = vunpack.c.l.b16 %v3050
  %v3388 = vunpack.c.h.b16 %v3050
  %v3389 = vunpack.c.l.b16 %v3051
  %v3390 = vunpack.c.h.b16 %v3051
  %v3391 = vunpack.c.l.b16 %v3052
  %v3392 = vunpack.c.h.b16 %v3052
  %v3393 = vunpack.c.l.b16 %v3053
  %v3394 = vunpack.c.h.b16 %v3053
  %v3395 = vunpack.c.l.b16 %v3054
  %v3396 = vunpack.c.h.b16 %v3054
  %v3397 = vunpack.c.l.b16 %v3055
  %v3398 = vunpack.c.h.b16 %v3055
  %v3399 = vunpack.c.l.b16 %v3056
  %v3400 = vunpack.c.h.b16 %v3056
  %v3401 = vunpack.c.l.b16 %v3057
  %v3402 = vunpack.c.h.b16 %v3057
  %v3403 = vunpack.c.l.b16 %v3058
  %v3404 = vunpack.c.h.b16 %v3058
  %v3405 = vunpack.c.l.b16 %v3059
  %v3406 = vunpack.c.h.b16 %v3059
  %v3407 = vunpack.c.l.b16 %v3060
  %v3408 = vunpack.c.h.b16 %v3060
  %v3409 = vunpack.c.l.b16 %v3061
  %v3410 = vunpack.c.h.b16 %v3061
  %v3411 = vunpack.c.l.b16 %v3062
  %v3412 = vunpack.c.h.b16 %v3062
  %v3413 = vunpack.c.l.b16 %v3063
  %v3414 = vunpack.c.h.b16 %v3063
  %v3415 = vunpack.c.l.b16 %v3064
  %v3416 = vunpack.c.h.b16 %v3064
  %v3417 = vunpack.c.l.b16 %v3065
  %v3418 = vunpack.c.h.b16 %v3065
  %v3419 = vunpack.c.l.b16 %v3066
  %v3420 = vunpack.c.h.b16 %v3066
  %v3421 = vunpack.c.l.b16 %v3067
  %v3422 = vunpack.c.h.b16 %v3067
  %v3423 = vunpack.c.l.b16 %v3068
  %v3424 = vunpack.c.h.b16 %v3068
  %v3425 = vunpack.c.l.b16 %v3069
  %v3426 = vunpack.c.h.b16 %v3069
  %v3427 = vunpack.c.l.b16 %v3070
  %v3428 = vunpack.c.h.b16 %v3070
  %v3429 = vunpack.c.l.b16 %v3071
  %v3430 = vunpack.c.h.b16 %v3071
  %v3431 = vunpack.c.l.b16 %v3072
  %v3432 = vunpack.c.h.b16 %v3072
  %v3433 = vunpack.c.l.b16 %v3073
  %v3434 = vunpack.c.h.b16 %v3073
  %v3435 = vunpack.c.l.b16 %v3074
  %v3436 = vunpack.c.h.b16 %v3074
  %v3437 = vunpack.c.l.b16 %v3075
  %v3438 = vunpack.c.h.b16 %v3075
  %v3439 = vunpack.c.l.b16 %v3076
  %v3440 = vunpack.c.h.b16 %v3076
  %v3441 = vunpack.c.l.b16 %v3077
  %v3442 = vunpack.c.h.b16 %v3077
  %v3443 = vunpack.c.l.b16 %v3078
  %v3444 = vunpack.c.h.b16 %v3078
  %v3445 = vunpack.c.l.b16 %v3079
  %v3446 = vunpack.c.h.b16 %v3079
  %v3447 = vunpack.c.l.b16 %v3080
  %v3448 = vunpack.c.h.b16 %v3080
  %v3449 = vunpack.c.l.b16 %v3081
  %v3450 = vunpack.c.h.b16 %v3081
  %v3451 = vunpack.c.l.b16 %v3082
  %v3452 = vunpack.c.h.b16 %v3082
  %v3453 = vunpack.c.l.b16 %v3083
  %v3454 = vunpack.c.h.b16 %v3083
  %v3455 = vunpack.c.l.b16 %v3084
  %v3456 = vunpack.c.h.b16 %v3084
  %v3457 = vunpack.c.l.b16 %v3085
  %v3458 = vunpack.c.h.b16 %v3085
  %v3459 = vunpack.c.l.b16 %v3086
  %v3460 = vunpack.c.h.b16 %v3086
  %v3461 = vunpack.c.l.b16 %v3087
  %v3462 = vunpack.c.h.b16 %v3087
  %v3463 = vunpack.c.l.b16 %v3088
  %v3464 = vunpack.c.h.b16 %v3088
  %v3465 = vunpack.c.l.b16 %v3089
  %v3466 = vunpack.c.h.b16 %v3089
  %v3467 = vunpack.c.l.b16 %v3090
  %v3468 = vunpack.c.h.b16 %v3090
  %v3469 = vunpack.c.l.b16 %v3091
  %v3470 = vunpack.c.h.b16 %v3091
  %v3471 = vunpack.c.l.b16 %v3092
  %v3472 = vunpack.c.h.b16 %v3092
  %v3473 = vunpack.c.l.b16 %v3093
  %v3474 = vunpack.c.h.b16 %v3093
  %v3475 = vunpack.c.l.b16 %v3094
  %v3476 = vunpack.c.h.b16 %v3094
  %v3477 = vunpack.c.l.b16 %v3095
  %v3478 = vunpack.c.h.b16 %v3095
  %v3479 = vunpack.c.l.b16 %v3096
  %v3480 = vunpack.c.h.b16 %v3096
  %v3481 = vunpack.c.l.b16 %v3097
  %v3482 = vunpack.c.h.b16 %v3097
  %v3483 = vunpack.c.l.b16 %v3098
  %v3484 = vunpack.c.h.b16 %v3098
  %v3485 = vunpack.c.l.b16 %v3099
  %v3486 = vunpack.c.h.b16 %v3099
  %v3487 = vunpack.c.l.b16 %v3100
  %v3488 = vunpack.c.h.b16 %v3100
  %v3489 = vunpack.c.l.b16 %v3101
  %v3490 = vunpack.c.h.b16 %v3101
  %v3491 = vunpack.c.l.b16 %v3102
  %v3492 = vunpack.c.h.b16 %v3102
  %v3493 = vunpack.c.l.b16 %v3103
  %v3494 = vunpack.c.h.b16 %v3103
  %v3495 = vunpack.c.l.b16 %v3104
  %v3496 = vunpack.c.h.b16 %v3104
  %v3497 = vunpack.c.l.b16 %v3105
  %v3498 = vunpack.c.h.b16 %v3105
  %v3499 = vunpack.c.l.b16 %v3106
  %v3500 = vunpack.c.h.b16 %v3106
  %v3501 = vunpack.c.l.b16 %v3107
  %v3502 = vunpack.c.h.b16 %v3107
  %v3503 = vunpack.c.l.b16 %v3108
  %v3504 = vunpack.c.h.b16 %v3108
  %v3505 = vunpack.c.l.b16 %v3109
  %v3506 = vunpack.c.h.b16 %v3109
  %v3507 = vunpack.c.l.b16 %v3110
  %v3508 = vunpack.c.h.b16 %v3110
  %v3509 = vunpack.c.l.b16 %v3111
  %v3510 = vunpack.c.h.b16 %v3111
  %v3511 = vunpack.c.l.b16 %v3112
  %v3512 = vunpack.c.h.b16 %v3112
  %v3513 = vunpack.c.l.b16 %v3113
  %v3514 = vunpack.c.h.b16 %v3113
  %v3515 = vunpack.c.l.b16 %v3114
  %v3516 = vunpack.c.h.b16 %v3114
  %v3517 = vunpack.c.l.b16 %v3115
  %v3518 = vunpack.c.h.b16 %v3115
  %v3519 = vunpack.c.l.b16 %v3116
  %v3520 = vunpack.c.h.b16 %v3116
  %v3521 = vunpack.c.l.b16 %v3117
  %v3522 = vunpack.c.h.b16 %v3117
  %v3523 = vunpack.c.l.b16 %v3118
  %v3524 = vunpack.c.h.b16 %v3118
  %v3525 = vunpack.c.l.b16 %v3119
  %v3526 = vunpack.c.h.b16 %v3119
  %v3527 = vunpack.c.l.b16 %v3120
  %v3528 = vunpack.c.h.b16 %v3120
  %v3529 = vunpack.c.l.b16 %v3121
  %v3530 = vunpack.c.h.b16 %v3121
  %v3531 = vunpack.c.l.b16 %v3122
  %v3532 = vunpack.c.h.b16 %v3122
  %v3533 = vunpack.c.l.b16 %v3123
  %v3534 = vunpack.c.h.b16 %v3123
  %v3535 = vunpack.c.l.b16 %v3124
  %v3536 = vunpack.c.h.b16 %v3124
  %v3537 = vunpack.c.l.b16 %v3125
  %v3538 = vunpack.c.h.b16 %v3125
  %v3539 = vunpack.c.l.b16 %v3126
  %v3540 = vunpack.c.h.b16 %v3126
  %v3541 = vunpack.c.l.b16 %v3127
  %v3542 = vunpack.c.h.b16 %v3127
  %v3543 = vunpack.c.l.b16 %v3128
  %v3544 = vunpack.c.h.b16 %v3128
  %v3545 = vpack.c.b16 %v3293, %v3289
  %v3546 = vpack.c.b16 %v3294, %v3290
  %v3547 = vpack.c.b16 %v3295, %v3291
  %v3548 = vpack.c.b16 %v3296, %v3292
  %v3549 = vpack.c.b16 %v3301, %v3297
  %v3550 = vpack.c.b16 %v3302, %v3298
  %v3551 = vpack.c.b16 %v3303, %v3299
  %v3552 = vpack.c.b16 %v3304, %v3300
  %v3553 = vpack.c.b16 %v3309, %v3305
  %v3554 = vpack.c.b16 %v3310, %v3306
  %v3555 = vpack.c.b16 %v3311, %v3307
  %v3556 = vpack.c.b16 %v3312, %v3308
  %v3557 = vpack.c.b16 %v3317, %v3313
  %v3558 = vpack.c.b16 %v3318, %v3314
  %v3559 = vpack.c.b16 %v3319, %v3315
  %v3560 = vpack.c.b16 %v3320, %v3316
  %v3561 = vpack.c.b16 %v3325, %v3321
  %v3562 = vpack.c.b16 %v3326, %v3322
  %v3563 = vpack.c.b16 %v3327, %v3323
  %v3564 = vpack.c.b16 %v3328, %v3324
  %v3565 = vpack.c.b16 %v3333, %v3329
  %v3566 = vpack.c.b16 %v3334, %v3330
  %v3567 = vpack.c.b16 %v3335, %v3331
  %v3568 = vpack.c.b16 %v3336, %v3332
  %v3569 = vpack.c.b16 %v3341, %v3337
  %v3570 = vpack.c.b16 %v3342, %v3338
  %v3571 = vpack.c.b16 %v3343, %v3339
  %v3572 = vpack.c.b16 %v3344, %v3340
  %v3573 = vpack.c.b16 %v3349, %v3345
  %v3574 = vpack.c.b16 %v3350, %v3346
  %v3575 = vpack.c.b16 %v3351, %v3347
  %v3576 = vpack.c.b16 %v3352, %v3348
  %v3577 = vpack.c.b16 %v3357, %v3353
  %v3578 = vpack.c.b16 %v3358, %v3354
  %v3579 = vpack.c.b16 %v3359, %v3355
  %v3580 = vpack.c.b16 %v3360, %v3356
  %v3581 = vpack.c.b16 %v3365, %v3361
  %v3582 = vpack.c.b16 %v3366, %v3362
  %v3583 = vpack.c.b16 %v3367, %v3363
  %v3584 = vpack.c.b16 %v3368, %v3364
  %v3585 = vpack.c.b16 %v3373, %v3369
  %v3586 = vpack.c.b16 %v3374, %v3370
  %v3587 = vpack.c.b16 %v3375, %v3371
  %v3588 = vpack.c.b16 %v3376, %v3372
  %v3589 = vpack.c.b16 %v3381, %v3377
  %v3590 = vpack.c.b16 %v3382, %v3378
  %v3591 = vpack.c.b16 %v3383, %v3379
  %v3592 = vpack.c.b16 %v3384, %v3380
  %v3593 = vpack.c.b16 %v3389, %v3385
  %v3594 = vpack.c.b16 %v3390, %v3386
  %v3595 = vpack.c.b16 %v3391, %v3387
  %v3596 = vpack.c.b16 %v3392, %v3388
  %v3597 = vpack.c.b16 %v3397, %v3393
  %v3598 = vpack.c.b16 %v3398, %v3394
  %v3599 = vpack.c.b16 %v3399, %v3395
  %v3600 = vpack.c.b16 %v3400, %v3396
  %v3601 = vpack.c.b16 %v3405, %v3401
  %v3602 = vpack.c.b16 %v3406, %v3402
  %v3603 = vpack.c.b16 %v3407, %v3403
  %v3604 = vpack.c.b16 %v3408, %v3404
  %v3605 = vpack.c.b16 %v3413, %v3409
  %v3606 = vpack.c.b16 %v3414, %v3410
  %v3607 = vpack.c.b16 %v3415, %v3411
  %v3608 = vpack.c.b16 %v3416, %v3412
  %v3609 = vpack.c.b16 %v3421, %v3417
  %v3610 = vpack.c.b16 %v3422, %v3418
  %v3611 = vpack.c.b16 %v3423, %v3419
  %v3612 = vpack.c.b16 %v3424, %v3420
  %v3613 = vpack.c.b16 %v3429, %v3425
  %v3614 = vpack.c.b16 %v3430, %v3426
  %v3615 = vpack.c.b16 %v3431, %v3427
  %v3616 = vpack.c.b16 %v3432, %v3428
  %v3617 = vpack.c.b16 %v3437, %v3433
  %v3618 = vpack.c.b16 %v3438, %v3434
  %v3619 = vpack.c.b16 %v3439, %v3435
  %v3620 = vpack.c.b16 %v3440, %v3436
  %v3621 = vpack.c.b16 %v3445, %v3441
  %v3622 = vpack.c.b16 %v3446, %v3442
  %v3623 = vpack.c.b16 %v3447, %v3443
  %v3624 = vpack.c.b16 %v3448, %v3444
  %v3625 = vpack.c.b16 %v3453, %v3449
  %v3626 = vpack.c.b16 %v3454, %v3450
  %v3627 = vpack.c.b16 %v3455, %v3451
  %v3628 = vpack.c.b16 %v3456, %v3452
  %v3629 = vpack.c.b16 %v3461, %v3457
  %v3630 = vpack.c.b16 %v3462, %v3458
  %v3631 = vpack.c.b16 %v3463, %v3459
  %v3632 = vpack.c.b16 %v3464, %v3460
  %v3633 = vpack.c.b16 %v3469, %v3465
  %v3634 = vpack.c.b16 %v3470, %v3466
  %v3635 = vpack.c.b16 %v3471, %v3467
  %v3636 = vpack.c.b16 %v3472, %v3468
  %v3637 = vpack.c.b16 %v3477, %v3473
  %v3638 = vpack.c.b16 %v3478, %v3474
  %v3639 = vpack.c.b16 %v3479, %v3475
  %v3640 = vpack.c.b16 %v3480, %v3476
  %v3641 = vpack.c.b16 %v3485, %v3481
  %v3642 = vpack.c.b16 %v3486, %v3482
  %v3643 = vpack.c.b16 %v3487, %v3483
  %v3644 = vpack.c.b16 %v3488, %v3484
  %v3645 = vpack.c.b16 %v3493, %v3489
  %v3646 = vpack.c.b16 %v3494, %v3490
  %v3647 = vpack.c.b16 %v3495, %v3491
  %v3648 = vpack.c.b16 %v3496, %v3492
  %v3649 = vpack.c.b16 %v3501, %v3497
  %v3650 = vpack.c.b16 %v3502, %v3498
  %v3651 = vpack.c.b16 %v3503, %v3499
  %v3652 = vpack.c.b16 %v3504, %v3500
  %v3653 = vpack.c.b16 %v3509, %v3505
  %v3654 = vpack.c.b16 %v3510, %v3506
  %v3655 = vpack.c.b16 %v3511, %v3507
  %v3656 = vpack.c.b16 %v3512, %v3508
  %v3657 = vpack.c.b16 %v3517, %v3513
  %v3658 = vpack.c.b16 %v3518, %v3514
  %v3659 = vpack.c.b16 %v3519, %v3515
  %v3660 = vpack.c.b16 %v3520, %v3516
  %v3661 = vpack.c.b16 %v3525, %v3521
  %v3662 = vpack.c.b16 %v3526, %v3522
  %v3663 = vpack.c.b16 %v3527, %v3523
  %v3664 = vpack.c.b16 %v3528, %v3524
  %v3665 = vpack.c.b16 %v3533, %v3529
  %v3666 = vpack.c.b16 %v3534, %v3530
  %v3667 = vpack.c.b16 %v3535, %v3531
  %v3668 = vpack.c.b16 %v3536, %v3532
  %v3669 = vpack.c.b16 %v3541, %v3537
  %v3670 = vpack.c.b16 %v3542, %v3538
  %v3671 = vpack.c.b16 %v3543, %v3539
  %v3672 = vpack.c.b16 %v3544, %v3540
  %3801 = vmatprep.subr.bf16.mxu0 %v3574
  %3802 = vmatpush1.bf16.msra.mxu0 %v3573
  %3803 = vmatprep.subr.bf16.mxu0 %v3570
  %3804 = vmatpush1.bf16.msra.mxu0 %v3569
  %3805 = vmatprep.subr.bf16.mxu0 %v3566
  %3806 = vmatpush1.bf16.msra.mxu0 %v3565
  %3807 = vmatprep.subr.bf16.mxu0 %v3562
  %3808 = vmatpush1.bf16.msra.mxu0 %v3561
  %3809 = vmatprep.subr.bf16.mxu0 %v3558
  %3810 = vmatpush1.bf16.msra.mxu0 %v3557
  %3811 = vmatprep.subr.bf16.mxu0 %v3554
  %3812 = vmatpush1.bf16.msra.mxu0 %v3553
  %3813 = vmatprep.subr.bf16.mxu0 %v3550
  %3814 = vmatpush1.bf16.msra.mxu0 %v3549
  %3815 = vmatprep.subr.bf16.mxu0 %v3546
  %3816 = vmatpush1.bf16.msra.mxu0 %v3545
  %3817 = vmatprep.subr.bf16.mxu0 %v3606
  %3818 = vmatpush2.bf16.msra.mxu0 %v3605
  %3819 = vmatprep.subr.bf16.mxu0 %v3602
  %3820 = vmatpush2.bf16.msra.mxu0 %v3601
  %3821 = vmatprep.subr.bf16.mxu0 %v3598
  %3822 = vmatpush2.bf16.msra.mxu0 %v3597
  %3823 = vmatprep.subr.bf16.mxu0 %v3594
  %3824 = vmatpush2.bf16.msra.mxu0 %v3593
  %3825 = vmatprep.subr.bf16.mxu0 %v3590
  %3826 = vmatpush2.bf16.msra.mxu0 %v3589
  %3827 = vmatprep.subr.bf16.mxu0 %v3586
  %3828 = vmatpush2.bf16.msra.mxu0 %v3585
  %3829 = vmatprep.subr.bf16.mxu0 %v3582
  %3830 = vmatpush2.bf16.msra.mxu0 %v3581
  %3831 = vmatprep.subr.bf16.mxu0 %v3578
  %3832 = vmatpush2.bf16.msra.mxu0 %v3577
  %3833 = vmatprep.mubr.bf16.mxu0 %v3130
  %3834 = vmatmul.mubr.bf16.gmra.mxu0 %v3129
  %v3835 = vpop.f32.mrf.mxu0
  %v3836 = vadd.f32 0.0, %v3835
  %v3837 = vpop.f32.mrf.mxu0
  %v3838 = vadd.f32 0.0, %v3837
  %v3839 = vpop.f32.mrf.mxu0
  %v3840 = vadd.f32 0.0, %v3839
  %v3841 = vpop.f32.mrf.mxu0
  %v3842 = vadd.f32 0.0, %v3841
  %3843 = vmatprep.mubr.bf16.mxu0 %v3134
  %3844 = vmatmul.mubr.bf16.gmra.mxu0 %v3133
  %v3845 = vpop.f32.mrf.mxu0
  %v3846 = vadd.f32 0.0, %v3845
  %v3847 = vpop.f32.mrf.mxu0
  %v3848 = vadd.f32 0.0, %v3847
  %v3849 = vpop.f32.mrf.mxu0
  %v3850 = vadd.f32 0.0, %v3849
  %v3851 = vpop.f32.mrf.mxu0
  %v3852 = vadd.f32 0.0, %v3851
  %3853 = vmatprep.mubr.bf16.mxu0 %v3138
  %3854 = vmatmul.mubr.bf16.gmra.mxu0 %v3137
  %v3855 = vpop.f32.mrf.mxu0
  %v3856 = vadd.f32 0.0, %v3855
  %v3857 = vpop.f32.mrf.mxu0
  %v3858 = vadd.f32 0.0, %v3857
  %v3859 = vpop.f32.mrf.mxu0
  %v3860 = vadd.f32 0.0, %v3859
  %v3861 = vpop.f32.mrf.mxu0
  %v3862 = vadd.f32 0.0, %v3861
  %3863 = vmatprep.mubr.bf16.mxu0 %v3142
  %3864 = vmatmul.mubr.bf16.gmra.mxu0 %v3141
  %v3865 = vpop.f32.mrf.mxu0
  %v3866 = vadd.f32 0.0, %v3865
  %v3867 = vpop.f32.mrf.mxu0
  %v3868 = vadd.f32 0.0, %v3867
  %v3869 = vpop.f32.mrf.mxu0
  %v3870 = vadd.f32 0.0, %v3869
  %v3871 = vpop.f32.mrf.mxu0
  %v3872 = vadd.f32 0.0, %v3871
  %3873 = vdwg.mxu0
  %3874 = vmatprep.subr.bf16.mxu0 %v3638
  %3875 = vmatpush1.bf16.msra.mxu0 %v3637
  %3876 = vmatprep.subr.bf16.mxu0 %v3634
  %3877 = vmatpush1.bf16.msra.mxu0 %v3633
  %3878 = vmatprep.subr.bf16.mxu0 %v3630
  %3879 = vmatpush1.bf16.msra.mxu0 %v3629
  %3880 = vmatprep.subr.bf16.mxu0 %v3626
  %3881 = vmatpush1.bf16.msra.mxu0 %v3625
  %3882 = vmatprep.subr.bf16.mxu0 %v3622
  %3883 = vmatpush1.bf16.msra.mxu0 %v3621
  %3884 = vmatprep.subr.bf16.mxu0 %v3618
  %3885 = vmatpush1.bf16.msra.mxu0 %v3617
  %3886 = vmatprep.subr.bf16.mxu0 %v3614
  %3887 = vmatpush1.bf16.msra.mxu0 %v3613
  %3888 = vmatprep.subr.bf16.mxu0 %v3610
  %3889 = vmatpush1.bf16.msra.mxu0 %v3609
  %3890 = vmatprep.subr.bf16.mxu0 %v3670
  %3891 = vmatpush2.bf16.msra.mxu0 %v3669
  %3892 = vmatprep.subr.bf16.mxu0 %v3666
  %3893 = vmatpush2.bf16.msra.mxu0 %v3665
  %3894 = vmatprep.subr.bf16.mxu0 %v3662
  %3895 = vmatpush2.bf16.msra.mxu0 %v3661
  %3896 = vmatprep.subr.bf16.mxu0 %v3658
  %3897 = vmatpush2.bf16.msra.mxu0 %v3657
  %3898 = vmatprep.subr.bf16.mxu0 %v3654
  %3899 = vmatpush2.bf16.msra.mxu0 %v3653
  %3900 = vmatprep.subr.bf16.mxu0 %v3650
  %3901 = vmatpush2.bf16.msra.mxu0 %v3649
  %3902 = vmatprep.subr.bf16.mxu0 %v3646
  %3903 = vmatpush2.bf16.msra.mxu0 %v3645
  %3904 = vmatprep.subr.bf16.mxu0 %v3642
  %3905 = vmatpush2.bf16.msra.mxu0 %v3641
  %3906 = vmatprep.mubr.bf16.mxu0 %v3132
  %3907 = vmatmul.mubr.bf16.gmra.mxu0 %v3131
  %v3908 = vpop.f32.mrf.mxu0
  %v3909 = vadd.f32 %v3836, %v3908
  %v3910 = vpop.f32.mrf.mxu0
  %v3911 = vadd.f32 %v3838, %v3910
  %v3912 = vpop.f32.mrf.mxu0
  %v3913 = vadd.f32 %v3840, %v3912
  %v3914 = vpop.f32.mrf.mxu0
  %v3915 = vadd.f32 %v3842, %v3914
  %3916 = vmatprep.mubr.bf16.mxu0 %v3136
  %3917 = vmatmul.mubr.bf16.gmra.mxu0 %v3135
  %v3918 = vpop.f32.mrf.mxu0
  %v3919 = vadd.f32 %v3846, %v3918
  %v3920 = vpop.f32.mrf.mxu0
  %v3921 = vadd.f32 %v3848, %v3920
  %v3922 = vpop.f32.mrf.mxu0
  %v3923 = vadd.f32 %v3850, %v3922
  %v3924 = vpop.f32.mrf.mxu0
  %v3925 = vadd.f32 %v3852, %v3924
  %3926 = vmatprep.mubr.bf16.mxu0 %v3140
  %3927 = vmatmul.mubr.bf16.gmra.mxu0 %v3139
  %v3928 = vpop.f32.mrf.mxu0
  %v3929 = vadd.f32 %v3856, %v3928
  %v3930 = vpop.f32.mrf.mxu0
  %v3931 = vadd.f32 %v3858, %v3930
  %v3932 = vpop.f32.mrf.mxu0
  %v3933 = vadd.f32 %v3860, %v3932
  %v3934 = vpop.f32.mrf.mxu0
  %v3935 = vadd.f32 %v3862, %v3934
  %3936 = vmatprep.mubr.bf16.mxu0 %v3144
  %3937 = vmatmul.mubr.bf16.gmra.mxu0 %v3143
  %v3938 = vpop.f32.mrf.mxu0
  %v3939 = vadd.f32 %v3866, %v3938
  %v3940 = vpop.f32.mrf.mxu0
  %v3941 = vadd.f32 %v3868, %v3940
  %v3942 = vpop.f32.mrf.mxu0
  %v3943 = vadd.f32 %v3870, %v3942
  %v3944 = vpop.f32.mrf.mxu0
  %v3945 = vadd.f32 %v3872, %v3944
  %3946 = vdwg.mxu0
  %3947 = vmatprep.subr.bf16.mxu0 %v3576
  %3948 = vmatpush1.bf16.msra.mxu0 %v3575
  %3949 = vmatprep.subr.bf16.mxu0 %v3572
  %3950 = vmatpush1.bf16.msra.mxu0 %v3571
  %3951 = vmatprep.subr.bf16.mxu0 %v3568
  %3952 = vmatpush1.bf16.msra.mxu0 %v3567
  %3953 = vmatprep.subr.bf16.mxu0 %v3564
  %3954 = vmatpush1.bf16.msra.mxu0 %v3563
  %3955 = vmatprep.subr.bf16.mxu0 %v3560
  %3956 = vmatpush1.bf16.msra.mxu0 %v3559
  %3957 = vmatprep.subr.bf16.mxu0 %v3556
  %3958 = vmatpush1.bf16.msra.mxu0 %v3555
  %3959 = vmatprep.subr.bf16.mxu0 %v3552
  %3960 = vmatpush1.bf16.msra.mxu0 %v3551
  %3961 = vmatprep.subr.bf16.mxu0 %v3548
  %3962 = vmatpush1.bf16.msra.mxu0 %v3547
  %3963 = vmatprep.subr.bf16.mxu0 %v3608
  %3964 = vmatpush2.bf16.msra.mxu0 %v3607
  %3965 = vmatprep.subr.bf16.mxu0 %v3604
  %3966 = vmatpush2.bf16.msra.mxu0 %v3603
  %3967 = vmatprep.subr.bf16.mxu0 %v3600
  %3968 = vmatpush2.bf16.msra.mxu0 %v3599
  %3969 = vmatprep.subr.bf16.mxu0 %v3596
  %3970 = vmatpush2.bf16.msra.mxu0 %v3595
  %3971 = vmatprep.subr.bf16.mxu0 %v3592
  %3972 = vmatpush2.bf16.msra.mxu0 %v3591
  %3973 = vmatprep.subr.bf16.mxu0 %v3588
  %3974 = vmatpush2.bf16.msra.mxu0 %v3587
  %3975 = vmatprep.subr.bf16.mxu0 %v3584
  %3976 = vmatpush2.bf16.msra.mxu0 %v3583
  %3977 = vmatprep.subr.bf16.mxu0 %v3580
  %3978 = vmatpush2.bf16.msra.mxu0 %v3579
  %3979 = vmatprep.mubr.bf16.mxu0 %v3130
  %3980 = vmatmul.mubr.bf16.gmra.mxu0 %v3129
  %v3981 = vpop.f32.mrf.mxu0
  %v3982 = vadd.f32 0.0, %v3981
  %v3983 = vpop.f32.mrf.mxu0
  %v3984 = vadd.f32 0.0, %v3983
  %v3985 = vpop.f32.mrf.mxu0
  %v3986 = vadd.f32 0.0, %v3985
  %v3987 = vpop.f32.mrf.mxu0
  %v3988 = vadd.f32 0.0, %v3987
  %3989 = vmatprep.mubr.bf16.mxu0 %v3134
  %3990 = vmatmul.mubr.bf16.gmra.mxu0 %v3133
  %v3991 = vpop.f32.mrf.mxu0
  %v3992 = vadd.f32 0.0, %v3991
  %v3993 = vpop.f32.mrf.mxu0
  %v3994 = vadd.f32 0.0, %v3993
  %v3995 = vpop.f32.mrf.mxu0
  %v3996 = vadd.f32 0.0, %v3995
  %v3997 = vpop.f32.mrf.mxu0
  %v3998 = vadd.f32 0.0, %v3997
  %3999 = vmatprep.mubr.bf16.mxu0 %v3138
  %4000 = vmatmul.mubr.bf16.gmra.mxu0 %v3137
  %v4001 = vpop.f32.mrf.mxu0
  %v4002 = vadd.f32 0.0, %v4001
  %v4003 = vpop.f32.mrf.mxu0
  %v4004 = vadd.f32 0.0, %v4003
  %v4005 = vpop.f32.mrf.mxu0
  %v4006 = vadd.f32 0.0, %v4005
  %v4007 = vpop.f32.mrf.mxu0
  %v4008 = vadd.f32 0.0, %v4007
  %4009 = vmatprep.mubr.bf16.mxu0 %v3142
  %4010 = vmatmul.mubr.bf16.gmra.mxu0 %v3141
  %v4011 = vpop.f32.mrf.mxu0
  %v4012 = vadd.f32 0.0, %v4011
  %v4013 = vpop.f32.mrf.mxu0
  %v4014 = vadd.f32 0.0, %v4013
  %v4015 = vpop.f32.mrf.mxu0
  %v4016 = vadd.f32 0.0, %v4015
  %v4017 = vpop.f32.mrf.mxu0
  %v4018 = vadd.f32 0.0, %v4017
  %4019 = vdwg.mxu0
  %4020 = vmatprep.subr.bf16.mxu0 %v3640
  %4021 = vmatpush1.bf16.msra.mxu0 %v3639
  %4022 = vmatprep.subr.bf16.mxu0 %v3636
  %4023 = vmatpush1.bf16.msra.mxu0 %v3635
  %4024 = vmatprep.subr.bf16.mxu0 %v3632
  %4025 = vmatpush1.bf16.msra.mxu0 %v3631
  %4026 = vmatprep.subr.bf16.mxu0 %v3628
  %4027 = vmatpush1.bf16.msra.mxu0 %v3627
  %4028 = vmatprep.subr.bf16.mxu0 %v3624
  %4029 = vmatpush1.bf16.msra.mxu0 %v3623
  %4030 = vmatprep.subr.bf16.mxu0 %v3620
  %4031 = vmatpush1.bf16.msra.mxu0 %v3619
  %4032 = vmatprep.subr.bf16.mxu0 %v3616
  %4033 = vmatpush1.bf16.msra.mxu0 %v3615
  %4034 = vmatprep.subr.bf16.mxu0 %v3612
  %4035 = vmatpush1.bf16.msra.mxu0 %v3611
  %4036 = vmatprep.subr.bf16.mxu0 %v3672
  %4037 = vmatpush2.bf16.msra.mxu0 %v3671
  %4038 = vmatprep.subr.bf16.mxu0 %v3668
  %4039 = vmatpush2.bf16.msra.mxu0 %v3667
  %4040 = vmatprep.subr.bf16.mxu0 %v3664
  %4041 = vmatpush2.bf16.msra.mxu0 %v3663
  %4042 = vmatprep.subr.bf16.mxu0 %v3660
  %4043 = vmatpush2.bf16.msra.mxu0 %v3659
  %4044 = vmatprep.subr.bf16.mxu0 %v3656
  %4045 = vmatpush2.bf16.msra.mxu0 %v3655
  %4046 = vmatprep.subr.bf16.mxu0 %v3652
  %4047 = vmatpush2.bf16.msra.mxu0 %v3651
  %4048 = vmatprep.subr.bf16.mxu0 %v3648
  %4049 = vmatpush2.bf16.msra.mxu0 %v3647
  %4050 = vmatprep.subr.bf16.mxu0 %v3644
  %4051 = vmatpush2.bf16.msra.mxu0 %v3643
  %4052 = vmatprep.mubr.bf16.mxu0 %v3132
  %4053 = vmatmul.mubr.bf16.gmra.mxu0 %v3131
  %v4054 = vpop.f32.mrf.mxu0
  %v4055 = vadd.f32 %v3982, %v4054
  %v4056 = vpop.f32.mrf.mxu0
  %v4057 = vadd.f32 %v3984, %v4056
  %v4058 = vpop.f32.mrf.mxu0
  %v4059 = vadd.f32 %v3986, %v4058
  %v4060 = vpop.f32.mrf.mxu0
  %v4061 = vadd.f32 %v3988, %v4060
  %4062 = vmatprep.mubr.bf16.mxu0 %v3136
  %4063 = vmatmul.mubr.bf16.gmra.mxu0 %v3135
  %v4064 = vpop.f32.mrf.mxu0
  %v4065 = vadd.f32 %v3992, %v4064
  %v4066 = vpop.f32.mrf.mxu0
  %v4067 = vadd.f32 %v3994, %v4066
  %v4068 = vpop.f32.mrf.mxu0
  %v4069 = vadd.f32 %v3996, %v4068
  %v4070 = vpop.f32.mrf.mxu0
  %v4071 = vadd.f32 %v3998, %v4070
  %4072 = vmatprep.mubr.bf16.mxu0 %v3140
  %4073 = vmatmul.mubr.bf16.gmra.mxu0 %v3139
  %v4074 = vpop.f32.mrf.mxu0
  %v4075 = vadd.f32 %v4002, %v4074
  %v4076 = vpop.f32.mrf.mxu0
  %v4077 = vadd.f32 %v4004, %v4076
  %v4078 = vpop.f32.mrf.mxu0
  %v4079 = vadd.f32 %v4006, %v4078
  %v4080 = vpop.f32.mrf.mxu0
  %v4081 = vadd.f32 %v4008, %v4080
  %4082 = vmatprep.mubr.bf16.mxu0 %v3144
  %4083 = vmatmul.mubr.bf16.gmra.mxu0 %v3143
  %v4084 = vpop.f32.mrf.mxu0
  %v4085 = vadd.f32 %v4012, %v4084
  %v4086 = vpop.f32.mrf.mxu0
  %v4087 = vadd.f32 %v4014, %v4086
  %v4088 = vpop.f32.mrf.mxu0
  %v4089 = vadd.f32 %v4016, %v4088
  %v4090 = vpop.f32.mrf.mxu0
  %v4091 = vadd.f32 %v4018, %v4090
  %4092 = vdwg.mxu0
  %4093 = vst [vmem:[#allocation2] sm:$0xff] %v3909
  %4094 = vst [vmem:[#allocation2 + $0x8] sm:$0xff] %v3911
  %4095 = vst [vmem:[#allocation2 + $0x10] sm:$0xff] %v4055
  %4096 = vst [vmem:[#allocation2 + $0x18] sm:$0xff] %v4057
  %4097 = vst [vmem:[#allocation2 + $0x20] sm:$0xff] %v3913
  %4098 = vst [vmem:[#allocation2 + $0x28] sm:$0xff] %v3915
  %4099 = vst [vmem:[#allocation2 + $0x30] sm:$0xff] %v4059
  %4100 = vst [vmem:[#allocation2 + $0x38] sm:$0xff] %v4061
  %4101 = vst [vmem:[#allocation2 + $0x40] sm:$0xff] %v3919
  %4102 = vst [vmem:[#allocation2 + $0x48] sm:$0xff] %v3921
  %4103 = vst [vmem:[#allocation2 + $0x50] sm:$0xff] %v4065
  %4104 = vst [vmem:[#allocation2 + $0x58] sm:$0xff] %v4067
  %4105 = vst [vmem:[#allocation2 + $0x60] sm:$0xff] %v3923
  %4106 = vst [vmem:[#allocation2 + $0x68] sm:$0xff] %v3925
  %4107 = vst [vmem:[#allocation2 + $0x70] sm:$0xff] %v4069
  %4108 = vst [vmem:[#allocation2 + $0x78] sm:$0xff] %v4071
  %4109 = vst [vmem:[#allocation2 + $0x80] sm:$0xff] %v3929
  %4110 = vst [vmem:[#allocation2 + $0x88] sm:$0xff] %v3931
  %4111 = vst [vmem:[#allocation2 + $0x90] sm:$0xff] %v4075
  %4112 = vst [vmem:[#allocation2 + $0x98] sm:$0xff] %v4077
  %4113 = vst [vmem:[#allocation2 + $0xa0] sm:$0xff] %v3933
  %4114 = vst [vmem:[#allocation2 + $0xa8] sm:$0xff] %v3935
  %4115 = vst [vmem:[#allocation2 + $0xb0] sm:$0xff] %v4079
  %4116 = vst [vmem:[#allocation2 + $0xb8] sm:$0xff] %v4081
  %4117 = vst [vmem:[#allocation2 + $0xc0] sm:$0xff] %v3939
  %4118 = vst [vmem:[#allocation2 + $0xc8] sm:$0xff] %v3941
  %4119 = vst [vmem:[#allocation2 + $0xd0] sm:$0xff] %v4085
  %4120 = vst [vmem:[#allocation2 + $0xd8] sm:$0xff] %v4087
  %4121 = vst [vmem:[#allocation2 + $0xe0] sm:$0xff] %v3943
  %4122 = vst [vmem:[#allocation2 + $0xe8] sm:$0xff] %v3945
  %4123 = vst [vmem:[#allocation2 + $0xf0] sm:$0xff] %v4089
  %4124 = vst [vmem:[#allocation2 + $0xf8] sm:$0xff] %v4091
  %v4125 = vld [vmem:[#allocation2] sm:$0xff]
  %v4126 = vld [vmem:[#allocation2 + $0x8] sm:$0xff]
  %v4127 = vld [vmem:[#allocation2 + $0x10] sm:$0xff]
  %v4128 = vld [vmem:[#allocation2 + $0x18] sm:$0xff]
  %v4129 = vld [vmem:[#allocation2 + $0x20] sm:$0xff]
  %v4130 = vld [vmem:[#allocation2 + $0x28] sm:$0xff]
  %v4131 = vld [vmem:[#allocation2 + $0x30] sm:$0xff]
  %v4132 = vld [vmem:[#allocation2 + $0x38] sm:$0xff]
  %v4133 = vld [vmem:[#allocation2 + $0x40] sm:$0xff]
  %v4134 = vld [vmem:[#allocation2 + $0x48] sm:$0xff]
  %v4135 = vld [vmem:[#allocation2 + $0x50] sm:$0xff]
  %v4136 = vld [vmem:[#allocation2 + $0x58] sm:$0xff]
  %v4137 = vld [vmem:[#allocation2 + $0x60] sm:$0xff]
  %v4138 = vld [vmem:[#allocation2 + $0x68] sm:$0xff]
  %v4139 = vld [vmem:[#allocation2 + $0x70] sm:$0xff]
  %v4140 = vld [vmem:[#allocation2 + $0x78] sm:$0xff]
  %v4141 = vld [vmem:[#allocation2 + $0x80] sm:$0xff]
  %v4142 = vld [vmem:[#allocation2 + $0x88] sm:$0xff]
  %v4143 = vld [vmem:[#allocation2 + $0x90] sm:$0xff]
  %v4144 = vld [vmem:[#allocation2 + $0x98] sm:$0xff]
  %v4145 = vld [vmem:[#allocation2 + $0xa0] sm:$0xff]
  %v4146 = vld [vmem:[#allocation2 + $0xa8] sm:$0xff]
  %v4147 = vld [vmem:[#allocation2 + $0xb0] sm:$0xff]
  %v4148 = vld [vmem:[#allocation2 + $0xb8] sm:$0xff]
  %v4149 = vld [vmem:[#allocation2 + $0xc0] sm:$0xff]
  %v4150 = vld [vmem:[#allocation2 + $0xc8] sm:$0xff]
  %v4151 = vld [vmem:[#allocation2 + $0xd0] sm:$0xff]
  %v4152 = vld [vmem:[#allocation2 + $0xd8] sm:$0xff]
  %v4153 = vld [vmem:[#allocation2 + $0xe0] sm:$0xff]
  %v4154 = vld [vmem:[#allocation2 + $0xe8] sm:$0xff]
  %v4155 = vld [vmem:[#allocation2 + $0xf0] sm:$0xff]
  %v4156 = vld [vmem:[#allocation2 + $0xf8] sm:$0xff]
  %v4157 = vunpack.c.h.b16 %v2905
  %v4158 = vunpack.c.h.b16 %v2906
  %v4159 = vunpack.c.h.b16 %v2907
  %v4160 = vunpack.c.h.b16 %v2908
  %v4161 = vunpack.c.h.b16 %v2909
  %v4162 = vunpack.c.h.b16 %v2910
  %v4163 = vunpack.c.h.b16 %v2911
  %v4164 = vunpack.c.h.b16 %v2912
  %v4165 = vunpack.c.h.b16 %v2913
  %v4166 = vunpack.c.h.b16 %v2914
  %v4167 = vunpack.c.h.b16 %v2915
  %v4168 = vunpack.c.h.b16 %v2916
  %v4169 = vunpack.c.h.b16 %v2917
  %v4170 = vunpack.c.h.b16 %v2918
  %v4171 = vunpack.c.h.b16 %v2919
  %v4172 = vunpack.c.h.b16 %v2920
  %v4173 = vunpack.c.h.b16 %v2921
  %v4174 = vunpack.c.h.b16 %v2922
  %v4175 = vunpack.c.h.b16 %v2923
  %v4176 = vunpack.c.h.b16 %v2924
  %v4177 = vunpack.c.h.b16 %v2925
  %v4178 = vunpack.c.h.b16 %v2926
  %v4179 = vunpack.c.h.b16 %v2927
  %v4180 = vunpack.c.h.b16 %v2928
  %v4181 = vunpack.c.h.b16 %v2929
  %v4182 = vunpack.c.h.b16 %v2930
  %v4183 = vunpack.c.h.b16 %v2931
  %v4184 = vunpack.c.h.b16 %v2932
  %v4185 = vunpack.c.h.b16 %v2933
  %v4186 = vunpack.c.h.b16 %v2934
  %v4187 = vunpack.c.h.b16 %v2935
  %v4188 = vunpack.c.h.b16 %v2936
  %v4189 = vpack.c.b16 %v2970, %v2969
  %v4190 = vpack.c.b16 %v2972, %v2971
  %v4191 = vpack.c.b16 %v4158, %v4157
  %v4192 = vpack.c.b16 %v4160, %v4159
  %v4193 = vpack.c.b16 %v2974, %v2973
  %v4194 = vpack.c.b16 %v2976, %v2975
  %v4195 = vpack.c.b16 %v4162, %v4161
  %v4196 = vpack.c.b16 %v4164, %v4163
  %v4197 = vpack.c.b16 %v2978, %v2977
  %v4198 = vpack.c.b16 %v2980, %v2979
  %v4199 = vpack.c.b16 %v4166, %v4165
  %v4200 = vpack.c.b16 %v4168, %v4167
  %v4201 = vpack.c.b16 %v2982, %v2981
  %v4202 = vpack.c.b16 %v2984, %v2983
  %v4203 = vpack.c.b16 %v4170, %v4169
  %v4204 = vpack.c.b16 %v4172, %v4171
  %v4205 = vpack.c.b16 %v2986, %v2985
  %v4206 = vpack.c.b16 %v2988, %v2987
  %v4207 = vpack.c.b16 %v4174, %v4173
  %v4208 = vpack.c.b16 %v4176, %v4175
  %v4209 = vpack.c.b16 %v2990, %v2989
  %v4210 = vpack.c.b16 %v2992, %v2991
  %v4211 = vpack.c.b16 %v4178, %v4177
  %v4212 = vpack.c.b16 %v4180, %v4179
  %v4213 = vpack.c.b16 %v2994, %v2993
  %v4214 = vpack.c.b16 %v2996, %v2995
  %v4215 = vpack.c.b16 %v4182, %v4181
  %v4216 = vpack.c.b16 %v4184, %v4183
  %v4217 = vpack.c.b16 %v2998, %v2997
  %v4218 = vpack.c.b16 %v3000, %v2999
  %v4219 = vpack.c.b16 %v4186, %v4185
  %v4220 = vpack.c.b16 %v4188, %v4187
  %vm4221 = vsmask.f32 3328
  %vm4222 = vsmask.f32 7440
  %vm4223 = vmor %vm4221, %vm4222
  %v4225 = vshrl.u32 %v4189, 16
  %v4227 = vrot.slane %v4225, 4
  %v4228 = vshll.u32 %v4189, 16
  %v4230 = vrot.slane %v4228, 5
  %v4231 = vor.u32 %v4227, %v4230
  %v4232 = vrot.slane %v4231, 4
  %v4234 = vshll.u32 %v4191, 16
  %v4236 = vrot.slane %v4234, 5
  %v4237 = vsel %vm4223, %v4232, %v4236
  %v4239 = vshrl.u32 %v4190, 16
  %v4241 = vrot.slane %v4239, 4
  %v4242 = vshll.u32 %v4190, 16
  %v4244 = vrot.slane %v4242, 5
  %v4245 = vor.u32 %v4241, %v4244
  %v4246 = vrot.slane %v4245, 4
  %v4248 = vshll.u32 %v4192, 16
  %v4250 = vrot.slane %v4248, 5
  %v4251 = vsel %vm4223, %v4246, %v4250
  %v4253 = vshrl.u32 %v4193, 16
  %v4255 = vrot.slane %v4253, 4
  %v4256 = vshll.u32 %v4193, 16
  %v4258 = vrot.slane %v4256, 5
  %v4259 = vor.u32 %v4255, %v4258
  %v4260 = vrot.slane %v4259, 4
  %v4262 = vshll.u32 %v4195, 16
  %v4264 = vrot.slane %v4262, 5
  %v4265 = vsel %vm4223, %v4260, %v4264
  %v4267 = vshrl.u32 %v4194, 16
  %v4269 = vrot.slane %v4267, 4
  %v4270 = vshll.u32 %v4194, 16
  %v4272 = vrot.slane %v4270, 5
  %v4273 = vor.u32 %v4269, %v4272
  %v4274 = vrot.slane %v4273, 4
  %v4276 = vshll.u32 %v4196, 16
  %v4278 = vrot.slane %v4276, 5
  %v4279 = vsel %vm4223, %v4274, %v4278
  %v4281 = vshrl.u32 %v4197, 16
  %v4283 = vrot.slane %v4281, 4
  %v4284 = vshll.u32 %v4197, 16
  %v4286 = vrot.slane %v4284, 5
  %v4287 = vor.u32 %v4283, %v4286
  %v4288 = vrot.slane %v4287, 4
  %v4290 = vshll.u32 %v4199, 16
  %v4292 = vrot.slane %v4290, 5
  %v4293 = vsel %vm4223, %v4288, %v4292
  %v4295 = vshrl.u32 %v4198, 16
  %v4297 = vrot.slane %v4295, 4
  %v4298 = vshll.u32 %v4198, 16
  %v4300 = vrot.slane %v4298, 5
  %v4301 = vor.u32 %v4297, %v4300
  %v4302 = vrot.slane %v4301, 4
  %v4304 = vshll.u32 %v4200, 16
  %v4306 = vrot.slane %v4304, 5
  %v4307 = vsel %vm4223, %v4302, %v4306
  %v4309 = vshrl.u32 %v4201, 16
  %v4311 = vrot.slane %v4309, 4
  %v4312 = vshll.u32 %v4201, 16
  %v4314 = vrot.slane %v4312, 5
  %v4315 = vor.u32 %v4311, %v4314
  %v4316 = vrot.slane %v4315, 4
  %v4318 = vshll.u32 %v4203, 16
  %v4320 = vrot.slane %v4318, 5
  %v4321 = vsel %vm4223, %v4316, %v4320
  %v4323 = vshrl.u32 %v4202, 16
  %v4325 = vrot.slane %v4323, 4
  %v4326 = vshll.u32 %v4202, 16
  %v4328 = vrot.slane %v4326, 5
  %v4329 = vor.u32 %v4325, %v4328
  %v4330 = vrot.slane %v4329, 4
  %v4332 = vshll.u32 %v4204, 16
  %v4334 = vrot.slane %v4332, 5
  %v4335 = vsel %vm4223, %v4330, %v4334
  %v4337 = vshrl.u32 %v4205, 16
  %v4339 = vrot.slane %v4337, 4
  %v4340 = vshll.u32 %v4205, 16
  %v4342 = vrot.slane %v4340, 5
  %v4343 = vor.u32 %v4339, %v4342
  %v4344 = vrot.slane %v4343, 4
  %v4346 = vshll.u32 %v4207, 16
  %v4348 = vrot.slane %v4346, 5
  %v4349 = vsel %vm4223, %v4344, %v4348
  %v4351 = vshrl.u32 %v4206, 16
  %v4353 = vrot.slane %v4351, 4
  %v4354 = vshll.u32 %v4206, 16
  %v4356 = vrot.slane %v4354, 5
  %v4357 = vor.u32 %v4353, %v4356
  %v4358 = vrot.slane %v4357, 4
  %v4360 = vshll.u32 %v4208, 16
  %v4362 = vrot.slane %v4360, 5
  %v4363 = vsel %vm4223, %v4358, %v4362
  %v4365 = vshrl.u32 %v4209, 16
  %v4367 = vrot.slane %v4365, 4
  %v4368 = vshll.u32 %v4209, 16
  %v4370 = vrot.slane %v4368, 5
  %v4371 = vor.u32 %v4367, %v4370
  %v4372 = vrot.slane %v4371, 4
  %v4374 = vshll.u32 %v4211, 16
  %v4376 = vrot.slane %v4374, 5
  %v4377 = vsel %vm4223, %v4372, %v4376
  %v4379 = vshrl.u32 %v4210, 16
  %v4381 = vrot.slane %v4379, 4
  %v4382 = vshll.u32 %v4210, 16
  %v4384 = vrot.slane %v4382, 5
  %v4385 = vor.u32 %v4381, %v4384
  %v4386 = vrot.slane %v4385, 4
  %v4388 = vshll.u32 %v4212, 16
  %v4390 = vrot.slane %v4388, 5
  %v4391 = vsel %vm4223, %v4386, %v4390
  %v4393 = vshrl.u32 %v4213, 16
  %v4395 = vrot.slane %v4393, 4
  %v4396 = vshll.u32 %v4213, 16
  %v4398 = vrot.slane %v4396, 5
  %v4399 = vor.u32 %v4395, %v4398
  %v4400 = vrot.slane %v4399, 4
  %v4402 = vshll.u32 %v4215, 16
  %v4404 = vrot.slane %v4402, 5
  %v4405 = vsel %vm4223, %v4400, %v4404
  %v4407 = vshrl.u32 %v4214, 16
  %v4409 = vrot.slane %v4407, 4
  %v4410 = vshll.u32 %v4214, 16
  %v4412 = vrot.slane %v4410, 5
  %v4413 = vor.u32 %v4409, %v4412
  %v4414 = vrot.slane %v4413, 4
  %v4416 = vshll.u32 %v4216, 16
  %v4418 = vrot.slane %v4416, 5
  %v4419 = vsel %vm4223, %v4414, %v4418
  %v4421 = vshrl.u32 %v4217, 16
  %v4423 = vrot.slane %v4421, 4
  %v4424 = vshll.u32 %v4217, 16
  %v4426 = vrot.slane %v4424, 5
  %v4427 = vor.u32 %v4423, %v4426
  %v4428 = vrot.slane %v4427, 4
  %v4430 = vshll.u32 %v4219, 16
  %v4432 = vrot.slane %v4430, 5
  %v4433 = vsel %vm4223, %v4428, %v4432
  %v4435 = vshrl.u32 %v4218, 16
  %v4437 = vrot.slane %v4435, 4
  %v4438 = vshll.u32 %v4218, 16
  %v4440 = vrot.slane %v4438, 5
  %v4441 = vor.u32 %v4437, %v4440
  %v4442 = vrot.slane %v4441, 4
  %v4444 = vshll.u32 %v4220, 16
  %v4446 = vrot.slane %v4444, 5
  %v4447 = vsel %vm4223, %v4442, %v4446
  %s4448 = scalar_lea.vmem %s3, 1024
  %v4449 = vld [vmem:[%s4448] sm:$0xff]
  %v4450 = vld [vmem:[%s4448 + $0x8] sm:$0xff]
  %v4451 = vld [vmem:[%s4448 + $0x10] sm:$0xff]
  %v4452 = vld [vmem:[%s4448 + $0x18] sm:$0xff]
  %v4453 = vld [vmem:[%s4448 + $0x20] sm:$0xff]
  %v4454 = vld [vmem:[%s4448 + $0x28] sm:$0xff]
  %v4455 = vld [vmem:[%s4448 + $0x30] sm:$0xff]
  %v4456 = vld [vmem:[%s4448 + $0x38] sm:$0xff]
  %v4457 = vld [vmem:[%s4448 + $0x40] sm:$0xff]
  %v4458 = vld [vmem:[%s4448 + $0x48] sm:$0xff]
  %v4459 = vld [vmem:[%s4448 + $0x50] sm:$0xff]
  %v4460 = vld [vmem:[%s4448 + $0x58] sm:$0xff]
  %v4461 = vld [vmem:[%s4448 + $0x60] sm:$0xff]
  %v4462 = vld [vmem:[%s4448 + $0x68] sm:$0xff]
  %v4463 = vld [vmem:[%s4448 + $0x70] sm:$0xff]
  %v4464 = vld [vmem:[%s4448 + $0x78] sm:$0xff]
  %v4465 = vld [vmem:[%s4448 + $0x80] sm:$0xff]
  %v4466 = vld [vmem:[%s4448 + $0x88] sm:$0xff]
  %v4467 = vld [vmem:[%s4448 + $0x90] sm:$0xff]
  %v4468 = vld [vmem:[%s4448 + $0x98] sm:$0xff]
  %v4469 = vld [vmem:[%s4448 + $0xa0] sm:$0xff]
  %v4470 = vld [vmem:[%s4448 + $0xa8] sm:$0xff]
  %v4471 = vld [vmem:[%s4448 + $0xb0] sm:$0xff]
  %v4472 = vld [vmem:[%s4448 + $0xb8] sm:$0xff]
  %v4473 = vld [vmem:[%s4448 + $0xc0] sm:$0xff]
  %v4474 = vld [vmem:[%s4448 + $0xc8] sm:$0xff]
  %v4475 = vld [vmem:[%s4448 + $0xd0] sm:$0xff]
  %v4476 = vld [vmem:[%s4448 + $0xd8] sm:$0xff]
  %v4477 = vld [vmem:[%s4448 + $0xe0] sm:$0xff]
  %v4478 = vld [vmem:[%s4448 + $0xe8] sm:$0xff]
  %v4479 = vld [vmem:[%s4448 + $0xf0] sm:$0xff]
  %v4480 = vld [vmem:[%s4448 + $0xf8] sm:$0xff]
  %v4481 = vld [vmem:[%s4448 + $0x100] sm:$0xff]
  %v4482 = vld [vmem:[%s4448 + $0x108] sm:$0xff]
  %v4483 = vld [vmem:[%s4448 + $0x110] sm:$0xff]
  %v4484 = vld [vmem:[%s4448 + $0x118] sm:$0xff]
  %v4485 = vld [vmem:[%s4448 + $0x120] sm:$0xff]
  %v4486 = vld [vmem:[%s4448 + $0x128] sm:$0xff]
  %v4487 = vld [vmem:[%s4448 + $0x130] sm:$0xff]
  %v4488 = vld [vmem:[%s4448 + $0x138] sm:$0xff]
  %v4489 = vld [vmem:[%s4448 + $0x140] sm:$0xff]
  %v4490 = vld [vmem:[%s4448 + $0x148] sm:$0xff]
  %v4491 = vld [vmem:[%s4448 + $0x150] sm:$0xff]
  %v4492 = vld [vmem:[%s4448 + $0x158] sm:$0xff]
  %v4493 = vld [vmem:[%s4448 + $0x160] sm:$0xff]
  %v4494 = vld [vmem:[%s4448 + $0x168] sm:$0xff]
  %v4495 = vld [vmem:[%s4448 + $0x170] sm:$0xff]
  %v4496 = vld [vmem:[%s4448 + $0x178] sm:$0xff]
  %v4497 = vld [vmem:[%s4448 + $0x180] sm:$0xff]
  %v4498 = vld [vmem:[%s4448 + $0x188] sm:$0xff]
  %v4499 = vld [vmem:[%s4448 + $0x190] sm:$0xff]
  %v4500 = vld [vmem:[%s4448 + $0x198] sm:$0xff]
  %v4501 = vld [vmem:[%s4448 + $0x1a0] sm:$0xff]
  %v4502 = vld [vmem:[%s4448 + $0x1a8] sm:$0xff]
  %v4503 = vld [vmem:[%s4448 + $0x1b0] sm:$0xff]
  %v4504 = vld [vmem:[%s4448 + $0x1b8] sm:$0xff]
  %v4505 = vld [vmem:[%s4448 + $0x1c0] sm:$0xff]
  %v4506 = vld [vmem:[%s4448 + $0x1c8] sm:$0xff]
  %v4507 = vld [vmem:[%s4448 + $0x1d0] sm:$0xff]
  %v4508 = vld [vmem:[%s4448 + $0x1d8] sm:$0xff]
  %v4509 = vld [vmem:[%s4448 + $0x1e0] sm:$0xff]
  %v4510 = vld [vmem:[%s4448 + $0x1e8] sm:$0xff]
  %v4511 = vld [vmem:[%s4448 + $0x1f0] sm:$0xff]
  %v4512 = vld [vmem:[%s4448 + $0x1f8] sm:$0xff]
  %v4513 = vld [vmem:[%s4448 + $0x200] sm:$0xff]
  %v4514 = vld [vmem:[%s4448 + $0x208] sm:$0xff]
  %v4515 = vld [vmem:[%s4448 + $0x210] sm:$0xff]
  %v4516 = vld [vmem:[%s4448 + $0x218] sm:$0xff]
  %v4517 = vld [vmem:[%s4448 + $0x220] sm:$0xff]
  %v4518 = vld [vmem:[%s4448 + $0x228] sm:$0xff]
  %v4519 = vld [vmem:[%s4448 + $0x230] sm:$0xff]
  %v4520 = vld [vmem:[%s4448 + $0x238] sm:$0xff]
  %v4521 = vld [vmem:[%s4448 + $0x240] sm:$0xff]
  %v4522 = vld [vmem:[%s4448 + $0x248] sm:$0xff]
  %v4523 = vld [vmem:[%s4448 + $0x250] sm:$0xff]
  %v4524 = vld [vmem:[%s4448 + $0x258] sm:$0xff]
  %v4525 = vld [vmem:[%s4448 + $0x260] sm:$0xff]
  %v4526 = vld [vmem:[%s4448 + $0x268] sm:$0xff]
  %v4527 = vld [vmem:[%s4448 + $0x270] sm:$0xff]
  %v4528 = vld [vmem:[%s4448 + $0x278] sm:$0xff]
  %v4529 = vld [vmem:[%s4448 + $0x280] sm:$0xff]
  %v4530 = vld [vmem:[%s4448 + $0x288] sm:$0xff]
  %v4531 = vld [vmem:[%s4448 + $0x290] sm:$0xff]
  %v4532 = vld [vmem:[%s4448 + $0x298] sm:$0xff]
  %v4533 = vld [vmem:[%s4448 + $0x2a0] sm:$0xff]
  %v4534 = vld [vmem:[%s4448 + $0x2a8] sm:$0xff]
  %v4535 = vld [vmem:[%s4448 + $0x2b0] sm:$0xff]
  %v4536 = vld [vmem:[%s4448 + $0x2b8] sm:$0xff]
  %v4537 = vld [vmem:[%s4448 + $0x2c0] sm:$0xff]
  %v4538 = vld [vmem:[%s4448 + $0x2c8] sm:$0xff]
  %v4539 = vld [vmem:[%s4448 + $0x2d0] sm:$0xff]
  %v4540 = vld [vmem:[%s4448 + $0x2d8] sm:$0xff]
  %v4541 = vld [vmem:[%s4448 + $0x2e0] sm:$0xff]
  %v4542 = vld [vmem:[%s4448 + $0x2e8] sm:$0xff]
  %v4543 = vld [vmem:[%s4448 + $0x2f0] sm:$0xff]
  %v4544 = vld [vmem:[%s4448 + $0x2f8] sm:$0xff]
  %v4545 = vld [vmem:[%s4448 + $0x300] sm:$0xff]
  %v4546 = vld [vmem:[%s4448 + $0x308] sm:$0xff]
  %v4547 = vld [vmem:[%s4448 + $0x310] sm:$0xff]
  %v4548 = vld [vmem:[%s4448 + $0x318] sm:$0xff]
  %v4549 = vld [vmem:[%s4448 + $0x320] sm:$0xff]
  %v4550 = vld [vmem:[%s4448 + $0x328] sm:$0xff]
  %v4551 = vld [vmem:[%s4448 + $0x330] sm:$0xff]
  %v4552 = vld [vmem:[%s4448 + $0x338] sm:$0xff]
  %v4553 = vld [vmem:[%s4448 + $0x340] sm:$0xff]
  %v4554 = vld [vmem:[%s4448 + $0x348] sm:$0xff]
  %v4555 = vld [vmem:[%s4448 + $0x350] sm:$0xff]
  %v4556 = vld [vmem:[%s4448 + $0x358] sm:$0xff]
  %v4557 = vld [vmem:[%s4448 + $0x360] sm:$0xff]
  %v4558 = vld [vmem:[%s4448 + $0x368] sm:$0xff]
  %v4559 = vld [vmem:[%s4448 + $0x370] sm:$0xff]
  %v4560 = vld [vmem:[%s4448 + $0x378] sm:$0xff]
  %v4561 = vld [vmem:[%s4448 + $0x380] sm:$0xff]
  %v4562 = vld [vmem:[%s4448 + $0x388] sm:$0xff]
  %v4563 = vld [vmem:[%s4448 + $0x390] sm:$0xff]
  %v4564 = vld [vmem:[%s4448 + $0x398] sm:$0xff]
  %v4565 = vld [vmem:[%s4448 + $0x3a0] sm:$0xff]
  %v4566 = vld [vmem:[%s4448 + $0x3a8] sm:$0xff]
  %v4567 = vld [vmem:[%s4448 + $0x3b0] sm:$0xff]
  %v4568 = vld [vmem:[%s4448 + $0x3b8] sm:$0xff]
  %v4569 = vld [vmem:[%s4448 + $0x3c0] sm:$0xff]
  %v4570 = vld [vmem:[%s4448 + $0x3c8] sm:$0xff]
  %v4571 = vld [vmem:[%s4448 + $0x3d0] sm:$0xff]
  %v4572 = vld [vmem:[%s4448 + $0x3d8] sm:$0xff]
  %v4573 = vld [vmem:[%s4448 + $0x3e0] sm:$0xff]
  %v4574 = vld [vmem:[%s4448 + $0x3e8] sm:$0xff]
  %v4575 = vld [vmem:[%s4448 + $0x3f0] sm:$0xff]
  %v4576 = vld [vmem:[%s4448 + $0x3f8] sm:$0xff]
  %v4577 = vunpack.c.l.b16 %v4237
  %v4578 = vunpack.c.h.b16 %v4237
  %v4579 = vunpack.c.l.b16 %v4251
  %v4580 = vunpack.c.h.b16 %v4251
  %v4581 = vunpack.c.l.b16 %v4265
  %v4582 = vunpack.c.h.b16 %v4265
  %v4583 = vunpack.c.l.b16 %v4279
  %v4584 = vunpack.c.h.b16 %v4279
  %v4585 = vunpack.c.l.b16 %v4293
  %v4586 = vunpack.c.h.b16 %v4293
  %v4587 = vunpack.c.l.b16 %v4307
  %v4588 = vunpack.c.h.b16 %v4307
  %v4589 = vunpack.c.l.b16 %v4321
  %v4590 = vunpack.c.h.b16 %v4321
  %v4591 = vunpack.c.l.b16 %v4335
  %v4592 = vunpack.c.h.b16 %v4335
  %v4593 = vunpack.c.l.b16 %v4349
  %v4594 = vunpack.c.h.b16 %v4349
  %v4595 = vunpack.c.l.b16 %v4363
  %v4596 = vunpack.c.h.b16 %v4363
  %v4597 = vunpack.c.l.b16 %v4377
  %v4598 = vunpack.c.h.b16 %v4377
  %v4599 = vunpack.c.l.b16 %v4391
  %v4600 = vunpack.c.h.b16 %v4391
  %v4601 = vunpack.c.l.b16 %v4405
  %v4602 = vunpack.c.h.b16 %v4405
  %v4603 = vunpack.c.l.b16 %v4419
  %v4604 = vunpack.c.h.b16 %v4419
  %v4605 = vunpack.c.l.b16 %v4433
  %v4606 = vunpack.c.h.b16 %v4433
  %v4607 = vunpack.c.l.b16 %v4447
  %v4608 = vunpack.c.h.b16 %v4447
  %v4609 = vpack.c.b16 %v4581, %v4577
  %v4610 = vpack.c.b16 %v4582, %v4578
  %v4611 = vpack.c.b16 %v4583, %v4579
  %v4612 = vpack.c.b16 %v4584, %v4580
  %v4613 = vpack.c.b16 %v4589, %v4585
  %v4614 = vpack.c.b16 %v4590, %v4586
  %v4615 = vpack.c.b16 %v4591, %v4587
  %v4616 = vpack.c.b16 %v4592, %v4588
  %v4617 = vpack.c.b16 %v4597, %v4593
  %v4618 = vpack.c.b16 %v4598, %v4594
  %v4619 = vpack.c.b16 %v4599, %v4595
  %v4620 = vpack.c.b16 %v4600, %v4596
  %v4621 = vpack.c.b16 %v4605, %v4601
  %v4622 = vpack.c.b16 %v4606, %v4602
  %v4623 = vpack.c.b16 %v4607, %v4603
  %v4624 = vpack.c.b16 %v4608, %v4604
  %v4769 = vunpack.c.l.b16 %v4449
  %v4770 = vunpack.c.h.b16 %v4449
  %v4771 = vunpack.c.l.b16 %v4450
  %v4772 = vunpack.c.h.b16 %v4450
  %v4773 = vunpack.c.l.b16 %v4451
  %v4774 = vunpack.c.h.b16 %v4451
  %v4775 = vunpack.c.l.b16 %v4452
  %v4776 = vunpack.c.h.b16 %v4452
  %v4777 = vunpack.c.l.b16 %v4453
  %v4778 = vunpack.c.h.b16 %v4453
  %v4779 = vunpack.c.l.b16 %v4454
  %v4780 = vunpack.c.h.b16 %v4454
  %v4781 = vunpack.c.l.b16 %v4455
  %v4782 = vunpack.c.h.b16 %v4455
  %v4783 = vunpack.c.l.b16 %v4456
  %v4784 = vunpack.c.h.b16 %v4456
  %v4785 = vunpack.c.l.b16 %v4457
  %v4786 = vunpack.c.h.b16 %v4457
  %v4787 = vunpack.c.l.b16 %v4458
  %v4788 = vunpack.c.h.b16 %v4458
  %v4789 = vunpack.c.l.b16 %v4459
  %v4790 = vunpack.c.h.b16 %v4459
  %v4791 = vunpack.c.l.b16 %v4460
  %v4792 = vunpack.c.h.b16 %v4460
  %v4793 = vunpack.c.l.b16 %v4461
  %v4794 = vunpack.c.h.b16 %v4461
  %v4795 = vunpack.c.l.b16 %v4462
  %v4796 = vunpack.c.h.b16 %v4462
  %v4797 = vunpack.c.l.b16 %v4463
  %v4798 = vunpack.c.h.b16 %v4463
  %v4799 = vunpack.c.l.b16 %v4464
  %v4800 = vunpack.c.h.b16 %v4464
  %v4801 = vunpack.c.l.b16 %v4465
  %v4802 = vunpack.c.h.b16 %v4465
  %v4803 = vunpack.c.l.b16 %v4466
  %v4804 = vunpack.c.h.b16 %v4466
  %v4805 = vunpack.c.l.b16 %v4467
  %v4806 = vunpack.c.h.b16 %v4467
  %v4807 = vunpack.c.l.b16 %v4468
  %v4808 = vunpack.c.h.b16 %v4468
  %v4809 = vunpack.c.l.b16 %v4469
  %v4810 = vunpack.c.h.b16 %v4469
  %v4811 = vunpack.c.l.b16 %v4470
  %v4812 = vunpack.c.h.b16 %v4470
  %v4813 = vunpack.c.l.b16 %v4471
  %v4814 = vunpack.c.h.b16 %v4471
  %v4815 = vunpack.c.l.b16 %v4472
  %v4816 = vunpack.c.h.b16 %v4472
  %v4817 = vunpack.c.l.b16 %v4473
  %v4818 = vunpack.c.h.b16 %v4473
  %v4819 = vunpack.c.l.b16 %v4474
  %v4820 = vunpack.c.h.b16 %v4474
  %v4821 = vunpack.c.l.b16 %v4475
  %v4822 = vunpack.c.h.b16 %v4475
  %v4823 = vunpack.c.l.b16 %v4476
  %v4824 = vunpack.c.h.b16 %v4476
  %v4825 = vunpack.c.l.b16 %v4477
  %v4826 = vunpack.c.h.b16 %v4477
  %v4827 = vunpack.c.l.b16 %v4478
  %v4828 = vunpack.c.h.b16 %v4478
  %v4829 = vunpack.c.l.b16 %v4479
  %v4830 = vunpack.c.h.b16 %v4479
  %v4831 = vunpack.c.l.b16 %v4480
  %v4832 = vunpack.c.h.b16 %v4480
  %v4833 = vunpack.c.l.b16 %v4481
  %v4834 = vunpack.c.h.b16 %v4481
  %v4835 = vunpack.c.l.b16 %v4482
  %v4836 = vunpack.c.h.b16 %v4482
  %v4837 = vunpack.c.l.b16 %v4483
  %v4838 = vunpack.c.h.b16 %v4483
  %v4839 = vunpack.c.l.b16 %v4484
  %v4840 = vunpack.c.h.b16 %v4484
  %v4841 = vunpack.c.l.b16 %v4485
  %v4842 = vunpack.c.h.b16 %v4485
  %v4843 = vunpack.c.l.b16 %v4486
  %v4844 = vunpack.c.h.b16 %v4486
  %v4845 = vunpack.c.l.b16 %v4487
  %v4846 = vunpack.c.h.b16 %v4487
  %v4847 = vunpack.c.l.b16 %v4488
  %v4848 = vunpack.c.h.b16 %v4488
  %v4849 = vunpack.c.l.b16 %v4489
  %v4850 = vunpack.c.h.b16 %v4489
  %v4851 = vunpack.c.l.b16 %v4490
  %v4852 = vunpack.c.h.b16 %v4490
  %v4853 = vunpack.c.l.b16 %v4491
  %v4854 = vunpack.c.h.b16 %v4491
  %v4855 = vunpack.c.l.b16 %v4492
  %v4856 = vunpack.c.h.b16 %v4492
  %v4857 = vunpack.c.l.b16 %v4493
  %v4858 = vunpack.c.h.b16 %v4493
  %v4859 = vunpack.c.l.b16 %v4494
  %v4860 = vunpack.c.h.b16 %v4494
  %v4861 = vunpack.c.l.b16 %v4495
  %v4862 = vunpack.c.h.b16 %v4495
  %v4863 = vunpack.c.l.b16 %v4496
  %v4864 = vunpack.c.h.b16 %v4496
  %v4865 = vunpack.c.l.b16 %v4497
  %v4866 = vunpack.c.h.b16 %v4497
  %v4867 = vunpack.c.l.b16 %v4498
  %v4868 = vunpack.c.h.b16 %v4498
  %v4869 = vunpack.c.l.b16 %v4499
  %v4870 = vunpack.c.h.b16 %v4499
  %v4871 = vunpack.c.l.b16 %v4500
  %v4872 = vunpack.c.h.b16 %v4500
  %v4873 = vunpack.c.l.b16 %v4501
  %v4874 = vunpack.c.h.b16 %v4501
  %v4875 = vunpack.c.l.b16 %v4502
  %v4876 = vunpack.c.h.b16 %v4502
  %v4877 = vunpack.c.l.b16 %v4503
  %v4878 = vunpack.c.h.b16 %v4503
  %v4879 = vunpack.c.l.b16 %v4504
  %v4880 = vunpack.c.h.b16 %v4504
  %v4881 = vunpack.c.l.b16 %v4505
  %v4882 = vunpack.c.h.b16 %v4505
  %v4883 = vunpack.c.l.b16 %v4506
  %v4884 = vunpack.c.h.b16 %v4506
  %v4885 = vunpack.c.l.b16 %v4507
  %v4886 = vunpack.c.h.b16 %v4507
  %v4887 = vunpack.c.l.b16 %v4508
  %v4888 = vunpack.c.h.b16 %v4508
  %v4889 = vunpack.c.l.b16 %v4509
  %v4890 = vunpack.c.h.b16 %v4509
  %v4891 = vunpack.c.l.b16 %v4510
  %v4892 = vunpack.c.h.b16 %v4510
  %v4893 = vunpack.c.l.b16 %v4511
  %v4894 = vunpack.c.h.b16 %v4511
  %v4895 = vunpack.c.l.b16 %v4512
  %v4896 = vunpack.c.h.b16 %v4512
  %v4897 = vunpack.c.l.b16 %v4513
  %v4898 = vunpack.c.h.b16 %v4513
  %v4899 = vunpack.c.l.b16 %v4514
  %v4900 = vunpack.c.h.b16 %v4514
  %v4901 = vunpack.c.l.b16 %v4515
  %v4902 = vunpack.c.h.b16 %v4515
  %v4903 = vunpack.c.l.b16 %v4516
  %v4904 = vunpack.c.h.b16 %v4516
  %v4905 = vunpack.c.l.b16 %v4517
  %v4906 = vunpack.c.h.b16 %v4517
  %v4907 = vunpack.c.l.b16 %v4518
  %v4908 = vunpack.c.h.b16 %v4518
  %v4909 = vunpack.c.l.b16 %v4519
  %v4910 = vunpack.c.h.b16 %v4519
  %v4911 = vunpack.c.l.b16 %v4520
  %v4912 = vunpack.c.h.b16 %v4520
  %v4913 = vunpack.c.l.b16 %v4521
  %v4914 = vunpack.c.h.b16 %v4521
  %v4915 = vunpack.c.l.b16 %v4522
  %v4916 = vunpack.c.h.b16 %v4522
  %v4917 = vunpack.c.l.b16 %v4523
  %v4918 = vunpack.c.h.b16 %v4523
  %v4919 = vunpack.c.l.b16 %v4524
  %v4920 = vunpack.c.h.b16 %v4524
  %v4921 = vunpack.c.l.b16 %v4525
  %v4922 = vunpack.c.h.b16 %v4525
  %v4923 = vunpack.c.l.b16 %v4526
  %v4924 = vunpack.c.h.b16 %v4526
  %v4925 = vunpack.c.l.b16 %v4527
  %v4926 = vunpack.c.h.b16 %v4527
  %v4927 = vunpack.c.l.b16 %v4528
  %v4928 = vunpack.c.h.b16 %v4528
  %v4929 = vunpack.c.l.b16 %v4529
  %v4930 = vunpack.c.h.b16 %v4529
  %v4931 = vunpack.c.l.b16 %v4530
  %v4932 = vunpack.c.h.b16 %v4530
  %v4933 = vunpack.c.l.b16 %v4531
  %v4934 = vunpack.c.h.b16 %v4531
  %v4935 = vunpack.c.l.b16 %v4532
  %v4936 = vunpack.c.h.b16 %v4532
  %v4937 = vunpack.c.l.b16 %v4533
  %v4938 = vunpack.c.h.b16 %v4533
  %v4939 = vunpack.c.l.b16 %v4534
  %v4940 = vunpack.c.h.b16 %v4534
  %v4941 = vunpack.c.l.b16 %v4535
  %v4942 = vunpack.c.h.b16 %v4535
  %v4943 = vunpack.c.l.b16 %v4536
  %v4944 = vunpack.c.h.b16 %v4536
  %v4945 = vunpack.c.l.b16 %v4537
  %v4946 = vunpack.c.h.b16 %v4537
  %v4947 = vunpack.c.l.b16 %v4538
  %v4948 = vunpack.c.h.b16 %v4538
  %v4949 = vunpack.c.l.b16 %v4539
  %v4950 = vunpack.c.h.b16 %v4539
  %v4951 = vunpack.c.l.b16 %v4540
  %v4952 = vunpack.c.h.b16 %v4540
  %v4953 = vunpack.c.l.b16 %v4541
  %v4954 = vunpack.c.h.b16 %v4541
  %v4955 = vunpack.c.l.b16 %v4542
  %v4956 = vunpack.c.h.b16 %v4542
  %v4957 = vunpack.c.l.b16 %v4543
  %v4958 = vunpack.c.h.b16 %v4543
  %v4959 = vunpack.c.l.b16 %v4544
  %v4960 = vunpack.c.h.b16 %v4544
  %v4961 = vunpack.c.l.b16 %v4545
  %v4962 = vunpack.c.h.b16 %v4545
  %v4963 = vunpack.c.l.b16 %v4546
  %v4964 = vunpack.c.h.b16 %v4546
  %v4965 = vunpack.c.l.b16 %v4547
  %v4966 = vunpack.c.h.b16 %v4547
  %v4967 = vunpack.c.l.b16 %v4548
  %v4968 = vunpack.c.h.b16 %v4548
  %v4969 = vunpack.c.l.b16 %v4549
  %v4970 = vunpack.c.h.b16 %v4549
  %v4971 = vunpack.c.l.b16 %v4550
  %v4972 = vunpack.c.h.b16 %v4550
  %v4973 = vunpack.c.l.b16 %v4551
  %v4974 = vunpack.c.h.b16 %v4551
  %v4975 = vunpack.c.l.b16 %v4552
  %v4976 = vunpack.c.h.b16 %v4552
  %v4977 = vunpack.c.l.b16 %v4553
  %v4978 = vunpack.c.h.b16 %v4553
  %v4979 = vunpack.c.l.b16 %v4554
  %v4980 = vunpack.c.h.b16 %v4554
  %v4981 = vunpack.c.l.b16 %v4555
  %v4982 = vunpack.c.h.b16 %v4555
  %v4983 = vunpack.c.l.b16 %v4556
  %v4984 = vunpack.c.h.b16 %v4556
  %v4985 = vunpack.c.l.b16 %v4557
  %v4986 = vunpack.c.h.b16 %v4557
  %v4987 = vunpack.c.l.b16 %v4558
  %v4988 = vunpack.c.h.b16 %v4558
  %v4989 = vunpack.c.l.b16 %v4559
  %v4990 = vunpack.c.h.b16 %v4559
  %v4991 = vunpack.c.l.b16 %v4560
  %v4992 = vunpack.c.h.b16 %v4560
  %v4993 = vunpack.c.l.b16 %v4561
  %v4994 = vunpack.c.h.b16 %v4561
  %v4995 = vunpack.c.l.b16 %v4562
  %v4996 = vunpack.c.h.b16 %v4562
  %v4997 = vunpack.c.l.b16 %v4563
  %v4998 = vunpack.c.h.b16 %v4563
  %v4999 = vunpack.c.l.b16 %v4564
  %v5000 = vunpack.c.h.b16 %v4564
  %v5001 = vunpack.c.l.b16 %v4565
  %v5002 = vunpack.c.h.b16 %v4565
  %v5003 = vunpack.c.l.b16 %v4566
  %v5004 = vunpack.c.h.b16 %v4566
  %v5005 = vunpack.c.l.b16 %v4567
  %v5006 = vunpack.c.h.b16 %v4567
  %v5007 = vunpack.c.l.b16 %v4568
  %v5008 = vunpack.c.h.b16 %v4568
  %v5009 = vunpack.c.l.b16 %v4569
  %v5010 = vunpack.c.h.b16 %v4569
  %v5011 = vunpack.c.l.b16 %v4570
  %v5012 = vunpack.c.h.b16 %v4570
  %v5013 = vunpack.c.l.b16 %v4571
  %v5014 = vunpack.c.h.b16 %v4571
  %v5015 = vunpack.c.l.b16 %v4572
  %v5016 = vunpack.c.h.b16 %v4572
  %v5017 = vunpack.c.l.b16 %v4573
  %v5018 = vunpack.c.h.b16 %v4573
  %v5019 = vunpack.c.l.b16 %v4574
  %v5020 = vunpack.c.h.b16 %v4574
  %v5021 = vunpack.c.l.b16 %v4575
  %v5022 = vunpack.c.h.b16 %v4575
  %v5023 = vunpack.c.l.b16 %v4576
  %v5024 = vunpack.c.h.b16 %v4576
  %v5025 = vpack.c.b16 %v4773, %v4769
  %v5026 = vpack.c.b16 %v4774, %v4770
  %v5027 = vpack.c.b16 %v4775, %v4771
  %v5028 = vpack.c.b16 %v4776, %v4772
  %v5029 = vpack.c.b16 %v4781, %v4777
  %v5030 = vpack.c.b16 %v4782, %v4778
  %v5031 = vpack.c.b16 %v4783, %v4779
  %v5032 = vpack.c.b16 %v4784, %v4780
  %v5033 = vpack.c.b16 %v4789, %v4785
  %v5034 = vpack.c.b16 %v4790, %v4786
  %v5035 = vpack.c.b16 %v4791, %v4787
  %v5036 = vpack.c.b16 %v4792, %v4788
  %v5037 = vpack.c.b16 %v4797, %v4793
  %v5038 = vpack.c.b16 %v4798, %v4794
  %v5039 = vpack.c.b16 %v4799, %v4795
  %v5040 = vpack.c.b16 %v4800, %v4796
  %v5041 = vpack.c.b16 %v4805, %v4801
  %v5042 = vpack.c.b16 %v4806, %v4802
  %v5043 = vpack.c.b16 %v4807, %v4803
  %v5044 = vpack.c.b16 %v4808, %v4804
  %v5045 = vpack.c.b16 %v4813, %v4809
  %v5046 = vpack.c.b16 %v4814, %v4810
  %v5047 = vpack.c.b16 %v4815, %v4811
  %v5048 = vpack.c.b16 %v4816, %v4812
  %v5049 = vpack.c.b16 %v4821, %v4817
  %v5050 = vpack.c.b16 %v4822, %v4818
  %v5051 = vpack.c.b16 %v4823, %v4819
  %v5052 = vpack.c.b16 %v4824, %v4820
  %v5053 = vpack.c.b16 %v4829, %v4825
  %v5054 = vpack.c.b16 %v4830, %v4826
  %v5055 = vpack.c.b16 %v4831, %v4827
  %v5056 = vpack.c.b16 %v4832, %v4828
  %v5057 = vpack.c.b16 %v4837, %v4833
  %v5058 = vpack.c.b16 %v4838, %v4834
  %v5059 = vpack.c.b16 %v4839, %v4835
  %v5060 = vpack.c.b16 %v4840, %v4836
  %v5061 = vpack.c.b16 %v4845, %v4841
  %v5062 = vpack.c.b16 %v4846, %v4842
  %v5063 = vpack.c.b16 %v4847, %v4843
  %v5064 = vpack.c.b16 %v4848, %v4844
  %v5065 = vpack.c.b16 %v4853, %v4849
  %v5066 = vpack.c.b16 %v4854, %v4850
  %v5067 = vpack.c.b16 %v4855, %v4851
  %v5068 = vpack.c.b16 %v4856, %v4852
  %v5069 = vpack.c.b16 %v4861, %v4857
  %v5070 = vpack.c.b16 %v4862, %v4858
  %v5071 = vpack.c.b16 %v4863, %v4859
  %v5072 = vpack.c.b16 %v4864, %v4860
  %v5073 = vpack.c.b16 %v4869, %v4865
  %v5074 = vpack.c.b16 %v4870, %v4866
  %v5075 = vpack.c.b16 %v4871, %v4867
  %v5076 = vpack.c.b16 %v4872, %v4868
  %v5077 = vpack.c.b16 %v4877, %v4873
  %v5078 = vpack.c.b16 %v4878, %v4874
  %v5079 = vpack.c.b16 %v4879, %v4875
  %v5080 = vpack.c.b16 %v4880, %v4876
  %v5081 = vpack.c.b16 %v4885, %v4881
  %v5082 = vpack.c.b16 %v4886, %v4882
  %v5083 = vpack.c.b16 %v4887, %v4883
  %v5084 = vpack.c.b16 %v4888, %v4884
  %v5085 = vpack.c.b16 %v4893, %v4889
  %v5086 = vpack.c.b16 %v4894, %v4890
  %v5087 = vpack.c.b16 %v4895, %v4891
  %v5088 = vpack.c.b16 %v4896, %v4892
  %v5089 = vpack.c.b16 %v4901, %v4897
  %v5090 = vpack.c.b16 %v4902, %v4898
  %v5091 = vpack.c.b16 %v4903, %v4899
  %v5092 = vpack.c.b16 %v4904, %v4900
  %v5093 = vpack.c.b16 %v4909, %v4905
  %v5094 = vpack.c.b16 %v4910, %v4906
  %v5095 = vpack.c.b16 %v4911, %v4907
  %v5096 = vpack.c.b16 %v4912, %v4908
  %v5097 = vpack.c.b16 %v4917, %v4913
  %v5098 = vpack.c.b16 %v4918, %v4914
  %v5099 = vpack.c.b16 %v4919, %v4915
  %v5100 = vpack.c.b16 %v4920, %v4916
  %v5101 = vpack.c.b16 %v4925, %v4921
  %v5102 = vpack.c.b16 %v4926, %v4922
  %v5103 = vpack.c.b16 %v4927, %v4923
  %v5104 = vpack.c.b16 %v4928, %v4924
  %v5105 = vpack.c.b16 %v4933, %v4929
  %v5106 = vpack.c.b16 %v4934, %v4930
  %v5107 = vpack.c.b16 %v4935, %v4931
  %v5108 = vpack.c.b16 %v4936, %v4932
  %v5109 = vpack.c.b16 %v4941, %v4937
  %v5110 = vpack.c.b16 %v4942, %v4938
  %v5111 = vpack.c.b16 %v4943, %v4939
  %v5112 = vpack.c.b16 %v4944, %v4940
  %v5113 = vpack.c.b16 %v4949, %v4945
  %v5114 = vpack.c.b16 %v4950, %v4946
  %v5115 = vpack.c.b16 %v4951, %v4947
  %v5116 = vpack.c.b16 %v4952, %v4948
  %v5117 = vpack.c.b16 %v4957, %v4953
  %v5118 = vpack.c.b16 %v4958, %v4954
  %v5119 = vpack.c.b16 %v4959, %v4955
  %v5120 = vpack.c.b16 %v4960, %v4956
  %v5121 = vpack.c.b16 %v4965, %v4961
  %v5122 = vpack.c.b16 %v4966, %v4962
  %v5123 = vpack.c.b16 %v4967, %v4963
  %v5124 = vpack.c.b16 %v4968, %v4964
  %v5125 = vpack.c.b16 %v4973, %v4969
  %v5126 = vpack.c.b16 %v4974, %v4970
  %v5127 = vpack.c.b16 %v4975, %v4971
  %v5128 = vpack.c.b16 %v4976, %v4972
  %v5129 = vpack.c.b16 %v4981, %v4977
  %v5130 = vpack.c.b16 %v4982, %v4978
  %v5131 = vpack.c.b16 %v4983, %v4979
  %v5132 = vpack.c.b16 %v4984, %v4980
  %v5133 = vpack.c.b16 %v4989, %v4985
  %v5134 = vpack.c.b16 %v4990, %v4986
  %v5135 = vpack.c.b16 %v4991, %v4987
  %v5136 = vpack.c.b16 %v4992, %v4988
  %v5137 = vpack.c.b16 %v4997, %v4993
  %v5138 = vpack.c.b16 %v4998, %v4994
  %v5139 = vpack.c.b16 %v4999, %v4995
  %v5140 = vpack.c.b16 %v5000, %v4996
  %v5141 = vpack.c.b16 %v5005, %v5001
  %v5142 = vpack.c.b16 %v5006, %v5002
  %v5143 = vpack.c.b16 %v5007, %v5003
  %v5144 = vpack.c.b16 %v5008, %v5004
  %v5145 = vpack.c.b16 %v5013, %v5009
  %v5146 = vpack.c.b16 %v5014, %v5010
  %v5147 = vpack.c.b16 %v5015, %v5011
  %v5148 = vpack.c.b16 %v5016, %v5012
  %v5149 = vpack.c.b16 %v5021, %v5017
  %v5150 = vpack.c.b16 %v5022, %v5018
  %v5151 = vpack.c.b16 %v5023, %v5019
  %v5152 = vpack.c.b16 %v5024, %v5020
  %5281 = vmatprep.subr.bf16.mxu0 %v5054
  %5282 = vmatpush1.bf16.msra.mxu0 %v5053
  %5283 = vmatprep.subr.bf16.mxu0 %v5050
  %5284 = vmatpush1.bf16.msra.mxu0 %v5049
  %5285 = vmatprep.subr.bf16.mxu0 %v5046
  %5286 = vmatpush1.bf16.msra.mxu0 %v5045
  %5287 = vmatprep.subr.bf16.mxu0 %v5042
  %5288 = vmatpush1.bf16.msra.mxu0 %v5041
  %5289 = vmatprep.subr.bf16.mxu0 %v5038
  %5290 = vmatpush1.bf16.msra.mxu0 %v5037
  %5291 = vmatprep.subr.bf16.mxu0 %v5034
  %5292 = vmatpush1.bf16.msra.mxu0 %v5033
  %5293 = vmatprep.subr.bf16.mxu0 %v5030
  %5294 = vmatpush1.bf16.msra.mxu0 %v5029
  %5295 = vmatprep.subr.bf16.mxu0 %v5026
  %5296 = vmatpush1.bf16.msra.mxu0 %v5025
  %5297 = vmatprep.subr.bf16.mxu0 %v5086
  %5298 = vmatpush2.bf16.msra.mxu0 %v5085
  %5299 = vmatprep.subr.bf16.mxu0 %v5082
  %5300 = vmatpush2.bf16.msra.mxu0 %v5081
  %5301 = vmatprep.subr.bf16.mxu0 %v5078
  %5302 = vmatpush2.bf16.msra.mxu0 %v5077
  %5303 = vmatprep.subr.bf16.mxu0 %v5074
  %5304 = vmatpush2.bf16.msra.mxu0 %v5073
  %5305 = vmatprep.subr.bf16.mxu0 %v5070
  %5306 = vmatpush2.bf16.msra.mxu0 %v5069
  %5307 = vmatprep.subr.bf16.mxu0 %v5066
  %5308 = vmatpush2.bf16.msra.mxu0 %v5065
  %5309 = vmatprep.subr.bf16.mxu0 %v5062
  %5310 = vmatpush2.bf16.msra.mxu0 %v5061
  %5311 = vmatprep.subr.bf16.mxu0 %v5058
  %5312 = vmatpush2.bf16.msra.mxu0 %v5057
  %5313 = vmatprep.mubr.bf16.mxu0 %v4610
  %5314 = vmatmul.mubr.bf16.gmra.mxu0 %v4609
  %v5315 = vpop.f32.mrf.mxu0
  %v5316 = vadd.f32 0.0, %v5315
  %v5317 = vpop.f32.mrf.mxu0
  %v5318 = vadd.f32 0.0, %v5317
  %v5319 = vpop.f32.mrf.mxu0
  %v5320 = vadd.f32 0.0, %v5319
  %v5321 = vpop.f32.mrf.mxu0
  %v5322 = vadd.f32 0.0, %v5321
  %5323 = vmatprep.mubr.bf16.mxu0 %v4614
  %5324 = vmatmul.mubr.bf16.gmra.mxu0 %v4613
  %v5325 = vpop.f32.mrf.mxu0
  %v5326 = vadd.f32 0.0, %v5325
  %v5327 = vpop.f32.mrf.mxu0
  %v5328 = vadd.f32 0.0, %v5327
  %v5329 = vpop.f32.mrf.mxu0
  %v5330 = vadd.f32 0.0, %v5329
  %v5331 = vpop.f32.mrf.mxu0
  %v5332 = vadd.f32 0.0, %v5331
  %5333 = vmatprep.mubr.bf16.mxu0 %v4618
  %5334 = vmatmul.mubr.bf16.gmra.mxu0 %v4617
  %v5335 = vpop.f32.mrf.mxu0
  %v5336 = vadd.f32 0.0, %v5335
  %v5337 = vpop.f32.mrf.mxu0
  %v5338 = vadd.f32 0.0, %v5337
  %v5339 = vpop.f32.mrf.mxu0
  %v5340 = vadd.f32 0.0, %v5339
  %v5341 = vpop.f32.mrf.mxu0
  %v5342 = vadd.f32 0.0, %v5341
  %5343 = vmatprep.mubr.bf16.mxu0 %v4622
  %5344 = vmatmul.mubr.bf16.gmra.mxu0 %v4621
  %v5345 = vpop.f32.mrf.mxu0
  %v5346 = vadd.f32 0.0, %v5345
  %v5347 = vpop.f32.mrf.mxu0
  %v5348 = vadd.f32 0.0, %v5347
  %v5349 = vpop.f32.mrf.mxu0
  %v5350 = vadd.f32 0.0, %v5349
  %v5351 = vpop.f32.mrf.mxu0
  %v5352 = vadd.f32 0.0, %v5351
  %5353 = vdwg.mxu0
  %5354 = vmatprep.subr.bf16.mxu0 %v5118
  %5355 = vmatpush1.bf16.msra.mxu0 %v5117
  %5356 = vmatprep.subr.bf16.mxu0 %v5114
  %5357 = vmatpush1.bf16.msra.mxu0 %v5113
  %5358 = vmatprep.subr.bf16.mxu0 %v5110
  %5359 = vmatpush1.bf16.msra.mxu0 %v5109
  %5360 = vmatprep.subr.bf16.mxu0 %v5106
  %5361 = vmatpush1.bf16.msra.mxu0 %v5105
  %5362 = vmatprep.subr.bf16.mxu0 %v5102
  %5363 = vmatpush1.bf16.msra.mxu0 %v5101
  %5364 = vmatprep.subr.bf16.mxu0 %v5098
  %5365 = vmatpush1.bf16.msra.mxu0 %v5097
  %5366 = vmatprep.subr.bf16.mxu0 %v5094
  %5367 = vmatpush1.bf16.msra.mxu0 %v5093
  %5368 = vmatprep.subr.bf16.mxu0 %v5090
  %5369 = vmatpush1.bf16.msra.mxu0 %v5089
  %5370 = vmatprep.subr.bf16.mxu0 %v5150
  %5371 = vmatpush2.bf16.msra.mxu0 %v5149
  %5372 = vmatprep.subr.bf16.mxu0 %v5146
  %5373 = vmatpush2.bf16.msra.mxu0 %v5145
  %5374 = vmatprep.subr.bf16.mxu0 %v5142
  %5375 = vmatpush2.bf16.msra.mxu0 %v5141
  %5376 = vmatprep.subr.bf16.mxu0 %v5138
  %5377 = vmatpush2.bf16.msra.mxu0 %v5137
  %5378 = vmatprep.subr.bf16.mxu0 %v5134
  %5379 = vmatpush2.bf16.msra.mxu0 %v5133
  %5380 = vmatprep.subr.bf16.mxu0 %v5130
  %5381 = vmatpush2.bf16.msra.mxu0 %v5129
  %5382 = vmatprep.subr.bf16.mxu0 %v5126
  %5383 = vmatpush2.bf16.msra.mxu0 %v5125
  %5384 = vmatprep.subr.bf16.mxu0 %v5122
  %5385 = vmatpush2.bf16.msra.mxu0 %v5121
  %5386 = vmatprep.mubr.bf16.mxu0 %v4612
  %5387 = vmatmul.mubr.bf16.gmra.mxu0 %v4611
  %v5388 = vpop.f32.mrf.mxu0
  %v5389 = vadd.f32 %v5316, %v5388
  %v5390 = vpop.f32.mrf.mxu0
  %v5391 = vadd.f32 %v5318, %v5390
  %v5392 = vpop.f32.mrf.mxu0
  %v5393 = vadd.f32 %v5320, %v5392
  %v5394 = vpop.f32.mrf.mxu0
  %v5395 = vadd.f32 %v5322, %v5394
  %5396 = vmatprep.mubr.bf16.mxu0 %v4616
  %5397 = vmatmul.mubr.bf16.gmra.mxu0 %v4615
  %v5398 = vpop.f32.mrf.mxu0
  %v5399 = vadd.f32 %v5326, %v5398
  %v5400 = vpop.f32.mrf.mxu0
  %v5401 = vadd.f32 %v5328, %v5400
  %v5402 = vpop.f32.mrf.mxu0
  %v5403 = vadd.f32 %v5330, %v5402
  %v5404 = vpop.f32.mrf.mxu0
  %v5405 = vadd.f32 %v5332, %v5404
  %5406 = vmatprep.mubr.bf16.mxu0 %v4620
  %5407 = vmatmul.mubr.bf16.gmra.mxu0 %v4619
  %v5408 = vpop.f32.mrf.mxu0
  %v5409 = vadd.f32 %v5336, %v5408
  %v5410 = vpop.f32.mrf.mxu0
  %v5411 = vadd.f32 %v5338, %v5410
  %v5412 = vpop.f32.mrf.mxu0
  %v5413 = vadd.f32 %v5340, %v5412
  %v5414 = vpop.f32.mrf.mxu0
  %v5415 = vadd.f32 %v5342, %v5414
  %5416 = vmatprep.mubr.bf16.mxu0 %v4624
  %5417 = vmatmul.mubr.bf16.gmra.mxu0 %v4623
  %v5418 = vpop.f32.mrf.mxu0
  %v5419 = vadd.f32 %v5346, %v5418
  %v5420 = vpop.f32.mrf.mxu0
  %v5421 = vadd.f32 %v5348, %v5420
  %v5422 = vpop.f32.mrf.mxu0
  %v5423 = vadd.f32 %v5350, %v5422
  %v5424 = vpop.f32.mrf.mxu0
  %v5425 = vadd.f32 %v5352, %v5424
  %5426 = vdwg.mxu0
  %5427 = vmatprep.subr.bf16.mxu0 %v5056
  %5428 = vmatpush1.bf16.msra.mxu0 %v5055
  %5429 = vmatprep.subr.bf16.mxu0 %v5052
  %5430 = vmatpush1.bf16.msra.mxu0 %v5051
  %5431 = vmatprep.subr.bf16.mxu0 %v5048
  %5432 = vmatpush1.bf16.msra.mxu0 %v5047
  %5433 = vmatprep.subr.bf16.mxu0 %v5044
  %5434 = vmatpush1.bf16.msra.mxu0 %v5043
  %5435 = vmatprep.subr.bf16.mxu0 %v5040
  %5436 = vmatpush1.bf16.msra.mxu0 %v5039
  %5437 = vmatprep.subr.bf16.mxu0 %v5036
  %5438 = vmatpush1.bf16.msra.mxu0 %v5035
  %5439 = vmatprep.subr.bf16.mxu0 %v5032
  %5440 = vmatpush1.bf16.msra.mxu0 %v5031
  %5441 = vmatprep.subr.bf16.mxu0 %v5028
  %5442 = vmatpush1.bf16.msra.mxu0 %v5027
  %5443 = vmatprep.subr.bf16.mxu0 %v5088
  %5444 = vmatpush2.bf16.msra.mxu0 %v5087
  %5445 = vmatprep.subr.bf16.mxu0 %v5084
  %5446 = vmatpush2.bf16.msra.mxu0 %v5083
  %5447 = vmatprep.subr.bf16.mxu0 %v5080
  %5448 = vmatpush2.bf16.msra.mxu0 %v5079
  %5449 = vmatprep.subr.bf16.mxu0 %v5076
  %5450 = vmatpush2.bf16.msra.mxu0 %v5075
  %5451 = vmatprep.subr.bf16.mxu0 %v5072
  %5452 = vmatpush2.bf16.msra.mxu0 %v5071
  %5453 = vmatprep.subr.bf16.mxu0 %v5068
  %5454 = vmatpush2.bf16.msra.mxu0 %v5067
  %5455 = vmatprep.subr.bf16.mxu0 %v5064
  %5456 = vmatpush2.bf16.msra.mxu0 %v5063
  %5457 = vmatprep.subr.bf16.mxu0 %v5060
  %5458 = vmatpush2.bf16.msra.mxu0 %v5059
  %5459 = vmatprep.mubr.bf16.mxu0 %v4610
  %5460 = vmatmul.mubr.bf16.gmra.mxu0 %v4609
  %v5461 = vpop.f32.mrf.mxu0
  %v5462 = vadd.f32 0.0, %v5461
  %v5463 = vpop.f32.mrf.mxu0
  %v5464 = vadd.f32 0.0, %v5463
  %v5465 = vpop.f32.mrf.mxu0
  %v5466 = vadd.f32 0.0, %v5465
  %v5467 = vpop.f32.mrf.mxu0
  %v5468 = vadd.f32 0.0, %v5467
  %5469 = vmatprep.mubr.bf16.mxu0 %v4614
  %5470 = vmatmul.mubr.bf16.gmra.mxu0 %v4613
  %v5471 = vpop.f32.mrf.mxu0
  %v5472 = vadd.f32 0.0, %v5471
  %v5473 = vpop.f32.mrf.mxu0
  %v5474 = vadd.f32 0.0, %v5473
  %v5475 = vpop.f32.mrf.mxu0
  %v5476 = vadd.f32 0.0, %v5475
  %v5477 = vpop.f32.mrf.mxu0
  %v5478 = vadd.f32 0.0, %v5477
  %5479 = vmatprep.mubr.bf16.mxu0 %v4618
  %5480 = vmatmul.mubr.bf16.gmra.mxu0 %v4617
  %v5481 = vpop.f32.mrf.mxu0
  %v5482 = vadd.f32 0.0, %v5481
  %v5483 = vpop.f32.mrf.mxu0
  %v5484 = vadd.f32 0.0, %v5483
  %v5485 = vpop.f32.mrf.mxu0
  %v5486 = vadd.f32 0.0, %v5485
  %v5487 = vpop.f32.mrf.mxu0
  %v5488 = vadd.f32 0.0, %v5487
  %5489 = vmatprep.mubr.bf16.mxu0 %v4622
  %5490 = vmatmul.mubr.bf16.gmra.mxu0 %v4621
  %v5491 = vpop.f32.mrf.mxu0
  %v5492 = vadd.f32 0.0, %v5491
  %v5493 = vpop.f32.mrf.mxu0
  %v5494 = vadd.f32 0.0, %v5493
  %v5495 = vpop.f32.mrf.mxu0
  %v5496 = vadd.f32 0.0, %v5495
  %v5497 = vpop.f32.mrf.mxu0
  %v5498 = vadd.f32 0.0, %v5497
  %5499 = vdwg.mxu0
  %5500 = vmatprep.subr.bf16.mxu0 %v5120
  %5501 = vmatpush1.bf16.msra.mxu0 %v5119
  %5502 = vmatprep.subr.bf16.mxu0 %v5116
  %5503 = vmatpush1.bf16.msra.mxu0 %v5115
  %5504 = vmatprep.subr.bf16.mxu0 %v5112
  %5505 = vmatpush1.bf16.msra.mxu0 %v5111
  %5506 = vmatprep.subr.bf16.mxu0 %v5108
  %5507 = vmatpush1.bf16.msra.mxu0 %v5107
  %5508 = vmatprep.subr.bf16.mxu0 %v5104
  %5509 = vmatpush1.bf16.msra.mxu0 %v5103
  %5510 = vmatprep.subr.bf16.mxu0 %v5100
  %5511 = vmatpush1.bf16.msra.mxu0 %v5099
  %5512 = vmatprep.subr.bf16.mxu0 %v5096
  %5513 = vmatpush1.bf16.msra.mxu0 %v5095
  %5514 = vmatprep.subr.bf16.mxu0 %v5092
  %5515 = vmatpush1.bf16.msra.mxu0 %v5091
  %5516 = vmatprep.subr.bf16.mxu0 %v5152
  %5517 = vmatpush2.bf16.msra.mxu0 %v5151
  %5518 = vmatprep.subr.bf16.mxu0 %v5148
  %5519 = vmatpush2.bf16.msra.mxu0 %v5147
  %5520 = vmatprep.subr.bf16.mxu0 %v5144
  %5521 = vmatpush2.bf16.msra.mxu0 %v5143
  %5522 = vmatprep.subr.bf16.mxu0 %v5140
  %5523 = vmatpush2.bf16.msra.mxu0 %v5139
  %5524 = vmatprep.subr.bf16.mxu0 %v5136
  %5525 = vmatpush2.bf16.msra.mxu0 %v5135
  %5526 = vmatprep.subr.bf16.mxu0 %v5132
  %5527 = vmatpush2.bf16.msra.mxu0 %v5131
  %5528 = vmatprep.subr.bf16.mxu0 %v5128
  %5529 = vmatpush2.bf16.msra.mxu0 %v5127
  %5530 = vmatprep.subr.bf16.mxu0 %v5124
  %5531 = vmatpush2.bf16.msra.mxu0 %v5123
  %5532 = vmatprep.mubr.bf16.mxu0 %v4612
  %5533 = vmatmul.mubr.bf16.gmra.mxu0 %v4611
  %v5534 = vpop.f32.mrf.mxu0
  %v5535 = vadd.f32 %v5462, %v5534
  %v5536 = vpop.f32.mrf.mxu0
  %v5537 = vadd.f32 %v5464, %v5536
  %v5538 = vpop.f32.mrf.mxu0
  %v5539 = vadd.f32 %v5466, %v5538
  %v5540 = vpop.f32.mrf.mxu0
  %v5541 = vadd.f32 %v5468, %v5540
  %5542 = vmatprep.mubr.bf16.mxu0 %v4616
  %5543 = vmatmul.mubr.bf16.gmra.mxu0 %v4615
  %v5544 = vpop.f32.mrf.mxu0
  %v5545 = vadd.f32 %v5472, %v5544
  %v5546 = vpop.f32.mrf.mxu0
  %v5547 = vadd.f32 %v5474, %v5546
  %v5548 = vpop.f32.mrf.mxu0
  %v5549 = vadd.f32 %v5476, %v5548
  %v5550 = vpop.f32.mrf.mxu0
  %v5551 = vadd.f32 %v5478, %v5550
  %5552 = vmatprep.mubr.bf16.mxu0 %v4620
  %5553 = vmatmul.mubr.bf16.gmra.mxu0 %v4619
  %v5554 = vpop.f32.mrf.mxu0
  %v5555 = vadd.f32 %v5482, %v5554
  %v5556 = vpop.f32.mrf.mxu0
  %v5557 = vadd.f32 %v5484, %v5556
  %v5558 = vpop.f32.mrf.mxu0
  %v5559 = vadd.f32 %v5486, %v5558
  %v5560 = vpop.f32.mrf.mxu0
  %v5561 = vadd.f32 %v5488, %v5560
  %5562 = vmatprep.mubr.bf16.mxu0 %v4624
  %5563 = vmatmul.mubr.bf16.gmra.mxu0 %v4623
  %v5564 = vpop.f32.mrf.mxu0
  %v5565 = vadd.f32 %v5492, %v5564
  %v5566 = vpop.f32.mrf.mxu0
  %v5567 = vadd.f32 %v5494, %v5566
  %v5568 = vpop.f32.mrf.mxu0
  %v5569 = vadd.f32 %v5496, %v5568
  %v5570 = vpop.f32.mrf.mxu0
  %v5571 = vadd.f32 %v5498, %v5570
  %5572 = vdwg.mxu0
  %v5573 = vadd.f32 %v4125, %v5389
  %v5574 = vadd.f32 %v4126, %v5391
  %v5575 = vadd.f32 %v4127, %v5535
  %v5576 = vadd.f32 %v4128, %v5537
  %v5577 = vadd.f32 %v4129, %v5393
  %v5578 = vadd.f32 %v4130, %v5395
  %v5579 = vadd.f32 %v4131, %v5539
  %v5580 = vadd.f32 %v4132, %v5541
  %v5581 = vadd.f32 %v4133, %v5399
  %v5582 = vadd.f32 %v4134, %v5401
  %v5583 = vadd.f32 %v4135, %v5545
  %v5584 = vadd.f32 %v4136, %v5547
  %v5585 = vadd.f32 %v4137, %v5403
  %v5586 = vadd.f32 %v4138, %v5405
  %v5587 = vadd.f32 %v4139, %v5549
  %v5588 = vadd.f32 %v4140, %v5551
  %v5589 = vadd.f32 %v4141, %v5409
  %v5590 = vadd.f32 %v4142, %v5411
  %v5591 = vadd.f32 %v4143, %v5555
  %v5592 = vadd.f32 %v4144, %v5557
  %v5593 = vadd.f32 %v4145, %v5413
  %v5594 = vadd.f32 %v4146, %v5415
  %v5595 = vadd.f32 %v4147, %v5559
  %v5596 = vadd.f32 %v4148, %v5561
  %v5597 = vadd.f32 %v4149, %v5419
  %v5598 = vadd.f32 %v4150, %v5421
  %v5599 = vadd.f32 %v4151, %v5565
  %v5600 = vadd.f32 %v4152, %v5567
  %v5601 = vadd.f32 %v4153, %v5423
  %v5602 = vadd.f32 %v4154, %v5425
  %v5603 = vadd.f32 %v4155, %v5569
  %v5604 = vadd.f32 %v4156, %v5571
  %5605 = vst [vmem:[#allocation2] sm:$0xff] %v5573
  %5606 = vst [vmem:[#allocation2 + $0x8] sm:$0xff] %v5574
  %5607 = vst [vmem:[#allocation2 + $0x10] sm:$0xff] %v5575
  %5608 = vst [vmem:[#allocation2 + $0x18] sm:$0xff] %v5576
  %5609 = vst [vmem:[#allocation2 + $0x20] sm:$0xff] %v5577
  %5610 = vst [vmem:[#allocation2 + $0x28] sm:$0xff] %v5578
  %5611 = vst [vmem:[#allocation2 + $0x30] sm:$0xff] %v5579
  %5612 = vst [vmem:[#allocation2 + $0x38] sm:$0xff] %v5580
  %5613 = vst [vmem:[#allocation2 + $0x40] sm:$0xff] %v5581
  %5614 = vst [vmem:[#allocation2 + $0x48] sm:$0xff] %v5582
  %5615 = vst [vmem:[#allocation2 + $0x50] sm:$0xff] %v5583
  %5616 = vst [vmem:[#allocation2 + $0x58] sm:$0xff] %v5584
  %5617 = vst [vmem:[#allocation2 + $0x60] sm:$0xff] %v5585
  %5618 = vst [vmem:[#allocation2 + $0x68] sm:$0xff] %v5586
  %5619 = vst [vmem:[#allocation2 + $0x70] sm:$0xff] %v5587
  %5620 = vst [vmem:[#allocation2 + $0x78] sm:$0xff] %v5588
  %5621 = vst [vmem:[#allocation2 + $0x80] sm:$0xff] %v5589
  %5622 = vst [vmem:[#allocation2 + $0x88] sm:$0xff] %v5590
  %5623 = vst [vmem:[#allocation2 + $0x90] sm:$0xff] %v5591
  %5624 = vst [vmem:[#allocation2 + $0x98] sm:$0xff] %v5592
  %5625 = vst [vmem:[#allocation2 + $0xa0] sm:$0xff] %v5593
  %5626 = vst [vmem:[#allocation2 + $0xa8] sm:$0xff] %v5594
  %5627 = vst [vmem:[#allocation2 + $0xb0] sm:$0xff] %v5595
  %5628 = vst [vmem:[#allocation2 + $0xb8] sm:$0xff] %v5596
  %5629 = vst [vmem:[#allocation2 + $0xc0] sm:$0xff] %v5597
  %5630 = vst [vmem:[#allocation2 + $0xc8] sm:$0xff] %v5598
  %5631 = vst [vmem:[#allocation2 + $0xd0] sm:$0xff] %v5599
  %5632 = vst [vmem:[#allocation2 + $0xd8] sm:$0xff] %v5600
  %5633 = vst [vmem:[#allocation2 + $0xe0] sm:$0xff] %v5601
  %5634 = vst [vmem:[#allocation2 + $0xe8] sm:$0xff] %v5602
  %5635 = vst [vmem:[#allocation2 + $0xf0] sm:$0xff] %v5603
  %5636 = vst [vmem:[#allocation2 + $0xf8] sm:$0xff] %v5604
  %v5637 = vld [vmem:[#allocation2] sm:$0xff]
  %v5638 = vld [vmem:[#allocation2 + $0x8] sm:$0xff]
  %v5639 = vld [vmem:[#allocation2 + $0x10] sm:$0xff]
  %v5640 = vld [vmem:[#allocation2 + $0x18] sm:$0xff]
  %v5641 = vld [vmem:[#allocation2 + $0x20] sm:$0xff]
  %v5642 = vld [vmem:[#allocation2 + $0x28] sm:$0xff]
  %v5643 = vld [vmem:[#allocation2 + $0x30] sm:$0xff]
  %v5644 = vld [vmem:[#allocation2 + $0x38] sm:$0xff]
  %v5645 = vld [vmem:[#allocation2 + $0x40] sm:$0xff]
  %v5646 = vld [vmem:[#allocation2 + $0x48] sm:$0xff]
  %v5647 = vld [vmem:[#allocation2 + $0x50] sm:$0xff]
  %v5648 = vld [vmem:[#allocation2 + $0x58] sm:$0xff]
  %v5649 = vld [vmem:[#allocation2 + $0x60] sm:$0xff]
  %v5650 = vld [vmem:[#allocation2 + $0x68] sm:$0xff]
  %v5651 = vld [vmem:[#allocation2 + $0x70] sm:$0xff]
  %v5652 = vld [vmem:[#allocation2 + $0x78] sm:$0xff]
  %v5653 = vld [vmem:[#allocation2 + $0x80] sm:$0xff]
  %v5654 = vld [vmem:[#allocation2 + $0x88] sm:$0xff]
  %v5655 = vld [vmem:[#allocation2 + $0x90] sm:$0xff]
  %v5656 = vld [vmem:[#allocation2 + $0x98] sm:$0xff]
  %v5657 = vld [vmem:[#allocation2 + $0xa0] sm:$0xff]
  %v5658 = vld [vmem:[#allocation2 + $0xa8] sm:$0xff]
  %v5659 = vld [vmem:[#allocation2 + $0xb0] sm:$0xff]
  %v5660 = vld [vmem:[#allocation2 + $0xb8] sm:$0xff]
  %v5661 = vld [vmem:[#allocation2 + $0xc0] sm:$0xff]
  %v5662 = vld [vmem:[#allocation2 + $0xc8] sm:$0xff]
  %v5663 = vld [vmem:[#allocation2 + $0xd0] sm:$0xff]
  %v5664 = vld [vmem:[#allocation2 + $0xd8] sm:$0xff]
  %v5665 = vld [vmem:[#allocation2 + $0xe0] sm:$0xff]
  %v5666 = vld [vmem:[#allocation2 + $0xe8] sm:$0xff]
  %v5667 = vld [vmem:[#allocation2 + $0xf0] sm:$0xff]
  %v5668 = vld [vmem:[#allocation2 + $0xf8] sm:$0xff]
  %vm5669 = vcmask 1042432
  %vm5670 = vcmask 1046532
  %vm5671 = vmor %vm5669, %vm5670
  %v5672 = vrot.slane %v4189, 5
  %v5673 = vrot.slane %v5672, 4
  %v5674 = vrot.slane %v4191, 5
  %v5675 = vsel %vm5671, %v5673, %v5674
  %v5676 = vrot.slane %v4190, 5
  %v5677 = vrot.slane %v5676, 4
  %v5678 = vrot.slane %v4192, 5
  %v5679 = vsel %vm5671, %v5677, %v5678
  %v5680 = vrot.slane %v4193, 5
  %v5681 = vrot.slane %v5680, 4
  %v5682 = vrot.slane %v4195, 5
  %v5683 = vsel %vm5671, %v5681, %v5682
  %v5684 = vrot.slane %v4194, 5
  %v5685 = vrot.slane %v5684, 4
  %v5686 = vrot.slane %v4196, 5
  %v5687 = vsel %vm5671, %v5685, %v5686
  %v5688 = vrot.slane %v4197, 5
  %v5689 = vrot.slane %v5688, 4
  %v5690 = vrot.slane %v4199, 5
  %v5691 = vsel %vm5671, %v5689, %v5690
  %v5692 = vrot.slane %v4198, 5
  %v5693 = vrot.slane %v5692, 4
  %v5694 = vrot.slane %v4200, 5
  %v5695 = vsel %vm5671, %v5693, %v5694
  %v5696 = vrot.slane %v4201, 5
  %v5697 = vrot.slane %v5696, 4
  %v5698 = vrot.slane %v4203, 5
  %v5699 = vsel %vm5671, %v5697, %v5698
  %v5700 = vrot.slane %v4202, 5
  %v5701 = vrot.slane %v5700, 4
  %v5702 = vrot.slane %v4204, 5
  %v5703 = vsel %vm5671, %v5701, %v5702
  %v5704 = vrot.slane %v4205, 5
  %v5705 = vrot.slane %v5704, 4
  %v5706 = vrot.slane %v4207, 5
  %v5707 = vsel %vm5671, %v5705, %v5706
  %v5708 = vrot.slane %v4206, 5
  %v5709 = vrot.slane %v5708, 4
  %v5710 = vrot.slane %v4208, 5
  %v5711 = vsel %vm5671, %v5709, %v5710
  %v5712 = vrot.slane %v4209, 5
  %v5713 = vrot.slane %v5712, 4
  %v5714 = vrot.slane %v4211, 5
  %v5715 = vsel %vm5671, %v5713, %v5714
  %v5716 = vrot.slane %v4210, 5
  %v5717 = vrot.slane %v5716, 4
  %v5718 = vrot.slane %v4212, 5
  %v5719 = vsel %vm5671, %v5717, %v5718
  %v5720 = vrot.slane %v4213, 5
  %v5721 = vrot.slane %v5720, 4
  %v5722 = vrot.slane %v4215, 5
  %v5723 = vsel %vm5671, %v5721, %v5722
  %v5724 = vrot.slane %v4214, 5
  %v5725 = vrot.slane %v5724, 4
  %v5726 = vrot.slane %v4216, 5
  %v5727 = vsel %vm5671, %v5725, %v5726
  %v5728 = vrot.slane %v4217, 5
  %v5729 = vrot.slane %v5728, 4
  %v5730 = vrot.slane %v4219, 5
  %v5731 = vsel %vm5671, %v5729, %v5730
  %v5732 = vrot.slane %v4218, 5
  %v5733 = vrot.slane %v5732, 4
  %v5734 = vrot.slane %v4220, 5
  %v5735 = vsel %vm5671, %v5733, %v5734
  %s5736 = scalar_lea.vmem %s3, 2048
  %v5737 = vld [vmem:[%s5736] sm:$0xff]
  %v5738 = vld [vmem:[%s5736 + $0x8] sm:$0xff]
  %v5739 = vld [vmem:[%s5736 + $0x10] sm:$0xff]
  %v5740 = vld [vmem:[%s5736 + $0x18] sm:$0xff]
  %v5741 = vld [vmem:[%s5736 + $0x20] sm:$0xff]
  %v5742 = vld [vmem:[%s5736 + $0x28] sm:$0xff]
  %v5743 = vld [vmem:[%s5736 + $0x30] sm:$0xff]
  %v5744 = vld [vmem:[%s5736 + $0x38] sm:$0xff]
  %v5745 = vld [vmem:[%s5736 + $0x40] sm:$0xff]
  %v5746 = vld [vmem:[%s5736 + $0x48] sm:$0xff]
  %v5747 = vld [vmem:[%s5736 + $0x50] sm:$0xff]
  %v5748 = vld [vmem:[%s5736 + $0x58] sm:$0xff]
  %v5749 = vld [vmem:[%s5736 + $0x60] sm:$0xff]
  %v5750 = vld [vmem:[%s5736 + $0x68] sm:$0xff]
  %v5751 = vld [vmem:[%s5736 + $0x70] sm:$0xff]
  %v5752 = vld [vmem:[%s5736 + $0x78] sm:$0xff]
  %v5753 = vld [vmem:[%s5736 + $0x80] sm:$0xff]
  %v5754 = vld [vmem:[%s5736 + $0x88] sm:$0xff]
  %v5755 = vld [vmem:[%s5736 + $0x90] sm:$0xff]
  %v5756 = vld [vmem:[%s5736 + $0x98] sm:$0xff]
  %v5757 = vld [vmem:[%s5736 + $0xa0] sm:$0xff]
  %v5758 = vld [vmem:[%s5736 + $0xa8] sm:$0xff]
  %v5759 = vld [vmem:[%s5736 + $0xb0] sm:$0xff]
  %v5760 = vld [vmem:[%s5736 + $0xb8] sm:$0xff]
  %v5761 = vld [vmem:[%s5736 + $0xc0] sm:$0xff]
  %v5762 = vld [vmem:[%s5736 + $0xc8] sm:$0xff]
  %v5763 = vld [vmem:[%s5736 + $0xd0] sm:$0xff]
  %v5764 = vld [vmem:[%s5736 + $0xd8] sm:$0xff]
  %v5765 = vld [vmem:[%s5736 + $0xe0] sm:$0xff]
  %v5766 = vld [vmem:[%s5736 + $0xe8] sm:$0xff]
  %v5767 = vld [vmem:[%s5736 + $0xf0] sm:$0xff]
  %v5768 = vld [vmem:[%s5736 + $0xf8] sm:$0xff]
  %v5769 = vld [vmem:[%s5736 + $0x100] sm:$0xff]
  %v5770 = vld [vmem:[%s5736 + $0x108] sm:$0xff]
  %v5771 = vld [vmem:[%s5736 + $0x110] sm:$0xff]
  %v5772 = vld [vmem:[%s5736 + $0x118] sm:$0xff]
  %v5773 = vld [vmem:[%s5736 + $0x120] sm:$0xff]
  %v5774 = vld [vmem:[%s5736 + $0x128] sm:$0xff]
  %v5775 = vld [vmem:[%s5736 + $0x130] sm:$0xff]
  %v5776 = vld [vmem:[%s5736 + $0x138] sm:$0xff]
  %v5777 = vld [vmem:[%s5736 + $0x140] sm:$0xff]
  %v5778 = vld [vmem:[%s5736 + $0x148] sm:$0xff]
  %v5779 = vld [vmem:[%s5736 + $0x150] sm:$0xff]
  %v5780 = vld [vmem:[%s5736 + $0x158] sm:$0xff]
  %v5781 = vld [vmem:[%s5736 + $0x160] sm:$0xff]
  %v5782 = vld [vmem:[%s5736 + $0x168] sm:$0xff]
  %v5783 = vld [vmem:[%s5736 + $0x170] sm:$0xff]
  %v5784 = vld [vmem:[%s5736 + $0x178] sm:$0xff]
  %v5785 = vld [vmem:[%s5736 + $0x180] sm:$0xff]
  %v5786 = vld [vmem:[%s5736 + $0x188] sm:$0xff]
  %v5787 = vld [vmem:[%s5736 + $0x190] sm:$0xff]
  %v5788 = vld [vmem:[%s5736 + $0x198] sm:$0xff]
  %v5789 = vld [vmem:[%s5736 + $0x1a0] sm:$0xff]
  %v5790 = vld [vmem:[%s5736 + $0x1a8] sm:$0xff]
  %v5791 = vld [vmem:[%s5736 + $0x1b0] sm:$0xff]
  %v5792 = vld [vmem:[%s5736 + $0x1b8] sm:$0xff]
  %v5793 = vld [vmem:[%s5736 + $0x1c0] sm:$0xff]
  %v5794 = vld [vmem:[%s5736 + $0x1c8] sm:$0xff]
  %v5795 = vld [vmem:[%s5736 + $0x1d0] sm:$0xff]
  %v5796 = vld [vmem:[%s5736 + $0x1d8] sm:$0xff]
  %v5797 = vld [vmem:[%s5736 + $0x1e0] sm:$0xff]
  %v5798 = vld [vmem:[%s5736 + $0x1e8] sm:$0xff]
  %v5799 = vld [vmem:[%s5736 + $0x1f0] sm:$0xff]
  %v5800 = vld [vmem:[%s5736 + $0x1f8] sm:$0xff]
  %v5801 = vld [vmem:[%s5736 + $0x200] sm:$0xff]
  %v5802 = vld [vmem:[%s5736 + $0x208] sm:$0xff]
  %v5803 = vld [vmem:[%s5736 + $0x210] sm:$0xff]
  %v5804 = vld [vmem:[%s5736 + $0x218] sm:$0xff]
  %v5805 = vld [vmem:[%s5736 + $0x220] sm:$0xff]
  %v5806 = vld [vmem:[%s5736 + $0x228] sm:$0xff]
  %v5807 = vld [vmem:[%s5736 + $0x230] sm:$0xff]
  %v5808 = vld [vmem:[%s5736 + $0x238] sm:$0xff]
  %v5809 = vld [vmem:[%s5736 + $0x240] sm:$0xff]
  %v5810 = vld [vmem:[%s5736 + $0x248] sm:$0xff]
  %v5811 = vld [vmem:[%s5736 + $0x250] sm:$0xff]
  %v5812 = vld [vmem:[%s5736 + $0x258] sm:$0xff]
  %v5813 = vld [vmem:[%s5736 + $0x260] sm:$0xff]
  %v5814 = vld [vmem:[%s5736 + $0x268] sm:$0xff]
  %v5815 = vld [vmem:[%s5736 + $0x270] sm:$0xff]
  %v5816 = vld [vmem:[%s5736 + $0x278] sm:$0xff]
  %v5817 = vld [vmem:[%s5736 + $0x280] sm:$0xff]
  %v5818 = vld [vmem:[%s5736 + $0x288] sm:$0xff]
  %v5819 = vld [vmem:[%s5736 + $0x290] sm:$0xff]
  %v5820 = vld [vmem:[%s5736 + $0x298] sm:$0xff]
  %v5821 = vld [vmem:[%s5736 + $0x2a0] sm:$0xff]
  %v5822 = vld [vmem:[%s5736 + $0x2a8] sm:$0xff]
  %v5823 = vld [vmem:[%s5736 + $0x2b0] sm:$0xff]
  %v5824 = vld [vmem:[%s5736 + $0x2b8] sm:$0xff]
  %v5825 = vld [vmem:[%s5736 + $0x2c0] sm:$0xff]
  %v5826 = vld [vmem:[%s5736 + $0x2c8] sm:$0xff]
  %v5827 = vld [vmem:[%s5736 + $0x2d0] sm:$0xff]
  %v5828 = vld [vmem:[%s5736 + $0x2d8] sm:$0xff]
  %v5829 = vld [vmem:[%s5736 + $0x2e0] sm:$0xff]
  %v5830 = vld [vmem:[%s5736 + $0x2e8] sm:$0xff]
  %v5831 = vld [vmem:[%s5736 + $0x2f0] sm:$0xff]
  %v5832 = vld [vmem:[%s5736 + $0x2f8] sm:$0xff]
  %v5833 = vld [vmem:[%s5736 + $0x300] sm:$0xff]
  %v5834 = vld [vmem:[%s5736 + $0x308] sm:$0xff]
  %v5835 = vld [vmem:[%s5736 + $0x310] sm:$0xff]
  %v5836 = vld [vmem:[%s5736 + $0x318] sm:$0xff]
  %v5837 = vld [vmem:[%s5736 + $0x320] sm:$0xff]
  %v5838 = vld [vmem:[%s5736 + $0x328] sm:$0xff]
  %v5839 = vld [vmem:[%s5736 + $0x330] sm:$0xff]
  %v5840 = vld [vmem:[%s5736 + $0x338] sm:$0xff]
  %v5841 = vld [vmem:[%s5736 + $0x340] sm:$0xff]
  %v5842 = vld [vmem:[%s5736 + $0x348] sm:$0xff]
  %v5843 = vld [vmem:[%s5736 + $0x350] sm:$0xff]
  %v5844 = vld [vmem:[%s5736 + $0x358] sm:$0xff]
  %v5845 = vld [vmem:[%s5736 + $0x360] sm:$0xff]
  %v5846 = vld [vmem:[%s5736 + $0x368] sm:$0xff]
  %v5847 = vld [vmem:[%s5736 + $0x370] sm:$0xff]
  %v5848 = vld [vmem:[%s5736 + $0x378] sm:$0xff]
  %v5849 = vld [vmem:[%s5736 + $0x380] sm:$0xff]
  %v5850 = vld [vmem:[%s5736 + $0x388] sm:$0xff]
  %v5851 = vld [vmem:[%s5736 + $0x390] sm:$0xff]
  %v5852 = vld [vmem:[%s5736 + $0x398] sm:$0xff]
  %v5853 = vld [vmem:[%s5736 + $0x3a0] sm:$0xff]
  %v5854 = vld [vmem:[%s5736 + $0x3a8] sm:$0xff]
  %v5855 = vld [vmem:[%s5736 + $0x3b0] sm:$0xff]
  %v5856 = vld [vmem:[%s5736 + $0x3b8] sm:$0xff]
  %v5857 = vld [vmem:[%s5736 + $0x3c0] sm:$0xff]
  %v5858 = vld [vmem:[%s5736 + $0x3c8] sm:$0xff]
  %v5859 = vld [vmem:[%s5736 + $0x3d0] sm:$0xff]
  %v5860 = vld [vmem:[%s5736 + $0x3d8] sm:$0xff]
  %v5861 = vld [vmem:[%s5736 + $0x3e0] sm:$0xff]
  %v5862 = vld [vmem:[%s5736 + $0x3e8] sm:$0xff]
  %v5863 = vld [vmem:[%s5736 + $0x3f0] sm:$0xff]
  %v5864 = vld [vmem:[%s5736 + $0x3f8] sm:$0xff]
  %v5865 = vunpack.c.l.b16 %v5675
  %v5866 = vunpack.c.h.b16 %v5675
  %v5867 = vunpack.c.l.b16 %v5679
  %v5868 = vunpack.c.h.b16 %v5679
  %v5869 = vunpack.c.l.b16 %v5683
  %v5870 = vunpack.c.h.b16 %v5683
  %v5871 = vunpack.c.l.b16 %v5687
  %v5872 = vunpack.c.h.b16 %v5687
  %v5873 = vunpack.c.l.b16 %v5691
  %v5874 = vunpack.c.h.b16 %v5691
  %v5875 = vunpack.c.l.b16 %v5695
  %v5876 = vunpack.c.h.b16 %v5695
  %v5877 = vunpack.c.l.b16 %v5699
  %v5878 = vunpack.c.h.b16 %v5699
  %v5879 = vunpack.c.l.b16 %v5703
  %v5880 = vunpack.c.h.b16 %v5703
  %v5881 = vunpack.c.l.b16 %v5707
  %v5882 = vunpack.c.h.b16 %v5707
  %v5883 = vunpack.c.l.b16 %v5711
  %v5884 = vunpack.c.h.b16 %v5711
  %v5885 = vunpack.c.l.b16 %v5715
  %v5886 = vunpack.c.h.b16 %v5715
  %v5887 = vunpack.c.l.b16 %v5719
  %v5888 = vunpack.c.h.b16 %v5719
  %v5889 = vunpack.c.l.b16 %v5723
  %v5890 = vunpack.c.h.b16 %v5723
  %v5891 = vunpack.c.l.b16 %v5727
  %v5892 = vunpack.c.h.b16 %v5727
  %v5893 = vunpack.c.l.b16 %v5731
  %v5894 = vunpack.c.h.b16 %v5731
  %v5895 = vunpack.c.l.b16 %v5735
  %v5896 = vunpack.c.h.b16 %v5735
  %v5897 = vpack.c.b16 %v5869, %v5865
  %v5898 = vpack.c.b16 %v5870, %v5866
  %v5899 = vpack.c.b16 %v5871, %v5867
  %v5900 = vpack.c.b16 %v5872, %v5868
  %v5901 = vpack.c.b16 %v5877, %v5873
  %v5902 = vpack.c.b16 %v5878, %v5874
  %v5903 = vpack.c.b16 %v5879, %v5875
  %v5904 = vpack.c.b16 %v5880, %v5876
  %v5905 = vpack.c.b16 %v5885, %v5881
  %v5906 = vpack.c.b16 %v5886, %v5882
  %v5907 = vpack.c.b16 %v5887, %v5883
  %v5908 = vpack.c.b16 %v5888, %v5884
  %v5909 = vpack.c.b16 %v5893, %v5889
  %v5910 = vpack.c.b16 %v5894, %v5890
  %v5911 = vpack.c.b16 %v5895, %v5891
  %v5912 = vpack.c.b16 %v5896, %v5892
  %v6057 = vunpack.c.l.b16 %v5737
  %v6058 = vunpack.c.h.b16 %v5737
  %v6059 = vunpack.c.l.b16 %v5738
  %v6060 = vunpack.c.h.b16 %v5738
  %v6061 = vunpack.c.l.b16 %v5739
  %v6062 = vunpack.c.h.b16 %v5739
  %v6063 = vunpack.c.l.b16 %v5740
  %v6064 = vunpack.c.h.b16 %v5740
  %v6065 = vunpack.c.l.b16 %v5741
  %v6066 = vunpack.c.h.b16 %v5741
  %v6067 = vunpack.c.l.b16 %v5742
  %v6068 = vunpack.c.h.b16 %v5742
  %v6069 = vunpack.c.l.b16 %v5743
  %v6070 = vunpack.c.h.b16 %v5743
  %v6071 = vunpack.c.l.b16 %v5744
  %v6072 = vunpack.c.h.b16 %v5744
  %v6073 = vunpack.c.l.b16 %v5745
  %v6074 = vunpack.c.h.b16 %v5745
  %v6075 = vunpack.c.l.b16 %v5746
  %v6076 = vunpack.c.h.b16 %v5746
  %v6077 = vunpack.c.l.b16 %v5747
  %v6078 = vunpack.c.h.b16 %v5747
  %v6079 = vunpack.c.l.b16 %v5748
  %v6080 = vunpack.c.h.b16 %v5748
  %v6081 = vunpack.c.l.b16 %v5749
  %v6082 = vunpack.c.h.b16 %v5749
  %v6083 = vunpack.c.l.b16 %v5750
  %v6084 = vunpack.c.h.b16 %v5750
  %v6085 = vunpack.c.l.b16 %v5751
  %v6086 = vunpack.c.h.b16 %v5751
  %v6087 = vunpack.c.l.b16 %v5752
  %v6088 = vunpack.c.h.b16 %v5752
  %v6089 = vunpack.c.l.b16 %v5753
  %v6090 = vunpack.c.h.b16 %v5753
  %v6091 = vunpack.c.l.b16 %v5754
  %v6092 = vunpack.c.h.b16 %v5754
  %v6093 = vunpack.c.l.b16 %v5755
  %v6094 = vunpack.c.h.b16 %v5755
  %v6095 = vunpack.c.l.b16 %v5756
  %v6096 = vunpack.c.h.b16 %v5756
  %v6097 = vunpack.c.l.b16 %v5757
  %v6098 = vunpack.c.h.b16 %v5757
  %v6099 = vunpack.c.l.b16 %v5758
  %v6100 = vunpack.c.h.b16 %v5758
  %v6101 = vunpack.c.l.b16 %v5759
  %v6102 = vunpack.c.h.b16 %v5759
  %v6103 = vunpack.c.l.b16 %v5760
  %v6104 = vunpack.c.h.b16 %v5760
  %v6105 = vunpack.c.l.b16 %v5761
  %v6106 = vunpack.c.h.b16 %v5761
  %v6107 = vunpack.c.l.b16 %v5762
  %v6108 = vunpack.c.h.b16 %v5762
  %v6109 = vunpack.c.l.b16 %v5763
  %v6110 = vunpack.c.h.b16 %v5763
  %v6111 = vunpack.c.l.b16 %v5764
  %v6112 = vunpack.c.h.b16 %v5764
  %v6113 = vunpack.c.l.b16 %v5765
  %v6114 = vunpack.c.h.b16 %v5765
  %v6115 = vunpack.c.l.b16 %v5766
  %v6116 = vunpack.c.h.b16 %v5766
  %v6117 = vunpack.c.l.b16 %v5767
  %v6118 = vunpack.c.h.b16 %v5767
  %v6119 = vunpack.c.l.b16 %v5768
  %v6120 = vunpack.c.h.b16 %v5768
  %v6121 = vunpack.c.l.b16 %v5769
  %v6122 = vunpack.c.h.b16 %v5769
  %v6123 = vunpack.c.l.b16 %v5770
  %v6124 = vunpack.c.h.b16 %v5770
  %v6125 = vunpack.c.l.b16 %v5771
  %v6126 = vunpack.c.h.b16 %v5771
  %v6127 = vunpack.c.l.b16 %v5772
  %v6128 = vunpack.c.h.b16 %v5772
  %v6129 = vunpack.c.l.b16 %v5773
  %v6130 = vunpack.c.h.b16 %v5773
  %v6131 = vunpack.c.l.b16 %v5774
  %v6132 = vunpack.c.h.b16 %v5774
  %v6133 = vunpack.c.l.b16 %v5775
  %v6134 = vunpack.c.h.b16 %v5775
  %v6135 = vunpack.c.l.b16 %v5776
  %v6136 = vunpack.c.h.b16 %v5776
  %v6137 = vunpack.c.l.b16 %v5777
  %v6138 = vunpack.c.h.b16 %v5777
  %v6139 = vunpack.c.l.b16 %v5778
  %v6140 = vunpack.c.h.b16 %v5778
  %v6141 = vunpack.c.l.b16 %v5779
  %v6142 = vunpack.c.h.b16 %v5779
  %v6143 = vunpack.c.l.b16 %v5780
  %v6144 = vunpack.c.h.b16 %v5780
  %v6145 = vunpack.c.l.b16 %v5781
  %v6146 = vunpack.c.h.b16 %v5781
  %v6147 = vunpack.c.l.b16 %v5782
  %v6148 = vunpack.c.h.b16 %v5782
  %v6149 = vunpack.c.l.b16 %v5783
  %v6150 = vunpack.c.h.b16 %v5783
  %v6151 = vunpack.c.l.b16 %v5784
  %v6152 = vunpack.c.h.b16 %v5784
  %v6153 = vunpack.c.l.b16 %v5785
  %v6154 = vunpack.c.h.b16 %v5785
  %v6155 = vunpack.c.l.b16 %v5786
  %v6156 = vunpack.c.h.b16 %v5786
  %v6157 = vunpack.c.l.b16 %v5787
  %v6158 = vunpack.c.h.b16 %v5787
  %v6159 = vunpack.c.l.b16 %v5788
  %v6160 = vunpack.c.h.b16 %v5788
  %v6161 = vunpack.c.l.b16 %v5789
  %v6162 = vunpack.c.h.b16 %v5789
  %v6163 = vunpack.c.l.b16 %v5790
  %v6164 = vunpack.c.h.b16 %v5790
  %v6165 = vunpack.c.l.b16 %v5791
  %v6166 = vunpack.c.h.b16 %v5791
  %v6167 = vunpack.c.l.b16 %v5792
  %v6168 = vunpack.c.h.b16 %v5792
  %v6169 = vunpack.c.l.b16 %v5793
  %v6170 = vunpack.c.h.b16 %v5793
  %v6171 = vunpack.c.l.b16 %v5794
  %v6172 = vunpack.c.h.b16 %v5794
  %v6173 = vunpack.c.l.b16 %v5795
  %v6174 = vunpack.c.h.b16 %v5795
  %v6175 = vunpack.c.l.b16 %v5796
  %v6176 = vunpack.c.h.b16 %v5796
  %v6177 = vunpack.c.l.b16 %v5797
  %v6178 = vunpack.c.h.b16 %v5797
  %v6179 = vunpack.c.l.b16 %v5798
  %v6180 = vunpack.c.h.b16 %v5798
  %v6181 = vunpack.c.l.b16 %v5799
  %v6182 = vunpack.c.h.b16 %v5799
  %v6183 = vunpack.c.l.b16 %v5800
  %v6184 = vunpack.c.h.b16 %v5800
  %v6185 = vunpack.c.l.b16 %v5801
  %v6186 = vunpack.c.h.b16 %v5801
  %v6187 = vunpack.c.l.b16 %v5802
  %v6188 = vunpack.c.h.b16 %v5802
  %v6189 = vunpack.c.l.b16 %v5803
  %v6190 = vunpack.c.h.b16 %v5803
  %v6191 = vunpack.c.l.b16 %v5804
  %v6192 = vunpack.c.h.b16 %v5804
  %v6193 = vunpack.c.l.b16 %v5805
  %v6194 = vunpack.c.h.b16 %v5805
  %v6195 = vunpack.c.l.b16 %v5806
  %v6196 = vunpack.c.h.b16 %v5806
  %v6197 = vunpack.c.l.b16 %v5807
  %v6198 = vunpack.c.h.b16 %v5807
  %v6199 = vunpack.c.l.b16 %v5808
  %v6200 = vunpack.c.h.b16 %v5808
  %v6201 = vunpack.c.l.b16 %v5809
  %v6202 = vunpack.c.h.b16 %v5809
  %v6203 = vunpack.c.l.b16 %v5810
  %v6204 = vunpack.c.h.b16 %v5810
  %v6205 = vunpack.c.l.b16 %v5811
  %v6206 = vunpack.c.h.b16 %v5811
  %v6207 = vunpack.c.l.b16 %v5812
  %v6208 = vunpack.c.h.b16 %v5812
  %v6209 = vunpack.c.l.b16 %v5813
  %v6210 = vunpack.c.h.b16 %v5813
  %v6211 = vunpack.c.l.b16 %v5814
  %v6212 = vunpack.c.h.b16 %v5814
  %v6213 = vunpack.c.l.b16 %v5815
  %v6214 = vunpack.c.h.b16 %v5815
  %v6215 = vunpack.c.l.b16 %v5816
  %v6216 = vunpack.c.h.b16 %v5816
  %v6217 = vunpack.c.l.b16 %v5817
  %v6218 = vunpack.c.h.b16 %v5817
  %v6219 = vunpack.c.l.b16 %v5818
  %v6220 = vunpack.c.h.b16 %v5818
  %v6221 = vunpack.c.l.b16 %v5819
  %v6222 = vunpack.c.h.b16 %v5819
  %v6223 = vunpack.c.l.b16 %v5820
  %v6224 = vunpack.c.h.b16 %v5820
  %v6225 = vunpack.c.l.b16 %v5821
  %v6226 = vunpack.c.h.b16 %v5821
  %v6227 = vunpack.c.l.b16 %v5822
  %v6228 = vunpack.c.h.b16 %v5822
  %v6229 = vunpack.c.l.b16 %v5823
  %v6230 = vunpack.c.h.b16 %v5823
  %v6231 = vunpack.c.l.b16 %v5824
  %v6232 = vunpack.c.h.b16 %v5824
  %v6233 = vunpack.c.l.b16 %v5825
  %v6234 = vunpack.c.h.b16 %v5825
  %v6235 = vunpack.c.l.b16 %v5826
  %v6236 = vunpack.c.h.b16 %v5826
  %v6237 = vunpack.c.l.b16 %v5827
  %v6238 = vunpack.c.h.b16 %v5827
  %v6239 = vunpack.c.l.b16 %v5828
  %v6240 = vunpack.c.h.b16 %v5828
  %v6241 = vunpack.c.l.b16 %v5829
  %v6242 = vunpack.c.h.b16 %v5829
  %v6243 = vunpack.c.l.b16 %v5830
  %v6244 = vunpack.c.h.b16 %v5830
  %v6245 = vunpack.c.l.b16 %v5831
  %v6246 = vunpack.c.h.b16 %v5831
  %v6247 = vunpack.c.l.b16 %v5832
  %v6248 = vunpack.c.h.b16 %v5832
  %v6249 = vunpack.c.l.b16 %v5833
  %v6250 = vunpack.c.h.b16 %v5833
  %v6251 = vunpack.c.l.b16 %v5834
  %v6252 = vunpack.c.h.b16 %v5834
  %v6253 = vunpack.c.l.b16 %v5835
  %v6254 = vunpack.c.h.b16 %v5835
  %v6255 = vunpack.c.l.b16 %v5836
  %v6256 = vunpack.c.h.b16 %v5836
  %v6257 = vunpack.c.l.b16 %v5837
  %v6258 = vunpack.c.h.b16 %v5837
  %v6259 = vunpack.c.l.b16 %v5838
  %v6260 = vunpack.c.h.b16 %v5838
  %v6261 = vunpack.c.l.b16 %v5839
  %v6262 = vunpack.c.h.b16 %v5839
  %v6263 = vunpack.c.l.b16 %v5840
  %v6264 = vunpack.c.h.b16 %v5840
  %v6265 = vunpack.c.l.b16 %v5841
  %v6266 = vunpack.c.h.b16 %v5841
  %v6267 = vunpack.c.l.b16 %v5842
  %v6268 = vunpack.c.h.b16 %v5842
  %v6269 = vunpack.c.l.b16 %v5843
  %v6270 = vunpack.c.h.b16 %v5843
  %v6271 = vunpack.c.l.b16 %v5844
  %v6272 = vunpack.c.h.b16 %v5844
  %v6273 = vunpack.c.l.b16 %v5845
  %v6274 = vunpack.c.h.b16 %v5845
  %v6275 = vunpack.c.l.b16 %v5846
  %v6276 = vunpack.c.h.b16 %v5846
  %v6277 = vunpack.c.l.b16 %v5847
  %v6278 = vunpack.c.h.b16 %v5847
  %v6279 = vunpack.c.l.b16 %v5848
  %v6280 = vunpack.c.h.b16 %v5848
  %v6281 = vunpack.c.l.b16 %v5849
  %v6282 = vunpack.c.h.b16 %v5849
  %v6283 = vunpack.c.l.b16 %v5850
  %v6284 = vunpack.c.h.b16 %v5850
  %v6285 = vunpack.c.l.b16 %v5851
  %v6286 = vunpack.c.h.b16 %v5851
  %v6287 = vunpack.c.l.b16 %v5852
  %v6288 = vunpack.c.h.b16 %v5852
  %v6289 = vunpack.c.l.b16 %v5853
  %v6290 = vunpack.c.h.b16 %v5853
  %v6291 = vunpack.c.l.b16 %v5854
  %v6292 = vunpack.c.h.b16 %v5854
  %v6293 = vunpack.c.l.b16 %v5855
  %v6294 = vunpack.c.h.b16 %v5855
  %v6295 = vunpack.c.l.b16 %v5856
  %v6296 = vunpack.c.h.b16 %v5856
  %v6297 = vunpack.c.l.b16 %v5857
  %v6298 = vunpack.c.h.b16 %v5857
  %v6299 = vunpack.c.l.b16 %v5858
  %v6300 = vunpack.c.h.b16 %v5858
  %v6301 = vunpack.c.l.b16 %v5859
  %v6302 = vunpack.c.h.b16 %v5859
  %v6303 = vunpack.c.l.b16 %v5860
  %v6304 = vunpack.c.h.b16 %v5860
  %v6305 = vunpack.c.l.b16 %v5861
  %v6306 = vunpack.c.h.b16 %v5861
  %v6307 = vunpack.c.l.b16 %v5862
  %v6308 = vunpack.c.h.b16 %v5862
  %v6309 = vunpack.c.l.b16 %v5863
  %v6310 = vunpack.c.h.b16 %v5863
  %v6311 = vunpack.c.l.b16 %v5864
  %v6312 = vunpack.c.h.b16 %v5864
  %v6313 = vpack.c.b16 %v6061, %v6057
  %v6314 = vpack.c.b16 %v6062, %v6058
  %v6315 = vpack.c.b16 %v6063, %v6059
  %v6316 = vpack.c.b16 %v6064, %v6060
  %v6317 = vpack.c.b16 %v6069, %v6065
  %v6318 = vpack.c.b16 %v6070, %v6066
  %v6319 = vpack.c.b16 %v6071, %v6067
  %v6320 = vpack.c.b16 %v6072, %v6068
  %v6321 = vpack.c.b16 %v6077, %v6073
  %v6322 = vpack.c.b16 %v6078, %v6074
  %v6323 = vpack.c.b16 %v6079, %v6075
  %v6324 = vpack.c.b16 %v6080, %v6076
  %v6325 = vpack.c.b16 %v6085, %v6081
  %v6326 = vpack.c.b16 %v6086, %v6082
  %v6327 = vpack.c.b16 %v6087, %v6083
  %v6328 = vpack.c.b16 %v6088, %v6084
  %v6329 = vpack.c.b16 %v6093, %v6089
  %v6330 = vpack.c.b16 %v6094, %v6090
  %v6331 = vpack.c.b16 %v6095, %v6091
  %v6332 = vpack.c.b16 %v6096, %v6092
  %v6333 = vpack.c.b16 %v6101, %v6097
  %v6334 = vpack.c.b16 %v6102, %v6098
  %v6335 = vpack.c.b16 %v6103, %v6099
  %v6336 = vpack.c.b16 %v6104, %v6100
  %v6337 = vpack.c.b16 %v6109, %v6105
  %v6338 = vpack.c.b16 %v6110, %v6106
  %v6339 = vpack.c.b16 %v6111, %v6107
  %v6340 = vpack.c.b16 %v6112, %v6108
  %v6341 = vpack.c.b16 %v6117, %v6113
  %v6342 = vpack.c.b16 %v6118, %v6114
  %v6343 = vpack.c.b16 %v6119, %v6115
  %v6344 = vpack.c.b16 %v6120, %v6116
  %v6345 = vpack.c.b16 %v6125, %v6121
  %v6346 = vpack.c.b16 %v6126, %v6122
  %v6347 = vpack.c.b16 %v6127, %v6123
  %v6348 = vpack.c.b16 %v6128, %v6124
  %v6349 = vpack.c.b16 %v6133, %v6129
  %v6350 = vpack.c.b16 %v6134, %v6130
  %v6351 = vpack.c.b16 %v6135, %v6131
  %v6352 = vpack.c.b16 %v6136, %v6132
  %v6353 = vpack.c.b16 %v6141, %v6137
  %v6354 = vpack.c.b16 %v6142, %v6138
  %v6355 = vpack.c.b16 %v6143, %v6139
  %v6356 = vpack.c.b16 %v6144, %v6140
  %v6357 = vpack.c.b16 %v6149, %v6145
  %v6358 = vpack.c.b16 %v6150, %v6146
  %v6359 = vpack.c.b16 %v6151, %v6147
  %v6360 = vpack.c.b16 %v6152, %v6148
  %v6361 = vpack.c.b16 %v6157, %v6153
  %v6362 = vpack.c.b16 %v6158, %v6154
  %v6363 = vpack.c.b16 %v6159, %v6155
  %v6364 = vpack.c.b16 %v6160, %v6156
  %v6365 = vpack.c.b16 %v6165, %v6161
  %v6366 = vpack.c.b16 %v6166, %v6162
  %v6367 = vpack.c.b16 %v6167, %v6163
  %v6368 = vpack.c.b16 %v6168, %v6164
  %v6369 = vpack.c.b16 %v6173, %v6169
  %v6370 = vpack.c.b16 %v6174, %v6170
  %v6371 = vpack.c.b16 %v6175, %v6171
  %v6372 = vpack.c.b16 %v6176, %v6172
  %v6373 = vpack.c.b16 %v6181, %v6177
  %v6374 = vpack.c.b16 %v6182, %v6178
  %v6375 = vpack.c.b16 %v6183, %v6179
  %v6376 = vpack.c.b16 %v6184, %v6180
  %v6377 = vpack.c.b16 %v6189, %v6185
  %v6378 = vpack.c.b16 %v6190, %v6186
  %v6379 = vpack.c.b16 %v6191, %v6187
  %v6380 = vpack.c.b16 %v6192, %v6188
  %v6381 = vpack.c.b16 %v6197, %v6193
  %v6382 = vpack.c.b16 %v6198, %v6194
  %v6383 = vpack.c.b16 %v6199, %v6195
  %v6384 = vpack.c.b16 %v6200, %v6196
  %v6385 = vpack.c.b16 %v6205, %v6201
  %v6386 = vpack.c.b16 %v6206, %v6202
  %v6387 = vpack.c.b16 %v6207, %v6203
  %v6388 = vpack.c.b16 %v6208, %v6204
  %v6389 = vpack.c.b16 %v6213, %v6209
  %v6390 = vpack.c.b16 %v6214, %v6210
  %v6391 = vpack.c.b16 %v6215, %v6211
  %v6392 = vpack.c.b16 %v6216, %v6212
  %v6393 = vpack.c.b16 %v6221, %v6217
  %v6394 = vpack.c.b16 %v6222, %v6218
  %v6395 = vpack.c.b16 %v6223, %v6219
  %v6396 = vpack.c.b16 %v6224, %v6220
  %v6397 = vpack.c.b16 %v6229, %v6225
  %v6398 = vpack.c.b16 %v6230, %v6226
  %v6399 = vpack.c.b16 %v6231, %v6227
  %v6400 = vpack.c.b16 %v6232, %v6228
  %v6401 = vpack.c.b16 %v6237, %v6233
  %v6402 = vpack.c.b16 %v6238, %v6234
  %v6403 = vpack.c.b16 %v6239, %v6235
  %v6404 = vpack.c.b16 %v6240, %v6236
  %v6405 = vpack.c.b16 %v6245, %v6241
  %v6406 = vpack.c.b16 %v6246, %v6242
  %v6407 = vpack.c.b16 %v6247, %v6243
  %v6408 = vpack.c.b16 %v6248, %v6244
  %v6409 = vpack.c.b16 %v6253, %v6249
  %v6410 = vpack.c.b16 %v6254, %v6250
  %v6411 = vpack.c.b16 %v6255, %v6251
  %v6412 = vpack.c.b16 %v6256, %v6252
  %v6413 = vpack.c.b16 %v6261, %v6257
  %v6414 = vpack.c.b16 %v6262, %v6258
  %v6415 = vpack.c.b16 %v6263, %v6259
  %v6416 = vpack.c.b16 %v6264, %v6260
  %v6417 = vpack.c.b16 %v6269, %v6265
  %v6418 = vpack.c.b16 %v6270, %v6266
  %v6419 = vpack.c.b16 %v6271, %v6267
  %v6420 = vpack.c.b16 %v6272, %v6268
  %v6421 = vpack.c.b16 %v6277, %v6273
  %v6422 = vpack.c.b16 %v6278, %v6274
  %v6423 = vpack.c.b16 %v6279, %v6275
  %v6424 = vpack.c.b16 %v6280, %v6276
  %v6425 = vpack.c.b16 %v6285, %v6281
  %v6426 = vpack.c.b16 %v6286, %v6282
  %v6427 = vpack.c.b16 %v6287, %v6283
  %v6428 = vpack.c.b16 %v6288, %v6284
  %v6429 = vpack.c.b16 %v6293, %v6289
  %v6430 = vpack.c.b16 %v6294, %v6290
  %v6431 = vpack.c.b16 %v6295, %v6291
  %v6432 = vpack.c.b16 %v6296, %v6292
  %v6433 = vpack.c.b16 %v6301, %v6297
  %v6434 = vpack.c.b16 %v6302, %v6298
  %v6435 = vpack.c.b16 %v6303, %v6299
  %v6436 = vpack.c.b16 %v6304, %v6300
  %v6437 = vpack.c.b16 %v6309, %v6305
  %v6438 = vpack.c.b16 %v6310, %v6306
  %v6439 = vpack.c.b16 %v6311, %v6307
  %v6440 = vpack.c.b16 %v6312, %v6308
  %6569 = vmatprep.subr.bf16.mxu0 %v6342
  %6570 = vmatpush1.bf16.msra.mxu0 %v6341
  %6571 = vmatprep.subr.bf16.mxu0 %v6338
  %6572 = vmatpush1.bf16.msra.mxu0 %v6337
  %6573 = vmatprep.subr.bf16.mxu0 %v6334
  %6574 = vmatpush1.bf16.msra.mxu0 %v6333
  %6575 = vmatprep.subr.bf16.mxu0 %v6330
  %6576 = vmatpush1.bf16.msra.mxu0 %v6329
  %6577 = vmatprep.subr.bf16.mxu0 %v6326
  %6578 = vmatpush1.bf16.msra.mxu0 %v6325
  %6579 = vmatprep.subr.bf16.mxu0 %v6322
  %6580 = vmatpush1.bf16.msra.mxu0 %v6321
  %6581 = vmatprep.subr.bf16.mxu0 %v6318
  %6582 = vmatpush1.bf16.msra.mxu0 %v6317
  %6583 = vmatprep.subr.bf16.mxu0 %v6314
  %6584 = vmatpush1.bf16.msra.mxu0 %v6313
  %6585 = vmatprep.subr.bf16.mxu0 %v6374
  %6586 = vmatpush2.bf16.msra.mxu0 %v6373
  %6587 = vmatprep.subr.bf16.mxu0 %v6370
  %6588 = vmatpush2.bf16.msra.mxu0 %v6369
  %6589 = vmatprep.subr.bf16.mxu0 %v6366
  %6590 = vmatpush2.bf16.msra.mxu0 %v6365
  %6591 = vmatprep.subr.bf16.mxu0 %v6362
  %6592 = vmatpush2.bf16.msra.mxu0 %v6361
  %6593 = vmatprep.subr.bf16.mxu0 %v6358
  %6594 = vmatpush2.bf16.msra.mxu0 %v6357
  %6595 = vmatprep.subr.bf16.mxu0 %v6354
  %6596 = vmatpush2.bf16.msra.mxu0 %v6353
  %6597 = vmatprep.subr.bf16.mxu0 %v6350
  %6598 = vmatpush2.bf16.msra.mxu0 %v6349
  %6599 = vmatprep.subr.bf16.mxu0 %v6346
  %6600 = vmatpush2.bf16.msra.mxu0 %v6345
  %6601 = vmatprep.mubr.bf16.mxu0 %v5898
  %6602 = vmatmul.mubr.bf16.gmra.mxu0 %v5897
  %v6603 = vpop.f32.mrf.mxu0
  %v6604 = vadd.f32 0.0, %v6603
  %v6605 = vpop.f32.mrf.mxu0
  %v6606 = vadd.f32 0.0, %v6605
  %v6607 = vpop.f32.mrf.mxu0
  %v6608 = vadd.f32 0.0, %v6607
  %v6609 = vpop.f32.mrf.mxu0
  %v6610 = vadd.f32 0.0, %v6609
  %6611 = vmatprep.mubr.bf16.mxu0 %v5902
  %6612 = vmatmul.mubr.bf16.gmra.mxu0 %v5901
  %v6613 = vpop.f32.mrf.mxu0
  %v6614 = vadd.f32 0.0, %v6613
  %v6615 = vpop.f32.mrf.mxu0
  %v6616 = vadd.f32 0.0, %v6615
  %v6617 = vpop.f32.mrf.mxu0
  %v6618 = vadd.f32 0.0, %v6617
  %v6619 = vpop.f32.mrf.mxu0
  %v6620 = vadd.f32 0.0, %v6619
  %6621 = vmatprep.mubr.bf16.mxu0 %v5906
  %6622 = vmatmul.mubr.bf16.gmra.mxu0 %v5905
  %v6623 = vpop.f32.mrf.mxu0
  %v6624 = vadd.f32 0.0, %v6623
  %v6625 = vpop.f32.mrf.mxu0
  %v6626 = vadd.f32 0.0, %v6625
  %v6627 = vpop.f32.mrf.mxu0
  %v6628 = vadd.f32 0.0, %v6627
  %v6629 = vpop.f32.mrf.mxu0
  %v6630 = vadd.f32 0.0, %v6629
  %6631 = vmatprep.mubr.bf16.mxu0 %v5910
  %6632 = vmatmul.mubr.bf16.gmra.mxu0 %v5909
  %v6633 = vpop.f32.mrf.mxu0
  %v6634 = vadd.f32 0.0, %v6633
  %v6635 = vpop.f32.mrf.mxu0
  %v6636 = vadd.f32 0.0, %v6635
  %v6637 = vpop.f32.mrf.mxu0
  %v6638 = vadd.f32 0.0, %v6637
  %v6639 = vpop.f32.mrf.mxu0
  %v6640 = vadd.f32 0.0, %v6639
  %6641 = vdwg.mxu0
  %6642 = vmatprep.subr.bf16.mxu0 %v6406
  %6643 = vmatpush1.bf16.msra.mxu0 %v6405
  %6644 = vmatprep.subr.bf16.mxu0 %v6402
  %6645 = vmatpush1.bf16.msra.mxu0 %v6401
  %6646 = vmatprep.subr.bf16.mxu0 %v6398
  %6647 = vmatpush1.bf16.msra.mxu0 %v6397
  %6648 = vmatprep.subr.bf16.mxu0 %v6394
  %6649 = vmatpush1.bf16.msra.mxu0 %v6393
  %6650 = vmatprep.subr.bf16.mxu0 %v6390
  %6651 = vmatpush1.bf16.msra.mxu0 %v6389
  %6652 = vmatprep.subr.bf16.mxu0 %v6386
  %6653 = vmatpush1.bf16.msra.mxu0 %v6385
  %6654 = vmatprep.subr.bf16.mxu0 %v6382
  %6655 = vmatpush1.bf16.msra.mxu0 %v6381
  %6656 = vmatprep.subr.bf16.mxu0 %v6378
  %6657 = vmatpush1.bf16.msra.mxu0 %v6377
  %6658 = vmatprep.subr.bf16.mxu0 %v6438
  %6659 = vmatpush2.bf16.msra.mxu0 %v6437
  %6660 = vmatprep.subr.bf16.mxu0 %v6434
  %6661 = vmatpush2.bf16.msra.mxu0 %v6433
  %6662 = vmatprep.subr.bf16.mxu0 %v6430
  %6663 = vmatpush2.bf16.msra.mxu0 %v6429
  %6664 = vmatprep.subr.bf16.mxu0 %v6426
  %6665 = vmatpush2.bf16.msra.mxu0 %v6425
  %6666 = vmatprep.subr.bf16.mxu0 %v6422
  %6667 = vmatpush2.bf16.msra.mxu0 %v6421
  %6668 = vmatprep.subr.bf16.mxu0 %v6418
  %6669 = vmatpush2.bf16.msra.mxu0 %v6417
  %6670 = vmatprep.subr.bf16.mxu0 %v6414
  %6671 = vmatpush2.bf16.msra.mxu0 %v6413
  %6672 = vmatprep.subr.bf16.mxu0 %v6410
  %6673 = vmatpush2.bf16.msra.mxu0 %v6409
  %6674 = vmatprep.mubr.bf16.mxu0 %v5900
  %6675 = vmatmul.mubr.bf16.gmra.mxu0 %v5899
  %v6676 = vpop.f32.mrf.mxu0
  %v6677 = vadd.f32 %v6604, %v6676
  %v6678 = vpop.f32.mrf.mxu0
  %v6679 = vadd.f32 %v6606, %v6678
  %v6680 = vpop.f32.mrf.mxu0
  %v6681 = vadd.f32 %v6608, %v6680
  %v6682 = vpop.f32.mrf.mxu0
  %v6683 = vadd.f32 %v6610, %v6682
  %6684 = vmatprep.mubr.bf16.mxu0 %v5904
  %6685 = vmatmul.mubr.bf16.gmra.mxu0 %v5903
  %v6686 = vpop.f32.mrf.mxu0
  %v6687 = vadd.f32 %v6614, %v6686
  %v6688 = vpop.f32.mrf.mxu0
  %v6689 = vadd.f32 %v6616, %v6688
  %v6690 = vpop.f32.mrf.mxu0
  %v6691 = vadd.f32 %v6618, %v6690
  %v6692 = vpop.f32.mrf.mxu0
  %v6693 = vadd.f32 %v6620, %v6692
  %6694 = vmatprep.mubr.bf16.mxu0 %v5908
  %6695 = vmatmul.mubr.bf16.gmra.mxu0 %v5907
  %v6696 = vpop.f32.mrf.mxu0
  %v6697 = vadd.f32 %v6624, %v6696
  %v6698 = vpop.f32.mrf.mxu0
  %v6699 = vadd.f32 %v6626, %v6698
  %v6700 = vpop.f32.mrf.mxu0
  %v6701 = vadd.f32 %v6628, %v6700
  %v6702 = vpop.f32.mrf.mxu0
  %v6703 = vadd.f32 %v6630, %v6702
  %6704 = vmatprep.mubr.bf16.mxu0 %v5912
  %6705 = vmatmul.mubr.bf16.gmra.mxu0 %v5911
  %v6706 = vpop.f32.mrf.mxu0
  %v6707 = vadd.f32 %v6634, %v6706
  %v6708 = vpop.f32.mrf.mxu0
  %v6709 = vadd.f32 %v6636, %v6708
  %v6710 = vpop.f32.mrf.mxu0
  %v6711 = vadd.f32 %v6638, %v6710
  %v6712 = vpop.f32.mrf.mxu0
  %v6713 = vadd.f32 %v6640, %v6712
  %6714 = vdwg.mxu0
  %6715 = vmatprep.subr.bf16.mxu0 %v6344
  %6716 = vmatpush1.bf16.msra.mxu0 %v6343
  %6717 = vmatprep.subr.bf16.mxu0 %v6340
  %6718 = vmatpush1.bf16.msra.mxu0 %v6339
  %6719 = vmatprep.subr.bf16.mxu0 %v6336
  %6720 = vmatpush1.bf16.msra.mxu0 %v6335
  %6721 = vmatprep.subr.bf16.mxu0 %v6332
  %6722 = vmatpush1.bf16.msra.mxu0 %v6331
  %6723 = vmatprep.subr.bf16.mxu0 %v6328
  %6724 = vmatpush1.bf16.msra.mxu0 %v6327
  %6725 = vmatprep.subr.bf16.mxu0 %v6324
  %6726 = vmatpush1.bf16.msra.mxu0 %v6323
  %6727 = vmatprep.subr.bf16.mxu0 %v6320
  %6728 = vmatpush1.bf16.msra.mxu0 %v6319
  %6729 = vmatprep.subr.bf16.mxu0 %v6316
  %6730 = vmatpush1.bf16.msra.mxu0 %v6315
  %6731 = vmatprep.subr.bf16.mxu0 %v6376
  %6732 = vmatpush2.bf16.msra.mxu0 %v6375
  %6733 = vmatprep.subr.bf16.mxu0 %v6372
  %6734 = vmatpush2.bf16.msra.mxu0 %v6371
  %6735 = vmatprep.subr.bf16.mxu0 %v6368
  %6736 = vmatpush2.bf16.msra.mxu0 %v6367
  %6737 = vmatprep.subr.bf16.mxu0 %v6364
  %6738 = vmatpush2.bf16.msra.mxu0 %v6363
  %6739 = vmatprep.subr.bf16.mxu0 %v6360
  %6740 = vmatpush2.bf16.msra.mxu0 %v6359
  %6741 = vmatprep.subr.bf16.mxu0 %v6356
  %6742 = vmatpush2.bf16.msra.mxu0 %v6355
  %6743 = vmatprep.subr.bf16.mxu0 %v6352
  %6744 = vmatpush2.bf16.msra.mxu0 %v6351
  %6745 = vmatprep.subr.bf16.mxu0 %v6348
  %6746 = vmatpush2.bf16.msra.mxu0 %v6347
  %6747 = vmatprep.mubr.bf16.mxu0 %v5898
  %6748 = vmatmul.mubr.bf16.gmra.mxu0 %v5897
  %v6749 = vpop.f32.mrf.mxu0
  %v6750 = vadd.f32 0.0, %v6749
  %v6751 = vpop.f32.mrf.mxu0
  %v6752 = vadd.f32 0.0, %v6751
  %v6753 = vpop.f32.mrf.mxu0
  %v6754 = vadd.f32 0.0, %v6753
  %v6755 = vpop.f32.mrf.mxu0
  %v6756 = vadd.f32 0.0, %v6755
  %6757 = vmatprep.mubr.bf16.mxu0 %v5902
  %6758 = vmatmul.mubr.bf16.gmra.mxu0 %v5901
  %v6759 = vpop.f32.mrf.mxu0
  %v6760 = vadd.f32 0.0, %v6759
  %v6761 = vpop.f32.mrf.mxu0
  %v6762 = vadd.f32 0.0, %v6761
  %v6763 = vpop.f32.mrf.mxu0
  %v6764 = vadd.f32 0.0, %v6763
  %v6765 = vpop.f32.mrf.mxu0
  %v6766 = vadd.f32 0.0, %v6765
  %6767 = vmatprep.mubr.bf16.mxu0 %v5906
  %6768 = vmatmul.mubr.bf16.gmra.mxu0 %v5905
  %v6769 = vpop.f32.mrf.mxu0
  %v6770 = vadd.f32 0.0, %v6769
  %v6771 = vpop.f32.mrf.mxu0
  %v6772 = vadd.f32 0.0, %v6771
  %v6773 = vpop.f32.mrf.mxu0
  %v6774 = vadd.f32 0.0, %v6773
  %v6775 = vpop.f32.mrf.mxu0
  %v6776 = vadd.f32 0.0, %v6775
  %6777 = vmatprep.mubr.bf16.mxu0 %v5910
  %6778 = vmatmul.mubr.bf16.gmra.mxu0 %v5909
  %v6779 = vpop.f32.mrf.mxu0
  %v6780 = vadd.f32 0.0, %v6779
  %v6781 = vpop.f32.mrf.mxu0
  %v6782 = vadd.f32 0.0, %v6781
  %v6783 = vpop.f32.mrf.mxu0
  %v6784 = vadd.f32 0.0, %v6783
  %v6785 = vpop.f32.mrf.mxu0
  %v6786 = vadd.f32 0.0, %v6785
  %6787 = vdwg.mxu0
  %6788 = vmatprep.subr.bf16.mxu0 %v6408
  %6789 = vmatpush1.bf16.msra.mxu0 %v6407
  %6790 = vmatprep.subr.bf16.mxu0 %v6404
  %6791 = vmatpush1.bf16.msra.mxu0 %v6403
  %6792 = vmatprep.subr.bf16.mxu0 %v6400
  %6793 = vmatpush1.bf16.msra.mxu0 %v6399
  %6794 = vmatprep.subr.bf16.mxu0 %v6396
  %6795 = vmatpush1.bf16.msra.mxu0 %v6395
  %6796 = vmatprep.subr.bf16.mxu0 %v6392
  %6797 = vmatpush1.bf16.msra.mxu0 %v6391
  %6798 = vmatprep.subr.bf16.mxu0 %v6388
  %6799 = vmatpush1.bf16.msra.mxu0 %v6387
  %6800 = vmatprep.subr.bf16.mxu0 %v6384
  %6801 = vmatpush1.bf16.msra.mxu0 %v6383
  %6802 = vmatprep.subr.bf16.mxu0 %v6380
  %6803 = vmatpush1.bf16.msra.mxu0 %v6379
  %6804 = vmatprep.subr.bf16.mxu0 %v6440
  %6805 = vmatpush2.bf16.msra.mxu0 %v6439
  %6806 = vmatprep.subr.bf16.mxu0 %v6436
  %6807 = vmatpush2.bf16.msra.mxu0 %v6435
  %6808 = vmatprep.subr.bf16.mxu0 %v6432
  %6809 = vmatpush2.bf16.msra.mxu0 %v6431
  %6810 = vmatprep.subr.bf16.mxu0 %v6428
  %6811 = vmatpush2.bf16.msra.mxu0 %v6427
  %6812 = vmatprep.subr.bf16.mxu0 %v6424
  %6813 = vmatpush2.bf16.msra.mxu0 %v6423
  %6814 = vmatprep.subr.bf16.mxu0 %v6420
  %6815 = vmatpush2.bf16.msra.mxu0 %v6419
  %6816 = vmatprep.subr.bf16.mxu0 %v6416
  %6817 = vmatpush2.bf16.msra.mxu0 %v6415
  %6818 = vmatprep.subr.bf16.mxu0 %v6412
  %6819 = vmatpush2.bf16.msra.mxu0 %v6411
  %6820 = vmatprep.mubr.bf16.mxu0 %v5900
  %6821 = vmatmul.mubr.bf16.gmra.mxu0 %v5899
  %v6822 = vpop.f32.mrf.mxu0
  %v6823 = vadd.f32 %v6750, %v6822
  %v6824 = vpop.f32.mrf.mxu0
  %v6825 = vadd.f32 %v6752, %v6824
  %v6826 = vpop.f32.mrf.mxu0
  %v6827 = vadd.f32 %v6754, %v6826
  %v6828 = vpop.f32.mrf.mxu0
  %v6829 = vadd.f32 %v6756, %v6828
  %6830 = vmatprep.mubr.bf16.mxu0 %v5904
  %6831 = vmatmul.mubr.bf16.gmra.mxu0 %v5903
  %v6832 = vpop.f32.mrf.mxu0
  %v6833 = vadd.f32 %v6760, %v6832
  %v6834 = vpop.f32.mrf.mxu0
  %v6835 = vadd.f32 %v6762, %v6834
  %v6836 = vpop.f32.mrf.mxu0
  %v6837 = vadd.f32 %v6764, %v6836
  %v6838 = vpop.f32.mrf.mxu0
  %v6839 = vadd.f32 %v6766, %v6838
  %6840 = vmatprep.mubr.bf16.mxu0 %v5908
  %6841 = vmatmul.mubr.bf16.gmra.mxu0 %v5907
  %v6842 = vpop.f32.mrf.mxu0
  %v6843 = vadd.f32 %v6770, %v6842
  %v6844 = vpop.f32.mrf.mxu0
  %v6845 = vadd.f32 %v6772, %v6844
  %v6846 = vpop.f32.mrf.mxu0
  %v6847 = vadd.f32 %v6774, %v6846
  %v6848 = vpop.f32.mrf.mxu0
  %v6849 = vadd.f32 %v6776, %v6848
  %6850 = vmatprep.mubr.bf16.mxu0 %v5912
  %6851 = vmatmul.mubr.bf16.gmra.mxu0 %v5911
  %v6852 = vpop.f32.mrf.mxu0
  %v6853 = vadd.f32 %v6780, %v6852
  %v6854 = vpop.f32.mrf.mxu0
  %v6855 = vadd.f32 %v6782, %v6854
  %v6856 = vpop.f32.mrf.mxu0
  %v6857 = vadd.f32 %v6784, %v6856
  %v6858 = vpop.f32.mrf.mxu0
  %v6859 = vadd.f32 %v6786, %v6858
  %6860 = vdwg.mxu0
  %v6861 = vadd.f32 %v5637, %v6677
  %v6862 = vadd.f32 %v5638, %v6679
  %v6863 = vadd.f32 %v5639, %v6823
  %v6864 = vadd.f32 %v5640, %v6825
  %v6865 = vadd.f32 %v5641, %v6681
  %v6866 = vadd.f32 %v5642, %v6683
  %v6867 = vadd.f32 %v5643, %v6827
  %v6868 = vadd.f32 %v5644, %v6829
  %v6869 = vadd.f32 %v5645, %v6687
  %v6870 = vadd.f32 %v5646, %v6689
  %v6871 = vadd.f32 %v5647, %v6833
  %v6872 = vadd.f32 %v5648, %v6835
  %v6873 = vadd.f32 %v5649, %v6691
  %v6874 = vadd.f32 %v5650, %v6693
  %v6875 = vadd.f32 %v5651, %v6837
  %v6876 = vadd.f32 %v5652, %v6839
  %v6877 = vadd.f32 %v5653, %v6697
  %v6878 = vadd.f32 %v5654, %v6699
  %v6879 = vadd.f32 %v5655, %v6843
  %v6880 = vadd.f32 %v5656, %v6845
  %v6881 = vadd.f32 %v5657, %v6701
  %v6882 = vadd.f32 %v5658, %v6703
  %v6883 = vadd.f32 %v5659, %v6847
  %v6884 = vadd.f32 %v5660, %v6849
  %v6885 = vadd.f32 %v5661, %v6707
  %v6886 = vadd.f32 %v5662, %v6709
  %v6887 = vadd.f32 %v5663, %v6853
  %v6888 = vadd.f32 %v5664, %v6855
  %v6889 = vadd.f32 %v5665, %v6711
  %v6890 = vadd.f32 %v5666, %v6713
  %v6891 = vadd.f32 %v5667, %v6857
  %v6892 = vadd.f32 %v5668, %v6859
  %6893 = vst [vmem:[#allocation2] sm:$0xff] %v6861
  %6894 = vst [vmem:[#allocation2 + $0x8] sm:$0xff] %v6862
  %6895 = vst [vmem:[#allocation2 + $0x10] sm:$0xff] %v6863
  %6896 = vst [vmem:[#allocation2 + $0x18] sm:$0xff] %v6864
  %6897 = vst [vmem:[#allocation2 + $0x20] sm:$0xff] %v6865
  %6898 = vst [vmem:[#allocation2 + $0x28] sm:$0xff] %v6866
  %6899 = vst [vmem:[#allocation2 + $0x30] sm:$0xff] %v6867
  %6900 = vst [vmem:[#allocation2 + $0x38] sm:$0xff] %v6868
  %6901 = vst [vmem:[#allocation2 + $0x40] sm:$0xff] %v6869
  %6902 = vst [vmem:[#allocation2 + $0x48] sm:$0xff] %v6870
  %6903 = vst [vmem:[#allocation2 + $0x50] sm:$0xff] %v6871
  %6904 = vst [vmem:[#allocation2 + $0x58] sm:$0xff] %v6872
  %6905 = vst [vmem:[#allocation2 + $0x60] sm:$0xff] %v6873
  %6906 = vst [vmem:[#allocation2 + $0x68] sm:$0xff] %v6874
  %6907 = vst [vmem:[#allocation2 + $0x70] sm:$0xff] %v6875
  %6908 = vst [vmem:[#allocation2 + $0x78] sm:$0xff] %v6876
  %6909 = vst [vmem:[#allocation2 + $0x80] sm:$0xff] %v6877
  %6910 = vst [vmem:[#allocation2 + $0x88] sm:$0xff] %v6878
  %6911 = vst [vmem:[#allocation2 + $0x90] sm:$0xff] %v6879
  %6912 = vst [vmem:[#allocation2 + $0x98] sm:$0xff] %v6880
  %6913 = vst [vmem:[#allocation2 + $0xa0] sm:$0xff] %v6881
  %6914 = vst [vmem:[#allocation2 + $0xa8] sm:$0xff] %v6882
  %6915 = vst [vmem:[#allocation2 + $0xb0] sm:$0xff] %v6883
  %6916 = vst [vmem:[#allocation2 + $0xb8] sm:$0xff] %v6884
  %6917 = vst [vmem:[#allocation2 + $0xc0] sm:$0xff] %v6885
  %6918 = vst [vmem:[#allocation2 + $0xc8] sm:$0xff] %v6886
  %6919 = vst [vmem:[#allocation2 + $0xd0] sm:$0xff] %v6887
  %6920 = vst [vmem:[#allocation2 + $0xd8] sm:$0xff] %v6888
  %6921 = vst [vmem:[#allocation2 + $0xe0] sm:$0xff] %v6889
  %6922 = vst [vmem:[#allocation2 + $0xe8] sm:$0xff] %v6890
  %6923 = vst [vmem:[#allocation2 + $0xf0] sm:$0xff] %v6891
  %6924 = vst [vmem:[#allocation2 + $0xf8] sm:$0xff] %v6892
  %v6925 = vld [vmem:[#allocation2] sm:$0xff]
  %v6926 = vld [vmem:[#allocation2 + $0x8] sm:$0xff]
  %v6927 = vld [vmem:[#allocation2 + $0x10] sm:$0xff]
  %v6928 = vld [vmem:[#allocation2 + $0x18] sm:$0xff]
  %v6929 = vld [vmem:[#allocation2 + $0x20] sm:$0xff]
  %v6930 = vld [vmem:[#allocation2 + $0x28] sm:$0xff]
  %v6931 = vld [vmem:[#allocation2 + $0x30] sm:$0xff]
  %v6932 = vld [vmem:[#allocation2 + $0x38] sm:$0xff]
  %v6933 = vld [vmem:[#allocation2 + $0x40] sm:$0xff]
  %v6934 = vld [vmem:[#allocation2 + $0x48] sm:$0xff]
  %v6935 = vld [vmem:[#allocation2 + $0x50] sm:$0xff]
  %v6936 = vld [vmem:[#allocation2 + $0x58] sm:$0xff]
  %v6937 = vld [vmem:[#allocation2 + $0x60] sm:$0xff]
  %v6938 = vld [vmem:[#allocation2 + $0x68] sm:$0xff]
  %v6939 = vld [vmem:[#allocation2 + $0x70] sm:$0xff]
  %v6940 = vld [vmem:[#allocation2 + $0x78] sm:$0xff]
  %v6941 = vld [vmem:[#allocation2 + $0x80] sm:$0xff]
  %v6942 = vld [vmem:[#allocation2 + $0x88] sm:$0xff]
  %v6943 = vld [vmem:[#allocation2 + $0x90] sm:$0xff]
  %v6944 = vld [vmem:[#allocation2 + $0x98] sm:$0xff]
  %v6945 = vld [vmem:[#allocation2 + $0xa0] sm:$0xff]
  %v6946 = vld [vmem:[#allocation2 + $0xa8] sm:$0xff]
  %v6947 = vld [vmem:[#allocation2 + $0xb0] sm:$0xff]
  %v6948 = vld [vmem:[#allocation2 + $0xb8] sm:$0xff]
  %v6949 = vld [vmem:[#allocation2 + $0xc0] sm:$0xff]
  %v6950 = vld [vmem:[#allocation2 + $0xc8] sm:$0xff]
  %v6951 = vld [vmem:[#allocation2 + $0xd0] sm:$0xff]
  %v6952 = vld [vmem:[#allocation2 + $0xd8] sm:$0xff]
  %v6953 = vld [vmem:[#allocation2 + $0xe0] sm:$0xff]
  %v6954 = vld [vmem:[#allocation2 + $0xe8] sm:$0xff]
  %v6955 = vld [vmem:[#allocation2 + $0xf0] sm:$0xff]
  %v6956 = vld [vmem:[#allocation2 + $0xf8] sm:$0xff]
  %vm6957 = vsmask.f32 2304
  %vm6958 = vsmask.f32 6416
  %vm6959 = vmor %vm6957, %vm6958
  %v6960 = vrot.slane %v4225, 5
  %v6961 = vrot.slane %v4228, 6
  %v6962 = vor.u32 %v6960, %v6961
  %v6963 = vrot.slane %v6962, 4
  %v6964 = vshrl.u32 %v4191, 16
  %v6966 = vrot.slane %v6964, 5
  %v6967 = vrot.slane %v4234, 6
  %v6968 = vor.u32 %v6966, %v6967
  %v6969 = vsel %vm6959, %v6963, %v6968
  %v6970 = vrot.slane %v4239, 5
  %v6971 = vrot.slane %v4242, 6
  %v6972 = vor.u32 %v6970, %v6971
  %v6973 = vrot.slane %v6972, 4
  %v6974 = vshrl.u32 %v4192, 16
  %v6976 = vrot.slane %v6974, 5
  %v6977 = vrot.slane %v4248, 6
  %v6978 = vor.u32 %v6976, %v6977
  %v6979 = vsel %vm6959, %v6973, %v6978
  %v6980 = vrot.slane %v4253, 5
  %v6981 = vrot.slane %v4256, 6
  %v6982 = vor.u32 %v6980, %v6981
  %v6983 = vrot.slane %v6982, 4
  %v6984 = vshrl.u32 %v4195, 16
  %v6986 = vrot.slane %v6984, 5
  %v6987 = vrot.slane %v4262, 6
  %v6988 = vor.u32 %v6986, %v6987
  %v6989 = vsel %vm6959, %v6983, %v6988
  %v6990 = vrot.slane %v4267, 5
  %v6991 = vrot.slane %v4270, 6
  %v6992 = vor.u32 %v6990, %v6991
  %v6993 = vrot.slane %v6992, 4
  %v6994 = vshrl.u32 %v4196, 16
  %v6996 = vrot.slane %v6994, 5
  %v6997 = vrot.slane %v4276, 6
  %v6998 = vor.u32 %v6996, %v6997
  %v6999 = vsel %vm6959, %v6993, %v6998
  %v7000 = vrot.slane %v4281, 5
  %v7001 = vrot.slane %v4284, 6
  %v7002 = vor.u32 %v7000, %v7001
  %v7003 = vrot.slane %v7002, 4
  %v7004 = vshrl.u32 %v4199, 16
  %v7006 = vrot.slane %v7004, 5
  %v7007 = vrot.slane %v4290, 6
  %v7008 = vor.u32 %v7006, %v7007
  %v7009 = vsel %vm6959, %v7003, %v7008
  %v7010 = vrot.slane %v4295, 5
  %v7011 = vrot.slane %v4298, 6
  %v7012 = vor.u32 %v7010, %v7011
  %v7013 = vrot.slane %v7012, 4
  %v7014 = vshrl.u32 %v4200, 16
  %v7016 = vrot.slane %v7014, 5
  %v7017 = vrot.slane %v4304, 6
  %v7018 = vor.u32 %v7016, %v7017
  %v7019 = vsel %vm6959, %v7013, %v7018
  %v7020 = vrot.slane %v4309, 5
  %v7021 = vrot.slane %v4312, 6
  %v7022 = vor.u32 %v7020, %v7021
  %v7023 = vrot.slane %v7022, 4
  %v7024 = vshrl.u32 %v4203, 16
  %v7026 = vrot.slane %v7024, 5
  %v7027 = vrot.slane %v4318, 6
  %v7028 = vor.u32 %v7026, %v7027
  %v7029 = vsel %vm6959, %v7023, %v7028
  %v7030 = vrot.slane %v4323, 5
  %v7031 = vrot.slane %v4326, 6
  %v7032 = vor.u32 %v7030, %v7031
  %v7033 = vrot.slane %v7032, 4
  %v7034 = vshrl.u32 %v4204, 16
  %v7036 = vrot.slane %v7034, 5
  %v7037 = vrot.slane %v4332, 6
  %v7038 = vor.u32 %v7036, %v7037
  %v7039 = vsel %vm6959, %v7033, %v7038
  %v7040 = vrot.slane %v4337, 5
  %v7041 = vrot.slane %v4340, 6
  %v7042 = vor.u32 %v7040, %v7041
  %v7043 = vrot.slane %v7042, 4
  %v7044 = vshrl.u32 %v4207, 16
  %v7046 = vrot.slane %v7044, 5
  %v7047 = vrot.slane %v4346, 6
  %v7048 = vor.u32 %v7046, %v7047
  %v7049 = vsel %vm6959, %v7043, %v7048
  %v7050 = vrot.slane %v4351, 5
  %v7051 = vrot.slane %v4354, 6
  %v7052 = vor.u32 %v7050, %v7051
  %v7053 = vrot.slane %v7052, 4
  %v7054 = vshrl.u32 %v4208, 16
  %v7056 = vrot.slane %v7054, 5
  %v7057 = vrot.slane %v4360, 6
  %v7058 = vor.u32 %v7056, %v7057
  %v7059 = vsel %vm6959, %v7053, %v7058
  %v7060 = vrot.slane %v4365, 5
  %v7061 = vrot.slane %v4368, 6
  %v7062 = vor.u32 %v7060, %v7061
  %v7063 = vrot.slane %v7062, 4
  %v7064 = vshrl.u32 %v4211, 16
  %v7066 = vrot.slane %v7064, 5
  %v7067 = vrot.slane %v4374, 6
  %v7068 = vor.u32 %v7066, %v7067
  %v7069 = vsel %vm6959, %v7063, %v7068
  %v7070 = vrot.slane %v4379, 5
  %v7071 = vrot.slane %v4382, 6
  %v7072 = vor.u32 %v7070, %v7071
  %v7073 = vrot.slane %v7072, 4
  %v7074 = vshrl.u32 %v4212, 16
  %v7076 = vrot.slane %v7074, 5
  %v7077 = vrot.slane %v4388, 6
  %v7078 = vor.u32 %v7076, %v7077
  %v7079 = vsel %vm6959, %v7073, %v7078
  %v7080 = vrot.slane %v4393, 5
  %v7081 = vrot.slane %v4396, 6
  %v7082 = vor.u32 %v7080, %v7081
  %v7083 = vrot.slane %v7082, 4
  %v7084 = vshrl.u32 %v4215, 16
  %v7086 = vrot.slane %v7084, 5
  %v7087 = vrot.slane %v4402, 6
  %v7088 = vor.u32 %v7086, %v7087
  %v7089 = vsel %vm6959, %v7083, %v7088
  %v7090 = vrot.slane %v4407, 5
  %v7091 = vrot.slane %v4410, 6
  %v7092 = vor.u32 %v7090, %v7091
  %v7093 = vrot.slane %v7092, 4
  %v7094 = vshrl.u32 %v4216, 16
  %v7096 = vrot.slane %v7094, 5
  %v7097 = vrot.slane %v4416, 6
  %v7098 = vor.u32 %v7096, %v7097
  %v7099 = vsel %vm6959, %v7093, %v7098
  %v7100 = vrot.slane %v4421, 5
  %v7101 = vrot.slane %v4424, 6
  %v7102 = vor.u32 %v7100, %v7101
  %v7103 = vrot.slane %v7102, 4
  %v7104 = vshrl.u32 %v4219, 16
  %v7106 = vrot.slane %v7104, 5
  %v7107 = vrot.slane %v4430, 6
  %v7108 = vor.u32 %v7106, %v7107
  %v7109 = vsel %vm6959, %v7103, %v7108
  %v7110 = vrot.slane %v4435, 5
  %v7111 = vrot.slane %v4438, 6
  %v7112 = vor.u32 %v7110, %v7111
  %v7113 = vrot.slane %v7112, 4
  %v7114 = vshrl.u32 %v4220, 16
  %v7116 = vrot.slane %v7114, 5
  %v7117 = vrot.slane %v4444, 6
  %v7118 = vor.u32 %v7116, %v7117
  %v7119 = vsel %vm6959, %v7113, %v7118
  %s7120 = scalar_lea.vmem %s3, 3072
  %v7121 = vld [vmem:[%s7120] sm:$0xff]
  %v7122 = vld [vmem:[%s7120 + $0x8] sm:$0xff]
  %v7123 = vld [vmem:[%s7120 + $0x10] sm:$0xff]
  %v7124 = vld [vmem:[%s7120 + $0x18] sm:$0xff]
  %v7125 = vld [vmem:[%s7120 + $0x20] sm:$0xff]
  %v7126 = vld [vmem:[%s7120 + $0x28] sm:$0xff]
  %v7127 = vld [vmem:[%s7120 + $0x30] sm:$0xff]
  %v7128 = vld [vmem:[%s7120 + $0x38] sm:$0xff]
  %v7129 = vld [vmem:[%s7120 + $0x40] sm:$0xff]
  %v7130 = vld [vmem:[%s7120 + $0x48] sm:$0xff]
  %v7131 = vld [vmem:[%s7120 + $0x50] sm:$0xff]
  %v7132 = vld [vmem:[%s7120 + $0x58] sm:$0xff]
  %v7133 = vld [vmem:[%s7120 + $0x60] sm:$0xff]
  %v7134 = vld [vmem:[%s7120 + $0x68] sm:$0xff]
  %v7135 = vld [vmem:[%s7120 + $0x70] sm:$0xff]
  %v7136 = vld [vmem:[%s7120 + $0x78] sm:$0xff]
  %v7137 = vld [vmem:[%s7120 + $0x80] sm:$0xff]
  %v7138 = vld [vmem:[%s7120 + $0x88] sm:$0xff]
  %v7139 = vld [vmem:[%s7120 + $0x90] sm:$0xff]
  %v7140 = vld [vmem:[%s7120 + $0x98] sm:$0xff]
  %v7141 = vld [vmem:[%s7120 + $0xa0] sm:$0xff]
  %v7142 = vld [vmem:[%s7120 + $0xa8] sm:$0xff]
  %v7143 = vld [vmem:[%s7120 + $0xb0] sm:$0xff]
  %v7144 = vld [vmem:[%s7120 + $0xb8] sm:$0xff]
  %v7145 = vld [vmem:[%s7120 + $0xc0] sm:$0xff]
  %v7146 = vld [vmem:[%s7120 + $0xc8] sm:$0xff]
  %v7147 = vld [vmem:[%s7120 + $0xd0] sm:$0xff]
  %v7148 = vld [vmem:[%s7120 + $0xd8] sm:$0xff]
  %v7149 = vld [vmem:[%s7120 + $0xe0] sm:$0xff]
  %v7150 = vld [vmem:[%s7120 + $0xe8] sm:$0xff]
  %v7151 = vld [vmem:[%s7120 + $0xf0] sm:$0xff]
  %v7152 = vld [vmem:[%s7120 + $0xf8] sm:$0xff]
  %v7153 = vld [vmem:[%s7120 + $0x100] sm:$0xff]
  %v7154 = vld [vmem:[%s7120 + $0x108] sm:$0xff]
  %v7155 = vld [vmem:[%s7120 + $0x110] sm:$0xff]
  %v7156 = vld [vmem:[%s7120 + $0x118] sm:$0xff]
  %v7157 = vld [vmem:[%s7120 + $0x120] sm:$0xff]
  %v7158 = vld [vmem:[%s7120 + $0x128] sm:$0xff]
  %v7159 = vld [vmem:[%s7120 + $0x130] sm:$0xff]
  %v7160 = vld [vmem:[%s7120 + $0x138] sm:$0xff]
  %v7161 = vld [vmem:[%s7120 + $0x140] sm:$0xff]
  %v7162 = vld [vmem:[%s7120 + $0x148] sm:$0xff]
  %v7163 = vld [vmem:[%s7120 + $0x150] sm:$0xff]
  %v7164 = vld [vmem:[%s7120 + $0x158] sm:$0xff]
  %v7165 = vld [vmem:[%s7120 + $0x160] sm:$0xff]
  %v7166 = vld [vmem:[%s7120 + $0x168] sm:$0xff]
  %v7167 = vld [vmem:[%s7120 + $0x170] sm:$0xff]
  %v7168 = vld [vmem:[%s7120 + $0x178] sm:$0xff]
  %v7169 = vld [vmem:[%s7120 + $0x180] sm:$0xff]
  %v7170 = vld [vmem:[%s7120 + $0x188] sm:$0xff]
  %v7171 = vld [vmem:[%s7120 + $0x190] sm:$0xff]
  %v7172 = vld [vmem:[%s7120 + $0x198] sm:$0xff]
  %v7173 = vld [vmem:[%s7120 + $0x1a0] sm:$0xff]
  %v7174 = vld [vmem:[%s7120 + $0x1a8] sm:$0xff]
  %v7175 = vld [vmem:[%s7120 + $0x1b0] sm:$0xff]
  %v7176 = vld [vmem:[%s7120 + $0x1b8] sm:$0xff]
  %v7177 = vld [vmem:[%s7120 + $0x1c0] sm:$0xff]
  %v7178 = vld [vmem:[%s7120 + $0x1c8] sm:$0xff]
  %v7179 = vld [vmem:[%s7120 + $0x1d0] sm:$0xff]
  %v7180 = vld [vmem:[%s7120 + $0x1d8] sm:$0xff]
  %v7181 = vld [vmem:[%s7120 + $0x1e0] sm:$0xff]
  %v7182 = vld [vmem:[%s7120 + $0x1e8] sm:$0xff]
  %v7183 = vld [vmem:[%s7120 + $0x1f0] sm:$0xff]
  %v7184 = vld [vmem:[%s7120 + $0x1f8] sm:$0xff]
  %v7185 = vld [vmem:[%s7120 + $0x200] sm:$0xff]
  %v7186 = vld [vmem:[%s7120 + $0x208] sm:$0xff]
  %v7187 = vld [vmem:[%s7120 + $0x210] sm:$0xff]
  %v7188 = vld [vmem:[%s7120 + $0x218] sm:$0xff]
  %v7189 = vld [vmem:[%s7120 + $0x220] sm:$0xff]
  %v7190 = vld [vmem:[%s7120 + $0x228] sm:$0xff]
  %v7191 = vld [vmem:[%s7120 + $0x230] sm:$0xff]
  %v7192 = vld [vmem:[%s7120 + $0x238] sm:$0xff]
  %v7193 = vld [vmem:[%s7120 + $0x240] sm:$0xff]
  %v7194 = vld [vmem:[%s7120 + $0x248] sm:$0xff]
  %v7195 = vld [vmem:[%s7120 + $0x250] sm:$0xff]
  %v7196 = vld [vmem:[%s7120 + $0x258] sm:$0xff]
  %v7197 = vld [vmem:[%s7120 + $0x260] sm:$0xff]
  %v7198 = vld [vmem:[%s7120 + $0x268] sm:$0xff]
  %v7199 = vld [vmem:[%s7120 + $0x270] sm:$0xff]
  %v7200 = vld [vmem:[%s7120 + $0x278] sm:$0xff]
  %v7201 = vld [vmem:[%s7120 + $0x280] sm:$0xff]
  %v7202 = vld [vmem:[%s7120 + $0x288] sm:$0xff]
  %v7203 = vld [vmem:[%s7120 + $0x290] sm:$0xff]
  %v7204 = vld [vmem:[%s7120 + $0x298] sm:$0xff]
  %v7205 = vld [vmem:[%s7120 + $0x2a0] sm:$0xff]
  %v7206 = vld [vmem:[%s7120 + $0x2a8] sm:$0xff]
  %v7207 = vld [vmem:[%s7120 + $0x2b0] sm:$0xff]
  %v7208 = vld [vmem:[%s7120 + $0x2b8] sm:$0xff]
  %v7209 = vld [vmem:[%s7120 + $0x2c0] sm:$0xff]
  %v7210 = vld [vmem:[%s7120 + $0x2c8] sm:$0xff]
  %v7211 = vld [vmem:[%s7120 + $0x2d0] sm:$0xff]
  %v7212 = vld [vmem:[%s7120 + $0x2d8] sm:$0xff]
  %v7213 = vld [vmem:[%s7120 + $0x2e0] sm:$0xff]
  %v7214 = vld [vmem:[%s7120 + $0x2e8] sm:$0xff]
  %v7215 = vld [vmem:[%s7120 + $0x2f0] sm:$0xff]
  %v7216 = vld [vmem:[%s7120 + $0x2f8] sm:$0xff]
  %v7217 = vld [vmem:[%s7120 + $0x300] sm:$0xff]
  %v7218 = vld [vmem:[%s7120 + $0x308] sm:$0xff]
  %v7219 = vld [vmem:[%s7120 + $0x310] sm:$0xff]
  %v7220 = vld [vmem:[%s7120 + $0x318] sm:$0xff]
  %v7221 = vld [vmem:[%s7120 + $0x320] sm:$0xff]
  %v7222 = vld [vmem:[%s7120 + $0x328] sm:$0xff]
  %v7223 = vld [vmem:[%s7120 + $0x330] sm:$0xff]
  %v7224 = vld [vmem:[%s7120 + $0x338] sm:$0xff]
  %v7225 = vld [vmem:[%s7120 + $0x340] sm:$0xff]
  %v7226 = vld [vmem:[%s7120 + $0x348] sm:$0xff]
  %v7227 = vld [vmem:[%s7120 + $0x350] sm:$0xff]
  %v7228 = vld [vmem:[%s7120 + $0x358] sm:$0xff]
  %v7229 = vld [vmem:[%s7120 + $0x360] sm:$0xff]
  %v7230 = vld [vmem:[%s7120 + $0x368] sm:$0xff]
  %v7231 = vld [vmem:[%s7120 + $0x370] sm:$0xff]
  %v7232 = vld [vmem:[%s7120 + $0x378] sm:$0xff]
  %v7233 = vld [vmem:[%s7120 + $0x380] sm:$0xff]
  %v7234 = vld [vmem:[%s7120 + $0x388] sm:$0xff]
  %v7235 = vld [vmem:[%s7120 + $0x390] sm:$0xff]
  %v7236 = vld [vmem:[%s7120 + $0x398] sm:$0xff]
  %v7237 = vld [vmem:[%s7120 + $0x3a0] sm:$0xff]
  %v7238 = vld [vmem:[%s7120 + $0x3a8] sm:$0xff]
  %v7239 = vld [vmem:[%s7120 + $0x3b0] sm:$0xff]
  %v7240 = vld [vmem:[%s7120 + $0x3b8] sm:$0xff]
  %v7241 = vld [vmem:[%s7120 + $0x3c0] sm:$0xff]
  %v7242 = vld [vmem:[%s7120 + $0x3c8] sm:$0xff]
  %v7243 = vld [vmem:[%s7120 + $0x3d0] sm:$0xff]
  %v7244 = vld [vmem:[%s7120 + $0x3d8] sm:$0xff]
  %v7245 = vld [vmem:[%s7120 + $0x3e0] sm:$0xff]
  %v7246 = vld [vmem:[%s7120 + $0x3e8] sm:$0xff]
  %v7247 = vld [vmem:[%s7120 + $0x3f0] sm:$0xff]
  %v7248 = vld [vmem:[%s7120 + $0x3f8] sm:$0xff]
  %v7249 = vunpack.c.l.b16 %v6969
  %v7250 = vunpack.c.h.b16 %v6969
  %v7251 = vunpack.c.l.b16 %v6979
  %v7252 = vunpack.c.h.b16 %v6979
  %v7253 = vunpack.c.l.b16 %v6989
  %v7254 = vunpack.c.h.b16 %v6989
  %v7255 = vunpack.c.l.b16 %v6999
  %v7256 = vunpack.c.h.b16 %v6999
  %v7257 = vunpack.c.l.b16 %v7009
  %v7258 = vunpack.c.h.b16 %v7009
  %v7259 = vunpack.c.l.b16 %v7019
  %v7260 = vunpack.c.h.b16 %v7019
  %v7261 = vunpack.c.l.b16 %v7029
  %v7262 = vunpack.c.h.b16 %v7029
  %v7263 = vunpack.c.l.b16 %v7039
  %v7264 = vunpack.c.h.b16 %v7039
  %v7265 = vunpack.c.l.b16 %v7049
  %v7266 = vunpack.c.h.b16 %v7049
  %v7267 = vunpack.c.l.b16 %v7059
  %v7268 = vunpack.c.h.b16 %v7059
  %v7269 = vunpack.c.l.b16 %v7069
  %v7270 = vunpack.c.h.b16 %v7069
  %v7271 = vunpack.c.l.b16 %v7079
  %v7272 = vunpack.c.h.b16 %v7079
  %v7273 = vunpack.c.l.b16 %v7089
  %v7274 = vunpack.c.h.b16 %v7089
  %v7275 = vunpack.c.l.b16 %v7099
  %v7276 = vunpack.c.h.b16 %v7099
  %v7277 = vunpack.c.l.b16 %v7109
  %v7278 = vunpack.c.h.b16 %v7109
  %v7279 = vunpack.c.l.b16 %v7119
  %v7280 = vunpack.c.h.b16 %v7119
  %v7281 = vpack.c.b16 %v7253, %v7249
  %v7282 = vpack.c.b16 %v7254, %v7250
  %v7283 = vpack.c.b16 %v7255, %v7251
  %v7284 = vpack.c.b16 %v7256, %v7252
  %v7285 = vpack.c.b16 %v7261, %v7257
  %v7286 = vpack.c.b16 %v7262, %v7258
  %v7287 = vpack.c.b16 %v7263, %v7259
  %v7288 = vpack.c.b16 %v7264, %v7260
  %v7289 = vpack.c.b16 %v7269, %v7265
  %v7290 = vpack.c.b16 %v7270, %v7266
  %v7291 = vpack.c.b16 %v7271, %v7267
  %v7292 = vpack.c.b16 %v7272, %v7268
  %v7293 = vpack.c.b16 %v7277, %v7273
  %v7294 = vpack.c.b16 %v7278, %v7274
  %v7295 = vpack.c.b16 %v7279, %v7275
  %v7296 = vpack.c.b16 %v7280, %v7276
  %v7441 = vunpack.c.l.b16 %v7121
  %v7442 = vunpack.c.h.b16 %v7121
  %v7443 = vunpack.c.l.b16 %v7122
  %v7444 = vunpack.c.h.b16 %v7122
  %v7445 = vunpack.c.l.b16 %v7123
  %v7446 = vunpack.c.h.b16 %v7123
  %v7447 = vunpack.c.l.b16 %v7124
  %v7448 = vunpack.c.h.b16 %v7124
  %v7449 = vunpack.c.l.b16 %v7125
  %v7450 = vunpack.c.h.b16 %v7125
  %v7451 = vunpack.c.l.b16 %v7126
  %v7452 = vunpack.c.h.b16 %v7126
  %v7453 = vunpack.c.l.b16 %v7127
  %v7454 = vunpack.c.h.b16 %v7127
  %v7455 = vunpack.c.l.b16 %v7128
  %v7456 = vunpack.c.h.b16 %v7128
  %v7457 = vunpack.c.l.b16 %v7129
  %v7458 = vunpack.c.h.b16 %v7129
  %v7459 = vunpack.c.l.b16 %v7130
  %v7460 = vunpack.c.h.b16 %v7130
  %v7461 = vunpack.c.l.b16 %v7131
  %v7462 = vunpack.c.h.b16 %v7131
  %v7463 = vunpack.c.l.b16 %v7132
  %v7464 = vunpack.c.h.b16 %v7132
  %v7465 = vunpack.c.l.b16 %v7133
  %v7466 = vunpack.c.h.b16 %v7133
  %v7467 = vunpack.c.l.b16 %v7134
  %v7468 = vunpack.c.h.b16 %v7134
  %v7469 = vunpack.c.l.b16 %v7135
  %v7470 = vunpack.c.h.b16 %v7135
  %v7471 = vunpack.c.l.b16 %v7136
  %v7472 = vunpack.c.h.b16 %v7136
  %v7473 = vunpack.c.l.b16 %v7137
  %v7474 = vunpack.c.h.b16 %v7137
  %v7475 = vunpack.c.l.b16 %v7138
  %v7476 = vunpack.c.h.b16 %v7138
  %v7477 = vunpack.c.l.b16 %v7139
  %v7478 = vunpack.c.h.b16 %v7139
  %v7479 = vunpack.c.l.b16 %v7140
  %v7480 = vunpack.c.h.b16 %v7140
  %v7481 = vunpack.c.l.b16 %v7141
  %v7482 = vunpack.c.h.b16 %v7141
  %v7483 = vunpack.c.l.b16 %v7142
  %v7484 = vunpack.c.h.b16 %v7142
  %v7485 = vunpack.c.l.b16 %v7143
  %v7486 = vunpack.c.h.b16 %v7143
  %v7487 = vunpack.c.l.b16 %v7144
  %v7488 = vunpack.c.h.b16 %v7144
  %v7489 = vunpack.c.l.b16 %v7145
  %v7490 = vunpack.c.h.b16 %v7145
  %v7491 = vunpack.c.l.b16 %v7146
  %v7492 = vunpack.c.h.b16 %v7146
  %v7493 = vunpack.c.l.b16 %v7147
  %v7494 = vunpack.c.h.b16 %v7147
  %v7495 = vunpack.c.l.b16 %v7148
  %v7496 = vunpack.c.h.b16 %v7148
  %v7497 = vunpack.c.l.b16 %v7149
  %v7498 = vunpack.c.h.b16 %v7149
  %v7499 = vunpack.c.l.b16 %v7150
  %v7500 = vunpack.c.h.b16 %v7150
  %v7501 = vunpack.c.l.b16 %v7151
  %v7502 = vunpack.c.h.b16 %v7151
  %v7503 = vunpack.c.l.b16 %v7152
  %v7504 = vunpack.c.h.b16 %v7152
  %v7505 = vunpack.c.l.b16 %v7153
  %v7506 = vunpack.c.h.b16 %v7153
  %v7507 = vunpack.c.l.b16 %v7154
  %v7508 = vunpack.c.h.b16 %v7154
  %v7509 = vunpack.c.l.b16 %v7155
  %v7510 = vunpack.c.h.b16 %v7155
  %v7511 = vunpack.c.l.b16 %v7156
  %v7512 = vunpack.c.h.b16 %v7156
  %v7513 = vunpack.c.l.b16 %v7157
  %v7514 = vunpack.c.h.b16 %v7157
  %v7515 = vunpack.c.l.b16 %v7158
  %v7516 = vunpack.c.h.b16 %v7158
  %v7517 = vunpack.c.l.b16 %v7159
  %v7518 = vunpack.c.h.b16 %v7159
  %v7519 = vunpack.c.l.b16 %v7160
  %v7520 = vunpack.c.h.b16 %v7160
  %v7521 = vunpack.c.l.b16 %v7161
  %v7522 = vunpack.c.h.b16 %v7161
  %v7523 = vunpack.c.l.b16 %v7162
  %v7524 = vunpack.c.h.b16 %v7162
  %v7525 = vunpack.c.l.b16 %v7163
  %v7526 = vunpack.c.h.b16 %v7163
  %v7527 = vunpack.c.l.b16 %v7164
  %v7528 = vunpack.c.h.b16 %v7164
  %v7529 = vunpack.c.l.b16 %v7165
  %v7530 = vunpack.c.h.b16 %v7165
  %v7531 = vunpack.c.l.b16 %v7166
  %v7532 = vunpack.c.h.b16 %v7166
  %v7533 = vunpack.c.l.b16 %v7167
  %v7534 = vunpack.c.h.b16 %v7167
  %v7535 = vunpack.c.l.b16 %v7168
  %v7536 = vunpack.c.h.b16 %v7168
  %v7537 = vunpack.c.l.b16 %v7169
  %v7538 = vunpack.c.h.b16 %v7169
  %v7539 = vunpack.c.l.b16 %v7170
  %v7540 = vunpack.c.h.b16 %v7170
  %v7541 = vunpack.c.l.b16 %v7171
  %v7542 = vunpack.c.h.b16 %v7171
  %v7543 = vunpack.c.l.b16 %v7172
  %v7544 = vunpack.c.h.b16 %v7172
  %v7545 = vunpack.c.l.b16 %v7173
  %v7546 = vunpack.c.h.b16 %v7173
  %v7547 = vunpack.c.l.b16 %v7174
  %v7548 = vunpack.c.h.b16 %v7174
  %v7549 = vunpack.c.l.b16 %v7175
  %v7550 = vunpack.c.h.b16 %v7175
  %v7551 = vunpack.c.l.b16 %v7176
  %v7552 = vunpack.c.h.b16 %v7176
  %v7553 = vunpack.c.l.b16 %v7177
  %v7554 = vunpack.c.h.b16 %v7177
  %v7555 = vunpack.c.l.b16 %v7178
  %v7556 = vunpack.c.h.b16 %v7178
  %v7557 = vunpack.c.l.b16 %v7179
  %v7558 = vunpack.c.h.b16 %v7179
  %v7559 = vunpack.c.l.b16 %v7180
  %v7560 = vunpack.c.h.b16 %v7180
  %v7561 = vunpack.c.l.b16 %v7181
  %v7562 = vunpack.c.h.b16 %v7181
  %v7563 = vunpack.c.l.b16 %v7182
  %v7564 = vunpack.c.h.b16 %v7182
  %v7565 = vunpack.c.l.b16 %v7183
  %v7566 = vunpack.c.h.b16 %v7183
  %v7567 = vunpack.c.l.b16 %v7184
  %v7568 = vunpack.c.h.b16 %v7184
  %v7569 = vunpack.c.l.b16 %v7185
  %v7570 = vunpack.c.h.b16 %v7185
  %v7571 = vunpack.c.l.b16 %v7186
  %v7572 = vunpack.c.h.b16 %v7186
  %v7573 = vunpack.c.l.b16 %v7187
  %v7574 = vunpack.c.h.b16 %v7187
  %v7575 = vunpack.c.l.b16 %v7188
  %v7576 = vunpack.c.h.b16 %v7188
  %v7577 = vunpack.c.l.b16 %v7189
  %v7578 = vunpack.c.h.b16 %v7189
  %v7579 = vunpack.c.l.b16 %v7190
  %v7580 = vunpack.c.h.b16 %v7190
  %v7581 = vunpack.c.l.b16 %v7191
  %v7582 = vunpack.c.h.b16 %v7191
  %v7583 = vunpack.c.l.b16 %v7192
  %v7584 = vunpack.c.h.b16 %v7192
  %v7585 = vunpack.c.l.b16 %v7193
  %v7586 = vunpack.c.h.b16 %v7193
  %v7587 = vunpack.c.l.b16 %v7194
  %v7588 = vunpack.c.h.b16 %v7194
  %v7589 = vunpack.c.l.b16 %v7195
  %v7590 = vunpack.c.h.b16 %v7195
  %v7591 = vunpack.c.l.b16 %v7196
  %v7592 = vunpack.c.h.b16 %v7196
  %v7593 = vunpack.c.l.b16 %v7197
  %v7594 = vunpack.c.h.b16 %v7197
  %v7595 = vunpack.c.l.b16 %v7198
  %v7596 = vunpack.c.h.b16 %v7198
  %v7597 = vunpack.c.l.b16 %v7199
  %v7598 = vunpack.c.h.b16 %v7199
  %v7599 = vunpack.c.l.b16 %v7200
  %v7600 = vunpack.c.h.b16 %v7200
  %v7601 = vunpack.c.l.b16 %v7201
  %v7602 = vunpack.c.h.b16 %v7201
  %v7603 = vunpack.c.l.b16 %v7202
  %v7604 = vunpack.c.h.b16 %v7202
  %v7605 = vunpack.c.l.b16 %v7203
  %v7606 = vunpack.c.h.b16 %v7203
  %v7607 = vunpack.c.l.b16 %v7204
  %v7608 = vunpack.c.h.b16 %v7204
  %v7609 = vunpack.c.l.b16 %v7205
  %v7610 = vunpack.c.h.b16 %v7205
  %v7611 = vunpack.c.l.b16 %v7206
  %v7612 = vunpack.c.h.b16 %v7206
  %v7613 = vunpack.c.l.b16 %v7207
  %v7614 = vunpack.c.h.b16 %v7207
  %v7615 = vunpack.c.l.b16 %v7208
  %v7616 = vunpack.c.h.b16 %v7208
  %v7617 = vunpack.c.l.b16 %v7209
  %v7618 = vunpack.c.h.b16 %v7209
  %v7619 = vunpack.c.l.b16 %v7210
  %v7620 = vunpack.c.h.b16 %v7210
  %v7621 = vunpack.c.l.b16 %v7211
  %v7622 = vunpack.c.h.b16 %v7211
  %v7623 = vunpack.c.l.b16 %v7212
  %v7624 = vunpack.c.h.b16 %v7212
  %v7625 = vunpack.c.l.b16 %v7213
  %v7626 = vunpack.c.h.b16 %v7213
  %v7627 = vunpack.c.l.b16 %v7214
  %v7628 = vunpack.c.h.b16 %v7214
  %v7629 = vunpack.c.l.b16 %v7215
  %v7630 = vunpack.c.h.b16 %v7215
  %v7631 = vunpack.c.l.b16 %v7216
  %v7632 = vunpack.c.h.b16 %v7216
  %v7633 = vunpack.c.l.b16 %v7217
  %v7634 = vunpack.c.h.b16 %v7217
  %v7635 = vunpack.c.l.b16 %v7218
  %v7636 = vunpack.c.h.b16 %v7218
  %v7637 = vunpack.c.l.b16 %v7219
  %v7638 = vunpack.c.h.b16 %v7219
  %v7639 = vunpack.c.l.b16 %v7220
  %v7640 = vunpack.c.h.b16 %v7220
  %v7641 = vunpack.c.l.b16 %v7221
  %v7642 = vunpack.c.h.b16 %v7221
  %v7643 = vunpack.c.l.b16 %v7222
  %v7644 = vunpack.c.h.b16 %v7222
  %v7645 = vunpack.c.l.b16 %v7223
  %v7646 = vunpack.c.h.b16 %v7223
  %v7647 = vunpack.c.l.b16 %v7224
  %v7648 = vunpack.c.h.b16 %v7224
  %v7649 = vunpack.c.l.b16 %v7225
  %v7650 = vunpack.c.h.b16 %v7225
  %v7651 = vunpack.c.l.b16 %v7226
  %v7652 = vunpack.c.h.b16 %v7226
  %v7653 = vunpack.c.l.b16 %v7227
  %v7654 = vunpack.c.h.b16 %v7227
  %v7655 = vunpack.c.l.b16 %v7228
  %v7656 = vunpack.c.h.b16 %v7228
  %v7657 = vunpack.c.l.b16 %v7229
  %v7658 = vunpack.c.h.b16 %v7229
  %v7659 = vunpack.c.l.b16 %v7230
  %v7660 = vunpack.c.h.b16 %v7230
  %v7661 = vunpack.c.l.b16 %v7231
  %v7662 = vunpack.c.h.b16 %v7231
  %v7663 = vunpack.c.l.b16 %v7232
  %v7664 = vunpack.c.h.b16 %v7232
  %v7665 = vunpack.c.l.b16 %v7233
  %v7666 = vunpack.c.h.b16 %v7233
  %v7667 = vunpack.c.l.b16 %v7234
  %v7668 = vunpack.c.h.b16 %v7234
  %v7669 = vunpack.c.l.b16 %v7235
  %v7670 = vunpack.c.h.b16 %v7235
  %v7671 = vunpack.c.l.b16 %v7236
  %v7672 = vunpack.c.h.b16 %v7236
  %v7673 = vunpack.c.l.b16 %v7237
  %v7674 = vunpack.c.h.b16 %v7237
  %v7675 = vunpack.c.l.b16 %v7238
  %v7676 = vunpack.c.h.b16 %v7238
  %v7677 = vunpack.c.l.b16 %v7239
  %v7678 = vunpack.c.h.b16 %v7239
  %v7679 = vunpack.c.l.b16 %v7240
  %v7680 = vunpack.c.h.b16 %v7240
  %v7681 = vunpack.c.l.b16 %v7241
  %v7682 = vunpack.c.h.b16 %v7241
  %v7683 = vunpack.c.l.b16 %v7242
  %v7684 = vunpack.c.h.b16 %v7242
  %v7685 = vunpack.c.l.b16 %v7243
  %v7686 = vunpack.c.h.b16 %v7243
  %v7687 = vunpack.c.l.b16 %v7244
  %v7688 = vunpack.c.h.b16 %v7244
  %v7689 = vunpack.c.l.b16 %v7245
  %v7690 = vunpack.c.h.b16 %v7245
  %v7691 = vunpack.c.l.b16 %v7246
  %v7692 = vunpack.c.h.b16 %v7246
  %v7693 = vunpack.c.l.b16 %v7247
  %v7694 = vunpack.c.h.b16 %v7247
  %v7695 = vunpack.c.l.b16 %v7248
  %v7696 = vunpack.c.h.b16 %v7248
  %v7697 = vpack.c.b16 %v7445, %v7441
  %v7698 = vpack.c.b16 %v7446, %v7442
  %v7699 = vpack.c.b16 %v7447, %v7443
  %v7700 = vpack.c.b16 %v7448, %v7444
  %v7701 = vpack.c.b16 %v7453, %v7449
  %v7702 = vpack.c.b16 %v7454, %v7450
  %v7703 = vpack.c.b16 %v7455, %v7451
  %v7704 = vpack.c.b16 %v7456, %v7452
  %v7705 = vpack.c.b16 %v7461, %v7457
  %v7706 = vpack.c.b16 %v7462, %v7458
  %v7707 = vpack.c.b16 %v7463, %v7459
  %v7708 = vpack.c.b16 %v7464, %v7460
  %v7709 = vpack.c.b16 %v7469, %v7465
  %v7710 = vpack.c.b16 %v7470, %v7466
  %v7711 = vpack.c.b16 %v7471, %v7467
  %v7712 = vpack.c.b16 %v7472, %v7468
  %v7713 = vpack.c.b16 %v7477, %v7473
  %v7714 = vpack.c.b16 %v7478, %v7474
  %v7715 = vpack.c.b16 %v7479, %v7475
  %v7716 = vpack.c.b16 %v7480, %v7476
  %v7717 = vpack.c.b16 %v7485, %v7481
  %v7718 = vpack.c.b16 %v7486, %v7482
  %v7719 = vpack.c.b16 %v7487, %v7483
  %v7720 = vpack.c.b16 %v7488, %v7484
  %v7721 = vpack.c.b16 %v7493, %v7489
  %v7722 = vpack.c.b16 %v7494, %v7490
  %v7723 = vpack.c.b16 %v7495, %v7491
  %v7724 = vpack.c.b16 %v7496, %v7492
  %v7725 = vpack.c.b16 %v7501, %v7497
  %v7726 = vpack.c.b16 %v7502, %v7498
  %v7727 = vpack.c.b16 %v7503, %v7499
  %v7728 = vpack.c.b16 %v7504, %v7500
  %v7729 = vpack.c.b16 %v7509, %v7505
  %v7730 = vpack.c.b16 %v7510, %v7506
  %v7731 = vpack.c.b16 %v7511, %v7507
  %v7732 = vpack.c.b16 %v7512, %v7508
  %v7733 = vpack.c.b16 %v7517, %v7513
  %v7734 = vpack.c.b16 %v7518, %v7514
  %v7735 = vpack.c.b16 %v7519, %v7515
  %v7736 = vpack.c.b16 %v7520, %v7516
  %v7737 = vpack.c.b16 %v7525, %v7521
  %v7738 = vpack.c.b16 %v7526, %v7522
  %v7739 = vpack.c.b16 %v7527, %v7523
  %v7740 = vpack.c.b16 %v7528, %v7524
  %v7741 = vpack.c.b16 %v7533, %v7529
  %v7742 = vpack.c.b16 %v7534, %v7530
  %v7743 = vpack.c.b16 %v7535, %v7531
  %v7744 = vpack.c.b16 %v7536, %v7532
  %v7745 = vpack.c.b16 %v7541, %v7537
  %v7746 = vpack.c.b16 %v7542, %v7538
  %v7747 = vpack.c.b16 %v7543, %v7539
  %v7748 = vpack.c.b16 %v7544, %v7540
  %v7749 = vpack.c.b16 %v7549, %v7545
  %v7750 = vpack.c.b16 %v7550, %v7546
  %v7751 = vpack.c.b16 %v7551, %v7547
  %v7752 = vpack.c.b16 %v7552, %v7548
  %v7753 = vpack.c.b16 %v7557, %v7553
  %v7754 = vpack.c.b16 %v7558, %v7554
  %v7755 = vpack.c.b16 %v7559, %v7555
  %v7756 = vpack.c.b16 %v7560, %v7556
  %v7757 = vpack.c.b16 %v7565, %v7561
  %v7758 = vpack.c.b16 %v7566, %v7562
  %v7759 = vpack.c.b16 %v7567, %v7563
  %v7760 = vpack.c.b16 %v7568, %v7564
  %v7761 = vpack.c.b16 %v7573, %v7569
  %v7762 = vpack.c.b16 %v7574, %v7570
  %v7763 = vpack.c.b16 %v7575, %v7571
  %v7764 = vpack.c.b16 %v7576, %v7572
  %v7765 = vpack.c.b16 %v7581, %v7577
  %v7766 = vpack.c.b16 %v7582, %v7578
  %v7767 = vpack.c.b16 %v7583, %v7579
  %v7768 = vpack.c.b16 %v7584, %v7580
  %v7769 = vpack.c.b16 %v7589, %v7585
  %v7770 = vpack.c.b16 %v7590, %v7586
  %v7771 = vpack.c.b16 %v7591, %v7587
  %v7772 = vpack.c.b16 %v7592, %v7588
  %v7773 = vpack.c.b16 %v7597, %v7593
  %v7774 = vpack.c.b16 %v7598, %v7594
  %v7775 = vpack.c.b16 %v7599, %v7595
  %v7776 = vpack.c.b16 %v7600, %v7596
  %v7777 = vpack.c.b16 %v7605, %v7601
  %v7778 = vpack.c.b16 %v7606, %v7602
  %v7779 = vpack.c.b16 %v7607, %v7603
  %v7780 = vpack.c.b16 %v7608, %v7604
  %v7781 = vpack.c.b16 %v7613, %v7609
  %v7782 = vpack.c.b16 %v7614, %v7610
  %v7783 = vpack.c.b16 %v7615, %v7611
  %v7784 = vpack.c.b16 %v7616, %v7612
  %v7785 = vpack.c.b16 %v7621, %v7617
  %v7786 = vpack.c.b16 %v7622, %v7618
  %v7787 = vpack.c.b16 %v7623, %v7619
  %v7788 = vpack.c.b16 %v7624, %v7620
  %v7789 = vpack.c.b16 %v7629, %v7625
  %v7790 = vpack.c.b16 %v7630, %v7626
  %v7791 = vpack.c.b16 %v7631, %v7627
  %v7792 = vpack.c.b16 %v7632, %v7628
  %v7793 = vpack.c.b16 %v7637, %v7633
  %v7794 = vpack.c.b16 %v7638, %v7634
  %v7795 = vpack.c.b16 %v7639, %v7635
  %v7796 = vpack.c.b16 %v7640, %v7636
  %v7797 = vpack.c.b16 %v7645, %v7641
  %v7798 = vpack.c.b16 %v7646, %v7642
  %v7799 = vpack.c.b16 %v7647, %v7643
  %v7800 = vpack.c.b16 %v7648, %v7644
  %v7801 = vpack.c.b16 %v7653, %v7649
  %v7802 = vpack.c.b16 %v7654, %v7650
  %v7803 = vpack.c.b16 %v7655, %v7651
  %v7804 = vpack.c.b16 %v7656, %v7652
  %v7805 = vpack.c.b16 %v7661, %v7657
  %v7806 = vpack.c.b16 %v7662, %v7658
  %v7807 = vpack.c.b16 %v7663, %v7659
  %v7808 = vpack.c.b16 %v7664, %v7660
  %v7809 = vpack.c.b16 %v7669, %v7665
  %v7810 = vpack.c.b16 %v7670, %v7666
  %v7811 = vpack.c.b16 %v7671, %v7667
  %v7812 = vpack.c.b16 %v7672, %v7668
  %v7813 = vpack.c.b16 %v7677, %v7673
  %v7814 = vpack.c.b16 %v7678, %v7674
  %v7815 = vpack.c.b16 %v7679, %v7675
  %v7816 = vpack.c.b16 %v7680, %v7676
  %v7817 = vpack.c.b16 %v7685, %v7681
  %v7818 = vpack.c.b16 %v7686, %v7682
  %v7819 = vpack.c.b16 %v7687, %v7683
  %v7820 = vpack.c.b16 %v7688, %v7684
  %v7821 = vpack.c.b16 %v7693, %v7689
  %v7822 = vpack.c.b16 %v7694, %v7690
  %v7823 = vpack.c.b16 %v7695, %v7691
  %v7824 = vpack.c.b16 %v7696, %v7692
  %7953 = vmatprep.subr.bf16.mxu0 %v7726
  %7954 = vmatpush1.bf16.msra.mxu0 %v7725
  %7955 = vmatprep.subr.bf16.mxu0 %v7722
  %7956 = vmatpush1.bf16.msra.mxu0 %v7721
  %7957 = vmatprep.subr.bf16.mxu0 %v7718
  %7958 = vmatpush1.bf16.msra.mxu0 %v7717
  %7959 = vmatprep.subr.bf16.mxu0 %v7714
  %7960 = vmatpush1.bf16.msra.mxu0 %v7713
  %7961 = vmatprep.subr.bf16.mxu0 %v7710
  %7962 = vmatpush1.bf16.msra.mxu0 %v7709
  %7963 = vmatprep.subr.bf16.mxu0 %v7706
  %7964 = vmatpush1.bf16.msra.mxu0 %v7705
  %7965 = vmatprep.subr.bf16.mxu0 %v7702
  %7966 = vmatpush1.bf16.msra.mxu0 %v7701
  %7967 = vmatprep.subr.bf16.mxu0 %v7698
  %7968 = vmatpush1.bf16.msra.mxu0 %v7697
  %7969 = vmatprep.subr.bf16.mxu0 %v7758
  %7970 = vmatpush2.bf16.msra.mxu0 %v7757
  %7971 = vmatprep.subr.bf16.mxu0 %v7754
  %7972 = vmatpush2.bf16.msra.mxu0 %v7753
  %7973 = vmatprep.subr.bf16.mxu0 %v7750
  %7974 = vmatpush2.bf16.msra.mxu0 %v7749
  %7975 = vmatprep.subr.bf16.mxu0 %v7746
  %7976 = vmatpush2.bf16.msra.mxu0 %v7745
  %7977 = vmatprep.subr.bf16.mxu0 %v7742
  %7978 = vmatpush2.bf16.msra.mxu0 %v7741
  %7979 = vmatprep.subr.bf16.mxu0 %v7738
  %7980 = vmatpush2.bf16.msra.mxu0 %v7737
  %7981 = vmatprep.subr.bf16.mxu0 %v7734
  %7982 = vmatpush2.bf16.msra.mxu0 %v7733
  %7983 = vmatprep.subr.bf16.mxu0 %v7730
  %7984 = vmatpush2.bf16.msra.mxu0 %v7729
  %7985 = vmatprep.mubr.bf16.mxu0 %v7282
  %7986 = vmatmul.mubr.bf16.gmra.mxu0 %v7281
  %v7987 = vpop.f32.mrf.mxu0
  %v7988 = vadd.f32 0.0, %v7987
  %v7989 = vpop.f32.mrf.mxu0
  %v7990 = vadd.f32 0.0, %v7989
  %v7991 = vpop.f32.mrf.mxu0
  %v7992 = vadd.f32 0.0, %v7991
  %v7993 = vpop.f32.mrf.mxu0
  %v7994 = vadd.f32 0.0, %v7993
  %7995 = vmatprep.mubr.bf16.mxu0 %v7286
  %7996 = vmatmul.mubr.bf16.gmra.mxu0 %v7285
  %v7997 = vpop.f32.mrf.mxu0
  %v7998 = vadd.f32 0.0, %v7997
  %v7999 = vpop.f32.mrf.mxu0
  %v8000 = vadd.f32 0.0, %v7999
  %v8001 = vpop.f32.mrf.mxu0
  %v8002 = vadd.f32 0.0, %v8001
  %v8003 = vpop.f32.mrf.mxu0
  %v8004 = vadd.f32 0.0, %v8003
  %8005 = vmatprep.mubr.bf16.mxu0 %v7290
  %8006 = vmatmul.mubr.bf16.gmra.mxu0 %v7289
  %v8007 = vpop.f32.mrf.mxu0
  %v8008 = vadd.f32 0.0, %v8007
  %v8009 = vpop.f32.mrf.mxu0
  %v8010 = vadd.f32 0.0, %v8009
  %v8011 = vpop.f32.mrf.mxu0
  %v8012 = vadd.f32 0.0, %v8011
  %v8013 = vpop.f32.mrf.mxu0
  %v8014 = vadd.f32 0.0, %v8013
  %8015 = vmatprep.mubr.bf16.mxu0 %v7294
  %8016 = vmatmul.mubr.bf16.gmra.mxu0 %v7293
  %v8017 = vpop.f32.mrf.mxu0
  %v8018 = vadd.f32 0.0, %v8017
  %v8019 = vpop.f32.mrf.mxu0
  %v8020 = vadd.f32 0.0, %v8019
  %v8021 = vpop.f32.mrf.mxu0
  %v8022 = vadd.f32 0.0, %v8021
  %v8023 = vpop.f32.mrf.mxu0
  %v8024 = vadd.f32 0.0, %v8023
  %8025 = vdwg.mxu0
  %8026 = vmatprep.subr.bf16.mxu0 %v7790
  %8027 = vmatpush1.bf16.msra.mxu0 %v7789
  %8028 = vmatprep.subr.bf16.mxu0 %v7786
  %8029 = vmatpush1.bf16.msra.mxu0 %v7785
  %8030 = vmatprep.subr.bf16.mxu0 %v7782
  %8031 = vmatpush1.bf16.msra.mxu0 %v7781
  %8032 = vmatprep.subr.bf16.mxu0 %v7778
  %8033 = vmatpush1.bf16.msra.mxu0 %v7777
  %8034 = vmatprep.subr.bf16.mxu0 %v7774
  %8035 = vmatpush1.bf16.msra.mxu0 %v7773
  %8036 = vmatprep.subr.bf16.mxu0 %v7770
  %8037 = vmatpush1.bf16.msra.mxu0 %v7769
  %8038 = vmatprep.subr.bf16.mxu0 %v7766
  %8039 = vmatpush1.bf16.msra.mxu0 %v7765
  %8040 = vmatprep.subr.bf16.mxu0 %v7762
  %8041 = vmatpush1.bf16.msra.mxu0 %v7761
  %8042 = vmatprep.subr.bf16.mxu0 %v7822
  %8043 = vmatpush2.bf16.msra.mxu0 %v7821
  %8044 = vmatprep.subr.bf16.mxu0 %v7818
  %8045 = vmatpush2.bf16.msra.mxu0 %v7817
  %8046 = vmatprep.subr.bf16.mxu0 %v7814
  %8047 = vmatpush2.bf16.msra.mxu0 %v7813
  %8048 = vmatprep.subr.bf16.mxu0 %v7810
  %8049 = vmatpush2.bf16.msra.mxu0 %v7809
  %8050 = vmatprep.subr.bf16.mxu0 %v7806
  %8051 = vmatpush2.bf16.msra.mxu0 %v7805
  %8052 = vmatprep.subr.bf16.mxu0 %v7802
  %8053 = vmatpush2.bf16.msra.mxu0 %v7801
  %8054 = vmatprep.subr.bf16.mxu0 %v7798
  %8055 = vmatpush2.bf16.msra.mxu0 %v7797
  %8056 = vmatprep.subr.bf16.mxu0 %v7794
  %8057 = vmatpush2.bf16.msra.mxu0 %v7793
  %8058 = vmatprep.mubr.bf16.mxu0 %v7284
  %8059 = vmatmul.mubr.bf16.gmra.mxu0 %v7283
  %v8060 = vpop.f32.mrf.mxu0
  %v8061 = vadd.f32 %v7988, %v8060
  %v8062 = vpop.f32.mrf.mxu0
  %v8063 = vadd.f32 %v7990, %v8062
  %v8064 = vpop.f32.mrf.mxu0
  %v8065 = vadd.f32 %v7992, %v8064
  %v8066 = vpop.f32.mrf.mxu0
  %v8067 = vadd.f32 %v7994, %v8066
  %8068 = vmatprep.mubr.bf16.mxu0 %v7288
  %8069 = vmatmul.mubr.bf16.gmra.mxu0 %v7287
  %v8070 = vpop.f32.mrf.mxu0
  %v8071 = vadd.f32 %v7998, %v8070
  %v8072 = vpop.f32.mrf.mxu0
  %v8073 = vadd.f32 %v8000, %v8072
  %v8074 = vpop.f32.mrf.mxu0
  %v8075 = vadd.f32 %v8002, %v8074
  %v8076 = vpop.f32.mrf.mxu0
  %v8077 = vadd.f32 %v8004, %v8076
  %8078 = vmatprep.mubr.bf16.mxu0 %v7292
  %8079 = vmatmul.mubr.bf16.gmra.mxu0 %v7291
  %v8080 = vpop.f32.mrf.mxu0
  %v8081 = vadd.f32 %v8008, %v8080
  %v8082 = vpop.f32.mrf.mxu0
  %v8083 = vadd.f32 %v8010, %v8082
  %v8084 = vpop.f32.mrf.mxu0
  %v8085 = vadd.f32 %v8012, %v8084
  %v8086 = vpop.f32.mrf.mxu0
  %v8087 = vadd.f32 %v8014, %v8086
  %8088 = vmatprep.mubr.bf16.mxu0 %v7296
  %8089 = vmatmul.mubr.bf16.gmra.mxu0 %v7295
  %v8090 = vpop.f32.mrf.mxu0
  %v8091 = vadd.f32 %v8018, %v8090
  %v8092 = vpop.f32.mrf.mxu0
  %v8093 = vadd.f32 %v8020, %v8092
  %v8094 = vpop.f32.mrf.mxu0
  %v8095 = vadd.f32 %v8022, %v8094
  %v8096 = vpop.f32.mrf.mxu0
  %v8097 = vadd.f32 %v8024, %v8096
  %8098 = vdwg.mxu0
  %8099 = vmatprep.subr.bf16.mxu0 %v7728
  %8100 = vmatpush1.bf16.msra.mxu0 %v7727
  %8101 = vmatprep.subr.bf16.mxu0 %v7724
  %8102 = vmatpush1.bf16.msra.mxu0 %v7723
  %8103 = vmatprep.subr.bf16.mxu0 %v7720
  %8104 = vmatpush1.bf16.msra.mxu0 %v7719
  %8105 = vmatprep.subr.bf16.mxu0 %v7716
  %8106 = vmatpush1.bf16.msra.mxu0 %v7715
  %8107 = vmatprep.subr.bf16.mxu0 %v7712
  %8108 = vmatpush1.bf16.msra.mxu0 %v7711
  %8109 = vmatprep.subr.bf16.mxu0 %v7708
  %8110 = vmatpush1.bf16.msra.mxu0 %v7707
  %8111 = vmatprep.subr.bf16.mxu0 %v7704
  %8112 = vmatpush1.bf16.msra.mxu0 %v7703
  %8113 = vmatprep.subr.bf16.mxu0 %v7700
  %8114 = vmatpush1.bf16.msra.mxu0 %v7699
  %8115 = vmatprep.subr.bf16.mxu0 %v7760
  %8116 = vmatpush2.bf16.msra.mxu0 %v7759
  %8117 = vmatprep.subr.bf16.mxu0 %v7756
  %8118 = vmatpush2.bf16.msra.mxu0 %v7755
  %8119 = vmatprep.subr.bf16.mxu0 %v7752
  %8120 = vmatpush2.bf16.msra.mxu0 %v7751
  %8121 = vmatprep.subr.bf16.mxu0 %v7748
  %8122 = vmatpush2.bf16.msra.mxu0 %v7747
  %8123 = vmatprep.subr.bf16.mxu0 %v7744
  %8124 = vmatpush2.bf16.msra.mxu0 %v7743
  %8125 = vmatprep.subr.bf16.mxu0 %v7740
  %8126 = vmatpush2.bf16.msra.mxu0 %v7739
  %8127 = vmatprep.subr.bf16.mxu0 %v7736
  %8128 = vmatpush2.bf16.msra.mxu0 %v7735
  %8129 = vmatprep.subr.bf16.mxu0 %v7732
  %8130 = vmatpush2.bf16.msra.mxu0 %v7731
  %8131 = vmatprep.mubr.bf16.mxu0 %v7282
  %8132 = vmatmul.mubr.bf16.gmra.mxu0 %v7281
  %v8133 = vpop.f32.mrf.mxu0
  %v8134 = vadd.f32 0.0, %v8133
  %v8135 = vpop.f32.mrf.mxu0
  %v8136 = vadd.f32 0.0, %v8135
  %v8137 = vpop.f32.mrf.mxu0
  %v8138 = vadd.f32 0.0, %v8137
  %v8139 = vpop.f32.mrf.mxu0
  %v8140 = vadd.f32 0.0, %v8139
  %8141 = vmatprep.mubr.bf16.mxu0 %v7286
  %8142 = vmatmul.mubr.bf16.gmra.mxu0 %v7285
  %v8143 = vpop.f32.mrf.mxu0
  %v8144 = vadd.f32 0.0, %v8143
  %v8145 = vpop.f32.mrf.mxu0
  %v8146 = vadd.f32 0.0, %v8145
  %v8147 = vpop.f32.mrf.mxu0
  %v8148 = vadd.f32 0.0, %v8147
  %v8149 = vpop.f32.mrf.mxu0
  %v8150 = vadd.f32 0.0, %v8149
  %8151 = vmatprep.mubr.bf16.mxu0 %v7290
  %8152 = vmatmul.mubr.bf16.gmra.mxu0 %v7289
  %v8153 = vpop.f32.mrf.mxu0
  %v8154 = vadd.f32 0.0, %v8153
  %v8155 = vpop.f32.mrf.mxu0
  %v8156 = vadd.f32 0.0, %v8155
  %v8157 = vpop.f32.mrf.mxu0
  %v8158 = vadd.f32 0.0, %v8157
  %v8159 = vpop.f32.mrf.mxu0
  %v8160 = vadd.f32 0.0, %v8159
  %8161 = vmatprep.mubr.bf16.mxu0 %v7294
  %8162 = vmatmul.mubr.bf16.gmra.mxu0 %v7293
  %v8163 = vpop.f32.mrf.mxu0
  %v8164 = vadd.f32 0.0, %v8163
  %v8165 = vpop.f32.mrf.mxu0
  %v8166 = vadd.f32 0.0, %v8165
  %v8167 = vpop.f32.mrf.mxu0
  %v8168 = vadd.f32 0.0, %v8167
  %v8169 = vpop.f32.mrf.mxu0
  %v8170 = vadd.f32 0.0, %v8169
  %8171 = vdwg.mxu0
  %8172 = vmatprep.subr.bf16.mxu0 %v7792
  %8173 = vmatpush1.bf16.msra.mxu0 %v7791
  %8174 = vmatprep.subr.bf16.mxu0 %v7788
  %8175 = vmatpush1.bf16.msra.mxu0 %v7787
  %8176 = vmatprep.subr.bf16.mxu0 %v7784
  %8177 = vmatpush1.bf16.msra.mxu0 %v7783
  %8178 = vmatprep.subr.bf16.mxu0 %v7780
  %8179 = vmatpush1.bf16.msra.mxu0 %v7779
  %8180 = vmatprep.subr.bf16.mxu0 %v7776
  %8181 = vmatpush1.bf16.msra.mxu0 %v7775
  %8182 = vmatprep.subr.bf16.mxu0 %v7772
  %8183 = vmatpush1.bf16.msra.mxu0 %v7771
  %8184 = vmatprep.subr.bf16.mxu0 %v7768
  %8185 = vmatpush1.bf16.msra.mxu0 %v7767
  %8186 = vmatprep.subr.bf16.mxu0 %v7764
  %8187 = vmatpush1.bf16.msra.mxu0 %v7763
  %8188 = vmatprep.subr.bf16.mxu0 %v7824
  %8189 = vmatpush2.bf16.msra.mxu0 %v7823
  %8190 = vmatprep.subr.bf16.mxu0 %v7820
  %8191 = vmatpush2.bf16.msra.mxu0 %v7819
  %8192 = vmatprep.subr.bf16.mxu0 %v7816
  %8193 = vmatpush2.bf16.msra.mxu0 %v7815
  %8194 = vmatprep.subr.bf16.mxu0 %v7812
  %8195 = vmatpush2.bf16.msra.mxu0 %v7811
  %8196 = vmatprep.subr.bf16.mxu0 %v7808
  %8197 = vmatpush2.bf16.msra.mxu0 %v7807
  %8198 = vmatprep.subr.bf16.mxu0 %v7804
  %8199 = vmatpush2.bf16.msra.mxu0 %v7803
  %8200 = vmatprep.subr.bf16.mxu0 %v7800
  %8201 = vmatpush2.bf16.msra.mxu0 %v7799
  %8202 = vmatprep.subr.bf16.mxu0 %v7796
  %8203 = vmatpush2.bf16.msra.mxu0 %v7795
  %8204 = vmatprep.mubr.bf16.mxu0 %v7284
  %8205 = vmatmul.mubr.bf16.gmra.mxu0 %v7283
  %v8206 = vpop.f32.mrf.mxu0
  %v8207 = vadd.f32 %v8134, %v8206
  %v8208 = vpop.f32.mrf.mxu0
  %v8209 = vadd.f32 %v8136, %v8208
  %v8210 = vpop.f32.mrf.mxu0
  %v8211 = vadd.f32 %v8138, %v8210
  %v8212 = vpop.f32.mrf.mxu0
  %v8213 = vadd.f32 %v8140, %v8212
  %8214 = vmatprep.mubr.bf16.mxu0 %v7288
  %8215 = vmatmul.mubr.bf16.gmra.mxu0 %v7287
  %v8216 = vpop.f32.mrf.mxu0
  %v8217 = vadd.f32 %v8144, %v8216
  %v8218 = vpop.f32.mrf.mxu0
  %v8219 = vadd.f32 %v8146, %v8218
  %v8220 = vpop.f32.mrf.mxu0
  %v8221 = vadd.f32 %v8148, %v8220
  %v8222 = vpop.f32.mrf.mxu0
  %v8223 = vadd.f32 %v8150, %v8222
  %8224 = vmatprep.mubr.bf16.mxu0 %v7292
  %8225 = vmatmul.mubr.bf16.gmra.mxu0 %v7291
  %v8226 = vpop.f32.mrf.mxu0
  %v8227 = vadd.f32 %v8154, %v8226
  %v8228 = vpop.f32.mrf.mxu0
  %v8229 = vadd.f32 %v8156, %v8228
  %v8230 = vpop.f32.mrf.mxu0
  %v8231 = vadd.f32 %v8158, %v8230
  %v8232 = vpop.f32.mrf.mxu0
  %v8233 = vadd.f32 %v8160, %v8232
  %8234 = vmatprep.mubr.bf16.mxu0 %v7296
  %8235 = vmatmul.mubr.bf16.gmra.mxu0 %v7295
  %v8236 = vpop.f32.mrf.mxu0
  %v8237 = vadd.f32 %v8164, %v8236
  %v8238 = vpop.f32.mrf.mxu0
  %v8239 = vadd.f32 %v8166, %v8238
  %v8240 = vpop.f32.mrf.mxu0
  %v8241 = vadd.f32 %v8168, %v8240
  %v8242 = vpop.f32.mrf.mxu0
  %v8243 = vadd.f32 %v8170, %v8242
  %8244 = vdwg.mxu0
  %v8245 = vadd.f32 %v6925, %v8061
  %v8246 = vadd.f32 %v6926, %v8063
  %v8247 = vadd.f32 %v6927, %v8207
  %v8248 = vadd.f32 %v6928, %v8209
  %v8249 = vadd.f32 %v6929, %v8065
  %v8250 = vadd.f32 %v6930, %v8067
  %v8251 = vadd.f32 %v6931, %v8211
  %v8252 = vadd.f32 %v6932, %v8213
  %v8253 = vadd.f32 %v6933, %v8071
  %v8254 = vadd.f32 %v6934, %v8073
  %v8255 = vadd.f32 %v6935, %v8217
  %v8256 = vadd.f32 %v6936, %v8219
  %v8257 = vadd.f32 %v6937, %v8075
  %v8258 = vadd.f32 %v6938, %v8077
  %v8259 = vadd.f32 %v6939, %v8221
  %v8260 = vadd.f32 %v6940, %v8223
  %v8261 = vadd.f32 %v6941, %v8081
  %v8262 = vadd.f32 %v6942, %v8083
  %v8263 = vadd.f32 %v6943, %v8227
  %v8264 = vadd.f32 %v6944, %v8229
  %v8265 = vadd.f32 %v6945, %v8085
  %v8266 = vadd.f32 %v6946, %v8087
  %v8267 = vadd.f32 %v6947, %v8231
  %v8268 = vadd.f32 %v6948, %v8233
  %v8269 = vadd.f32 %v6949, %v8091
  %v8270 = vadd.f32 %v6950, %v8093
  %v8271 = vadd.f32 %v6951, %v8237
  %v8272 = vadd.f32 %v6952, %v8239
  %v8273 = vadd.f32 %v6953, %v8095
  %v8274 = vadd.f32 %v6954, %v8097
  %v8275 = vadd.f32 %v6955, %v8241
  %v8276 = vadd.f32 %v6956, %v8243
  %8277 = vst [vmem:[#allocation2] sm:$0xff] %v8245
  %8278 = vst [vmem:[#allocation2 + $0x8] sm:$0xff] %v8246
  %8279 = vst [vmem:[#allocation2 + $0x10] sm:$0xff] %v8247
  %8280 = vst [vmem:[#allocation2 + $0x18] sm:$0xff] %v8248
  %8281 = vst [vmem:[#allocation2 + $0x20] sm:$0xff] %v8249
  %8282 = vst [vmem:[#allocation2 + $0x28] sm:$0xff] %v8250
  %8283 = vst [vmem:[#allocation2 + $0x30] sm:$0xff] %v8251
  %8284 = vst [vmem:[#allocation2 + $0x38] sm:$0xff] %v8252
  %8285 = vst [vmem:[#allocation2 + $0x40] sm:$0xff] %v8253
  %8286 = vst [vmem:[#allocation2 + $0x48] sm:$0xff] %v8254
  %8287 = vst [vmem:[#allocation2 + $0x50] sm:$0xff] %v8255
  %8288 = vst [vmem:[#allocation2 + $0x58] sm:$0xff] %v8256
  %8289 = vst [vmem:[#allocation2 + $0x60] sm:$0xff] %v8257
  %8290 = vst [vmem:[#allocation2 + $0x68] sm:$0xff] %v8258
  %8291 = vst [vmem:[#allocation2 + $0x70] sm:$0xff] %v8259
  %8292 = vst [vmem:[#allocation2 + $0x78] sm:$0xff] %v8260
  %8293 = vst [vmem:[#allocation2 + $0x80] sm:$0xff] %v8261
  %8294 = vst [vmem:[#allocation2 + $0x88] sm:$0xff] %v8262
  %8295 = vst [vmem:[#allocation2 + $0x90] sm:$0xff] %v8263
  %8296 = vst [vmem:[#allocation2 + $0x98] sm:$0xff] %v8264
  %8297 = vst [vmem:[#allocation2 + $0xa0] sm:$0xff] %v8265
  %8298 = vst [vmem:[#allocation2 + $0xa8] sm:$0xff] %v8266
  %8299 = vst [vmem:[#allocation2 + $0xb0] sm:$0xff] %v8267
  %8300 = vst [vmem:[#allocation2 + $0xb8] sm:$0xff] %v8268
  %8301 = vst [vmem:[#allocation2 + $0xc0] sm:$0xff] %v8269
  %8302 = vst [vmem:[#allocation2 + $0xc8] sm:$0xff] %v8270
  %8303 = vst [vmem:[#allocation2 + $0xd0] sm:$0xff] %v8271
  %8304 = vst [vmem:[#allocation2 + $0xd8] sm:$0xff] %v8272
  %8305 = vst [vmem:[#allocation2 + $0xe0] sm:$0xff] %v8273
  %8306 = vst [vmem:[#allocation2 + $0xe8] sm:$0xff] %v8274
  %8307 = vst [vmem:[#allocation2 + $0xf0] sm:$0xff] %v8275
  %8308 = vst [vmem:[#allocation2 + $0xf8] sm:$0xff] %v8276
  %v8309 = vld [vmem:[#allocation2] sm:$0xff]
  %v8310 = vld [vmem:[#allocation2 + $0x8] sm:$0xff]
  %v8311 = vld [vmem:[#allocation2 + $0x10] sm:$0xff]
  %v8312 = vld [vmem:[#allocation2 + $0x18] sm:$0xff]
  %v8313 = vld [vmem:[#allocation2 + $0x20] sm:$0xff]
  %v8314 = vld [vmem:[#allocation2 + $0x28] sm:$0xff]
  %v8315 = vld [vmem:[#allocation2 + $0x30] sm:$0xff]
  %v8316 = vld [vmem:[#allocation2 + $0x38] sm:$0xff]
  %v8317 = vld [vmem:[#allocation2 + $0x40] sm:$0xff]
  %v8318 = vld [vmem:[#allocation2 + $0x48] sm:$0xff]
  %v8319 = vld [vmem:[#allocation2 + $0x50] sm:$0xff]
  %v8320 = vld [vmem:[#allocation2 + $0x58] sm:$0xff]
  %v8321 = vld [vmem:[#allocation2 + $0x60] sm:$0xff]
  %v8322 = vld [vmem:[#allocation2 + $0x68] sm:$0xff]
  %v8323 = vld [vmem:[#allocation2 + $0x70] sm:$0xff]
  %v8324 = vld [vmem:[#allocation2 + $0x78] sm:$0xff]
  %v8325 = vld [vmem:[#allocation2 + $0x80] sm:$0xff]
  %v8326 = vld [vmem:[#allocation2 + $0x88] sm:$0xff]
  %v8327 = vld [vmem:[#allocation2 + $0x90] sm:$0xff]
  %v8328 = vld [vmem:[#allocation2 + $0x98] sm:$0xff]
  %v8329 = vld [vmem:[#allocation2 + $0xa0] sm:$0xff]
  %v8330 = vld [vmem:[#allocation2 + $0xa8] sm:$0xff]
  %v8331 = vld [vmem:[#allocation2 + $0xb0] sm:$0xff]
  %v8332 = vld [vmem:[#allocation2 + $0xb8] sm:$0xff]
  %v8333 = vld [vmem:[#allocation2 + $0xc0] sm:$0xff]
  %v8334 = vld [vmem:[#allocation2 + $0xc8] sm:$0xff]
  %v8335 = vld [vmem:[#allocation2 + $0xd0] sm:$0xff]
  %v8336 = vld [vmem:[#allocation2 + $0xd8] sm:$0xff]
  %v8337 = vld [vmem:[#allocation2 + $0xe0] sm:$0xff]
  %v8338 = vld [vmem:[#allocation2 + $0xe8] sm:$0xff]
  %v8339 = vld [vmem:[#allocation2 + $0xf0] sm:$0xff]
  %v8340 = vld [vmem:[#allocation2 + $0xf8] sm:$0xff]
  %vm8341 = vcmask 1041408
  %vm8342 = vcmask 1045508
  %vm8343 = vmor %vm8341, %vm8342
  %v8344 = vrot.slane %v4189, 6
  %v8345 = vrot.slane %v8344, 4
  %v8346 = vrot.slane %v4191, 6
  %v8347 = vsel %vm8343, %v8345, %v8346
  %v8348 = vrot.slane %v4190, 6
  %v8349 = vrot.slane %v8348, 4
  %v8350 = vrot.slane %v4192, 6
  %v8351 = vsel %vm8343, %v8349, %v8350
  %v8352 = vrot.slane %v4193, 6
  %v8353 = vrot.slane %v8352, 4
  %v8354 = vrot.slane %v4195, 6
  %v8355 = vsel %vm8343, %v8353, %v8354
  %v8356 = vrot.slane %v4194, 6
  %v8357 = vrot.slane %v8356, 4
  %v8358 = vrot.slane %v4196, 6
  %v8359 = vsel %vm8343, %v8357, %v8358
  %v8360 = vrot.slane %v4197, 6
  %v8361 = vrot.slane %v8360, 4
  %v8362 = vrot.slane %v4199, 6
  %v8363 = vsel %vm8343, %v8361, %v8362
  %v8364 = vrot.slane %v4198, 6
  %v8365 = vrot.slane %v8364, 4
  %v8366 = vrot.slane %v4200, 6
  %v8367 = vsel %vm8343, %v8365, %v8366
  %v8368 = vrot.slane %v4201, 6
  %v8369 = vrot.slane %v8368, 4
  %v8370 = vrot.slane %v4203, 6
  %v8371 = vsel %vm8343, %v8369, %v8370
  %v8372 = vrot.slane %v4202, 6
  %v8373 = vrot.slane %v8372, 4
  %v8374 = vrot.slane %v4204, 6
  %v8375 = vsel %vm8343, %v8373, %v8374
  %v8376 = vrot.slane %v4205, 6
  %v8377 = vrot.slane %v8376, 4
  %v8378 = vrot.slane %v4207, 6
  %v8379 = vsel %vm8343, %v8377, %v8378
  %v8380 = vrot.slane %v4206, 6
  %v8381 = vrot.slane %v8380, 4
  %v8382 = vrot.slane %v4208, 6
  %v8383 = vsel %vm8343, %v8381, %v8382
  %v8384 = vrot.slane %v4209, 6
  %v8385 = vrot.slane %v8384, 4
  %v8386 = vrot.slane %v4211, 6
  %v8387 = vsel %vm8343, %v8385, %v8386
  %v8388 = vrot.slane %v4210, 6
  %v8389 = vrot.slane %v8388, 4
  %v8390 = vrot.slane %v4212, 6
  %v8391 = vsel %vm8343, %v8389, %v8390
  %v8392 = vrot.slane %v4213, 6
  %v8393 = vrot.slane %v8392, 4
  %v8394 = vrot.slane %v4215, 6
  %v8395 = vsel %vm8343, %v8393, %v8394
  %v8396 = vrot.slane %v4214, 6
  %v8397 = vrot.slane %v8396, 4
  %v8398 = vrot.slane %v4216, 6
  %v8399 = vsel %vm8343, %v8397, %v8398
  %v8400 = vrot.slane %v4217, 6
  %v8401 = vrot.slane %v8400, 4
  %v8402 = vrot.slane %v4219, 6
  %v8403 = vsel %vm8343, %v8401, %v8402
  %v8404 = vrot.slane %v4218, 6
  %v8405 = vrot.slane %v8404, 4
  %v8406 = vrot.slane %v4220, 6
  %v8407 = vsel %vm8343, %v8405, %v8406
  %s8408 = scalar_lea.vmem %s3, 4096
  %v8409 = vld [vmem:[%s8408] sm:$0xff]
  %v8410 = vld [vmem:[%s8408 + $0x8] sm:$0xff]
  %v8411 = vld [vmem:[%s8408 + $0x10] sm:$0xff]
  %v8412 = vld [vmem:[%s8408 + $0x18] sm:$0xff]
  %v8413 = vld [vmem:[%s8408 + $0x20] sm:$0xff]
  %v8414 = vld [vmem:[%s8408 + $0x28] sm:$0xff]
  %v8415 = vld [vmem:[%s8408 + $0x30] sm:$0xff]
  %v8416 = vld [vmem:[%s8408 + $0x38] sm:$0xff]
  %v8417 = vld [vmem:[%s8408 + $0x40] sm:$0xff]
  %v8418 = vld [vmem:[%s8408 + $0x48] sm:$0xff]
  %v8419 = vld [vmem:[%s8408 + $0x50] sm:$0xff]
  %v8420 = vld [vmem:[%s8408 + $0x58] sm:$0xff]
  %v8421 = vld [vmem:[%s8408 + $0x60] sm:$0xff]
  %v8422 = vld [vmem:[%s8408 + $0x68] sm:$0xff]
  %v8423 = vld [vmem:[%s8408 + $0x70] sm:$0xff]
  %v8424 = vld [vmem:[%s8408 + $0x78] sm:$0xff]
  %v8425 = vld [vmem:[%s8408 + $0x80] sm:$0xff]
  %v8426 = vld [vmem:[%s8408 + $0x88] sm:$0xff]
  %v8427 = vld [vmem:[%s8408 + $0x90] sm:$0xff]
  %v8428 = vld [vmem:[%s8408 + $0x98] sm:$0xff]
  %v8429 = vld [vmem:[%s8408 + $0xa0] sm:$0xff]
  %v8430 = vld [vmem:[%s8408 + $0xa8] sm:$0xff]
  %v8431 = vld [vmem:[%s8408 + $0xb0] sm:$0xff]
  %v8432 = vld [vmem:[%s8408 + $0xb8] sm:$0xff]
  %v8433 = vld [vmem:[%s8408 + $0xc0] sm:$0xff]
  %v8434 = vld [vmem:[%s8408 + $0xc8] sm:$0xff]
  %v8435 = vld [vmem:[%s8408 + $0xd0] sm:$0xff]
  %v8436 = vld [vmem:[%s8408 + $0xd8] sm:$0xff]
  %v8437 = vld [vmem:[%s8408 + $0xe0] sm:$0xff]
  %v8438 = vld [vmem:[%s8408 + $0xe8] sm:$0xff]
  %v8439 = vld [vmem:[%s8408 + $0xf0] sm:$0xff]
  %v8440 = vld [vmem:[%s8408 + $0xf8] sm:$0xff]
  %v8441 = vld [vmem:[%s8408 + $0x100] sm:$0xff]
  %v8442 = vld [vmem:[%s8408 + $0x108] sm:$0xff]
  %v8443 = vld [vmem:[%s8408 + $0x110] sm:$0xff]
  %v8444 = vld [vmem:[%s8408 + $0x118] sm:$0xff]
  %v8445 = vld [vmem:[%s8408 + $0x120] sm:$0xff]
  %v8446 = vld [vmem:[%s8408 + $0x128] sm:$0xff]
  %v8447 = vld [vmem:[%s8408 + $0x130] sm:$0xff]
  %v8448 = vld [vmem:[%s8408 + $0x138] sm:$0xff]
  %v8449 = vld [vmem:[%s8408 + $0x140] sm:$0xff]
  %v8450 = vld [vmem:[%s8408 + $0x148] sm:$0xff]
  %v8451 = vld [vmem:[%s8408 + $0x150] sm:$0xff]
  %v8452 = vld [vmem:[%s8408 + $0x158] sm:$0xff]
  %v8453 = vld [vmem:[%s8408 + $0x160] sm:$0xff]
  %v8454 = vld [vmem:[%s8408 + $0x168] sm:$0xff]
  %v8455 = vld [vmem:[%s8408 + $0x170] sm:$0xff]
  %v8456 = vld [vmem:[%s8408 + $0x178] sm:$0xff]
  %v8457 = vld [vmem:[%s8408 + $0x180] sm:$0xff]
  %v8458 = vld [vmem:[%s8408 + $0x188] sm:$0xff]
  %v8459 = vld [vmem:[%s8408 + $0x190] sm:$0xff]
  %v8460 = vld [vmem:[%s8408 + $0x198] sm:$0xff]
  %v8461 = vld [vmem:[%s8408 + $0x1a0] sm:$0xff]
  %v8462 = vld [vmem:[%s8408 + $0x1a8] sm:$0xff]
  %v8463 = vld [vmem:[%s8408 + $0x1b0] sm:$0xff]
  %v8464 = vld [vmem:[%s8408 + $0x1b8] sm:$0xff]
  %v8465 = vld [vmem:[%s8408 + $0x1c0] sm:$0xff]
  %v8466 = vld [vmem:[%s8408 + $0x1c8] sm:$0xff]
  %v8467 = vld [vmem:[%s8408 + $0x1d0] sm:$0xff]
  %v8468 = vld [vmem:[%s8408 + $0x1d8] sm:$0xff]
  %v8469 = vld [vmem:[%s8408 + $0x1e0] sm:$0xff]
  %v8470 = vld [vmem:[%s8408 + $0x1e8] sm:$0xff]
  %v8471 = vld [vmem:[%s8408 + $0x1f0] sm:$0xff]
  %v8472 = vld [vmem:[%s8408 + $0x1f8] sm:$0xff]
  %v8473 = vld [vmem:[%s8408 + $0x200] sm:$0xff]
  %v8474 = vld [vmem:[%s8408 + $0x208] sm:$0xff]
  %v8475 = vld [vmem:[%s8408 + $0x210] sm:$0xff]
  %v8476 = vld [vmem:[%s8408 + $0x218] sm:$0xff]
  %v8477 = vld [vmem:[%s8408 + $0x220] sm:$0xff]
  %v8478 = vld [vmem:[%s8408 + $0x228] sm:$0xff]
  %v8479 = vld [vmem:[%s8408 + $0x230] sm:$0xff]
  %v8480 = vld [vmem:[%s8408 + $0x238] sm:$0xff]
  %v8481 = vld [vmem:[%s8408 + $0x240] sm:$0xff]
  %v8482 = vld [vmem:[%s8408 + $0x248] sm:$0xff]
  %v8483 = vld [vmem:[%s8408 + $0x250] sm:$0xff]
  %v8484 = vld [vmem:[%s8408 + $0x258] sm:$0xff]
  %v8485 = vld [vmem:[%s8408 + $0x260] sm:$0xff]
  %v8486 = vld [vmem:[%s8408 + $0x268] sm:$0xff]
  %v8487 = vld [vmem:[%s8408 + $0x270] sm:$0xff]
  %v8488 = vld [vmem:[%s8408 + $0x278] sm:$0xff]
  %v8489 = vld [vmem:[%s8408 + $0x280] sm:$0xff]
  %v8490 = vld [vmem:[%s8408 + $0x288] sm:$0xff]
  %v8491 = vld [vmem:[%s8408 + $0x290] sm:$0xff]
  %v8492 = vld [vmem:[%s8408 + $0x298] sm:$0xff]
  %v8493 = vld [vmem:[%s8408 + $0x2a0] sm:$0xff]
  %v8494 = vld [vmem:[%s8408 + $0x2a8] sm:$0xff]
  %v8495 = vld [vmem:[%s8408 + $0x2b0] sm:$0xff]
  %v8496 = vld [vmem:[%s8408 + $0x2b8] sm:$0xff]
  %v8497 = vld [vmem:[%s8408 + $0x2c0] sm:$0xff]
  %v8498 = vld [vmem:[%s8408 + $0x2c8] sm:$0xff]
  %v8499 = vld [vmem:[%s8408 + $0x2d0] sm:$0xff]
  %v8500 = vld [vmem:[%s8408 + $0x2d8] sm:$0xff]
  %v8501 = vld [vmem:[%s8408 + $0x2e0] sm:$0xff]
  %v8502 = vld [vmem:[%s8408 + $0x2e8] sm:$0xff]
  %v8503 = vld [vmem:[%s8408 + $0x2f0] sm:$0xff]
  %v8504 = vld [vmem:[%s8408 + $0x2f8] sm:$0xff]
  %v8505 = vld [vmem:[%s8408 + $0x300] sm:$0xff]
  %v8506 = vld [vmem:[%s8408 + $0x308] sm:$0xff]
  %v8507 = vld [vmem:[%s8408 + $0x310] sm:$0xff]
  %v8508 = vld [vmem:[%s8408 + $0x318] sm:$0xff]
  %v8509 = vld [vmem:[%s8408 + $0x320] sm:$0xff]
  %v8510 = vld [vmem:[%s8408 + $0x328] sm:$0xff]
  %v8511 = vld [vmem:[%s8408 + $0x330] sm:$0xff]
  %v8512 = vld [vmem:[%s8408 + $0x338] sm:$0xff]
  %v8513 = vld [vmem:[%s8408 + $0x340] sm:$0xff]
  %v8514 = vld [vmem:[%s8408 + $0x348] sm:$0xff]
  %v8515 = vld [vmem:[%s8408 + $0x350] sm:$0xff]
  %v8516 = vld [vmem:[%s8408 + $0x358] sm:$0xff]
  %v8517 = vld [vmem:[%s8408 + $0x360] sm:$0xff]
  %v8518 = vld [vmem:[%s8408 + $0x368] sm:$0xff]
  %v8519 = vld [vmem:[%s8408 + $0x370] sm:$0xff]
  %v8520 = vld [vmem:[%s8408 + $0x378] sm:$0xff]
  %v8521 = vld [vmem:[%s8408 + $0x380] sm:$0xff]
  %v8522 = vld [vmem:[%s8408 + $0x388] sm:$0xff]
  %v8523 = vld [vmem:[%s8408 + $0x390] sm:$0xff]
  %v8524 = vld [vmem:[%s8408 + $0x398] sm:$0xff]
  %v8525 = vld [vmem:[%s8408 + $0x3a0] sm:$0xff]
  %v8526 = vld [vmem:[%s8408 + $0x3a8] sm:$0xff]
  %v8527 = vld [vmem:[%s8408 + $0x3b0] sm:$0xff]
  %v8528 = vld [vmem:[%s8408 + $0x3b8] sm:$0xff]
  %v8529 = vld [vmem:[%s8408 + $0x3c0] sm:$0xff]
  %v8530 = vld [vmem:[%s8408 + $0x3c8] sm:$0xff]
  %v8531 = vld [vmem:[%s8408 + $0x3d0] sm:$0xff]
  %v8532 = vld [vmem:[%s8408 + $0x3d8] sm:$0xff]
  %v8533 = vld [vmem:[%s8408 + $0x3e0] sm:$0xff]
  %v8534 = vld [vmem:[%s8408 + $0x3e8] sm:$0xff]
  %v8535 = vld [vmem:[%s8408 + $0x3f0] sm:$0xff]
  %v8536 = vld [vmem:[%s8408 + $0x3f8] sm:$0xff]
  %v8537 = vunpack.c.l.b16 %v8347
  %v8538 = vunpack.c.h.b16 %v8347
  %v8539 = vunpack.c.l.b16 %v8351
  %v8540 = vunpack.c.h.b16 %v8351
  %v8541 = vunpack.c.l.b16 %v8355
  %v8542 = vunpack.c.h.b16 %v8355
  %v8543 = vunpack.c.l.b16 %v8359
  %v8544 = vunpack.c.h.b16 %v8359
  %v8545 = vunpack.c.l.b16 %v8363
  %v8546 = vunpack.c.h.b16 %v8363
  %v8547 = vunpack.c.l.b16 %v8367
  %v8548 = vunpack.c.h.b16 %v8367
  %v8549 = vunpack.c.l.b16 %v8371
  %v8550 = vunpack.c.h.b16 %v8371
  %v8551 = vunpack.c.l.b16 %v8375
  %v8552 = vunpack.c.h.b16 %v8375
  %v8553 = vunpack.c.l.b16 %v8379
  %v8554 = vunpack.c.h.b16 %v8379
  %v8555 = vunpack.c.l.b16 %v8383
  %v8556 = vunpack.c.h.b16 %v8383
  %v8557 = vunpack.c.l.b16 %v8387
  %v8558 = vunpack.c.h.b16 %v8387
  %v8559 = vunpack.c.l.b16 %v8391
  %v8560 = vunpack.c.h.b16 %v8391
  %v8561 = vunpack.c.l.b16 %v8395
  %v8562 = vunpack.c.h.b16 %v8395
  %v8563 = vunpack.c.l.b16 %v8399
  %v8564 = vunpack.c.h.b16 %v8399
  %v8565 = vunpack.c.l.b16 %v8403
  %v8566 = vunpack.c.h.b16 %v8403
  %v8567 = vunpack.c.l.b16 %v8407
  %v8568 = vunpack.c.h.b16 %v8407
  %v8569 = vpack.c.b16 %v8541, %v8537
  %v8570 = vpack.c.b16 %v8542, %v8538
  %v8571 = vpack.c.b16 %v8543, %v8539
  %v8572 = vpack.c.b16 %v8544, %v8540
  %v8573 = vpack.c.b16 %v8549, %v8545
  %v8574 = vpack.c.b16 %v8550, %v8546
  %v8575 = vpack.c.b16 %v8551, %v8547
  %v8576 = vpack.c.b16 %v8552, %v8548
  %v8577 = vpack.c.b16 %v8557, %v8553
  %v8578 = vpack.c.b16 %v8558, %v8554
  %v8579 = vpack.c.b16 %v8559, %v8555
  %v8580 = vpack.c.b16 %v8560, %v8556
  %v8581 = vpack.c.b16 %v8565, %v8561
  %v8582 = vpack.c.b16 %v8566, %v8562
  %v8583 = vpack.c.b16 %v8567, %v8563
  %v8584 = vpack.c.b16 %v8568, %v8564
  %v8729 = vunpack.c.l.b16 %v8409
  %v8730 = vunpack.c.h.b16 %v8409
  %v8731 = vunpack.c.l.b16 %v8410
  %v8732 = vunpack.c.h.b16 %v8410
  %v8733 = vunpack.c.l.b16 %v8411
  %v8734 = vunpack.c.h.b16 %v8411
  %v8735 = vunpack.c.l.b16 %v8412
  %v8736 = vunpack.c.h.b16 %v8412
  %v8737 = vunpack.c.l.b16 %v8413
  %v8738 = vunpack.c.h.b16 %v8413
  %v8739 = vunpack.c.l.b16 %v8414
  %v8740 = vunpack.c.h.b16 %v8414
  %v8741 = vunpack.c.l.b16 %v8415
  %v8742 = vunpack.c.h.b16 %v8415
  %v8743 = vunpack.c.l.b16 %v8416
  %v8744 = vunpack.c.h.b16 %v8416
  %v8745 = vunpack.c.l.b16 %v8417
  %v8746 = vunpack.c.h.b16 %v8417
  %v8747 = vunpack.c.l.b16 %v8418
  %v8748 = vunpack.c.h.b16 %v8418
  %v8749 = vunpack.c.l.b16 %v8419
  %v8750 = vunpack.c.h.b16 %v8419
  %v8751 = vunpack.c.l.b16 %v8420
  %v8752 = vunpack.c.h.b16 %v8420
  %v8753 = vunpack.c.l.b16 %v8421
  %v8754 = vunpack.c.h.b16 %v8421
  %v8755 = vunpack.c.l.b16 %v8422
  %v8756 = vunpack.c.h.b16 %v8422
  %v8757 = vunpack.c.l.b16 %v8423
  %v8758 = vunpack.c.h.b16 %v8423
  %v8759 = vunpack.c.l.b16 %v8424
  %v8760 = vunpack.c.h.b16 %v8424
  %v8761 = vunpack.c.l.b16 %v8425
  %v8762 = vunpack.c.h.b16 %v8425
  %v8763 = vunpack.c.l.b16 %v8426
  %v8764 = vunpack.c.h.b16 %v8426
  %v8765 = vunpack.c.l.b16 %v8427
  %v8766 = vunpack.c.h.b16 %v8427
  %v8767 = vunpack.c.l.b16 %v8428
  %v8768 = vunpack.c.h.b16 %v8428
  %v8769 = vunpack.c.l.b16 %v8429
  %v8770 = vunpack.c.h.b16 %v8429
  %v8771 = vunpack.c.l.b16 %v8430
  %v8772 = vunpack.c.h.b16 %v8430
  %v8773 = vunpack.c.l.b16 %v8431
  %v8774 = vunpack.c.h.b16 %v8431
  %v8775 = vunpack.c.l.b16 %v8432
  %v8776 = vunpack.c.h.b16 %v8432
  %v8777 = vunpack.c.l.b16 %v8433
  %v8778 = vunpack.c.h.b16 %v8433
  %v8779 = vunpack.c.l.b16 %v8434
  %v8780 = vunpack.c.h.b16 %v8434
  %v8781 = vunpack.c.l.b16 %v8435
  %v8782 = vunpack.c.h.b16 %v8435
  %v8783 = vunpack.c.l.b16 %v8436
  %v8784 = vunpack.c.h.b16 %v8436
  %v8785 = vunpack.c.l.b16 %v8437
  %v8786 = vunpack.c.h.b16 %v8437
  %v8787 = vunpack.c.l.b16 %v8438
  %v8788 = vunpack.c.h.b16 %v8438
  %v8789 = vunpack.c.l.b16 %v8439
  %v8790 = vunpack.c.h.b16 %v8439
  %v8791 = vunpack.c.l.b16 %v8440
  %v8792 = vunpack.c.h.b16 %v8440
  %v8793 = vunpack.c.l.b16 %v8441
  %v8794 = vunpack.c.h.b16 %v8441
  %v8795 = vunpack.c.l.b16 %v8442
  %v8796 = vunpack.c.h.b16 %v8442
  %v8797 = vunpack.c.l.b16 %v8443
  %v8798 = vunpack.c.h.b16 %v8443
  %v8799 = vunpack.c.l.b16 %v8444
  %v8800 = vunpack.c.h.b16 %v8444
  %v8801 = vunpack.c.l.b16 %v8445
  %v8802 = vunpack.c.h.b16 %v8445
  %v8803 = vunpack.c.l.b16 %v8446
  %v8804 = vunpack.c.h.b16 %v8446
  %v8805 = vunpack.c.l.b16 %v8447
  %v8806 = vunpack.c.h.b16 %v8447
  %v8807 = vunpack.c.l.b16 %v8448
  %v8808 = vunpack.c.h.b16 %v8448
  %v8809 = vunpack.c.l.b16 %v8449
  %v8810 = vunpack.c.h.b16 %v8449
  %v8811 = vunpack.c.l.b16 %v8450
  %v8812 = vunpack.c.h.b16 %v8450
  %v8813 = vunpack.c.l.b16 %v8451
  %v8814 = vunpack.c.h.b16 %v8451
  %v8815 = vunpack.c.l.b16 %v8452
  %v8816 = vunpack.c.h.b16 %v8452
  %v8817 = vunpack.c.l.b16 %v8453
  %v8818 = vunpack.c.h.b16 %v8453
  %v8819 = vunpack.c.l.b16 %v8454
  %v8820 = vunpack.c.h.b16 %v8454
  %v8821 = vunpack.c.l.b16 %v8455
  %v8822 = vunpack.c.h.b16 %v8455
  %v8823 = vunpack.c.l.b16 %v8456
  %v8824 = vunpack.c.h.b16 %v8456
  %v8825 = vunpack.c.l.b16 %v8457
  %v8826 = vunpack.c.h.b16 %v8457
  %v8827 = vunpack.c.l.b16 %v8458
  %v8828 = vunpack.c.h.b16 %v8458
  %v8829 = vunpack.c.l.b16 %v8459
  %v8830 = vunpack.c.h.b16 %v8459
  %v8831 = vunpack.c.l.b16 %v8460
  %v8832 = vunpack.c.h.b16 %v8460
  %v8833 = vunpack.c.l.b16 %v8461
  %v8834 = vunpack.c.h.b16 %v8461
  %v8835 = vunpack.c.l.b16 %v8462
  %v8836 = vunpack.c.h.b16 %v8462
  %v8837 = vunpack.c.l.b16 %v8463
  %v8838 = vunpack.c.h.b16 %v8463
  %v8839 = vunpack.c.l.b16 %v8464
  %v8840 = vunpack.c.h.b16 %v8464
  %v8841 = vunpack.c.l.b16 %v8465
  %v8842 = vunpack.c.h.b16 %v8465
  %v8843 = vunpack.c.l.b16 %v8466
  %v8844 = vunpack.c.h.b16 %v8466
  %v8845 = vunpack.c.l.b16 %v8467
  %v8846 = vunpack.c.h.b16 %v8467
  %v8847 = vunpack.c.l.b16 %v8468
  %v8848 = vunpack.c.h.b16 %v8468
  %v8849 = vunpack.c.l.b16 %v8469
  %v8850 = vunpack.c.h.b16 %v8469
  %v8851 = vunpack.c.l.b16 %v8470
  %v8852 = vunpack.c.h.b16 %v8470
  %v8853 = vunpack.c.l.b16 %v8471
  %v8854 = vunpack.c.h.b16 %v8471
  %v8855 = vunpack.c.l.b16 %v8472
  %v8856 = vunpack.c.h.b16 %v8472
  %v8857 = vunpack.c.l.b16 %v8473
  %v8858 = vunpack.c.h.b16 %v8473
  %v8859 = vunpack.c.l.b16 %v8474
  %v8860 = vunpack.c.h.b16 %v8474
  %v8861 = vunpack.c.l.b16 %v8475
  %v8862 = vunpack.c.h.b16 %v8475
  %v8863 = vunpack.c.l.b16 %v8476
  %v8864 = vunpack.c.h.b16 %v8476
  %v8865 = vunpack.c.l.b16 %v8477
  %v8866 = vunpack.c.h.b16 %v8477
  %v8867 = vunpack.c.l.b16 %v8478
  %v8868 = vunpack.c.h.b16 %v8478
  %v8869 = vunpack.c.l.b16 %v8479
  %v8870 = vunpack.c.h.b16 %v8479
  %v8871 = vunpack.c.l.b16 %v8480
  %v8872 = vunpack.c.h.b16 %v8480
  %v8873 = vunpack.c.l.b16 %v8481
  %v8874 = vunpack.c.h.b16 %v8481
  %v8875 = vunpack.c.l.b16 %v8482
  %v8876 = vunpack.c.h.b16 %v8482
  %v8877 = vunpack.c.l.b16 %v8483
  %v8878 = vunpack.c.h.b16 %v8483
  %v8879 = vunpack.c.l.b16 %v8484
  %v8880 = vunpack.c.h.b16 %v8484
  %v8881 = vunpack.c.l.b16 %v8485
  %v8882 = vunpack.c.h.b16 %v8485
  %v8883 = vunpack.c.l.b16 %v8486
  %v8884 = vunpack.c.h.b16 %v8486
  %v8885 = vunpack.c.l.b16 %v8487
  %v8886 = vunpack.c.h.b16 %v8487
  %v8887 = vunpack.c.l.b16 %v8488
  %v8888 = vunpack.c.h.b16 %v8488
  %v8889 = vunpack.c.l.b16 %v8489
  %v8890 = vunpack.c.h.b16 %v8489
  %v8891 = vunpack.c.l.b16 %v8490
  %v8892 = vunpack.c.h.b16 %v8490
  %v8893 = vunpack.c.l.b16 %v8491
  %v8894 = vunpack.c.h.b16 %v8491
  %v8895 = vunpack.c.l.b16 %v8492
  %v8896 = vunpack.c.h.b16 %v8492
  %v8897 = vunpack.c.l.b16 %v8493
  %v8898 = vunpack.c.h.b16 %v8493
  %v8899 = vunpack.c.l.b16 %v8494
  %v8900 = vunpack.c.h.b16 %v8494
  %v8901 = vunpack.c.l.b16 %v8495
  %v8902 = vunpack.c.h.b16 %v8495
  %v8903 = vunpack.c.l.b16 %v8496
  %v8904 = vunpack.c.h.b16 %v8496
  %v8905 = vunpack.c.l.b16 %v8497
  %v8906 = vunpack.c.h.b16 %v8497
  %v8907 = vunpack.c.l.b16 %v8498
  %v8908 = vunpack.c.h.b16 %v8498
  %v8909 = vunpack.c.l.b16 %v8499
  %v8910 = vunpack.c.h.b16 %v8499
  %v8911 = vunpack.c.l.b16 %v8500
  %v8912 = vunpack.c.h.b16 %v8500
  %v8913 = vunpack.c.l.b16 %v8501
  %v8914 = vunpack.c.h.b16 %v8501
  %v8915 = vunpack.c.l.b16 %v8502
  %v8916 = vunpack.c.h.b16 %v8502
  %v8917 = vunpack.c.l.b16 %v8503
  %v8918 = vunpack.c.h.b16 %v8503
  %v8919 = vunpack.c.l.b16 %v8504
  %v8920 = vunpack.c.h.b16 %v8504
  %v8921 = vunpack.c.l.b16 %v8505
  %v8922 = vunpack.c.h.b16 %v8505
  %v8923 = vunpack.c.l.b16 %v8506
  %v8924 = vunpack.c.h.b16 %v8506
  %v8925 = vunpack.c.l.b16 %v8507
  %v8926 = vunpack.c.h.b16 %v8507
  %v8927 = vunpack.c.l.b16 %v8508
  %v8928 = vunpack.c.h.b16 %v8508
  %v8929 = vunpack.c.l.b16 %v8509
  %v8930 = vunpack.c.h.b16 %v8509
  %v8931 = vunpack.c.l.b16 %v8510
  %v8932 = vunpack.c.h.b16 %v8510
  %v8933 = vunpack.c.l.b16 %v8511
  %v8934 = vunpack.c.h.b16 %v8511
  %v8935 = vunpack.c.l.b16 %v8512
  %v8936 = vunpack.c.h.b16 %v8512
  %v8937 = vunpack.c.l.b16 %v8513
  %v8938 = vunpack.c.h.b16 %v8513
  %v8939 = vunpack.c.l.b16 %v8514
  %v8940 = vunpack.c.h.b16 %v8514
  %v8941 = vunpack.c.l.b16 %v8515
  %v8942 = vunpack.c.h.b16 %v8515
  %v8943 = vunpack.c.l.b16 %v8516
  %v8944 = vunpack.c.h.b16 %v8516
  %v8945 = vunpack.c.l.b16 %v8517
  %v8946 = vunpack.c.h.b16 %v8517
  %v8947 = vunpack.c.l.b16 %v8518
  %v8948 = vunpack.c.h.b16 %v8518
  %v8949 = vunpack.c.l.b16 %v8519
  %v8950 = vunpack.c.h.b16 %v8519
  %v8951 = vunpack.c.l.b16 %v8520
  %v8952 = vunpack.c.h.b16 %v8520
  %v8953 = vunpack.c.l.b16 %v8521
  %v8954 = vunpack.c.h.b16 %v8521
  %v8955 = vunpack.c.l.b16 %v8522
  %v8956 = vunpack.c.h.b16 %v8522
  %v8957 = vunpack.c.l.b16 %v8523
  %v8958 = vunpack.c.h.b16 %v8523
  %v8959 = vunpack.c.l.b16 %v8524
  %v8960 = vunpack.c.h.b16 %v8524
  %v8961 = vunpack.c.l.b16 %v8525
  %v8962 = vunpack.c.h.b16 %v8525
  %v8963 = vunpack.c.l.b16 %v8526
  %v8964 = vunpack.c.h.b16 %v8526
  %v8965 = vunpack.c.l.b16 %v8527
  %v8966 = vunpack.c.h.b16 %v8527
  %v8967 = vunpack.c.l.b16 %v8528
  %v8968 = vunpack.c.h.b16 %v8528
  %v8969 = vunpack.c.l.b16 %v8529
  %v8970 = vunpack.c.h.b16 %v8529
  %v8971 = vunpack.c.l.b16 %v8530
  %v8972 = vunpack.c.h.b16 %v8530
  %v8973 = vunpack.c.l.b16 %v8531
  %v8974 = vunpack.c.h.b16 %v8531
  %v8975 = vunpack.c.l.b16 %v8532
  %v8976 = vunpack.c.h.b16 %v8532
  %v8977 = vunpack.c.l.b16 %v8533
  %v8978 = vunpack.c.h.b16 %v8533
  %v8979 = vunpack.c.l.b16 %v8534
  %v8980 = vunpack.c.h.b16 %v8534
  %v8981 = vunpack.c.l.b16 %v8535
  %v8982 = vunpack.c.h.b16 %v8535
  %v8983 = vunpack.c.l.b16 %v8536
  %v8984 = vunpack.c.h.b16 %v8536
  %v8985 = vpack.c.b16 %v8733, %v8729
  %v8986 = vpack.c.b16 %v8734, %v8730
  %v8987 = vpack.c.b16 %v8735, %v8731
  %v8988 = vpack.c.b16 %v8736, %v8732
  %v8989 = vpack.c.b16 %v8741, %v8737
  %v8990 = vpack.c.b16 %v8742, %v8738
  %v8991 = vpack.c.b16 %v8743, %v8739
  %v8992 = vpack.c.b16 %v8744, %v8740
  %v8993 = vpack.c.b16 %v8749, %v8745
  %v8994 = vpack.c.b16 %v8750, %v8746
  %v8995 = vpack.c.b16 %v8751, %v8747
  %v8996 = vpack.c.b16 %v8752, %v8748
  %v8997 = vpack.c.b16 %v8757, %v8753
  %v8998 = vpack.c.b16 %v8758, %v8754
  %v8999 = vpack.c.b16 %v8759, %v8755
  %v9000 = vpack.c.b16 %v8760, %v8756
  %v9001 = vpack.c.b16 %v8765, %v8761
  %v9002 = vpack.c.b16 %v8766, %v8762
  %v9003 = vpack.c.b16 %v8767, %v8763
  %v9004 = vpack.c.b16 %v8768, %v8764
  %v9005 = vpack.c.b16 %v8773, %v8769
  %v9006 = vpack.c.b16 %v8774, %v8770
  %v9007 = vpack.c.b16 %v8775, %v8771
  %v9008 = vpack.c.b16 %v8776, %v8772
  %v9009 = vpack.c.b16 %v8781, %v8777
  %v9010 = vpack.c.b16 %v8782, %v8778
  %v9011 = vpack.c.b16 %v8783, %v8779
  %v9012 = vpack.c.b16 %v8784, %v8780
  %v9013 = vpack.c.b16 %v8789, %v8785
  %v9014 = vpack.c.b16 %v8790, %v8786
  %v9015 = vpack.c.b16 %v8791, %v8787
  %v9016 = vpack.c.b16 %v8792, %v8788
  %v9017 = vpack.c.b16 %v8797, %v8793
  %v9018 = vpack.c.b16 %v8798, %v8794
  %v9019 = vpack.c.b16 %v8799, %v8795
  %v9020 = vpack.c.b16 %v8800, %v8796
  %v9021 = vpack.c.b16 %v8805, %v8801
  %v9022 = vpack.c.b16 %v8806, %v8802
  %v9023 = vpack.c.b16 %v8807, %v8803
  %v9024 = vpack.c.b16 %v8808, %v8804
  %v9025 = vpack.c.b16 %v8813, %v8809
  %v9026 = vpack.c.b16 %v8814, %v8810
  %v9027 = vpack.c.b16 %v8815, %v8811
  %v9028 = vpack.c.b16 %v8816, %v8812
  %v9029 = vpack.c.b16 %v8821, %v8817
  %v9030 = vpack.c.b16 %v8822, %v8818
  %v9031 = vpack.c.b16 %v8823, %v8819
  %v9032 = vpack.c.b16 %v8824, %v8820
  %v9033 = vpack.c.b16 %v8829, %v8825
  %v9034 = vpack.c.b16 %v8830, %v8826
  %v9035 = vpack.c.b16 %v8831, %v8827
  %v9036 = vpack.c.b16 %v8832, %v8828
  %v9037 = vpack.c.b16 %v8837, %v8833
  %v9038 = vpack.c.b16 %v8838, %v8834
  %v9039 = vpack.c.b16 %v8839, %v8835
  %v9040 = vpack.c.b16 %v8840, %v8836
  %v9041 = vpack.c.b16 %v8845, %v8841
  %v9042 = vpack.c.b16 %v8846, %v8842
  %v9043 = vpack.c.b16 %v8847, %v8843
  %v9044 = vpack.c.b16 %v8848, %v8844
  %v9045 = vpack.c.b16 %v8853, %v8849
  %v9046 = vpack.c.b16 %v8854, %v8850
  %v9047 = vpack.c.b16 %v8855, %v8851
  %v9048 = vpack.c.b16 %v8856, %v8852
  %v9049 = vpack.c.b16 %v8861, %v8857
  %v9050 = vpack.c.b16 %v8862, %v8858
  %v9051 = vpack.c.b16 %v8863, %v8859
  %v9052 = vpack.c.b16 %v8864, %v8860
  %v9053 = vpack.c.b16 %v8869, %v8865
  %v9054 = vpack.c.b16 %v8870, %v8866
  %v9055 = vpack.c.b16 %v8871, %v8867
  %v9056 = vpack.c.b16 %v8872, %v8868
  %v9057 = vpack.c.b16 %v8877, %v8873
  %v9058 = vpack.c.b16 %v8878, %v8874
  %v9059 = vpack.c.b16 %v8879, %v8875
  %v9060 = vpack.c.b16 %v8880, %v8876
  %v9061 = vpack.c.b16 %v8885, %v8881
  %v9062 = vpack.c.b16 %v8886, %v8882
  %v9063 = vpack.c.b16 %v8887, %v8883
  %v9064 = vpack.c.b16 %v8888, %v8884
  %v9065 = vpack.c.b16 %v8893, %v8889
  %v9066 = vpack.c.b16 %v8894, %v8890
  %v9067 = vpack.c.b16 %v8895, %v8891
  %v9068 = vpack.c.b16 %v8896, %v8892
  %v9069 = vpack.c.b16 %v8901, %v8897
  %v9070 = vpack.c.b16 %v8902, %v8898
  %v9071 = vpack.c.b16 %v8903, %v8899
  %v9072 = vpack.c.b16 %v8904, %v8900
  %v9073 = vpack.c.b16 %v8909, %v8905
  %v9074 = vpack.c.b16 %v8910, %v8906
  %v9075 = vpack.c.b16 %v8911, %v8907
  %v9076 = vpack.c.b16 %v8912, %v8908
  %v9077 = vpack.c.b16 %v8917, %v8913
  %v9078 = vpack.c.b16 %v8918, %v8914
  %v9079 = vpack.c.b16 %v8919, %v8915
  %v9080 = vpack.c.b16 %v8920, %v8916
  %v9081 = vpack.c.b16 %v8925, %v8921
  %v9082 = vpack.c.b16 %v8926, %v8922
  %v9083 = vpack.c.b16 %v8927, %v8923
  %v9084 = vpack.c.b16 %v8928, %v8924
  %v9085 = vpack.c.b16 %v8933, %v8929
  %v9086 = vpack.c.b16 %v8934, %v8930
  %v9087 = vpack.c.b16 %v8935, %v8931
  %v9088 = vpack.c.b16 %v8936, %v8932
  %v9089 = vpack.c.b16 %v8941, %v8937
  %v9090 = vpack.c.b16 %v8942, %v8938
  %v9091 = vpack.c.b16 %v8943, %v8939
  %v9092 = vpack.c.b16 %v8944, %v8940
  %v9093 = vpack.c.b16 %v8949, %v8945
  %v9094 = vpack.c.b16 %v8950, %v8946
  %v9095 = vpack.c.b16 %v8951, %v8947
  %v9096 = vpack.c.b16 %v8952, %v8948
  %v9097 = vpack.c.b16 %v8957, %v8953
  %v9098 = vpack.c.b16 %v8958, %v8954
  %v9099 = vpack.c.b16 %v8959, %v8955
  %v9100 = vpack.c.b16 %v8960, %v8956
  %v9101 = vpack.c.b16 %v8965, %v8961
  %v9102 = vpack.c.b16 %v8966, %v8962
  %v9103 = vpack.c.b16 %v8967, %v8963
  %v9104 = vpack.c.b16 %v8968, %v8964
  %v9105 = vpack.c.b16 %v8973, %v8969
  %v9106 = vpack.c.b16 %v8974, %v8970
  %v9107 = vpack.c.b16 %v8975, %v8971
  %v9108 = vpack.c.b16 %v8976, %v8972
  %v9109 = vpack.c.b16 %v8981, %v8977
  %v9110 = vpack.c.b16 %v8982, %v8978
  %v9111 = vpack.c.b16 %v8983, %v8979
  %v9112 = vpack.c.b16 %v8984, %v8980
  %9241 = vmatprep.subr.bf16.mxu0 %v9014
  %9242 = vmatpush1.bf16.msra.mxu0 %v9013
  %9243 = vmatprep.subr.bf16.mxu0 %v9010
  %9244 = vmatpush1.bf16.msra.mxu0 %v9009
  %9245 = vmatprep.subr.bf16.mxu0 %v9006
  %9246 = vmatpush1.bf16.msra.mxu0 %v9005
  %9247 = vmatprep.subr.bf16.mxu0 %v9002
  %9248 = vmatpush1.bf16.msra.mxu0 %v9001
  %9249 = vmatprep.subr.bf16.mxu0 %v8998
  %9250 = vmatpush1.bf16.msra.mxu0 %v8997
  %9251 = vmatprep.subr.bf16.mxu0 %v8994
  %9252 = vmatpush1.bf16.msra.mxu0 %v8993
  %9253 = vmatprep.subr.bf16.mxu0 %v8990
  %9254 = vmatpush1.bf16.msra.mxu0 %v8989
  %9255 = vmatprep.subr.bf16.mxu0 %v8986
  %9256 = vmatpush1.bf16.msra.mxu0 %v8985
  %9257 = vmatprep.subr.bf16.mxu0 %v9046
  %9258 = vmatpush2.bf16.msra.mxu0 %v9045
  %9259 = vmatprep.subr.bf16.mxu0 %v9042
  %9260 = vmatpush2.bf16.msra.mxu0 %v9041
  %9261 = vmatprep.subr.bf16.mxu0 %v9038
  %9262 = vmatpush2.bf16.msra.mxu0 %v9037
  %9263 = vmatprep.subr.bf16.mxu0 %v9034
  %9264 = vmatpush2.bf16.msra.mxu0 %v9033
  %9265 = vmatprep.subr.bf16.mxu0 %v9030
  %9266 = vmatpush2.bf16.msra.mxu0 %v9029
  %9267 = vmatprep.subr.bf16.mxu0 %v9026
  %9268 = vmatpush2.bf16.msra.mxu0 %v9025
  %9269 = vmatprep.subr.bf16.mxu0 %v9022
  %9270 = vmatpush2.bf16.msra.mxu0 %v9021
  %9271 = vmatprep.subr.bf16.mxu0 %v9018
  %9272 = vmatpush2.bf16.msra.mxu0 %v9017
  %9273 = vmatprep.mubr.bf16.mxu0 %v8570
  %9274 = vmatmul.mubr.bf16.gmra.mxu0 %v8569
  %v9275 = vpop.f32.mrf.mxu0
  %v9276 = vadd.f32 0.0, %v9275
  %v9277 = vpop.f32.mrf.mxu0
  %v9278 = vadd.f32 0.0, %v9277
  %v9279 = vpop.f32.mrf.mxu0
  %v9280 = vadd.f32 0.0, %v9279
  %v9281 = vpop.f32.mrf.mxu0
  %v9282 = vadd.f32 0.0, %v9281
  %9283 = vmatprep.mubr.bf16.mxu0 %v8574
  %9284 = vmatmul.mubr.bf16.gmra.mxu0 %v8573
  %v9285 = vpop.f32.mrf.mxu0
  %v9286 = vadd.f32 0.0, %v9285
  %v9287 = vpop.f32.mrf.mxu0
  %v9288 = vadd.f32 0.0, %v9287
  %v9289 = vpop.f32.mrf.mxu0
  %v9290 = vadd.f32 0.0, %v9289
  %v9291 = vpop.f32.mrf.mxu0
  %v9292 = vadd.f32 0.0, %v9291
  %9293 = vmatprep.mubr.bf16.mxu0 %v8578
  %9294 = vmatmul.mubr.bf16.gmra.mxu0 %v8577
  %v9295 = vpop.f32.mrf.mxu0
  %v9296 = vadd.f32 0.0, %v9295
  %v9297 = vpop.f32.mrf.mxu0
  %v9298 = vadd.f32 0.0, %v9297
  %v9299 = vpop.f32.mrf.mxu0
  %v9300 = vadd.f32 0.0, %v9299
  %v9301 = vpop.f32.mrf.mxu0
  %v9302 = vadd.f32 0.0, %v9301
  %9303 = vmatprep.mubr.bf16.mxu0 %v8582
  %9304 = vmatmul.mubr.bf16.gmra.mxu0 %v8581
  %v9305 = vpop.f32.mrf.mxu0
  %v9306 = vadd.f32 0.0, %v9305
  %v9307 = vpop.f32.mrf.mxu0
  %v9308 = vadd.f32 0.0, %v9307
  %v9309 = vpop.f32.mrf.mxu0
  %v9310 = vadd.f32 0.0, %v9309
  %v9311 = vpop.f32.mrf.mxu0
  %v9312 = vadd.f32 0.0, %v9311
  %9313 = vdwg.mxu0
  %9314 = vmatprep.subr.bf16.mxu0 %v9078
  %9315 = vmatpush1.bf16.msra.mxu0 %v9077
  %9316 = vmatprep.subr.bf16.mxu0 %v9074
  %9317 = vmatpush1.bf16.msra.mxu0 %v9073
  %9318 = vmatprep.subr.bf16.mxu0 %v9070
  %9319 = vmatpush1.bf16.msra.mxu0 %v9069
  %9320 = vmatprep.subr.bf16.mxu0 %v9066
  %9321 = vmatpush1.bf16.msra.mxu0 %v9065
  %9322 = vmatprep.subr.bf16.mxu0 %v9062
  %9323 = vmatpush1.bf16.msra.mxu0 %v9061
  %9324 = vmatprep.subr.bf16.mxu0 %v9058
  %9325 = vmatpush1.bf16.msra.mxu0 %v9057
  %9326 = vmatprep.subr.bf16.mxu0 %v9054
  %9327 = vmatpush1.bf16.msra.mxu0 %v9053
  %9328 = vmatprep.subr.bf16.mxu0 %v9050
  %9329 = vmatpush1.bf16.msra.mxu0 %v9049
  %9330 = vmatprep.subr.bf16.mxu0 %v9110
  %9331 = vmatpush2.bf16.msra.mxu0 %v9109
  %9332 = vmatprep.subr.bf16.mxu0 %v9106
  %9333 = vmatpush2.bf16.msra.mxu0 %v9105
  %9334 = vmatprep.subr.bf16.mxu0 %v9102
  %9335 = vmatpush2.bf16.msra.mxu0 %v9101
  %9336 = vmatprep.subr.bf16.mxu0 %v9098
  %9337 = vmatpush2.bf16.msra.mxu0 %v9097
  %9338 = vmatprep.subr.bf16.mxu0 %v9094
  %9339 = vmatpush2.bf16.msra.mxu0 %v9093
  %9340 = vmatprep.subr.bf16.mxu0 %v9090
  %9341 = vmatpush2.bf16.msra.mxu0 %v9089
  %9342 = vmatprep.subr.bf16.mxu0 %v9086
  %9343 = vmatpush2.bf16.msra.mxu0 %v9085
  %9344 = vmatprep.subr.bf16.mxu0 %v9082
  %9345 = vmatpush2.bf16.msra.mxu0 %v9081
  %9346 = vmatprep.mubr.bf16.mxu0 %v8572
  %9347 = vmatmul.mubr.bf16.gmra.mxu0 %v8571
  %v9348 = vpop.f32.mrf.mxu0
  %v9349 = vadd.f32 %v9276, %v9348
  %v9350 = vpop.f32.mrf.mxu0
  %v9351 = vadd.f32 %v9278, %v9350
  %v9352 = vpop.f32.mrf.mxu0
  %v9353 = vadd.f32 %v9280, %v9352
  %v9354 = vpop.f32.mrf.mxu0
  %v9355 = vadd.f32 %v9282, %v9354
  %9356 = vmatprep.mubr.bf16.mxu0 %v8576
  %9357 = vmatmul.mubr.bf16.gmra.mxu0 %v8575
  %v9358 = vpop.f32.mrf.mxu0
  %v9359 = vadd.f32 %v9286, %v9358
  %v9360 = vpop.f32.mrf.mxu0
  %v9361 = vadd.f32 %v9288, %v9360
  %v9362 = vpop.f32.mrf.mxu0
  %v9363 = vadd.f32 %v9290, %v9362
  %v9364 = vpop.f32.mrf.mxu0
  %v9365 = vadd.f32 %v9292, %v9364
  %9366 = vmatprep.mubr.bf16.mxu0 %v8580
  %9367 = vmatmul.mubr.bf16.gmra.mxu0 %v8579
  %v9368 = vpop.f32.mrf.mxu0
  %v9369 = vadd.f32 %v9296, %v9368
  %v9370 = vpop.f32.mrf.mxu0
  %v9371 = vadd.f32 %v9298, %v9370
  %v9372 = vpop.f32.mrf.mxu0
  %v9373 = vadd.f32 %v9300, %v9372
  %v9374 = vpop.f32.mrf.mxu0
  %v9375 = vadd.f32 %v9302, %v9374
  %9376 = vmatprep.mubr.bf16.mxu0 %v8584
  %9377 = vmatmul.mubr.bf16.gmra.mxu0 %v8583
  %v9378 = vpop.f32.mrf.mxu0
  %v9379 = vadd.f32 %v9306, %v9378
  %v9380 = vpop.f32.mrf.mxu0
  %v9381 = vadd.f32 %v9308, %v9380
  %v9382 = vpop.f32.mrf.mxu0
  %v9383 = vadd.f32 %v9310, %v9382
  %v9384 = vpop.f32.mrf.mxu0
  %v9385 = vadd.f32 %v9312, %v9384
  %9386 = vdwg.mxu0
  %9387 = vmatprep.subr.bf16.mxu0 %v9016
  %9388 = vmatpush1.bf16.msra.mxu0 %v9015
  %9389 = vmatprep.subr.bf16.mxu0 %v9012
  %9390 = vmatpush1.bf16.msra.mxu0 %v9011
  %9391 = vmatprep.subr.bf16.mxu0 %v9008
  %9392 = vmatpush1.bf16.msra.mxu0 %v9007
  %9393 = vmatprep.subr.bf16.mxu0 %v9004
  %9394 = vmatpush1.bf16.msra.mxu0 %v9003
  %9395 = vmatprep.subr.bf16.mxu0 %v9000
  %9396 = vmatpush1.bf16.msra.mxu0 %v8999
  %9397 = vmatprep.subr.bf16.mxu0 %v8996
  %9398 = vmatpush1.bf16.msra.mxu0 %v8995
  %9399 = vmatprep.subr.bf16.mxu0 %v8992
  %9400 = vmatpush1.bf16.msra.mxu0 %v8991
  %9401 = vmatprep.subr.bf16.mxu0 %v8988
  %9402 = vmatpush1.bf16.msra.mxu0 %v8987
  %9403 = vmatprep.subr.bf16.mxu0 %v9048
  %9404 = vmatpush2.bf16.msra.mxu0 %v9047
  %9405 = vmatprep.subr.bf16.mxu0 %v9044
  %9406 = vmatpush2.bf16.msra.mxu0 %v9043
  %9407 = vmatprep.subr.bf16.mxu0 %v9040
  %9408 = vmatpush2.bf16.msra.mxu0 %v9039
  %9409 = vmatprep.subr.bf16.mxu0 %v9036
  %9410 = vmatpush2.bf16.msra.mxu0 %v9035
  %9411 = vmatprep.subr.bf16.mxu0 %v9032
  %9412 = vmatpush2.bf16.msra.mxu0 %v9031
  %9413 = vmatprep.subr.bf16.mxu0 %v9028
  %9414 = vmatpush2.bf16.msra.mxu0 %v9027
  %9415 = vmatprep.subr.bf16.mxu0 %v9024
  %9416 = vmatpush2.bf16.msra.mxu0 %v9023
  %9417 = vmatprep.subr.bf16.mxu0 %v9020
  %9418 = vmatpush2.bf16.msra.mxu0 %v9019
  %9419 = vmatprep.mubr.bf16.mxu0 %v8570
  %9420 = vmatmul.mubr.bf16.gmra.mxu0 %v8569
  %v9421 = vpop.f32.mrf.mxu0
  %v9422 = vadd.f32 0.0, %v9421
  %v9423 = vpop.f32.mrf.mxu0
  %v9424 = vadd.f32 0.0, %v9423
  %v9425 = vpop.f32.mrf.mxu0
  %v9426 = vadd.f32 0.0, %v9425
  %v9427 = vpop.f32.mrf.mxu0
  %v9428 = vadd.f32 0.0, %v9427
  %9429 = vmatprep.mubr.bf16.mxu0 %v8574
  %9430 = vmatmul.mubr.bf16.gmra.mxu0 %v8573
  %v9431 = vpop.f32.mrf.mxu0
  %v9432 = vadd.f32 0.0, %v9431
  %v9433 = vpop.f32.mrf.mxu0
  %v9434 = vadd.f32 0.0, %v9433
  %v9435 = vpop.f32.mrf.mxu0
  %v9436 = vadd.f32 0.0, %v9435
  %v9437 = vpop.f32.mrf.mxu0
  %v9438 = vadd.f32 0.0, %v9437
  %9439 = vmatprep.mubr.bf16.mxu0 %v8578
  %9440 = vmatmul.mubr.bf16.gmra.mxu0 %v8577
  %v9441 = vpop.f32.mrf.mxu0
  %v9442 = vadd.f32 0.0, %v9441
  %v9443 = vpop.f32.mrf.mxu0
  %v9444 = vadd.f32 0.0, %v9443
  %v9445 = vpop.f32.mrf.mxu0
  %v9446 = vadd.f32 0.0, %v9445
  %v9447 = vpop.f32.mrf.mxu0
  %v9448 = vadd.f32 0.0, %v9447
  %9449 = vmatprep.mubr.bf16.mxu0 %v8582
  %9450 = vmatmul.mubr.bf16.gmra.mxu0 %v8581
  %v9451 = vpop.f32.mrf.mxu0
  %v9452 = vadd.f32 0.0, %v9451
  %v9453 = vpop.f32.mrf.mxu0
  %v9454 = vadd.f32 0.0, %v9453
  %v9455 = vpop.f32.mrf.mxu0
  %v9456 = vadd.f32 0.0, %v9455
  %v9457 = vpop.f32.mrf.mxu0
  %v9458 = vadd.f32 0.0, %v9457
  %9459 = vdwg.mxu0
  %9460 = vmatprep.subr.bf16.mxu0 %v9080
  %9461 = vmatpush1.bf16.msra.mxu0 %v9079
  %9462 = vmatprep.subr.bf16.mxu0 %v9076
  %9463 = vmatpush1.bf16.msra.mxu0 %v9075
  %9464 = vmatprep.subr.bf16.mxu0 %v9072
  %9465 = vmatpush1.bf16.msra.mxu0 %v9071
  %9466 = vmatprep.subr.bf16.mxu0 %v9068
  %9467 = vmatpush1.bf16.msra.mxu0 %v9067
  %9468 = vmatprep.subr.bf16.mxu0 %v9064
  %9469 = vmatpush1.bf16.msra.mxu0 %v9063
  %9470 = vmatprep.subr.bf16.mxu0 %v9060
  %9471 = vmatpush1.bf16.msra.mxu0 %v9059
  %9472 = vmatprep.subr.bf16.mxu0 %v9056
  %9473 = vmatpush1.bf16.msra.mxu0 %v9055
  %9474 = vmatprep.subr.bf16.mxu0 %v9052
  %9475 = vmatpush1.bf16.msra.mxu0 %v9051
  %9476 = vmatprep.subr.bf16.mxu0 %v9112
  %9477 = vmatpush2.bf16.msra.mxu0 %v9111
  %9478 = vmatprep.subr.bf16.mxu0 %v9108
  %9479 = vmatpush2.bf16.msra.mxu0 %v9107
  %9480 = vmatprep.subr.bf16.mxu0 %v9104
  %9481 = vmatpush2.bf16.msra.mxu0 %v9103
  %9482 = vmatprep.subr.bf16.mxu0 %v9100
  %9483 = vmatpush2.bf16.msra.mxu0 %v9099
  %9484 = vmatprep.subr.bf16.mxu0 %v9096
  %9485 = vmatpush2.bf16.msra.mxu0 %v9095
  %9486 = vmatprep.subr.bf16.mxu0 %v9092
  %9487 = vmatpush2.bf16.msra.mxu0 %v9091
  %9488 = vmatprep.subr.bf16.mxu0 %v9088
  %9489 = vmatpush2.bf16.msra.mxu0 %v9087
  %9490 = vmatprep.subr.bf16.mxu0 %v9084
  %9491 = vmatpush2.bf16.msra.mxu0 %v9083
  %9492 = vmatprep.mubr.bf16.mxu0 %v8572
  %9493 = vmatmul.mubr.bf16.gmra.mxu0 %v8571
  %v9494 = vpop.f32.mrf.mxu0
  %v9495 = vadd.f32 %v9422, %v9494
  %v9496 = vpop.f32.mrf.mxu0
  %v9497 = vadd.f32 %v9424, %v9496
  %v9498 = vpop.f32.mrf.mxu0
  %v9499 = vadd.f32 %v9426, %v9498
  %v9500 = vpop.f32.mrf.mxu0
  %v9501 = vadd.f32 %v9428, %v9500
  %9502 = vmatprep.mubr.bf16.mxu0 %v8576
  %9503 = vmatmul.mubr.bf16.gmra.mxu0 %v8575
  %v9504 = vpop.f32.mrf.mxu0
  %v9505 = vadd.f32 %v9432, %v9504
  %v9506 = vpop.f32.mrf.mxu0
  %v9507 = vadd.f32 %v9434, %v9506
  %v9508 = vpop.f32.mrf.mxu0
  %v9509 = vadd.f32 %v9436, %v9508
  %v9510 = vpop.f32.mrf.mxu0
  %v9511 = vadd.f32 %v9438, %v9510
  %9512 = vmatprep.mubr.bf16.mxu0 %v8580
  %9513 = vmatmul.mubr.bf16.gmra.mxu0 %v8579
  %v9514 = vpop.f32.mrf.mxu0
  %v9515 = vadd.f32 %v9442, %v9514
  %v9516 = vpop.f32.mrf.mxu0
  %v9517 = vadd.f32 %v9444, %v9516
  %v9518 = vpop.f32.mrf.mxu0
  %v9519 = vadd.f32 %v9446, %v9518
  %v9520 = vpop.f32.mrf.mxu0
  %v9521 = vadd.f32 %v9448, %v9520
  %9522 = vmatprep.mubr.bf16.mxu0 %v8584
  %9523 = vmatmul.mubr.bf16.gmra.mxu0 %v8583
  %v9524 = vpop.f32.mrf.mxu0
  %v9525 = vadd.f32 %v9452, %v9524
  %v9526 = vpop.f32.mrf.mxu0
  %v9527 = vadd.f32 %v9454, %v9526
  %v9528 = vpop.f32.mrf.mxu0
  %v9529 = vadd.f32 %v9456, %v9528
  %v9530 = vpop.f32.mrf.mxu0
  %v9531 = vadd.f32 %v9458, %v9530
  %9532 = vdwg.mxu0
  %v9533 = vadd.f32 %v8309, %v9349
  %v9534 = vadd.f32 %v8310, %v9351
  %v9535 = vadd.f32 %v8311, %v9495
  %v9536 = vadd.f32 %v8312, %v9497
  %v9537 = vadd.f32 %v8313, %v9353
  %v9538 = vadd.f32 %v8314, %v9355
  %v9539 = vadd.f32 %v8315, %v9499
  %v9540 = vadd.f32 %v8316, %v9501
  %v9541 = vadd.f32 %v8317, %v9359
  %v9542 = vadd.f32 %v8318, %v9361
  %v9543 = vadd.f32 %v8319, %v9505
  %v9544 = vadd.f32 %v8320, %v9507
  %v9545 = vadd.f32 %v8321, %v9363
  %v9546 = vadd.f32 %v8322, %v9365
  %v9547 = vadd.f32 %v8323, %v9509
  %v9548 = vadd.f32 %v8324, %v9511
  %v9549 = vadd.f32 %v8325, %v9369
  %v9550 = vadd.f32 %v8326, %v9371
  %v9551 = vadd.f32 %v8327, %v9515
  %v9552 = vadd.f32 %v8328, %v9517
  %v9553 = vadd.f32 %v8329, %v9373
  %v9554 = vadd.f32 %v8330, %v9375
  %v9555 = vadd.f32 %v8331, %v9519
  %v9556 = vadd.f32 %v8332, %v9521
  %v9557 = vadd.f32 %v8333, %v9379
  %v9558 = vadd.f32 %v8334, %v9381
  %v9559 = vadd.f32 %v8335, %v9525
  %v9560 = vadd.f32 %v8336, %v9527
  %v9561 = vadd.f32 %v8337, %v9383
  %v9562 = vadd.f32 %v8338, %v9385
  %v9563 = vadd.f32 %v8339, %v9529
  %v9564 = vadd.f32 %v8340, %v9531
  %9565 = vst [vmem:[#allocation2] sm:$0xff] %v9533
  %9566 = vst [vmem:[#allocation2 + $0x8] sm:$0xff] %v9534
  %9567 = vst [vmem:[#allocation2 + $0x10] sm:$0xff] %v9535
  %9568 = vst [vmem:[#allocation2 + $0x18] sm:$0xff] %v9536
  %9569 = vst [vmem:[#allocation2 + $0x20] sm:$0xff] %v9537
  %9570 = vst [vmem:[#allocation2 + $0x28] sm:$0xff] %v9538
  %9571 = vst [vmem:[#allocation2 + $0x30] sm:$0xff] %v9539
  %9572 = vst [vmem:[#allocation2 + $0x38] sm:$0xff] %v9540
  %9573 = vst [vmem:[#allocation2 + $0x40] sm:$0xff] %v9541
  %9574 = vst [vmem:[#allocation2 + $0x48] sm:$0xff] %v9542
  %9575 = vst [vmem:[#allocation2 + $0x50] sm:$0xff] %v9543
  %9576 = vst [vmem:[#allocation2 + $0x58] sm:$0xff] %v9544
  %9577 = vst [vmem:[#allocation2 + $0x60] sm:$0xff] %v9545
  %9578 = vst [vmem:[#allocation2 + $0x68] sm:$0xff] %v9546
  %9579 = vst [vmem:[#allocation2 + $0x70] sm:$0xff] %v9547
  %9580 = vst [vmem:[#allocation2 + $0x78] sm:$0xff] %v9548
  %9581 = vst [vmem:[#allocation2 + $0x80] sm:$0xff] %v9549
  %9582 = vst [vmem:[#allocation2 + $0x88] sm:$0xff] %v9550
  %9583 = vst [vmem:[#allocation2 + $0x90] sm:$0xff] %v9551
  %9584 = vst [vmem:[#allocation2 + $0x98] sm:$0xff] %v9552
  %9585 = vst [vmem:[#allocation2 + $0xa0] sm:$0xff] %v9553
  %9586 = vst [vmem:[#allocation2 + $0xa8] sm:$0xff] %v9554
  %9587 = vst [vmem:[#allocation2 + $0xb0] sm:$0xff] %v9555
  %9588 = vst [vmem:[#allocation2 + $0xb8] sm:$0xff] %v9556
  %9589 = vst [vmem:[#allocation2 + $0xc0] sm:$0xff] %v9557
  %9590 = vst [vmem:[#allocation2 + $0xc8] sm:$0xff] %v9558
  %9591 = vst [vmem:[#allocation2 + $0xd0] sm:$0xff] %v9559
  %9592 = vst [vmem:[#allocation2 + $0xd8] sm:$0xff] %v9560
  %9593 = vst [vmem:[#allocation2 + $0xe0] sm:$0xff] %v9561
  %9594 = vst [vmem:[#allocation2 + $0xe8] sm:$0xff] %v9562
  %9595 = vst [vmem:[#allocation2 + $0xf0] sm:$0xff] %v9563
  %9596 = vst [vmem:[#allocation2 + $0xf8] sm:$0xff] %v9564
  %v9597 = vld [vmem:[#allocation2] sm:$0xff]
  %v9598 = vld [vmem:[#allocation2 + $0x8] sm:$0xff]
  %v9599 = vld [vmem:[#allocation2 + $0x10] sm:$0xff]
  %v9600 = vld [vmem:[#allocation2 + $0x18] sm:$0xff]
  %v9601 = vld [vmem:[#allocation2 + $0x20] sm:$0xff]
  %v9602 = vld [vmem:[#allocation2 + $0x28] sm:$0xff]
  %v9603 = vld [vmem:[#allocation2 + $0x30] sm:$0xff]
  %v9604 = vld [vmem:[#allocation2 + $0x38] sm:$0xff]
  %v9605 = vld [vmem:[#allocation2 + $0x40] sm:$0xff]
  %v9606 = vld [vmem:[#allocation2 + $0x48] sm:$0xff]
  %v9607 = vld [vmem:[#allocation2 + $0x50] sm:$0xff]
  %v9608 = vld [vmem:[#allocation2 + $0x58] sm:$0xff]
  %v9609 = vld [vmem:[#allocation2 + $0x60] sm:$0xff]
  %v9610 = vld [vmem:[#allocation2 + $0x68] sm:$0xff]
  %v9611 = vld [vmem:[#allocation2 + $0x70] sm:$0xff]
  %v9612 = vld [vmem:[#allocation2 + $0x78] sm:$0xff]
  %v9613 = vld [vmem:[#allocation2 + $0x80] sm:$0xff]
  %v9614 = vld [vmem:[#allocation2 + $0x88] sm:$0xff]
  %v9615 = vld [vmem:[#allocation2 + $0x90] sm:$0xff]
  %v9616 = vld [vmem:[#allocation2 + $0x98] sm:$0xff]
  %v9617 = vld [vmem:[#allocation2 + $0xa0] sm:$0xff]
  %v9618 = vld [vmem:[#allocation2 + $0xa8] sm:$0xff]
  %v9619 = vld [vmem:[#allocation2 + $0xb0] sm:$0xff]
  %v9620 = vld [vmem:[#allocation2 + $0xb8] sm:$0xff]
  %v9621 = vld [vmem:[#allocation2 + $0xc0] sm:$0xff]
  %v9622 = vld [vmem:[#allocation2 + $0xc8] sm:$0xff]
  %v9623 = vld [vmem:[#allocation2 + $0xd0] sm:$0xff]
  %v9624 = vld [vmem:[#allocation2 + $0xd8] sm:$0xff]
  %v9625 = vld [vmem:[#allocation2 + $0xe0] sm:$0xff]
  %v9626 = vld [vmem:[#allocation2 + $0xe8] sm:$0xff]
  %v9627 = vld [vmem:[#allocation2 + $0xf0] sm:$0xff]
  %v9628 = vld [vmem:[#allocation2 + $0xf8] sm:$0xff]
  %vm9629 = vsmask.f32 1280
  %vm9630 = vsmask.f32 5392
  %vm9631 = vmor %vm9629, %vm9630
  %v9632 = vrot.slane %v4225, 6
  %v9633 = vrot.slane %v4228, 7
  %v9634 = vor.u32 %v9632, %v9633
  %v9635 = vrot.slane %v9634, 4
  %v9636 = vrot.slane %v6964, 6
  %v9637 = vrot.slane %v4234, 7
  %v9638 = vor.u32 %v9636, %v9637
  %v9639 = vsel %vm9631, %v9635, %v9638
  %v9640 = vrot.slane %v4239, 6
  %v9641 = vrot.slane %v4242, 7
  %v9642 = vor.u32 %v9640, %v9641
  %v9643 = vrot.slane %v9642, 4
  %v9644 = vrot.slane %v6974, 6
  %v9645 = vrot.slane %v4248, 7
  %v9646 = vor.u32 %v9644, %v9645
  %v9647 = vsel %vm9631, %v9643, %v9646
  %v9648 = vrot.slane %v4253, 6
  %v9649 = vrot.slane %v4256, 7
  %v9650 = vor.u32 %v9648, %v9649
  %v9651 = vrot.slane %v9650, 4
  %v9652 = vrot.slane %v6984, 6
  %v9653 = vrot.slane %v4262, 7
  %v9654 = vor.u32 %v9652, %v9653
  %v9655 = vsel %vm9631, %v9651, %v9654
  %v9656 = vrot.slane %v4267, 6
  %v9657 = vrot.slane %v4270, 7
  %v9658 = vor.u32 %v9656, %v9657
  %v9659 = vrot.slane %v9658, 4
  %v9660 = vrot.slane %v6994, 6
  %v9661 = vrot.slane %v4276, 7
  %v9662 = vor.u32 %v9660, %v9661
  %v9663 = vsel %vm9631, %v9659, %v9662
  %v9664 = vrot.slane %v4281, 6
  %v9665 = vrot.slane %v4284, 7
  %v9666 = vor.u32 %v9664, %v9665
  %v9667 = vrot.slane %v9666, 4
  %v9668 = vrot.slane %v7004, 6
  %v9669 = vrot.slane %v4290, 7
  %v9670 = vor.u32 %v9668, %v9669
  %v9671 = vsel %vm9631, %v9667, %v9670
  %v9672 = vrot.slane %v4295, 6
  %v9673 = vrot.slane %v4298, 7
  %v9674 = vor.u32 %v9672, %v9673
  %v9675 = vrot.slane %v9674, 4
  %v9676 = vrot.slane %v7014, 6
  %v9677 = vrot.slane %v4304, 7
  %v9678 = vor.u32 %v9676, %v9677
  %v9679 = vsel %vm9631, %v9675, %v9678
  %v9680 = vrot.slane %v4309, 6
  %v9681 = vrot.slane %v4312, 7
  %v9682 = vor.u32 %v9680, %v9681
  %v9683 = vrot.slane %v9682, 4
  %v9684 = vrot.slane %v7024, 6
  %v9685 = vrot.slane %v4318, 7
  %v9686 = vor.u32 %v9684, %v9685
  %v9687 = vsel %vm9631, %v9683, %v9686
  %v9688 = vrot.slane %v4323, 6
  %v9689 = vrot.slane %v4326, 7
  %v9690 = vor.u32 %v9688, %v9689
  %v9691 = vrot.slane %v9690, 4
  %v9692 = vrot.slane %v7034, 6
  %v9693 = vrot.slane %v4332, 7
  %v9694 = vor.u32 %v9692, %v9693
  %v9695 = vsel %vm9631, %v9691, %v9694
  %v9696 = vrot.slane %v4337, 6
  %v9697 = vrot.slane %v4340, 7
  %v9698 = vor.u32 %v9696, %v9697
  %v9699 = vrot.slane %v9698, 4
  %v9700 = vrot.slane %v7044, 6
  %v9701 = vrot.slane %v4346, 7
  %v9702 = vor.u32 %v9700, %v9701
  %v9703 = vsel %vm9631, %v9699, %v9702
  %v9704 = vrot.slane %v4351, 6
  %v9705 = vrot.slane %v4354, 7
  %v9706 = vor.u32 %v9704, %v9705
  %v9707 = vrot.slane %v9706, 4
  %v9708 = vrot.slane %v7054, 6
  %v9709 = vrot.slane %v4360, 7
  %v9710 = vor.u32 %v9708, %v9709
  %v9711 = vsel %vm9631, %v9707, %v9710
  %v9712 = vrot.slane %v4365, 6
  %v9713 = vrot.slane %v4368, 7
  %v9714 = vor.u32 %v9712, %v9713
  %v9715 = vrot.slane %v9714, 4
  %v9716 = vrot.slane %v7064, 6
  %v9717 = vrot.slane %v4374, 7
  %v9718 = vor.u32 %v9716, %v9717
  %v9719 = vsel %vm9631, %v9715, %v9718
  %v9720 = vrot.slane %v4379, 6
  %v9721 = vrot.slane %v4382, 7
  %v9722 = vor.u32 %v9720, %v9721
  %v9723 = vrot.slane %v9722, 4
  %v9724 = vrot.slane %v7074, 6
  %v9725 = vrot.slane %v4388, 7
  %v9726 = vor.u32 %v9724, %v9725
  %v9727 = vsel %vm9631, %v9723, %v9726
  %v9728 = vrot.slane %v4393, 6
  %v9729 = vrot.slane %v4396, 7
  %v9730 = vor.u32 %v9728, %v9729
  %v9731 = vrot.slane %v9730, 4
  %v9732 = vrot.slane %v7084, 6
  %v9733 = vrot.slane %v4402, 7
  %v9734 = vor.u32 %v9732, %v9733
  %v9735 = vsel %vm9631, %v9731, %v9734
  %v9736 = vrot.slane %v4407, 6
  %v9737 = vrot.slane %v4410, 7
  %v9738 = vor.u32 %v9736, %v9737
  %v9739 = vrot.slane %v9738, 4
  %v9740 = vrot.slane %v7094, 6
  %v9741 = vrot.slane %v4416, 7
  %v9742 = vor.u32 %v9740, %v9741
  %v9743 = vsel %vm9631, %v9739, %v9742
  %v9744 = vrot.slane %v4421, 6
  %v9745 = vrot.slane %v4424, 7
  %v9746 = vor.u32 %v9744, %v9745
  %v9747 = vrot.slane %v9746, 4
  %v9748 = vrot.slane %v7104, 6
  %v9749 = vrot.slane %v4430, 7
  %v9750 = vor.u32 %v9748, %v9749
  %v9751 = vsel %vm9631, %v9747, %v9750
  %v9752 = vrot.slane %v4435, 6
  %v9753 = vrot.slane %v4438, 7
  %v9754 = vor.u32 %v9752, %v9753
  %v9755 = vrot.slane %v9754, 4
  %v9756 = vrot.slane %v7114, 6
  %v9757 = vrot.slane %v4444, 7
  %v9758 = vor.u32 %v9756, %v9757
  %v9759 = vsel %vm9631, %v9755, %v9758
  %s9760 = scalar_lea.vmem %s3, 5120
  %v9761 = vld [vmem:[%s9760] sm:$0xff]
  %v9762 = vld [vmem:[%s9760 + $0x8] sm:$0xff]
  %v9763 = vld [vmem:[%s9760 + $0x10] sm:$0xff]
  %v9764 = vld [vmem:[%s9760 + $0x18] sm:$0xff]
  %v9765 = vld [vmem:[%s9760 + $0x20] sm:$0xff]
  %v9766 = vld [vmem:[%s9760 + $0x28] sm:$0xff]
  %v9767 = vld [vmem:[%s9760 + $0x30] sm:$0xff]
  %v9768 = vld [vmem:[%s9760 + $0x38] sm:$0xff]
  %v9769 = vld [vmem:[%s9760 + $0x40] sm:$0xff]
  %v9770 = vld [vmem:[%s9760 + $0x48] sm:$0xff]
  %v9771 = vld [vmem:[%s9760 + $0x50] sm:$0xff]
  %v9772 = vld [vmem:[%s9760 + $0x58] sm:$0xff]
  %v9773 = vld [vmem:[%s9760 + $0x60] sm:$0xff]
  %v9774 = vld [vmem:[%s9760 + $0x68] sm:$0xff]
  %v9775 = vld [vmem:[%s9760 + $0x70] sm:$0xff]
  %v9776 = vld [vmem:[%s9760 + $0x78] sm:$0xff]
  %v9777 = vld [vmem:[%s9760 + $0x80] sm:$0xff]
  %v9778 = vld [vmem:[%s9760 + $0x88] sm:$0xff]
  %v9779 = vld [vmem:[%s9760 + $0x90] sm:$0xff]
  %v9780 = vld [vmem:[%s9760 + $0x98] sm:$0xff]
  %v9781 = vld [vmem:[%s9760 + $0xa0] sm:$0xff]
  %v9782 = vld [vmem:[%s9760 + $0xa8] sm:$0xff]
  %v9783 = vld [vmem:[%s9760 + $0xb0] sm:$0xff]
  %v9784 = vld [vmem:[%s9760 + $0xb8] sm:$0xff]
  %v9785 = vld [vmem:[%s9760 + $0xc0] sm:$0xff]
  %v9786 = vld [vmem:[%s9760 + $0xc8] sm:$0xff]
  %v9787 = vld [vmem:[%s9760 + $0xd0] sm:$0xff]
  %v9788 = vld [vmem:[%s9760 + $0xd8] sm:$0xff]
  %v9789 = vld [vmem:[%s9760 + $0xe0] sm:$0xff]
  %v9790 = vld [vmem:[%s9760 + $0xe8] sm:$0xff]
  %v9791 = vld [vmem:[%s9760 + $0xf0] sm:$0xff]
  %v9792 = vld [vmem:[%s9760 + $0xf8] sm:$0xff]
  %v9793 = vld [vmem:[%s9760 + $0x100] sm:$0xff]
  %v9794 = vld [vmem:[%s9760 + $0x108] sm:$0xff]
  %v9795 = vld [vmem:[%s9760 + $0x110] sm:$0xff]
  %v9796 = vld [vmem:[%s9760 + $0x118] sm:$0xff]
  %v9797 = vld [vmem:[%s9760 + $0x120] sm:$0xff]
  %v9798 = vld [vmem:[%s9760 + $0x128] sm:$0xff]
  %v9799 = vld [vmem:[%s9760 + $0x130] sm:$0xff]
  %v9800 = vld [vmem:[%s9760 + $0x138] sm:$0xff]
  %v9801 = vld [vmem:[%s9760 + $0x140] sm:$0xff]
  %v9802 = vld [vmem:[%s9760 + $0x148] sm:$0xff]
  %v9803 = vld [vmem:[%s9760 + $0x150] sm:$0xff]
  %v9804 = vld [vmem:[%s9760 + $0x158] sm:$0xff]
  %v9805 = vld [vmem:[%s9760 + $0x160] sm:$0xff]
  %v9806 = vld [vmem:[%s9760 + $0x168] sm:$0xff]
  %v9807 = vld [vmem:[%s9760 + $0x170] sm:$0xff]
  %v9808 = vld [vmem:[%s9760 + $0x178] sm:$0xff]
  %v9809 = vld [vmem:[%s9760 + $0x180] sm:$0xff]
  %v9810 = vld [vmem:[%s9760 + $0x188] sm:$0xff]
  %v9811 = vld [vmem:[%s9760 + $0x190] sm:$0xff]
  %v9812 = vld [vmem:[%s9760 + $0x198] sm:$0xff]
  %v9813 = vld [vmem:[%s9760 + $0x1a0] sm:$0xff]
  %v9814 = vld [vmem:[%s9760 + $0x1a8] sm:$0xff]
  %v9815 = vld [vmem:[%s9760 + $0x1b0] sm:$0xff]
  %v9816 = vld [vmem:[%s9760 + $0x1b8] sm:$0xff]
  %v9817 = vld [vmem:[%s9760 + $0x1c0] sm:$0xff]
  %v9818 = vld [vmem:[%s9760 + $0x1c8] sm:$0xff]
  %v9819 = vld [vmem:[%s9760 + $0x1d0] sm:$0xff]
  %v9820 = vld [vmem:[%s9760 + $0x1d8] sm:$0xff]
  %v9821 = vld [vmem:[%s9760 + $0x1e0] sm:$0xff]
  %v9822 = vld [vmem:[%s9760 + $0x1e8] sm:$0xff]
  %v9823 = vld [vmem:[%s9760 + $0x1f0] sm:$0xff]
  %v9824 = vld [vmem:[%s9760 + $0x1f8] sm:$0xff]
  %v9825 = vld [vmem:[%s9760 + $0x200] sm:$0xff]
  %v9826 = vld [vmem:[%s9760 + $0x208] sm:$0xff]
  %v9827 = vld [vmem:[%s9760 + $0x210] sm:$0xff]
  %v9828 = vld [vmem:[%s9760 + $0x218] sm:$0xff]
  %v9829 = vld [vmem:[%s9760 + $0x220] sm:$0xff]
  %v9830 = vld [vmem:[%s9760 + $0x228] sm:$0xff]
  %v9831 = vld [vmem:[%s9760 + $0x230] sm:$0xff]
  %v9832 = vld [vmem:[%s9760 + $0x238] sm:$0xff]
  %v9833 = vld [vmem:[%s9760 + $0x240] sm:$0xff]
  %v9834 = vld [vmem:[%s9760 + $0x248] sm:$0xff]
  %v9835 = vld [vmem:[%s9760 + $0x250] sm:$0xff]
  %v9836 = vld [vmem:[%s9760 + $0x258] sm:$0xff]
  %v9837 = vld [vmem:[%s9760 + $0x260] sm:$0xff]
  %v9838 = vld [vmem:[%s9760 + $0x268] sm:$0xff]
  %v9839 = vld [vmem:[%s9760 + $0x270] sm:$0xff]
  %v9840 = vld [vmem:[%s9760 + $0x278] sm:$0xff]
  %v9841 = vld [vmem:[%s9760 + $0x280] sm:$0xff]
  %v9842 = vld [vmem:[%s9760 + $0x288] sm:$0xff]
  %v9843 = vld [vmem:[%s9760 + $0x290] sm:$0xff]
  %v9844 = vld [vmem:[%s9760 + $0x298] sm:$0xff]
  %v9845 = vld [vmem:[%s9760 + $0x2a0] sm:$0xff]
  %v9846 = vld [vmem:[%s9760 + $0x2a8] sm:$0xff]
  %v9847 = vld [vmem:[%s9760 + $0x2b0] sm:$0xff]
  %v9848 = vld [vmem:[%s9760 + $0x2b8] sm:$0xff]
  %v9849 = vld [vmem:[%s9760 + $0x2c0] sm:$0xff]
  %v9850 = vld [vmem:[%s9760 + $0x2c8] sm:$0xff]
  %v9851 = vld [vmem:[%s9760 + $0x2d0] sm:$0xff]
  %v9852 = vld [vmem:[%s9760 + $0x2d8] sm:$0xff]
  %v9853 = vld [vmem:[%s9760 + $0x2e0] sm:$0xff]
  %v9854 = vld [vmem:[%s9760 + $0x2e8] sm:$0xff]
  %v9855 = vld [vmem:[%s9760 + $0x2f0] sm:$0xff]
  %v9856 = vld [vmem:[%s9760 + $0x2f8] sm:$0xff]
  %v9857 = vld [vmem:[%s9760 + $0x300] sm:$0xff]
  %v9858 = vld [vmem:[%s9760 + $0x308] sm:$0xff]
  %v9859 = vld [vmem:[%s9760 + $0x310] sm:$0xff]
  %v9860 = vld [vmem:[%s9760 + $0x318] sm:$0xff]
  %v9861 = vld [vmem:[%s9760 + $0x320] sm:$0xff]
  %v9862 = vld [vmem:[%s9760 + $0x328] sm:$0xff]
  %v9863 = vld [vmem:[%s9760 + $0x330] sm:$0xff]
  %v9864 = vld [vmem:[%s9760 + $0x338] sm:$0xff]
  %v9865 = vld [vmem:[%s9760 + $0x340] sm:$0xff]
  %v9866 = vld [vmem:[%s9760 + $0x348] sm:$0xff]
  %v9867 = vld [vmem:[%s9760 + $0x350] sm:$0xff]
  %v9868 = vld [vmem:[%s9760 + $0x358] sm:$0xff]
  %v9869 = vld [vmem:[%s9760 + $0x360] sm:$0xff]
  %v9870 = vld [vmem:[%s9760 + $0x368] sm:$0xff]
  %v9871 = vld [vmem:[%s9760 + $0x370] sm:$0xff]
  %v9872 = vld [vmem:[%s9760 + $0x378] sm:$0xff]
  %v9873 = vld [vmem:[%s9760 + $0x380] sm:$0xff]
  %v9874 = vld [vmem:[%s9760 + $0x388] sm:$0xff]
  %v9875 = vld [vmem:[%s9760 + $0x390] sm:$0xff]
  %v9876 = vld [vmem:[%s9760 + $0x398] sm:$0xff]
  %v9877 = vld [vmem:[%s9760 + $0x3a0] sm:$0xff]
  %v9878 = vld [vmem:[%s9760 + $0x3a8] sm:$0xff]
  %v9879 = vld [vmem:[%s9760 + $0x3b0] sm:$0xff]
  %v9880 = vld [vmem:[%s9760 + $0x3b8] sm:$0xff]
  %v9881 = vld [vmem:[%s9760 + $0x3c0] sm:$0xff]
  %v9882 = vld [vmem:[%s9760 + $0x3c8] sm:$0xff]
  %v9883 = vld [vmem:[%s9760 + $0x3d0] sm:$0xff]
  %v9884 = vld [vmem:[%s9760 + $0x3d8] sm:$0xff]
  %v9885 = vld [vmem:[%s9760 + $0x3e0] sm:$0xff]
  %v9886 = vld [vmem:[%s9760 + $0x3e8] sm:$0xff]
  %v9887 = vld [vmem:[%s9760 + $0x3f0] sm:$0xff]
  %v9888 = vld [vmem:[%s9760 + $0x3f8] sm:$0xff]
  %v9889 = vunpack.c.l.b16 %v9639
  %v9890 = vunpack.c.h.b16 %v9639
  %v9891 = vunpack.c.l.b16 %v9647
  %v9892 = vunpack.c.h.b16 %v9647
  %v9893 = vunpack.c.l.b16 %v9655
  %v9894 = vunpack.c.h.b16 %v9655
  %v9895 = vunpack.c.l.b16 %v9663
  %v9896 = vunpack.c.h.b16 %v9663
  %v9897 = vunpack.c.l.b16 %v9671
  %v9898 = vunpack.c.h.b16 %v9671
  %v9899 = vunpack.c.l.b16 %v9679
  %v9900 = vunpack.c.h.b16 %v9679
  %v9901 = vunpack.c.l.b16 %v9687
  %v9902 = vunpack.c.h.b16 %v9687
  %v9903 = vunpack.c.l.b16 %v9695
  %v9904 = vunpack.c.h.b16 %v9695
  %v9905 = vunpack.c.l.b16 %v9703
  %v9906 = vunpack.c.h.b16 %v9703
  %v9907 = vunpack.c.l.b16 %v9711
  %v9908 = vunpack.c.h.b16 %v9711
  %v9909 = vunpack.c.l.b16 %v9719
  %v9910 = vunpack.c.h.b16 %v9719
  %v9911 = vunpack.c.l.b16 %v9727
  %v9912 = vunpack.c.h.b16 %v9727
  %v9913 = vunpack.c.l.b16 %v9735
  %v9914 = vunpack.c.h.b16 %v9735
  %v9915 = vunpack.c.l.b16 %v9743
  %v9916 = vunpack.c.h.b16 %v9743
  %v9917 = vunpack.c.l.b16 %v9751
  %v9918 = vunpack.c.h.b16 %v9751
  %v9919 = vunpack.c.l.b16 %v9759
  %v9920 = vunpack.c.h.b16 %v9759
  %v9921 = vpack.c.b16 %v9893, %v9889
  %v9922 = vpack.c.b16 %v9894, %v9890
  %v9923 = vpack.c.b16 %v9895, %v9891
  %v9924 = vpack.c.b16 %v9896, %v9892
  %v9925 = vpack.c.b16 %v9901, %v9897
  %v9926 = vpack.c.b16 %v9902, %v9898
  %v9927 = vpack.c.b16 %v9903, %v9899
  %v9928 = vpack.c.b16 %v9904, %v9900
  %v9929 = vpack.c.b16 %v9909, %v9905
  %v9930 = vpack.c.b16 %v9910, %v9906
  %v9931 = vpack.c.b16 %v9911, %v9907
  %v9932 = vpack.c.b16 %v9912, %v9908
  %v9933 = vpack.c.b16 %v9917, %v9913
  %v9934 = vpack.c.b16 %v9918, %v9914
  %v9935 = vpack.c.b16 %v9919, %v9915
  %v9936 = vpack.c.b16 %v9920, %v9916
  %v10081 = vunpack.c.l.b16 %v9761
  %v10082 = vunpack.c.h.b16 %v9761
  %v10083 = vunpack.c.l.b16 %v9762
  %v10084 = vunpack.c.h.b16 %v9762
  %v10085 = vunpack.c.l.b16 %v9763
  %v10086 = vunpack.c.h.b16 %v9763
  %v10087 = vunpack.c.l.b16 %v9764
  %v10088 = vunpack.c.h.b16 %v9764
  %v10089 = vunpack.c.l.b16 %v9765
  %v10090 = vunpack.c.h.b16 %v9765
  %v10091 = vunpack.c.l.b16 %v9766
  %v10092 = vunpack.c.h.b16 %v9766
  %v10093 = vunpack.c.l.b16 %v9767
  %v10094 = vunpack.c.h.b16 %v9767
  %v10095 = vunpack.c.l.b16 %v9768
  %v10096 = vunpack.c.h.b16 %v9768
  %v10097 = vunpack.c.l.b16 %v9769
  %v10098 = vunpack.c.h.b16 %v9769
  %v10099 = vunpack.c.l.b16 %v9770
  %v10100 = vunpack.c.h.b16 %v9770
  %v10101 = vunpack.c.l.b16 %v9771
  %v10102 = vunpack.c.h.b16 %v9771
  %v10103 = vunpack.c.l.b16 %v9772
  %v10104 = vunpack.c.h.b16 %v9772
  %v10105 = vunpack.c.l.b16 %v9773
  %v10106 = vunpack.c.h.b16 %v9773
  %v10107 = vunpack.c.l.b16 %v9774
  %v10108 = vunpack.c.h.b16 %v9774
  %v10109 = vunpack.c.l.b16 %v9775
  %v10110 = vunpack.c.h.b16 %v9775
  %v10111 = vunpack.c.l.b16 %v9776
  %v10112 = vunpack.c.h.b16 %v9776
  %v10113 = vunpack.c.l.b16 %v9777
  %v10114 = vunpack.c.h.b16 %v9777
  %v10115 = vunpack.c.l.b16 %v9778
  %v10116 = vunpack.c.h.b16 %v9778
  %v10117 = vunpack.c.l.b16 %v9779
  %v10118 = vunpack.c.h.b16 %v9779
  %v10119 = vunpack.c.l.b16 %v9780
  %v10120 = vunpack.c.h.b16 %v9780
  %v10121 = vunpack.c.l.b16 %v9781
  %v10122 = vunpack.c.h.b16 %v9781
  %v10123 = vunpack.c.l.b16 %v9782
  %v10124 = vunpack.c.h.b16 %v9782
  %v10125 = vunpack.c.l.b16 %v9783
  %v10126 = vunpack.c.h.b16 %v9783
  %v10127 = vunpack.c.l.b16 %v9784
  %v10128 = vunpack.c.h.b16 %v9784
  %v10129 = vunpack.c.l.b16 %v9785
  %v10130 = vunpack.c.h.b16 %v9785
  %v10131 = vunpack.c.l.b16 %v9786
  %v10132 = vunpack.c.h.b16 %v9786
  %v10133 = vunpack.c.l.b16 %v9787
  %v10134 = vunpack.c.h.b16 %v9787
  %v10135 = vunpack.c.l.b16 %v9788
  %v10136 = vunpack.c.h.b16 %v9788
  %v10137 = vunpack.c.l.b16 %v9789
  %v10138 = vunpack.c.h.b16 %v9789
  %v10139 = vunpack.c.l.b16 %v9790
  %v10140 = vunpack.c.h.b16 %v9790
  %v10141 = vunpack.c.l.b16 %v9791
  %v10142 = vunpack.c.h.b16 %v9791
  %v10143 = vunpack.c.l.b16 %v9792
  %v10144 = vunpack.c.h.b16 %v9792
  %v10145 = vunpack.c.l.b16 %v9793
  %v10146 = vunpack.c.h.b16 %v9793
  %v10147 = vunpack.c.l.b16 %v9794
  %v10148 = vunpack.c.h.b16 %v9794
  %v10149 = vunpack.c.l.b16 %v9795
  %v10150 = vunpack.c.h.b16 %v9795
  %v10151 = vunpack.c.l.b16 %v9796
  %v10152 = vunpack.c.h.b16 %v9796
  %v10153 = vunpack.c.l.b16 %v9797
  %v10154 = vunpack.c.h.b16 %v9797
  %v10155 = vunpack.c.l.b16 %v9798
  %v10156 = vunpack.c.h.b16 %v9798
  %v10157 = vunpack.c.l.b16 %v9799
  %v10158 = vunpack.c.h.b16 %v9799
  %v10159 = vunpack.c.l.b16 %v9800
  %v10160 = vunpack.c.h.b16 %v9800
  %v10161 = vunpack.c.l.b16 %v9801
  %v10162 = vunpack.c.h.b16 %v9801
  %v10163 = vunpack.c.l.b16 %v9802
  %v10164 = vunpack.c.h.b16 %v9802
  %v10165 = vunpack.c.l.b16 %v9803
  %v10166 = vunpack.c.h.b16 %v9803
  %v10167 = vunpack.c.l.b16 %v9804
  %v10168 = vunpack.c.h.b16 %v9804
  %v10169 = vunpack.c.l.b16 %v9805
  %v10170 = vunpack.c.h.b16 %v9805
  %v10171 = vunpack.c.l.b16 %v9806
  %v10172 = vunpack.c.h.b16 %v9806
  %v10173 = vunpack.c.l.b16 %v9807
  %v10174 = vunpack.c.h.b16 %v9807
  %v10175 = vunpack.c.l.b16 %v9808
  %v10176 = vunpack.c.h.b16 %v9808
  %v10177 = vunpack.c.l.b16 %v9809
  %v10178 = vunpack.c.h.b16 %v9809
  %v10179 = vunpack.c.l.b16 %v9810
  %v10180 = vunpack.c.h.b16 %v9810
  %v10181 = vunpack.c.l.b16 %v9811
  %v10182 = vunpack.c.h.b16 %v9811
  %v10183 = vunpack.c.l.b16 %v9812
  %v10184 = vunpack.c.h.b16 %v9812
  %v10185 = vunpack.c.l.b16 %v9813
  %v10186 = vunpack.c.h.b16 %v9813
  %v10187 = vunpack.c.l.b16 %v9814
  %v10188 = vunpack.c.h.b16 %v9814
  %v10189 = vunpack.c.l.b16 %v9815
  %v10190 = vunpack.c.h.b16 %v9815
  %v10191 = vunpack.c.l.b16 %v9816
  %v10192 = vunpack.c.h.b16 %v9816
  %v10193 = vunpack.c.l.b16 %v9817
  %v10194 = vunpack.c.h.b16 %v9817
  %v10195 = vunpack.c.l.b16 %v9818
  %v10196 = vunpack.c.h.b16 %v9818
  %v10197 = vunpack.c.l.b16 %v9819
  %v10198 = vunpack.c.h.b16 %v9819
  %v10199 = vunpack.c.l.b16 %v9820
  %v10200 = vunpack.c.h.b16 %v9820
  %v10201 = vunpack.c.l.b16 %v9821
  %v10202 = vunpack.c.h.b16 %v9821
  %v10203 = vunpack.c.l.b16 %v9822
  %v10204 = vunpack.c.h.b16 %v9822
  %v10205 = vunpack.c.l.b16 %v9823
  %v10206 = vunpack.c.h.b16 %v9823
  %v10207 = vunpack.c.l.b16 %v9824
  %v10208 = vunpack.c.h.b16 %v9824
  %v10209 = vunpack.c.l.b16 %v9825
  %v10210 = vunpack.c.h.b16 %v9825
  %v10211 = vunpack.c.l.b16 %v9826
  %v10212 = vunpack.c.h.b16 %v9826
  %v10213 = vunpack.c.l.b16 %v9827
  %v10214 = vunpack.c.h.b16 %v9827
  %v10215 = vunpack.c.l.b16 %v9828
  %v10216 = vunpack.c.h.b16 %v9828
  %v10217 = vunpack.c.l.b16 %v9829
  %v10218 = vunpack.c.h.b16 %v9829
  %v10219 = vunpack.c.l.b16 %v9830
  %v10220 = vunpack.c.h.b16 %v9830
  %v10221 = vunpack.c.l.b16 %v9831
  %v10222 = vunpack.c.h.b16 %v9831
  %v10223 = vunpack.c.l.b16 %v9832
  %v10224 = vunpack.c.h.b16 %v9832
  %v10225 = vunpack.c.l.b16 %v9833
  %v10226 = vunpack.c.h.b16 %v9833
  %v10227 = vunpack.c.l.b16 %v9834
  %v10228 = vunpack.c.h.b16 %v9834
  %v10229 = vunpack.c.l.b16 %v9835
  %v10230 = vunpack.c.h.b16 %v9835
  %v10231 = vunpack.c.l.b16 %v9836
  %v10232 = vunpack.c.h.b16 %v9836
  %v10233 = vunpack.c.l.b16 %v9837
  %v10234 = vunpack.c.h.b16 %v9837
  %v10235 = vunpack.c.l.b16 %v9838
  %v10236 = vunpack.c.h.b16 %v9838
  %v10237 = vunpack.c.l.b16 %v9839
  %v10238 = vunpack.c.h.b16 %v9839
  %v10239 = vunpack.c.l.b16 %v9840
  %v10240 = vunpack.c.h.b16 %v9840
  %v10241 = vunpack.c.l.b16 %v9841
  %v10242 = vunpack.c.h.b16 %v9841
  %v10243 = vunpack.c.l.b16 %v9842
  %v10244 = vunpack.c.h.b16 %v9842
  %v10245 = vunpack.c.l.b16 %v9843
  %v10246 = vunpack.c.h.b16 %v9843
  %v10247 = vunpack.c.l.b16 %v9844
  %v10248 = vunpack.c.h.b16 %v9844
  %v10249 = vunpack.c.l.b16 %v9845
  %v10250 = vunpack.c.h.b16 %v9845
  %v10251 = vunpack.c.l.b16 %v9846
  %v10252 = vunpack.c.h.b16 %v9846
  %v10253 = vunpack.c.l.b16 %v9847
  %v10254 = vunpack.c.h.b16 %v9847
  %v10255 = vunpack.c.l.b16 %v9848
  %v10256 = vunpack.c.h.b16 %v9848
  %v10257 = vunpack.c.l.b16 %v9849
  %v10258 = vunpack.c.h.b16 %v9849
  %v10259 = vunpack.c.l.b16 %v9850
  %v10260 = vunpack.c.h.b16 %v9850
  %v10261 = vunpack.c.l.b16 %v9851
  %v10262 = vunpack.c.h.b16 %v9851
  %v10263 = vunpack.c.l.b16 %v9852
  %v10264 = vunpack.c.h.b16 %v9852
  %v10265 = vunpack.c.l.b16 %v9853
  %v10266 = vunpack.c.h.b16 %v9853
  %v10267 = vunpack.c.l.b16 %v9854
  %v10268 = vunpack.c.h.b16 %v9854
  %v10269 = vunpack.c.l.b16 %v9855
  %v10270 = vunpack.c.h.b16 %v9855
  %v10271 = vunpack.c.l.b16 %v9856
  %v10272 = vunpack.c.h.b16 %v9856
  %v10273 = vunpack.c.l.b16 %v9857
  %v10274 = vunpack.c.h.b16 %v9857
  %v10275 = vunpack.c.l.b16 %v9858
  %v10276 = vunpack.c.h.b16 %v9858
  %v10277 = vunpack.c.l.b16 %v9859
  %v10278 = vunpack.c.h.b16 %v9859
  %v10279 = vunpack.c.l.b16 %v9860
  %v10280 = vunpack.c.h.b16 %v9860
  %v10281 = vunpack.c.l.b16 %v9861
  %v10282 = vunpack.c.h.b16 %v9861
  %v10283 = vunpack.c.l.b16 %v9862
  %v10284 = vunpack.c.h.b16 %v9862
  %v10285 = vunpack.c.l.b16 %v9863
  %v10286 = vunpack.c.h.b16 %v9863
  %v10287 = vunpack.c.l.b16 %v9864
  %v10288 = vunpack.c.h.b16 %v9864
  %v10289 = vunpack.c.l.b16 %v9865
  %v10290 = vunpack.c.h.b16 %v9865
  %v10291 = vunpack.c.l.b16 %v9866
  %v10292 = vunpack.c.h.b16 %v9866
  %v10293 = vunpack.c.l.b16 %v9867
  %v10294 = vunpack.c.h.b16 %v9867
  %v10295 = vunpack.c.l.b16 %v9868
  %v10296 = vunpack.c.h.b16 %v9868
  %v10297 = vunpack.c.l.b16 %v9869
  %v10298 = vunpack.c.h.b16 %v9869
  %v10299 = vunpack.c.l.b16 %v9870
  %v10300 = vunpack.c.h.b16 %v9870
  %v10301 = vunpack.c.l.b16 %v9871
  %v10302 = vunpack.c.h.b16 %v9871
  %v10303 = vunpack.c.l.b16 %v9872
  %v10304 = vunpack.c.h.b16 %v9872
  %v10305 = vunpack.c.l.b16 %v9873
  %v10306 = vunpack.c.h.b16 %v9873
  %v10307 = vunpack.c.l.b16 %v9874
  %v10308 = vunpack.c.h.b16 %v9874
  %v10309 = vunpack.c.l.b16 %v9875
  %v10310 = vunpack.c.h.b16 %v9875
  %v10311 = vunpack.c.l.b16 %v9876
  %v10312 = vunpack.c.h.b16 %v9876
  %v10313 = vunpack.c.l.b16 %v9877
  %v10314 = vunpack.c.h.b16 %v9877
  %v10315 = vunpack.c.l.b16 %v9878
  %v10316 = vunpack.c.h.b16 %v9878
  %v10317 = vunpack.c.l.b16 %v9879
  %v10318 = vunpack.c.h.b16 %v9879
  %v10319 = vunpack.c.l.b16 %v9880
  %v10320 = vunpack.c.h.b16 %v9880
  %v10321 = vunpack.c.l.b16 %v9881
  %v10322 = vunpack.c.h.b16 %v9881
  %v10323 = vunpack.c.l.b16 %v9882
  %v10324 = vunpack.c.h.b16 %v9882
  %v10325 = vunpack.c.l.b16 %v9883
  %v10326 = vunpack.c.h.b16 %v9883
  %v10327 = vunpack.c.l.b16 %v9884
  %v10328 = vunpack.c.h.b16 %v9884
  %v10329 = vunpack.c.l.b16 %v9885
  %v10330 = vunpack.c.h.b16 %v9885
  %v10331 = vunpack.c.l.b16 %v9886
  %v10332 = vunpack.c.h.b16 %v9886
  %v10333 = vunpack.c.l.b16 %v9887
  %v10334 = vunpack.c.h.b16 %v9887
  %v10335 = vunpack.c.l.b16 %v9888
  %v10336 = vunpack.c.h.b16 %v9888
  %v10337 = vpack.c.b16 %v10085, %v10081
  %v10338 = vpack.c.b16 %v10086, %v10082
  %v10339 = vpack.c.b16 %v10087, %v10083
  %v10340 = vpack.c.b16 %v10088, %v10084
  %v10341 = vpack.c.b16 %v10093, %v10089
  %v10342 = vpack.c.b16 %v10094, %v10090
  %v10343 = vpack.c.b16 %v10095, %v10091
  %v10344 = vpack.c.b16 %v10096, %v10092
  %v10345 = vpack.c.b16 %v10101, %v10097
  %v10346 = vpack.c.b16 %v10102, %v10098
  %v10347 = vpack.c.b16 %v10103, %v10099
  %v10348 = vpack.c.b16 %v10104, %v10100
  %v10349 = vpack.c.b16 %v10109, %v10105
  %v10350 = vpack.c.b16 %v10110, %v10106
  %v10351 = vpack.c.b16 %v10111, %v10107
  %v10352 = vpack.c.b16 %v10112, %v10108
  %v10353 = vpack.c.b16 %v10117, %v10113
  %v10354 = vpack.c.b16 %v10118, %v10114
  %v10355 = vpack.c.b16 %v10119, %v10115
  %v10356 = vpack.c.b16 %v10120, %v10116
  %v10357 = vpack.c.b16 %v10125, %v10121
  %v10358 = vpack.c.b16 %v10126, %v10122
  %v10359 = vpack.c.b16 %v10127, %v10123
  %v10360 = vpack.c.b16 %v10128, %v10124
  %v10361 = vpack.c.b16 %v10133, %v10129
  %v10362 = vpack.c.b16 %v10134, %v10130
  %v10363 = vpack.c.b16 %v10135, %v10131
  %v10364 = vpack.c.b16 %v10136, %v10132
  %v10365 = vpack.c.b16 %v10141, %v10137
  %v10366 = vpack.c.b16 %v10142, %v10138
  %v10367 = vpack.c.b16 %v10143, %v10139
  %v10368 = vpack.c.b16 %v10144, %v10140
  %v10369 = vpack.c.b16 %v10149, %v10145
  %v10370 = vpack.c.b16 %v10150, %v10146
  %v10371 = vpack.c.b16 %v10151, %v10147
  %v10372 = vpack.c.b16 %v10152, %v10148
  %v10373 = vpack.c.b16 %v10157, %v10153
  %v10374 = vpack.c.b16 %v10158, %v10154
  %v10375 = vpack.c.b16 %v10159, %v10155
  %v10376 = vpack.c.b16 %v10160, %v10156
  %v10377 = vpack.c.b16 %v10165, %v10161
  %v10378 = vpack.c.b16 %v10166, %v10162
  %v10379 = vpack.c.b16 %v10167, %v10163
  %v10380 = vpack.c.b16 %v10168, %v10164
  %v10381 = vpack.c.b16 %v10173, %v10169
  %v10382 = vpack.c.b16 %v10174, %v10170
  %v10383 = vpack.c.b16 %v10175, %v10171
  %v10384 = vpack.c.b16 %v10176, %v10172
  %v10385 = vpack.c.b16 %v10181, %v10177
  %v10386 = vpack.c.b16 %v10182, %v10178
  %v10387 = vpack.c.b16 %v10183, %v10179
  %v10388 = vpack.c.b16 %v10184, %v10180
  %v10389 = vpack.c.b16 %v10189, %v10185
  %v10390 = vpack.c.b16 %v10190, %v10186
  %v10391 = vpack.c.b16 %v10191, %v10187
  %v10392 = vpack.c.b16 %v10192, %v10188
  %v10393 = vpack.c.b16 %v10197, %v10193
  %v10394 = vpack.c.b16 %v10198, %v10194
  %v10395 = vpack.c.b16 %v10199, %v10195
  %v10396 = vpack.c.b16 %v10200, %v10196
  %v10397 = vpack.c.b16 %v10205, %v10201
  %v10398 = vpack.c.b16 %v10206, %v10202
  %v10399 = vpack.c.b16 %v10207, %v10203
  %v10400 = vpack.c.b16 %v10208, %v10204
  %v10401 = vpack.c.b16 %v10213, %v10209
  %v10402 = vpack.c.b16 %v10214, %v10210
  %v10403 = vpack.c.b16 %v10215, %v10211
  %v10404 = vpack.c.b16 %v10216, %v10212
  %v10405 = vpack.c.b16 %v10221, %v10217
  %v10406 = vpack.c.b16 %v10222, %v10218
  %v10407 = vpack.c.b16 %v10223, %v10219
  %v10408 = vpack.c.b16 %v10224, %v10220
  %v10409 = vpack.c.b16 %v10229, %v10225
  %v10410 = vpack.c.b16 %v10230, %v10226
  %v10411 = vpack.c.b16 %v10231, %v10227
  %v10412 = vpack.c.b16 %v10232, %v10228
  %v10413 = vpack.c.b16 %v10237, %v10233
  %v10414 = vpack.c.b16 %v10238, %v10234
  %v10415 = vpack.c.b16 %v10239, %v10235
  %v10416 = vpack.c.b16 %v10240, %v10236
  %v10417 = vpack.c.b16 %v10245, %v10241
  %v10418 = vpack.c.b16 %v10246, %v10242
  %v10419 = vpack.c.b16 %v10247, %v10243
  %v10420 = vpack.c.b16 %v10248, %v10244
  %v10421 = vpack.c.b16 %v10253, %v10249
  %v10422 = vpack.c.b16 %v10254, %v10250
  %v10423 = vpack.c.b16 %v10255, %v10251
  %v10424 = vpack.c.b16 %v10256, %v10252
  %v10425 = vpack.c.b16 %v10261, %v10257
  %v10426 = vpack.c.b16 %v10262, %v10258
  %v10427 = vpack.c.b16 %v10263, %v10259
  %v10428 = vpack.c.b16 %v10264, %v10260
  %v10429 = vpack.c.b16 %v10269, %v10265
  %v10430 = vpack.c.b16 %v10270, %v10266
  %v10431 = vpack.c.b16 %v10271, %v10267
  %v10432 = vpack.c.b16 %v10272, %v10268
  %v10433 = vpack.c.b16 %v10277, %v10273
  %v10434 = vpack.c.b16 %v10278, %v10274
  %v10435 = vpack.c.b16 %v10279, %v10275
  %v10436 = vpack.c.b16 %v10280, %v10276
  %v10437 = vpack.c.b16 %v10285, %v10281
  %v10438 = vpack.c.b16 %v10286, %v10282
  %v10439 = vpack.c.b16 %v10287, %v10283
  %v10440 = vpack.c.b16 %v10288, %v10284
  %v10441 = vpack.c.b16 %v10293, %v10289
  %v10442 = vpack.c.b16 %v10294, %v10290
  %v10443 = vpack.c.b16 %v10295, %v10291
  %v10444 = vpack.c.b16 %v10296, %v10292
  %v10445 = vpack.c.b16 %v10301, %v10297
  %v10446 = vpack.c.b16 %v10302, %v10298
  %v10447 = vpack.c.b16 %v10303, %v10299
  %v10448 = vpack.c.b16 %v10304, %v10300
  %v10449 = vpack.c.b16 %v10309, %v10305
  %v10450 = vpack.c.b16 %v10310, %v10306
  %v10451 = vpack.c.b16 %v10311, %v10307
  %v10452 = vpack.c.b16 %v10312, %v10308
  %v10453 = vpack.c.b16 %v10317, %v10313
  %v10454 = vpack.c.b16 %v10318, %v10314
  %v10455 = vpack.c.b16 %v10319, %v10315
  %v10456 = vpack.c.b16 %v10320, %v10316
  %v10457 = vpack.c.b16 %v10325, %v10321
  %v10458 = vpack.c.b16 %v10326, %v10322
  %v10459 = vpack.c.b16 %v10327, %v10323
  %v10460 = vpack.c.b16 %v10328, %v10324
  %v10461 = vpack.c.b16 %v10333, %v10329
  %v10462 = vpack.c.b16 %v10334, %v10330
  %v10463 = vpack.c.b16 %v10335, %v10331
  %v10464 = vpack.c.b16 %v10336, %v10332
  %10593 = vmatprep.subr.bf16.mxu0 %v10366
  %10594 = vmatpush1.bf16.msra.mxu0 %v10365
  %10595 = vmatprep.subr.bf16.mxu0 %v10362
  %10596 = vmatpush1.bf16.msra.mxu0 %v10361
  %10597 = vmatprep.subr.bf16.mxu0 %v10358
  %10598 = vmatpush1.bf16.msra.mxu0 %v10357
  %10599 = vmatprep.subr.bf16.mxu0 %v10354
  %10600 = vmatpush1.bf16.msra.mxu0 %v10353
  %10601 = vmatprep.subr.bf16.mxu0 %v10350
  %10602 = vmatpush1.bf16.msra.mxu0 %v10349
  %10603 = vmatprep.subr.bf16.mxu0 %v10346
  %10604 = vmatpush1.bf16.msra.mxu0 %v10345
  %10605 = vmatprep.subr.bf16.mxu0 %v10342
  %10606 = vmatpush1.bf16.msra.mxu0 %v10341
  %10607 = vmatprep.subr.bf16.mxu0 %v10338
  %10608 = vmatpush1.bf16.msra.mxu0 %v10337
  %10609 = vmatprep.subr.bf16.mxu0 %v10398
  %10610 = vmatpush2.bf16.msra.mxu0 %v10397
  %10611 = vmatprep.subr.bf16.mxu0 %v10394
  %10612 = vmatpush2.bf16.msra.mxu0 %v10393
  %10613 = vmatprep.subr.bf16.mxu0 %v10390
  %10614 = vmatpush2.bf16.msra.mxu0 %v10389
  %10615 = vmatprep.subr.bf16.mxu0 %v10386
  %10616 = vmatpush2.bf16.msra.mxu0 %v10385
  %10617 = vmatprep.subr.bf16.mxu0 %v10382
  %10618 = vmatpush2.bf16.msra.mxu0 %v10381
  %10619 = vmatprep.subr.bf16.mxu0 %v10378
  %10620 = vmatpush2.bf16.msra.mxu0 %v10377
  %10621 = vmatprep.subr.bf16.mxu0 %v10374
  %10622 = vmatpush2.bf16.msra.mxu0 %v10373
  %10623 = vmatprep.subr.bf16.mxu0 %v10370
  %10624 = vmatpush2.bf16.msra.mxu0 %v10369
  %10625 = vmatprep.mubr.bf16.mxu0 %v9922
  %10626 = vmatmul.mubr.bf16.gmra.mxu0 %v9921
  %v10627 = vpop.f32.mrf.mxu0
  %v10628 = vadd.f32 0.0, %v10627
  %v10629 = vpop.f32.mrf.mxu0
  %v10630 = vadd.f32 0.0, %v10629
  %v10631 = vpop.f32.mrf.mxu0
  %v10632 = vadd.f32 0.0, %v10631
  %v10633 = vpop.f32.mrf.mxu0
  %v10634 = vadd.f32 0.0, %v10633
  %10635 = vmatprep.mubr.bf16.mxu0 %v9926
  %10636 = vmatmul.mubr.bf16.gmra.mxu0 %v9925
  %v10637 = vpop.f32.mrf.mxu0
  %v10638 = vadd.f32 0.0, %v10637
  %v10639 = vpop.f32.mrf.mxu0
  %v10640 = vadd.f32 0.0, %v10639
  %v10641 = vpop.f32.mrf.mxu0
  %v10642 = vadd.f32 0.0, %v10641
  %v10643 = vpop.f32.mrf.mxu0
  %v10644 = vadd.f32 0.0, %v10643
  %10645 = vmatprep.mubr.bf16.mxu0 %v9930
  %10646 = vmatmul.mubr.bf16.gmra.mxu0 %v9929
  %v10647 = vpop.f32.mrf.mxu0
  %v10648 = vadd.f32 0.0, %v10647
  %v10649 = vpop.f32.mrf.mxu0
  %v10650 = vadd.f32 0.0, %v10649
  %v10651 = vpop.f32.mrf.mxu0
  %v10652 = vadd.f32 0.0, %v10651
  %v10653 = vpop.f32.mrf.mxu0
  %v10654 = vadd.f32 0.0, %v10653
  %10655 = vmatprep.mubr.bf16.mxu0 %v9934
  %10656 = vmatmul.mubr.bf16.gmra.mxu0 %v9933
  %v10657 = vpop.f32.mrf.mxu0
  %v10658 = vadd.f32 0.0, %v10657
  %v10659 = vpop.f32.mrf.mxu0
  %v10660 = vadd.f32 0.0, %v10659
  %v10661 = vpop.f32.mrf.mxu0
  %v10662 = vadd.f32 0.0, %v10661
  %v10663 = vpop.f32.mrf.mxu0
  %v10664 = vadd.f32 0.0, %v10663
  %10665 = vdwg.mxu0
  %10666 = vmatprep.subr.bf16.mxu0 %v10430
  %10667 = vmatpush1.bf16.msra.mxu0 %v10429
  %10668 = vmatprep.subr.bf16.mxu0 %v10426
  %10669 = vmatpush1.bf16.msra.mxu0 %v10425
  %10670 = vmatprep.subr.bf16.mxu0 %v10422
  %10671 = vmatpush1.bf16.msra.mxu0 %v10421
  %10672 = vmatprep.subr.bf16.mxu0 %v10418
  %10673 = vmatpush1.bf16.msra.mxu0 %v10417
  %10674 = vmatprep.subr.bf16.mxu0 %v10414
  %10675 = vmatpush1.bf16.msra.mxu0 %v10413
  %10676 = vmatprep.subr.bf16.mxu0 %v10410
  %10677 = vmatpush1.bf16.msra.mxu0 %v10409
  %10678 = vmatprep.subr.bf16.mxu0 %v10406
  %10679 = vmatpush1.bf16.msra.mxu0 %v10405
  %10680 = vmatprep.subr.bf16.mxu0 %v10402
  %10681 = vmatpush1.bf16.msra.mxu0 %v10401
  %10682 = vmatprep.subr.bf16.mxu0 %v10462
  %10683 = vmatpush2.bf16.msra.mxu0 %v10461
  %10684 = vmatprep.subr.bf16.mxu0 %v10458
  %10685 = vmatpush2.bf16.msra.mxu0 %v10457
  %10686 = vmatprep.subr.bf16.mxu0 %v10454
  %10687 = vmatpush2.bf16.msra.mxu0 %v10453
  %10688 = vmatprep.subr.bf16.mxu0 %v10450
  %10689 = vmatpush2.bf16.msra.mxu0 %v10449
  %10690 = vmatprep.subr.bf16.mxu0 %v10446
  %10691 = vmatpush2.bf16.msra.mxu0 %v10445
  %10692 = vmatprep.subr.bf16.mxu0 %v10442
  %10693 = vmatpush2.bf16.msra.mxu0 %v10441
  %10694 = vmatprep.subr.bf16.mxu0 %v10438
  %10695 = vmatpush2.bf16.msra.mxu0 %v10437
  %10696 = vmatprep.subr.bf16.mxu0 %v10434
  %10697 = vmatpush2.bf16.msra.mxu0 %v10433
  %10698 = vmatprep.mubr.bf16.mxu0 %v9924
  %10699 = vmatmul.mubr.bf16.gmra.mxu0 %v9923
  %v10700 = vpop.f32.mrf.mxu0
  %v10701 = vadd.f32 %v10628, %v10700
  %v10702 = vpop.f32.mrf.mxu0
  %v10703 = vadd.f32 %v10630, %v10702
  %v10704 = vpop.f32.mrf.mxu0
  %v10705 = vadd.f32 %v10632, %v10704
  %v10706 = vpop.f32.mrf.mxu0
  %v10707 = vadd.f32 %v10634, %v10706
  %10708 = vmatprep.mubr.bf16.mxu0 %v9928
  %10709 = vmatmul.mubr.bf16.gmra.mxu0 %v9927
  %v10710 = vpop.f32.mrf.mxu0
  %v10711 = vadd.f32 %v10638, %v10710
  %v10712 = vpop.f32.mrf.mxu0
  %v10713 = vadd.f32 %v10640, %v10712
  %v10714 = vpop.f32.mrf.mxu0
  %v10715 = vadd.f32 %v10642, %v10714
  %v10716 = vpop.f32.mrf.mxu0
  %v10717 = vadd.f32 %v10644, %v10716
  %10718 = vmatprep.mubr.bf16.mxu0 %v9932
  %10719 = vmatmul.mubr.bf16.gmra.mxu0 %v9931
  %v10720 = vpop.f32.mrf.mxu0
  %v10721 = vadd.f32 %v10648, %v10720
  %v10722 = vpop.f32.mrf.mxu0
  %v10723 = vadd.f32 %v10650, %v10722
  %v10724 = vpop.f32.mrf.mxu0
  %v10725 = vadd.f32 %v10652, %v10724
  %v10726 = vpop.f32.mrf.mxu0
  %v10727 = vadd.f32 %v10654, %v10726
  %10728 = vmatprep.mubr.bf16.mxu0 %v9936
  %10729 = vmatmul.mubr.bf16.gmra.mxu0 %v9935
  %v10730 = vpop.f32.mrf.mxu0
  %v10731 = vadd.f32 %v10658, %v10730
  %v10732 = vpop.f32.mrf.mxu0
  %v10733 = vadd.f32 %v10660, %v10732
  %v10734 = vpop.f32.mrf.mxu0
  %v10735 = vadd.f32 %v10662, %v10734
  %v10736 = vpop.f32.mrf.mxu0
  %v10737 = vadd.f32 %v10664, %v10736
  %10738 = vdwg.mxu0
  %10739 = vmatprep.subr.bf16.mxu0 %v10368
  %10740 = vmatpush1.bf16.msra.mxu0 %v10367
  %10741 = vmatprep.subr.bf16.mxu0 %v10364
  %10742 = vmatpush1.bf16.msra.mxu0 %v10363
  %10743 = vmatprep.subr.bf16.mxu0 %v10360
  %10744 = vmatpush1.bf16.msra.mxu0 %v10359
  %10745 = vmatprep.subr.bf16.mxu0 %v10356
  %10746 = vmatpush1.bf16.msra.mxu0 %v10355
  %10747 = vmatprep.subr.bf16.mxu0 %v10352
  %10748 = vmatpush1.bf16.msra.mxu0 %v10351
  %10749 = vmatprep.subr.bf16.mxu0 %v10348
  %10750 = vmatpush1.bf16.msra.mxu0 %v10347
  %10751 = vmatprep.subr.bf16.mxu0 %v10344
  %10752 = vmatpush1.bf16.msra.mxu0 %v10343
  %10753 = vmatprep.subr.bf16.mxu0 %v10340
  %10754 = vmatpush1.bf16.msra.mxu0 %v10339
  %10755 = vmatprep.subr.bf16.mxu0 %v10400
  %10756 = vmatpush2.bf16.msra.mxu0 %v10399
  %10757 = vmatprep.subr.bf16.mxu0 %v10396
  %10758 = vmatpush2.bf16.msra.mxu0 %v10395
  %10759 = vmatprep.subr.bf16.mxu0 %v10392
  %10760 = vmatpush2.bf16.msra.mxu0 %v10391
  %10761 = vmatprep.subr.bf16.mxu0 %v10388
  %10762 = vmatpush2.bf16.msra.mxu0 %v10387
  %10763 = vmatprep.subr.bf16.mxu0 %v10384
  %10764 = vmatpush2.bf16.msra.mxu0 %v10383
  %10765 = vmatprep.subr.bf16.mxu0 %v10380
  %10766 = vmatpush2.bf16.msra.mxu0 %v10379
  %10767 = vmatprep.subr.bf16.mxu0 %v10376
  %10768 = vmatpush2.bf16.msra.mxu0 %v10375
  %10769 = vmatprep.subr.bf16.mxu0 %v10372
  %10770 = vmatpush2.bf16.msra.mxu0 %v10371
  %10771 = vmatprep.mubr.bf16.mxu0 %v9922
  %10772 = vmatmul.mubr.bf16.gmra.mxu0 %v9921
  %v10773 = vpop.f32.mrf.mxu0
  %v10774 = vadd.f32 0.0, %v10773
  %v10775 = vpop.f32.mrf.mxu0
  %v10776 = vadd.f32 0.0, %v10775
  %v10777 = vpop.f32.mrf.mxu0
  %v10778 = vadd.f32 0.0, %v10777
  %v10779 = vpop.f32.mrf.mxu0
  %v10780 = vadd.f32 0.0, %v10779
  %10781 = vmatprep.mubr.bf16.mxu0 %v9926
  %10782 = vmatmul.mubr.bf16.gmra.mxu0 %v9925
  %v10783 = vpop.f32.mrf.mxu0
  %v10784 = vadd.f32 0.0, %v10783
  %v10785 = vpop.f32.mrf.mxu0
  %v10786 = vadd.f32 0.0, %v10785
  %v10787 = vpop.f32.mrf.mxu0
  %v10788 = vadd.f32 0.0, %v10787
  %v10789 = vpop.f32.mrf.mxu0
  %v10790 = vadd.f32 0.0, %v10789
  %10791 = vmatprep.mubr.bf16.mxu0 %v9930
  %10792 = vmatmul.mubr.bf16.gmra.mxu0 %v9929
  %v10793 = vpop.f32.mrf.mxu0
  %v10794 = vadd.f32 0.0, %v10793
  %v10795 = vpop.f32.mrf.mxu0
  %v10796 = vadd.f32 0.0, %v10795
  %v10797 = vpop.f32.mrf.mxu0
  %v10798 = vadd.f32 0.0, %v10797
  %v10799 = vpop.f32.mrf.mxu0
  %v10800 = vadd.f32 0.0, %v10799
  %10801 = vmatprep.mubr.bf16.mxu0 %v9934
  %10802 = vmatmul.mubr.bf16.gmra.mxu0 %v9933
  %v10803 = vpop.f32.mrf.mxu0
  %v10804 = vadd.f32 0.0, %v10803
  %v10805 = vpop.f32.mrf.mxu0
  %v10806 = vadd.f32 0.0, %v10805
  %v10807 = vpop.f32.mrf.mxu0
  %v10808 = vadd.f32 0.0, %v10807
  %v10809 = vpop.f32.mrf.mxu0
  %v10810 = vadd.f32 0.0, %v10809
  %10811 = vdwg.mxu0
  %10812 = vmatprep.subr.bf16.mxu0 %v10432
  %10813 = vmatpush1.bf16.msra.mxu0 %v10431
  %10814 = vmatprep.subr.bf16.mxu0 %v10428
  %10815 = vmatpush1.bf16.msra.mxu0 %v10427
  %10816 = vmatprep.subr.bf16.mxu0 %v10424
  %10817 = vmatpush1.bf16.msra.mxu0 %v10423
  %10818 = vmatprep.subr.bf16.mxu0 %v10420
  %10819 = vmatpush1.bf16.msra.mxu0 %v10419
  %10820 = vmatprep.subr.bf16.mxu0 %v10416
  %10821 = vmatpush1.bf16.msra.mxu0 %v10415
  %10822 = vmatprep.subr.bf16.mxu0 %v10412
  %10823 = vmatpush1.bf16.msra.mxu0 %v10411
  %10824 = vmatprep.subr.bf16.mxu0 %v10408
  %10825 = vmatpush1.bf16.msra.mxu0 %v10407
  %10826 = vmatprep.subr.bf16.mxu0 %v10404
  %10827 = vmatpush1.bf16.msra.mxu0 %v10403
  %10828 = vmatprep.subr.bf16.mxu0 %v10464
  %10829 = vmatpush2.bf16.msra.mxu0 %v10463
  %10830 = vmatprep.subr.bf16.mxu0 %v10460
  %10831 = vmatpush2.bf16.msra.mxu0 %v10459
  %10832 = vmatprep.subr.bf16.mxu0 %v10456
  %10833 = vmatpush2.bf16.msra.mxu0 %v10455
  %10834 = vmatprep.subr.bf16.mxu0 %v10452
  %10835 = vmatpush2.bf16.msra.mxu0 %v10451
  %10836 = vmatprep.subr.bf16.mxu0 %v10448
  %10837 = vmatpush2.bf16.msra.mxu0 %v10447
  %10838 = vmatprep.subr.bf16.mxu0 %v10444
  %10839 = vmatpush2.bf16.msra.mxu0 %v10443
  %10840 = vmatprep.subr.bf16.mxu0 %v10440
  %10841 = vmatpush2.bf16.msra.mxu0 %v10439
  %10842 = vmatprep.subr.bf16.mxu0 %v10436
  %10843 = vmatpush2.bf16.msra.mxu0 %v10435
  %10844 = vmatprep.mubr.bf16.mxu0 %v9924
  %10845 = vmatmul.mubr.bf16.gmra.mxu0 %v9923
  %v10846 = vpop.f32.mrf.mxu0
  %v10847 = vadd.f32 %v10774, %v10846
  %v10848 = vpop.f32.mrf.mxu0
  %v10849 = vadd.f32 %v10776, %v10848
  %v10850 = vpop.f32.mrf.mxu0
  %v10851 = vadd.f32 %v10778, %v10850
  %v10852 = vpop.f32.mrf.mxu0
  %v10853 = vadd.f32 %v10780, %v10852
  %10854 = vmatprep.mubr.bf16.mxu0 %v9928
  %10855 = vmatmul.mubr.bf16.gmra.mxu0 %v9927
  %v10856 = vpop.f32.mrf.mxu0
  %v10857 = vadd.f32 %v10784, %v10856
  %v10858 = vpop.f32.mrf.mxu0
  %v10859 = vadd.f32 %v10786, %v10858
  %v10860 = vpop.f32.mrf.mxu0
  %v10861 = vadd.f32 %v10788, %v10860
  %v10862 = vpop.f32.mrf.mxu0
  %v10863 = vadd.f32 %v10790, %v10862
  %10864 = vmatprep.mubr.bf16.mxu0 %v9932
  %10865 = vmatmul.mubr.bf16.gmra.mxu0 %v9931
  %v10866 = vpop.f32.mrf.mxu0
  %v10867 = vadd.f32 %v10794, %v10866
  %v10868 = vpop.f32.mrf.mxu0
  %v10869 = vadd.f32 %v10796, %v10868
  %v10870 = vpop.f32.mrf.mxu0
  %v10871 = vadd.f32 %v10798, %v10870
  %v10872 = vpop.f32.mrf.mxu0
  %v10873 = vadd.f32 %v10800, %v10872
  %10874 = vmatprep.mubr.bf16.mxu0 %v9936
  %10875 = vmatmul.mubr.bf16.gmra.mxu0 %v9935
  %v10876 = vpop.f32.mrf.mxu0
  %v10877 = vadd.f32 %v10804, %v10876
  %v10878 = vpop.f32.mrf.mxu0
  %v10879 = vadd.f32 %v10806, %v10878
  %v10880 = vpop.f32.mrf.mxu0
  %v10881 = vadd.f32 %v10808, %v10880
  %v10882 = vpop.f32.mrf.mxu0
  %v10883 = vadd.f32 %v10810, %v10882
  %10884 = vdwg.mxu0
  %v10885 = vadd.f32 %v9597, %v10701
  %v10886 = vadd.f32 %v9598, %v10703
  %v10887 = vadd.f32 %v9599, %v10847
  %v10888 = vadd.f32 %v9600, %v10849
  %v10889 = vadd.f32 %v9601, %v10705
  %v10890 = vadd.f32 %v9602, %v10707
  %v10891 = vadd.f32 %v9603, %v10851
  %v10892 = vadd.f32 %v9604, %v10853
  %v10893 = vadd.f32 %v9605, %v10711
  %v10894 = vadd.f32 %v9606, %v10713
  %v10895 = vadd.f32 %v9607, %v10857
  %v10896 = vadd.f32 %v9608, %v10859
  %v10897 = vadd.f32 %v9609, %v10715
  %v10898 = vadd.f32 %v9610, %v10717
  %v10899 = vadd.f32 %v9611, %v10861
  %v10900 = vadd.f32 %v9612, %v10863
  %v10901 = vadd.f32 %v9613, %v10721
  %v10902 = vadd.f32 %v9614, %v10723
  %v10903 = vadd.f32 %v9615, %v10867
  %v10904 = vadd.f32 %v9616, %v10869
  %v10905 = vadd.f32 %v9617, %v10725
  %v10906 = vadd.f32 %v9618, %v10727
  %v10907 = vadd.f32 %v9619, %v10871
  %v10908 = vadd.f32 %v9620, %v10873
  %v10909 = vadd.f32 %v9621, %v10731
  %v10910 = vadd.f32 %v9622, %v10733
  %v10911 = vadd.f32 %v9623, %v10877
  %v10912 = vadd.f32 %v9624, %v10879
  %v10913 = vadd.f32 %v9625, %v10735
  %v10914 = vadd.f32 %v9626, %v10737
  %v10915 = vadd.f32 %v9627, %v10881
  %v10916 = vadd.f32 %v9628, %v10883
  %10917 = vst [vmem:[#allocation2] sm:$0xff] %v10885
  %10918 = vst [vmem:[#allocation2 + $0x8] sm:$0xff] %v10886
  %10919 = vst [vmem:[#allocation2 + $0x10] sm:$0xff] %v10887
  %10920 = vst [vmem:[#allocation2 + $0x18] sm:$0xff] %v10888
  %10921 = vst [vmem:[#allocation2 + $0x20] sm:$0xff] %v10889
  %10922 = vst [vmem:[#allocation2 + $0x28] sm:$0xff] %v10890
  %10923 = vst [vmem:[#allocation2 + $0x30] sm:$0xff] %v10891
  %10924 = vst [vmem:[#allocation2 + $0x38] sm:$0xff] %v10892
  %10925 = vst [vmem:[#allocation2 + $0x40] sm:$0xff] %v10893
  %10926 = vst [vmem:[#allocation2 + $0x48] sm:$0xff] %v10894
  %10927 = vst [vmem:[#allocation2 + $0x50] sm:$0xff] %v10895
  %10928 = vst [vmem:[#allocation2 + $0x58] sm:$0xff] %v10896
  %10929 = vst [vmem:[#allocation2 + $0x60] sm:$0xff] %v10897
  %10930 = vst [vmem:[#allocation2 + $0x68] sm:$0xff] %v10898
  %10931 = vst [vmem:[#allocation2 + $0x70] sm:$0xff] %v10899
  %10932 = vst [vmem:[#allocation2 + $0x78] sm:$0xff] %v10900
  %10933 = vst [vmem:[#allocation2 + $0x80] sm:$0xff] %v10901
  %10934 = vst [vmem:[#allocation2 + $0x88] sm:$0xff] %v10902
  %10935 = vst [vmem:[#allocation2 + $0x90] sm:$0xff] %v10903
  %10936 = vst [vmem:[#allocation2 + $0x98] sm:$0xff] %v10904
  %10937 = vst [vmem:[#allocation2 + $0xa0] sm:$0xff] %v10905
  %10938 = vst [vmem:[#allocation2 + $0xa8] sm:$0xff] %v10906
  %10939 = vst [vmem:[#allocation2 + $0xb0] sm:$0xff] %v10907
  %10940 = vst [vmem:[#allocation2 + $0xb8] sm:$0xff] %v10908
  %10941 = vst [vmem:[#allocation2 + $0xc0] sm:$0xff] %v10909
  %10942 = vst [vmem:[#allocation2 + $0xc8] sm:$0xff] %v10910
  %10943 = vst [vmem:[#allocation2 + $0xd0] sm:$0xff] %v10911
  %10944 = vst [vmem:[#allocation2 + $0xd8] sm:$0xff] %v10912
  %10945 = vst [vmem:[#allocation2 + $0xe0] sm:$0xff] %v10913
  %10946 = vst [vmem:[#allocation2 + $0xe8] sm:$0xff] %v10914
  %10947 = vst [vmem:[#allocation2 + $0xf0] sm:$0xff] %v10915
  %10948 = vst [vmem:[#allocation2 + $0xf8] sm:$0xff] %v10916
  %v10949 = vld [vmem:[#allocation2] sm:$0xff]
  %v10950 = vld [vmem:[#allocation2 + $0x8] sm:$0xff]
  %v10951 = vld [vmem:[#allocation2 + $0x10] sm:$0xff]
  %v10952 = vld [vmem:[#allocation2 + $0x18] sm:$0xff]
  %v10953 = vld [vmem:[#allocation2 + $0x20] sm:$0xff]
  %v10954 = vld [vmem:[#allocation2 + $0x28] sm:$0xff]
  %v10955 = vld [vmem:[#allocation2 + $0x30] sm:$0xff]
  %v10956 = vld [vmem:[#allocation2 + $0x38] sm:$0xff]
  %v10957 = vld [vmem:[#allocation2 + $0x40] sm:$0xff]
  %v10958 = vld [vmem:[#allocation2 + $0x48] sm:$0xff]
  %v10959 = vld [vmem:[#allocation2 + $0x50] sm:$0xff]
  %v10960 = vld [vmem:[#allocation2 + $0x58] sm:$0xff]
  %v10961 = vld [vmem:[#allocation2 + $0x60] sm:$0xff]
  %v10962 = vld [vmem:[#allocation2 + $0x68] sm:$0xff]
  %v10963 = vld [vmem:[#allocation2 + $0x70] sm:$0xff]
  %v10964 = vld [vmem:[#allocation2 + $0x78] sm:$0xff]
  %v10965 = vld [vmem:[#allocation2 + $0x80] sm:$0xff]
  %v10966 = vld [vmem:[#allocation2 + $0x88] sm:$0xff]
  %v10967 = vld [vmem:[#allocation2 + $0x90] sm:$0xff]
  %v10968 = vld [vmem:[#allocation2 + $0x98] sm:$0xff]
  %v10969 = vld [vmem:[#allocation2 + $0xa0] sm:$0xff]
  %v10970 = vld [vmem:[#allocation2 + $0xa8] sm:$0xff]
  %v10971 = vld [vmem:[#allocation2 + $0xb0] sm:$0xff]
  %v10972 = vld [vmem:[#allocation2 + $0xb8] sm:$0xff]
  %v10973 = vld [vmem:[#allocation2 + $0xc0] sm:$0xff]
  %v10974 = vld [vmem:[#allocation2 + $0xc8] sm:$0xff]
  %v10975 = vld [vmem:[#allocation2 + $0xd0] sm:$0xff]
  %v10976 = vld [vmem:[#allocation2 + $0xd8] sm:$0xff]
  %v10977 = vld [vmem:[#allocation2 + $0xe0] sm:$0xff]
  %v10978 = vld [vmem:[#allocation2 + $0xe8] sm:$0xff]
  %v10979 = vld [vmem:[#allocation2 + $0xf0] sm:$0xff]
  %v10980 = vld [vmem:[#allocation2 + $0xf8] sm:$0xff]
  %v10981 = vld [vmem:[%s4] sm:$0xf]
  %v10983 = vlaneseq
  %v10984 = vshrl.u32 %v10983, 7
  %v10985 = vsub.s32 0, %v10984
  %v10986 = vrot.slane %v10981, %v10985
  %v10987 = vlaneseq
  %v10988 = vshrl.u32 %v10987, 7
  %v10989 = vsub.s32 1, %v10988
  %v10990 = vrot.slane %v10981, %v10989
  %v10991 = vlaneseq
  %v10992 = vshrl.u32 %v10991, 7
  %v10993 = vsub.s32 2, %v10992
  %v10994 = vrot.slane %v10981, %v10993
  %v10995 = vlaneseq
  %v10996 = vshrl.u32 %v10995, 7
  %v10997 = vsub.s32 3, %v10996
  %v10998 = vrot.slane %v10981, %v10997
  %v11003 = vadd.f32 %v10949, %v10986
  %v11004 = vadd.f32 %v10950, %v10990
  %v11005 = vadd.f32 %v10951, %v10994
  %v11006 = vadd.f32 %v10952, %v10998
  %v11007 = vadd.f32 %v10953, %v10986
  %v11008 = vadd.f32 %v10954, %v10990
  %v11009 = vadd.f32 %v10955, %v10994
  %v11010 = vadd.f32 %v10956, %v10998
  %v11011 = vadd.f32 %v10957, %v10986
  %v11012 = vadd.f32 %v10958, %v10990
  %v11013 = vadd.f32 %v10959, %v10994
  %v11014 = vadd.f32 %v10960, %v10998
  %v11015 = vadd.f32 %v10961, %v10986
  %v11016 = vadd.f32 %v10962, %v10990
  %v11017 = vadd.f32 %v10963, %v10994
  %v11018 = vadd.f32 %v10964, %v10998
  %v11019 = vadd.f32 %v10965, %v10986
  %v11020 = vadd.f32 %v10966, %v10990
  %v11021 = vadd.f32 %v10967, %v10994
  %v11022 = vadd.f32 %v10968, %v10998
  %v11023 = vadd.f32 %v10969, %v10986
  %v11024 = vadd.f32 %v10970, %v10990
  %v11025 = vadd.f32 %v10971, %v10994
  %v11026 = vadd.f32 %v10972, %v10998
  %v11027 = vadd.f32 %v10973, %v10986
  %v11028 = vadd.f32 %v10974, %v10990
  %v11029 = vadd.f32 %v10975, %v10994
  %v11030 = vadd.f32 %v10976, %v10998
  %v11031 = vadd.f32 %v10977, %v10986
  %v11032 = vadd.f32 %v10978, %v10990
  %v11033 = vadd.f32 %v10979, %v10994
  %v11034 = vadd.f32 %v10980, %v10998
  %v11035 = vtanh.pop %v11003
  %v11036 = vtanh.pop %v11004
  %v11037 = vtanh.pop %v11005
  %v11038 = vtanh.pop %v11006
  %v11039 = vtanh.pop %v11007
  %v11040 = vtanh.pop %v11008
  %v11041 = vtanh.pop %v11009
  %v11042 = vtanh.pop %v11010
  %v11043 = vtanh.pop %v11011
  %v11044 = vtanh.pop %v11012
  %v11045 = vtanh.pop %v11013
  %v11046 = vtanh.pop %v11014
  %v11047 = vtanh.pop %v11015
  %v11048 = vtanh.pop %v11016
  %v11049 = vtanh.pop %v11017
  %v11050 = vtanh.pop %v11018
  %v11051 = vtanh.pop %v11019
  %v11052 = vtanh.pop %v11020
  %v11053 = vtanh.pop %v11021
  %v11054 = vtanh.pop %v11022
  %v11055 = vtanh.pop %v11023
  %v11056 = vtanh.pop %v11024
  %v11057 = vtanh.pop %v11025
  %v11058 = vtanh.pop %v11026
  %v11059 = vtanh.pop %v11027
  %v11060 = vtanh.pop %v11028
  %v11061 = vtanh.pop %v11029
  %v11062 = vtanh.pop %v11030
  %v11063 = vtanh.pop %v11031
  %v11064 = vtanh.pop %v11032
  %v11065 = vtanh.pop %v11033
  %v11066 = vtanh.pop %v11034
  %v11067 = vpack.c.bf16 %v11039, %v11035
  %v11068 = vpack.c.bf16 %v11040, %v11036
  %v11069 = vpack.c.bf16 %v11041, %v11037
  %v11070 = vpack.c.bf16 %v11042, %v11038
  %v11071 = vpack.c.bf16 %v11047, %v11043
  %v11072 = vpack.c.bf16 %v11048, %v11044
  %v11073 = vpack.c.bf16 %v11049, %v11045
  %v11074 = vpack.c.bf16 %v11050, %v11046
  %v11075 = vpack.c.bf16 %v11055, %v11051
  %v11076 = vpack.c.bf16 %v11056, %v11052
  %v11077 = vpack.c.bf16 %v11057, %v11053
  %v11078 = vpack.c.bf16 %v11058, %v11054
  %v11079 = vpack.c.bf16 %v11063, %v11059
  %v11080 = vpack.c.bf16 %v11064, %v11060
  %v11081 = vpack.c.bf16 %v11065, %v11061
  %v11082 = vpack.c.bf16 %v11066, %v11062
  %v11099 = vunpack.c.l.b16 %v11067
  %v11100 = vunpack.c.l.b16 %v11068
  %v11101 = vunpack.c.l.b16 %v11069
  %v11102 = vunpack.c.l.b16 %v11070
  %v11103 = vunpack.c.h.b16 %v11067
  %v11104 = vunpack.c.h.b16 %v11068
  %v11105 = vunpack.c.h.b16 %v11069
  %v11106 = vunpack.c.h.b16 %v11070
  %v11107 = vunpack.c.l.b16 %v11071
  %v11108 = vunpack.c.l.b16 %v11072
  %v11109 = vunpack.c.l.b16 %v11073
  %v11110 = vunpack.c.l.b16 %v11074
  %v11111 = vunpack.c.h.b16 %v11071
  %v11112 = vunpack.c.h.b16 %v11072
  %v11113 = vunpack.c.h.b16 %v11073
  %v11114 = vunpack.c.h.b16 %v11074
  %v11115 = vunpack.c.l.b16 %v11075
  %v11116 = vunpack.c.l.b16 %v11076
  %v11117 = vunpack.c.l.b16 %v11077
  %v11118 = vunpack.c.l.b16 %v11078
  %v11119 = vunpack.c.h.b16 %v11075
  %v11120 = vunpack.c.h.b16 %v11076
  %v11121 = vunpack.c.h.b16 %v11077
  %v11122 = vunpack.c.h.b16 %v11078
  %v11123 = vunpack.c.l.b16 %v11079
  %v11124 = vunpack.c.l.b16 %v11080
  %v11125 = vunpack.c.l.b16 %v11081
  %v11126 = vunpack.c.l.b16 %v11082
  %v11127 = vunpack.c.h.b16 %v11079
  %v11128 = vunpack.c.h.b16 %v11080
  %v11129 = vunpack.c.h.b16 %v11081
  %v11130 = vunpack.c.h.b16 %v11082
  %v11131 = vld [vmem:[%s5] sm:$0xf]
  %v11132 = vld [vmem:[%s5 + $0x4] sm:$0xf]
  %v11133 = vld [vmem:[%s5 + $0x8] sm:$0xf]
  %v11134 = vld [vmem:[%s5 + $0xc] sm:$0xf]
  %v11135 = vld [vmem:[%s5 + $0x10] sm:$0xf]
  %v11136 = vld [vmem:[%s5 + $0x14] sm:$0xf]
  %v11137 = vld [vmem:[%s5 + $0x18] sm:$0xf]
  %v11138 = vld [vmem:[%s5 + $0x1c] sm:$0xf]
  %v11139 = vld [vmem:[%s5 + $0x20] sm:$0xf]
  %v11140 = vld [vmem:[%s5 + $0x24] sm:$0xf]
  %v11141 = vld [vmem:[%s5 + $0x28] sm:$0xf]
  %v11142 = vld [vmem:[%s5 + $0x2c] sm:$0xf]
  %v11143 = vld [vmem:[%s5 + $0x30] sm:$0xf]
  %v11144 = vld [vmem:[%s5 + $0x34] sm:$0xf]
  %v11145 = vld [vmem:[%s5 + $0x38] sm:$0xf]
  %v11146 = vld [vmem:[%s5 + $0x3c] sm:$0xf]
  %v11147 = vld [vmem:[%s5 + $0x40] sm:$0xf]
  %v11148 = vld [vmem:[%s5 + $0x44] sm:$0xf]
  %v11149 = vld [vmem:[%s5 + $0x48] sm:$0xf]
  %v11150 = vld [vmem:[%s5 + $0x4c] sm:$0xf]
  %v11151 = vld [vmem:[%s5 + $0x50] sm:$0xf]
  %v11152 = vld [vmem:[%s5 + $0x54] sm:$0xf]
  %v11153 = vld [vmem:[%s5 + $0x58] sm:$0xf]
  %v11154 = vld [vmem:[%s5 + $0x5c] sm:$0xf]
  %v11155 = vld [vmem:[%s5 + $0x60] sm:$0xf]
  %v11156 = vld [vmem:[%s5 + $0x64] sm:$0xf]
  %v11157 = vld [vmem:[%s5 + $0x68] sm:$0xf]
  %v11158 = vld [vmem:[%s5 + $0x6c] sm:$0xf]
  %v11159 = vld [vmem:[%s5 + $0x70] sm:$0xf]
  %v11160 = vld [vmem:[%s5 + $0x74] sm:$0xf]
  %v11161 = vld [vmem:[%s5 + $0x78] sm:$0xf]
  %v11162 = vld [vmem:[%s5 + $0x7c] sm:$0xf]
  %v11163 = vld [vmem:[%s5 + $0x80] sm:$0xf]
  %v11164 = vld [vmem:[%s5 + $0x84] sm:$0xf]
  %v11165 = vld [vmem:[%s5 + $0x88] sm:$0xf]
  %v11166 = vld [vmem:[%s5 + $0x8c] sm:$0xf]
  %v11167 = vld [vmem:[%s5 + $0x90] sm:$0xf]
  %v11168 = vld [vmem:[%s5 + $0x94] sm:$0xf]
  %v11169 = vld [vmem:[%s5 + $0x98] sm:$0xf]
  %v11170 = vld [vmem:[%s5 + $0x9c] sm:$0xf]
  %v11171 = vld [vmem:[%s5 + $0xa0] sm:$0xf]
  %v11172 = vld [vmem:[%s5 + $0xa4] sm:$0xf]
  %v11173 = vld [vmem:[%s5 + $0xa8] sm:$0xf]
  %v11174 = vld [vmem:[%s5 + $0xac] sm:$0xf]
  %v11175 = vld [vmem:[%s5 + $0xb0] sm:$0xf]
  %v11176 = vld [vmem:[%s5 + $0xb4] sm:$0xf]
  %v11177 = vld [vmem:[%s5 + $0xb8] sm:$0xf]
  %v11178 = vld [vmem:[%s5 + $0xbc] sm:$0xf]
  %v11179 = vld [vmem:[%s5 + $0xc0] sm:$0xf]
  %v11180 = vld [vmem:[%s5 + $0xc4] sm:$0xf]
  %v11181 = vld [vmem:[%s5 + $0xc8] sm:$0xf]
  %v11182 = vld [vmem:[%s5 + $0xcc] sm:$0xf]
  %v11183 = vld [vmem:[%s5 + $0xd0] sm:$0xf]
  %v11184 = vld [vmem:[%s5 + $0xd4] sm:$0xf]
  %v11185 = vld [vmem:[%s5 + $0xd8] sm:$0xf]
  %v11186 = vld [vmem:[%s5 + $0xdc] sm:$0xf]
  %v11187 = vld [vmem:[%s5 + $0xe0] sm:$0xf]
  %v11188 = vld [vmem:[%s5 + $0xe4] sm:$0xf]
  %v11189 = vld [vmem:[%s5 + $0xe8] sm:$0xf]
  %v11190 = vld [vmem:[%s5 + $0xec] sm:$0xf]
  %v11191 = vld [vmem:[%s5 + $0xf0] sm:$0xf]
  %v11192 = vld [vmem:[%s5 + $0xf4] sm:$0xf]
  %v11193 = vld [vmem:[%s5 + $0xf8] sm:$0xf]
  %v11194 = vld [vmem:[%s5 + $0xfc] sm:$0xf]
  %v11195 = vpack.c.b16 %v11099, %v11099
  %v11196 = vpack.c.b16 %v11100, %v11100
  %v11197 = vpack.c.b16 %v11101, %v11101
  %v11198 = vpack.c.b16 %v11102, %v11102
  %v11199 = vpack.c.b16 %v11103, %v11103
  %v11200 = vpack.c.b16 %v11104, %v11104
  %v11201 = vpack.c.b16 %v11105, %v11105
  %v11202 = vpack.c.b16 %v11106, %v11106
  %v11203 = vpack.c.b16 %v11107, %v11107
  %v11204 = vpack.c.b16 %v11108, %v11108
  %v11205 = vpack.c.b16 %v11109, %v11109
  %v11206 = vpack.c.b16 %v11110, %v11110
  %v11207 = vpack.c.b16 %v11111, %v11111
  %v11208 = vpack.c.b16 %v11112, %v11112
  %v11209 = vpack.c.b16 %v11113, %v11113
  %v11210 = vpack.c.b16 %v11114, %v11114
  %v11211 = vpack.c.b16 %v11115, %v11115
  %v11212 = vpack.c.b16 %v11116, %v11116
  %v11213 = vpack.c.b16 %v11117, %v11117
  %v11214 = vpack.c.b16 %v11118, %v11118
  %v11215 = vpack.c.b16 %v11119, %v11119
  %v11216 = vpack.c.b16 %v11120, %v11120
  %v11217 = vpack.c.b16 %v11121, %v11121
  %v11218 = vpack.c.b16 %v11122, %v11122
  %v11219 = vpack.c.b16 %v11123, %v11123
  %v11220 = vpack.c.b16 %v11124, %v11124
  %v11221 = vpack.c.b16 %v11125, %v11125
  %v11222 = vpack.c.b16 %v11126, %v11126
  %v11223 = vpack.c.b16 %v11127, %v11127
  %v11224 = vpack.c.b16 %v11128, %v11128
  %v11225 = vpack.c.b16 %v11129, %v11129
  %v11226 = vpack.c.b16 %v11130, %v11130
  %v11227 = vunpack.c.l.b16 %v11195
  %v11228 = vunpack.c.l.b16 %v11196
  %v11229 = vunpack.c.l.b16 %v11197
  %v11230 = vunpack.c.l.b16 %v11198
  %v11231 = vunpack.c.l.b16 %v11199
  %v11232 = vunpack.c.l.b16 %v11200
  %v11233 = vunpack.c.l.b16 %v11201
  %v11234 = vunpack.c.l.b16 %v11202
  %v11235 = vunpack.c.l.b16 %v11203
  %v11236 = vunpack.c.l.b16 %v11204
  %v11237 = vunpack.c.l.b16 %v11205
  %v11238 = vunpack.c.l.b16 %v11206
  %v11239 = vunpack.c.l.b16 %v11207
  %v11240 = vunpack.c.l.b16 %v11208
  %v11241 = vunpack.c.l.b16 %v11209
  %v11242 = vunpack.c.l.b16 %v11210
  %v11243 = vunpack.c.l.b16 %v11211
  %v11244 = vunpack.c.l.b16 %v11212
  %v11245 = vunpack.c.l.b16 %v11213
  %v11246 = vunpack.c.l.b16 %v11214
  %v11247 = vunpack.c.l.b16 %v11215
  %v11248 = vunpack.c.l.b16 %v11216
  %v11249 = vunpack.c.l.b16 %v11217
  %v11250 = vunpack.c.l.b16 %v11218
  %v11251 = vunpack.c.l.b16 %v11219
  %v11252 = vunpack.c.l.b16 %v11220
  %v11253 = vunpack.c.l.b16 %v11221
  %v11254 = vunpack.c.l.b16 %v11222
  %v11255 = vunpack.c.l.b16 %v11223
  %v11256 = vunpack.c.l.b16 %v11224
  %v11257 = vunpack.c.l.b16 %v11225
  %v11258 = vunpack.c.l.b16 %v11226
  %v11259 = vrot.slane %v11231, 7
  %vm11260 = vcmask 1041409
  %v11261 = vsel %vm11260, %v11259, %v11227
  %v11262 = vrot.slane %v11235, 6
  %vm11263 = vcmask 1042434
  %v11264 = vsel %vm11263, %v11262, %v11261
  %v11265 = vrot.slane %v11239, 5
  %vm11266 = vcmask 1043459
  %v11267 = vsel %vm11266, %v11265, %v11264
  %v11268 = vrot.slane %v11243, 4
  %vm11269 = vcmask 1044484
  %v11270 = vsel %vm11269, %v11268, %v11267
  %v11271 = vrot.slane %v11247, 3
  %vm11272 = vcmask 1045509
  %v11273 = vsel %vm11272, %v11271, %v11270
  %v11274 = vrot.slane %v11251, 2
  %vm11275 = vcmask 1046534
  %v11276 = vsel %vm11275, %v11274, %v11273
  %v11277 = vrot.slane %v11255, 1
  %vm11278 = vcmask 1047559
  %v11279 = vsel %vm11278, %v11277, %v11276
  %v11280 = vrot.slane %v11232, 7
  %v11281 = vsel %vm11260, %v11280, %v11228
  %v11282 = vrot.slane %v11236, 6
  %v11283 = vsel %vm11263, %v11282, %v11281
  %v11284 = vrot.slane %v11240, 5
  %v11285 = vsel %vm11266, %v11284, %v11283
  %v11286 = vrot.slane %v11244, 4
  %v11287 = vsel %vm11269, %v11286, %v11285
  %v11288 = vrot.slane %v11248, 3
  %v11289 = vsel %vm11272, %v11288, %v11287
  %v11290 = vrot.slane %v11252, 2
  %v11291 = vsel %vm11275, %v11290, %v11289
  %v11292 = vrot.slane %v11256, 1
  %v11293 = vsel %vm11278, %v11292, %v11291
  %v11294 = vrot.slane %v11233, 7
  %v11295 = vsel %vm11260, %v11294, %v11229
  %v11296 = vrot.slane %v11237, 6
  %v11297 = vsel %vm11263, %v11296, %v11295
  %v11298 = vrot.slane %v11241, 5
  %v11299 = vsel %vm11266, %v11298, %v11297
  %v11300 = vrot.slane %v11245, 4
  %v11301 = vsel %vm11269, %v11300, %v11299
  %v11302 = vrot.slane %v11249, 3
  %v11303 = vsel %vm11272, %v11302, %v11301
  %v11304 = vrot.slane %v11253, 2
  %v11305 = vsel %vm11275, %v11304, %v11303
  %v11306 = vrot.slane %v11257, 1
  %v11307 = vsel %vm11278, %v11306, %v11305
  %v11308 = vrot.slane %v11234, 7
  %v11309 = vsel %vm11260, %v11308, %v11230
  %v11310 = vrot.slane %v11238, 6
  %v11311 = vsel %vm11263, %v11310, %v11309
  %v11312 = vrot.slane %v11242, 5
  %v11313 = vsel %vm11266, %v11312, %v11311
  %v11314 = vrot.slane %v11246, 4
  %v11315 = vsel %vm11269, %v11314, %v11313
  %v11316 = vrot.slane %v11250, 3
  %v11317 = vsel %vm11272, %v11316, %v11315
  %v11318 = vrot.slane %v11254, 2
  %v11319 = vsel %vm11275, %v11318, %v11317
  %v11320 = vrot.slane %v11258, 1
  %v11321 = vsel %vm11278, %v11320, %v11319
  %v11322 = vpack.c.b16 %v11279, %v11279
  %v11323 = vpack.c.b16 %v11293, %v11293
  %v11324 = vpack.c.b16 %v11307, %v11307
  %v11325 = vpack.c.b16 %v11321, %v11321
  %v11394 = vunpack.c.l.b16 %v11131
  %v11395 = vunpack.c.l.b16 %v11132
  %v11396 = vunpack.c.l.b16 %v11133
  %v11397 = vunpack.c.l.b16 %v11134
  %v11398 = vunpack.c.l.b16 %v11135
  %v11399 = vunpack.c.l.b16 %v11136
  %v11400 = vunpack.c.l.b16 %v11137
  %v11401 = vunpack.c.l.b16 %v11138
  %v11402 = vunpack.c.l.b16 %v11139
  %v11403 = vunpack.c.l.b16 %v11140
  %v11404 = vunpack.c.l.b16 %v11141
  %v11405 = vunpack.c.l.b16 %v11142
  %v11406 = vunpack.c.l.b16 %v11143
  %v11407 = vunpack.c.l.b16 %v11144
  %v11408 = vunpack.c.l.b16 %v11145
  %v11409 = vunpack.c.l.b16 %v11146
  %v11410 = vunpack.c.l.b16 %v11147
  %v11411 = vunpack.c.l.b16 %v11148
  %v11412 = vunpack.c.l.b16 %v11149
  %v11413 = vunpack.c.l.b16 %v11150
  %v11414 = vunpack.c.l.b16 %v11151
  %v11415 = vunpack.c.l.b16 %v11152
  %v11416 = vunpack.c.l.b16 %v11153
  %v11417 = vunpack.c.l.b16 %v11154
  %v11418 = vunpack.c.l.b16 %v11155
  %v11419 = vunpack.c.l.b16 %v11156
  %v11420 = vunpack.c.l.b16 %v11157
  %v11421 = vunpack.c.l.b16 %v11158
  %v11422 = vunpack.c.l.b16 %v11159
  %v11423 = vunpack.c.l.b16 %v11160
  %v11424 = vunpack.c.l.b16 %v11161
  %v11425 = vunpack.c.l.b16 %v11162
  %v11426 = vunpack.c.l.b16 %v11163
  %v11427 = vunpack.c.l.b16 %v11164
  %v11428 = vunpack.c.l.b16 %v11165
  %v11429 = vunpack.c.l.b16 %v11166
  %v11430 = vunpack.c.l.b16 %v11167
  %v11431 = vunpack.c.l.b16 %v11168
  %v11432 = vunpack.c.l.b16 %v11169
  %v11433 = vunpack.c.l.b16 %v11170
  %v11434 = vunpack.c.l.b16 %v11171
  %v11435 = vunpack.c.l.b16 %v11172
  %v11436 = vunpack.c.l.b16 %v11173
  %v11437 = vunpack.c.l.b16 %v11174
  %v11438 = vunpack.c.l.b16 %v11175
  %v11439 = vunpack.c.l.b16 %v11176
  %v11440 = vunpack.c.l.b16 %v11177
  %v11441 = vunpack.c.l.b16 %v11178
  %v11442 = vunpack.c.l.b16 %v11179
  %v11443 = vunpack.c.l.b16 %v11180
  %v11444 = vunpack.c.l.b16 %v11181
  %v11445 = vunpack.c.l.b16 %v11182
  %v11446 = vunpack.c.l.b16 %v11183
  %v11447 = vunpack.c.l.b16 %v11184
  %v11448 = vunpack.c.l.b16 %v11185
  %v11449 = vunpack.c.l.b16 %v11186
  %v11450 = vunpack.c.l.b16 %v11187
  %v11451 = vunpack.c.l.b16 %v11188
  %v11452 = vunpack.c.l.b16 %v11189
  %v11453 = vunpack.c.l.b16 %v11190
  %v11454 = vunpack.c.l.b16 %v11191
  %v11455 = vunpack.c.l.b16 %v11192
  %v11456 = vunpack.c.l.b16 %v11193
  %v11457 = vunpack.c.l.b16 %v11194
  %v11458 = vpack.c.b16 %v11395, %v11394
  %v11459 = vpack.c.b16 %v11397, %v11396
  %v11460 = vpack.c.b16 %v11399, %v11398
  %v11461 = vpack.c.b16 %v11401, %v11400
  %v11462 = vpack.c.b16 %v11403, %v11402
  %v11463 = vpack.c.b16 %v11405, %v11404
  %v11464 = vpack.c.b16 %v11407, %v11406
  %v11465 = vpack.c.b16 %v11409, %v11408
  %v11466 = vpack.c.b16 %v11411, %v11410
  %v11467 = vpack.c.b16 %v11413, %v11412
  %v11468 = vpack.c.b16 %v11415, %v11414
  %v11469 = vpack.c.b16 %v11417, %v11416
  %v11470 = vpack.c.b16 %v11419, %v11418
  %v11471 = vpack.c.b16 %v11421, %v11420
  %v11472 = vpack.c.b16 %v11423, %v11422
  %v11473 = vpack.c.b16 %v11425, %v11424
  %v11474 = vpack.c.b16 %v11427, %v11426
  %v11475 = vpack.c.b16 %v11429, %v11428
  %v11476 = vpack.c.b16 %v11431, %v11430
  %v11477 = vpack.c.b16 %v11433, %v11432
  %v11478 = vpack.c.b16 %v11435, %v11434
  %v11479 = vpack.c.b16 %v11437, %v11436
  %v11480 = vpack.c.b16 %v11439, %v11438
  %v11481 = vpack.c.b16 %v11441, %v11440
  %v11482 = vpack.c.b16 %v11443, %v11442
  %v11483 = vpack.c.b16 %v11445, %v11444
  %v11484 = vpack.c.b16 %v11447, %v11446
  %v11485 = vpack.c.b16 %v11449, %v11448
  %v11486 = vpack.c.b16 %v11451, %v11450
  %v11487 = vpack.c.b16 %v11453, %v11452
  %v11488 = vpack.c.b16 %v11455, %v11454
  %v11489 = vpack.c.b16 %v11457, %v11456
  %11522 = vmatprep.subr.bf16.mxu0 0
  %11523 = vmatpush1.bf16.msra.mxu0 %v11465
  %11524 = vmatprep.subr.bf16.mxu0 0
  %11525 = vmatpush1.bf16.msra.mxu0 %v11464
  %11526 = vmatprep.subr.bf16.mxu0 0
  %11527 = vmatpush1.bf16.msra.mxu0 %v11463
  %11528 = vmatprep.subr.bf16.mxu0 0
  %11529 = vmatpush1.bf16.msra.mxu0 %v11462
  %11530 = vmatprep.subr.bf16.mxu0 0
  %11531 = vmatpush1.bf16.msra.mxu0 %v11461
  %11532 = vmatprep.subr.bf16.mxu0 0
  %11533 = vmatpush1.bf16.msra.mxu0 %v11460
  %11534 = vmatprep.subr.bf16.mxu0 0
  %11535 = vmatpush1.bf16.msra.mxu0 %v11459
  %11536 = vmatprep.subr.bf16.mxu0 0
  %11537 = vmatpush1.bf16.msra.mxu0 %v11458
  %11538 = vmatprep.subr.bf16.mxu0 0
  %11539 = vmatpush2.bf16.msra.mxu0 %v11473
  %11540 = vmatprep.subr.bf16.mxu0 0
  %11541 = vmatpush2.bf16.msra.mxu0 %v11472
  %11542 = vmatprep.subr.bf16.mxu0 0
  %11543 = vmatpush2.bf16.msra.mxu0 %v11471
  %11544 = vmatprep.subr.bf16.mxu0 0
  %11545 = vmatpush2.bf16.msra.mxu0 %v11470
  %11546 = vmatprep.subr.bf16.mxu0 0
  %11547 = vmatpush2.bf16.msra.mxu0 %v11469
  %11548 = vmatprep.subr.bf16.mxu0 0
  %11549 = vmatpush2.bf16.msra.mxu0 %v11468
  %11550 = vmatprep.subr.bf16.mxu0 0
  %11551 = vmatpush2.bf16.msra.mxu0 %v11467
  %11552 = vmatprep.subr.bf16.mxu0 0
  %11553 = vmatpush2.bf16.msra.mxu0 %v11466
  %11554 = vmatprep.mubr.bf16.mxu0 %v11323
  %11555 = vmatmul.mubr.bf16.gmra.mxu0 %v11322
  %v11556 = vpop.f32.mrf.mxu0
  %v11557 = vadd.f32 0.0, %v11556
  %v11558 = vpop.f32.mrf.mxu0
  %v11559 = vpop.f32.mrf.mxu0
  %v11560 = vpop.f32.mrf.mxu0
  %11561 = vdwg.mxu0
  %11562 = vmatprep.subr.bf16.mxu0 0
  %11563 = vmatpush1.bf16.msra.mxu0 %v11481
  %11564 = vmatprep.subr.bf16.mxu0 0
  %11565 = vmatpush1.bf16.msra.mxu0 %v11480
  %11566 = vmatprep.subr.bf16.mxu0 0
  %11567 = vmatpush1.bf16.msra.mxu0 %v11479
  %11568 = vmatprep.subr.bf16.mxu0 0
  %11569 = vmatpush1.bf16.msra.mxu0 %v11478
  %11570 = vmatprep.subr.bf16.mxu0 0
  %11571 = vmatpush1.bf16.msra.mxu0 %v11477
  %11572 = vmatprep.subr.bf16.mxu0 0
  %11573 = vmatpush1.bf16.msra.mxu0 %v11476
  %11574 = vmatprep.subr.bf16.mxu0 0
  %11575 = vmatpush1.bf16.msra.mxu0 %v11475
  %11576 = vmatprep.subr.bf16.mxu0 0
  %11577 = vmatpush1.bf16.msra.mxu0 %v11474
  %11578 = vmatprep.subr.bf16.mxu0 0
  %11579 = vmatpush2.bf16.msra.mxu0 %v11489
  %11580 = vmatprep.subr.bf16.mxu0 0
  %11581 = vmatpush2.bf16.msra.mxu0 %v11488
  %11582 = vmatprep.subr.bf16.mxu0 0
  %11583 = vmatpush2.bf16.msra.mxu0 %v11487
  %11584 = vmatprep.subr.bf16.mxu0 0
  %11585 = vmatpush2.bf16.msra.mxu0 %v11486
  %11586 = vmatprep.subr.bf16.mxu0 0
  %11587 = vmatpush2.bf16.msra.mxu0 %v11485
  %11588 = vmatprep.subr.bf16.mxu0 0
  %11589 = vmatpush2.bf16.msra.mxu0 %v11484
  %11590 = vmatprep.subr.bf16.mxu0 0
  %11591 = vmatpush2.bf16.msra.mxu0 %v11483
  %11592 = vmatprep.subr.bf16.mxu0 0
  %11593 = vmatpush2.bf16.msra.mxu0 %v11482
  %11594 = vmatprep.mubr.bf16.mxu0 %v11325
  %11595 = vmatmul.mubr.bf16.gmra.mxu0 %v11324
  %v11596 = vpop.f32.mrf.mxu0
  %v11597 = vadd.f32 %v11557, %v11596
  %v11598 = vpop.f32.mrf.mxu0
  %v11599 = vpop.f32.mrf.mxu0
  %v11600 = vpop.f32.mrf.mxu0
  %11601 = vdwg.mxu0
  %11602 = vst [vmem:[#allocation3] sm:$0xff] %v11597
  %v11603 = vld [vmem:[#allocation3] sm:$0xff]
  %s11604 = scalar_lea.vmem %s5, 256
  %v11605 = vld [vmem:[%s11604] sm:$0xf]
  %v11606 = vld [vmem:[%s11604 + $0x4] sm:$0xf]
  %v11607 = vld [vmem:[%s11604 + $0x8] sm:$0xf]
  %v11608 = vld [vmem:[%s11604 + $0xc] sm:$0xf]
  %v11609 = vld [vmem:[%s11604 + $0x10] sm:$0xf]
  %v11610 = vld [vmem:[%s11604 + $0x14] sm:$0xf]
  %v11611 = vld [vmem:[%s11604 + $0x18] sm:$0xf]
  %v11612 = vld [vmem:[%s11604 + $0x1c] sm:$0xf]
  %v11613 = vld [vmem:[%s11604 + $0x20] sm:$0xf]
  %v11614 = vld [vmem:[%s11604 + $0x24] sm:$0xf]
  %v11615 = vld [vmem:[%s11604 + $0x28] sm:$0xf]
  %v11616 = vld [vmem:[%s11604 + $0x2c] sm:$0xf]
  %v11617 = vld [vmem:[%s11604 + $0x30] sm:$0xf]
  %v11618 = vld [vmem:[%s11604 + $0x34] sm:$0xf]
  %v11619 = vld [vmem:[%s11604 + $0x38] sm:$0xf]
  %v11620 = vld [vmem:[%s11604 + $0x3c] sm:$0xf]
  %v11621 = vld [vmem:[%s11604 + $0x40] sm:$0xf]
  %v11622 = vld [vmem:[%s11604 + $0x44] sm:$0xf]
  %v11623 = vld [vmem:[%s11604 + $0x48] sm:$0xf]
  %v11624 = vld [vmem:[%s11604 + $0x4c] sm:$0xf]
  %v11625 = vld [vmem:[%s11604 + $0x50] sm:$0xf]
  %v11626 = vld [vmem:[%s11604 + $0x54] sm:$0xf]
  %v11627 = vld [vmem:[%s11604 + $0x58] sm:$0xf]
  %v11628 = vld [vmem:[%s11604 + $0x5c] sm:$0xf]
  %v11629 = vld [vmem:[%s11604 + $0x60] sm:$0xf]
  %v11630 = vld [vmem:[%s11604 + $0x64] sm:$0xf]
  %v11631 = vld [vmem:[%s11604 + $0x68] sm:$0xf]
  %v11632 = vld [vmem:[%s11604 + $0x6c] sm:$0xf]
  %v11633 = vld [vmem:[%s11604 + $0x70] sm:$0xf]
  %v11634 = vld [vmem:[%s11604 + $0x74] sm:$0xf]
  %v11635 = vld [vmem:[%s11604 + $0x78] sm:$0xf]
  %v11636 = vld [vmem:[%s11604 + $0x7c] sm:$0xf]
  %v11637 = vld [vmem:[%s11604 + $0x80] sm:$0xf]
  %v11638 = vld [vmem:[%s11604 + $0x84] sm:$0xf]
  %v11639 = vld [vmem:[%s11604 + $0x88] sm:$0xf]
  %v11640 = vld [vmem:[%s11604 + $0x8c] sm:$0xf]
  %v11641 = vld [vmem:[%s11604 + $0x90] sm:$0xf]
  %v11642 = vld [vmem:[%s11604 + $0x94] sm:$0xf]
  %v11643 = vld [vmem:[%s11604 + $0x98] sm:$0xf]
  %v11644 = vld [vmem:[%s11604 + $0x9c] sm:$0xf]
  %v11645 = vld [vmem:[%s11604 + $0xa0] sm:$0xf]
  %v11646 = vld [vmem:[%s11604 + $0xa4] sm:$0xf]
  %v11647 = vld [vmem:[%s11604 + $0xa8] sm:$0xf]
  %v11648 = vld [vmem:[%s11604 + $0xac] sm:$0xf]
  %v11649 = vld [vmem:[%s11604 + $0xb0] sm:$0xf]
  %v11650 = vld [vmem:[%s11604 + $0xb4] sm:$0xf]
  %v11651 = vld [vmem:[%s11604 + $0xb8] sm:$0xf]
  %v11652 = vld [vmem:[%s11604 + $0xbc] sm:$0xf]
  %v11653 = vld [vmem:[%s11604 + $0xc0] sm:$0xf]
  %v11654 = vld [vmem:[%s11604 + $0xc4] sm:$0xf]
  %v11655 = vld [vmem:[%s11604 + $0xc8] sm:$0xf]
  %v11656 = vld [vmem:[%s11604 + $0xcc] sm:$0xf]
  %v11657 = vld [vmem:[%s11604 + $0xd0] sm:$0xf]
  %v11658 = vld [vmem:[%s11604 + $0xd4] sm:$0xf]
  %v11659 = vld [vmem:[%s11604 + $0xd8] sm:$0xf]
  %v11660 = vld [vmem:[%s11604 + $0xdc] sm:$0xf]
  %v11661 = vld [vmem:[%s11604 + $0xe0] sm:$0xf]
  %v11662 = vld [vmem:[%s11604 + $0xe4] sm:$0xf]
  %v11663 = vld [vmem:[%s11604 + $0xe8] sm:$0xf]
  %v11664 = vld [vmem:[%s11604 + $0xec] sm:$0xf]
  %v11665 = vld [vmem:[%s11604 + $0xf0] sm:$0xf]
  %v11666 = vld [vmem:[%s11604 + $0xf4] sm:$0xf]
  %v11667 = vld [vmem:[%s11604 + $0xf8] sm:$0xf]
  %v11668 = vld [vmem:[%s11604 + $0xfc] sm:$0xf]
  %v11669 = vrot.slane %v11227, 1
  %v11670 = vsel %vm11260, %v11231, %v11669
  %v11671 = vrot.slane %v11235, 7
  %v11672 = vsel %vm11263, %v11671, %v11670
  %v11673 = vrot.slane %v11239, 6
  %v11674 = vsel %vm11266, %v11673, %v11672
  %v11675 = vrot.slane %v11243, 5
  %v11676 = vsel %vm11269, %v11675, %v11674
  %v11677 = vrot.slane %v11247, 4
  %v11678 = vsel %vm11272, %v11677, %v11676
  %v11679 = vrot.slane %v11251, 3
  %v11680 = vsel %vm11275, %v11679, %v11678
  %v11681 = vrot.slane %v11255, 2
  %v11682 = vsel %vm11278, %v11681, %v11680
  %v11683 = vrot.slane %v11228, 1
  %v11684 = vsel %vm11260, %v11232, %v11683
  %v11685 = vrot.slane %v11236, 7
  %v11686 = vsel %vm11263, %v11685, %v11684
  %v11687 = vrot.slane %v11240, 6
  %v11688 = vsel %vm11266, %v11687, %v11686
  %v11689 = vrot.slane %v11244, 5
  %v11690 = vsel %vm11269, %v11689, %v11688
  %v11691 = vrot.slane %v11248, 4
  %v11692 = vsel %vm11272, %v11691, %v11690
  %v11693 = vrot.slane %v11252, 3
  %v11694 = vsel %vm11275, %v11693, %v11692
  %v11695 = vrot.slane %v11256, 2
  %v11696 = vsel %vm11278, %v11695, %v11694
  %v11697 = vrot.slane %v11229, 1
  %v11698 = vsel %vm11260, %v11233, %v11697
  %v11699 = vrot.slane %v11237, 7
  %v11700 = vsel %vm11263, %v11699, %v11698
  %v11701 = vrot.slane %v11241, 6
  %v11702 = vsel %vm11266, %v11701, %v11700
  %v11703 = vrot.slane %v11245, 5
  %v11704 = vsel %vm11269, %v11703, %v11702
  %v11705 = vrot.slane %v11249, 4
  %v11706 = vsel %vm11272, %v11705, %v11704
  %v11707 = vrot.slane %v11253, 3
  %v11708 = vsel %vm11275, %v11707, %v11706
  %v11709 = vrot.slane %v11257, 2
  %v11710 = vsel %vm11278, %v11709, %v11708
  %v11711 = vrot.slane %v11230, 1
  %v11712 = vsel %vm11260, %v11234, %v11711
  %v11713 = vrot.slane %v11238, 7
  %v11714 = vsel %vm11263, %v11713, %v11712
  %v11715 = vrot.slane %v11242, 6
  %v11716 = vsel %vm11266, %v11715, %v11714
  %v11717 = vrot.slane %v11246, 5
  %v11718 = vsel %vm11269, %v11717, %v11716
  %v11719 = vrot.slane %v11250, 4
  %v11720 = vsel %vm11272, %v11719, %v11718
  %v11721 = vrot.slane %v11254, 3
  %v11722 = vsel %vm11275, %v11721, %v11720
  %v11723 = vrot.slane %v11258, 2
  %v11724 = vsel %vm11278, %v11723, %v11722
  %v11725 = vpack.c.b16 %v11682, %v11682
  %v11726 = vpack.c.b16 %v11696, %v11696
  %v11727 = vpack.c.b16 %v11710, %v11710
  %v11728 = vpack.c.b16 %v11724, %v11724
  %v11797 = vunpack.c.l.b16 %v11605
  %v11798 = vunpack.c.l.b16 %v11606
  %v11799 = vunpack.c.l.b16 %v11607
  %v11800 = vunpack.c.l.b16 %v11608
  %v11801 = vunpack.c.l.b16 %v11609
  %v11802 = vunpack.c.l.b16 %v11610
  %v11803 = vunpack.c.l.b16 %v11611
  %v11804 = vunpack.c.l.b16 %v11612
  %v11805 = vunpack.c.l.b16 %v11613
  %v11806 = vunpack.c.l.b16 %v11614
  %v11807 = vunpack.c.l.b16 %v11615
  %v11808 = vunpack.c.l.b16 %v11616
  %v11809 = vunpack.c.l.b16 %v11617
  %v11810 = vunpack.c.l.b16 %v11618
  %v11811 = vunpack.c.l.b16 %v11619
  %v11812 = vunpack.c.l.b16 %v11620
  %v11813 = vunpack.c.l.b16 %v11621
  %v11814 = vunpack.c.l.b16 %v11622
  %v11815 = vunpack.c.l.b16 %v11623
  %v11816 = vunpack.c.l.b16 %v11624
  %v11817 = vunpack.c.l.b16 %v11625
  %v11818 = vunpack.c.l.b16 %v11626
  %v11819 = vunpack.c.l.b16 %v11627
  %v11820 = vunpack.c.l.b16 %v11628
  %v11821 = vunpack.c.l.b16 %v11629
  %v11822 = vunpack.c.l.b16 %v11630
  %v11823 = vunpack.c.l.b16 %v11631
  %v11824 = vunpack.c.l.b16 %v11632
  %v11825 = vunpack.c.l.b16 %v11633
  %v11826 = vunpack.c.l.b16 %v11634
  %v11827 = vunpack.c.l.b16 %v11635
  %v11828 = vunpack.c.l.b16 %v11636
  %v11829 = vunpack.c.l.b16 %v11637
  %v11830 = vunpack.c.l.b16 %v11638
  %v11831 = vunpack.c.l.b16 %v11639
  %v11832 = vunpack.c.l.b16 %v11640
  %v11833 = vunpack.c.l.b16 %v11641
  %v11834 = vunpack.c.l.b16 %v11642
  %v11835 = vunpack.c.l.b16 %v11643
  %v11836 = vunpack.c.l.b16 %v11644
  %v11837 = vunpack.c.l.b16 %v11645
  %v11838 = vunpack.c.l.b16 %v11646
  %v11839 = vunpack.c.l.b16 %v11647
  %v11840 = vunpack.c.l.b16 %v11648
  %v11841 = vunpack.c.l.b16 %v11649
  %v11842 = vunpack.c.l.b16 %v11650
  %v11843 = vunpack.c.l.b16 %v11651
  %v11844 = vunpack.c.l.b16 %v11652
  %v11845 = vunpack.c.l.b16 %v11653
  %v11846 = vunpack.c.l.b16 %v11654
  %v11847 = vunpack.c.l.b16 %v11655
  %v11848 = vunpack.c.l.b16 %v11656
  %v11849 = vunpack.c.l.b16 %v11657
  %v11850 = vunpack.c.l.b16 %v11658
  %v11851 = vunpack.c.l.b16 %v11659
  %v11852 = vunpack.c.l.b16 %v11660
  %v11853 = vunpack.c.l.b16 %v11661
  %v11854 = vunpack.c.l.b16 %v11662
  %v11855 = vunpack.c.l.b16 %v11663
  %v11856 = vunpack.c.l.b16 %v11664
  %v11857 = vunpack.c.l.b16 %v11665
  %v11858 = vunpack.c.l.b16 %v11666
  %v11859 = vunpack.c.l.b16 %v11667
  %v11860 = vunpack.c.l.b16 %v11668
  %v11861 = vpack.c.b16 %v11798, %v11797
  %v11862 = vpack.c.b16 %v11800, %v11799
  %v11863 = vpack.c.b16 %v11802, %v11801
  %v11864 = vpack.c.b16 %v11804, %v11803
  %v11865 = vpack.c.b16 %v11806, %v11805
  %v11866 = vpack.c.b16 %v11808, %v11807
  %v11867 = vpack.c.b16 %v11810, %v11809
  %v11868 = vpack.c.b16 %v11812, %v11811
  %v11869 = vpack.c.b16 %v11814, %v11813
  %v11870 = vpack.c.b16 %v11816, %v11815
  %v11871 = vpack.c.b16 %v11818, %v11817
  %v11872 = vpack.c.b16 %v11820, %v11819
  %v11873 = vpack.c.b16 %v11822, %v11821
  %v11874 = vpack.c.b16 %v11824, %v11823
  %v11875 = vpack.c.b16 %v11826, %v11825
  %v11876 = vpack.c.b16 %v11828, %v11827
  %v11877 = vpack.c.b16 %v11830, %v11829
  %v11878 = vpack.c.b16 %v11832, %v11831
  %v11879 = vpack.c.b16 %v11834, %v11833
  %v11880 = vpack.c.b16 %v11836, %v11835
  %v11881 = vpack.c.b16 %v11838, %v11837
  %v11882 = vpack.c.b16 %v11840, %v11839
  %v11883 = vpack.c.b16 %v11842, %v11841
  %v11884 = vpack.c.b16 %v11844, %v11843
  %v11885 = vpack.c.b16 %v11846, %v11845
  %v11886 = vpack.c.b16 %v11848, %v11847
  %v11887 = vpack.c.b16 %v11850, %v11849
  %v11888 = vpack.c.b16 %v11852, %v11851
  %v11889 = vpack.c.b16 %v11854, %v11853
  %v11890 = vpack.c.b16 %v11856, %v11855
  %v11891 = vpack.c.b16 %v11858, %v11857
  %v11892 = vpack.c.b16 %v11860, %v11859
  %11925 = vmatprep.subr.bf16.mxu0 0
  %11926 = vmatpush1.bf16.msra.mxu0 %v11868
  %11927 = vmatprep.subr.bf16.mxu0 0
  %11928 = vmatpush1.bf16.msra.mxu0 %v11867
  %11929 = vmatprep.subr.bf16.mxu0 0
  %11930 = vmatpush1.bf16.msra.mxu0 %v11866
  %11931 = vmatprep.subr.bf16.mxu0 0
  %11932 = vmatpush1.bf16.msra.mxu0 %v11865
  %11933 = vmatprep.subr.bf16.mxu0 0
  %11934 = vmatpush1.bf16.msra.mxu0 %v11864
  %11935 = vmatprep.subr.bf16.mxu0 0
  %11936 = vmatpush1.bf16.msra.mxu0 %v11863
  %11937 = vmatprep.subr.bf16.mxu0 0
  %11938 = vmatpush1.bf16.msra.mxu0 %v11862
  %11939 = vmatprep.subr.bf16.mxu0 0
  %11940 = vmatpush1.bf16.msra.mxu0 %v11861
  %11941 = vmatprep.subr.bf16.mxu0 0
  %11942 = vmatpush2.bf16.msra.mxu0 %v11876
  %11943 = vmatprep.subr.bf16.mxu0 0
  %11944 = vmatpush2.bf16.msra.mxu0 %v11875
  %11945 = vmatprep.subr.bf16.mxu0 0
  %11946 = vmatpush2.bf16.msra.mxu0 %v11874
  %11947 = vmatprep.subr.bf16.mxu0 0
  %11948 = vmatpush2.bf16.msra.mxu0 %v11873
  %11949 = vmatprep.subr.bf16.mxu0 0
  %11950 = vmatpush2.bf16.msra.mxu0 %v11872
  %11951 = vmatprep.subr.bf16.mxu0 0
  %11952 = vmatpush2.bf16.msra.mxu0 %v11871
  %11953 = vmatprep.subr.bf16.mxu0 0
  %11954 = vmatpush2.bf16.msra.mxu0 %v11870
  %11955 = vmatprep.subr.bf16.mxu0 0
  %11956 = vmatpush2.bf16.msra.mxu0 %v11869
  %11957 = vmatprep.mubr.bf16.mxu0 %v11726
  %11958 = vmatmul.mubr.bf16.gmra.mxu0 %v11725
  %v11959 = vpop.f32.mrf.mxu0
  %v11960 = vadd.f32 0.0, %v11959
  %v11961 = vpop.f32.mrf.mxu0
  %v11962 = vpop.f32.mrf.mxu0
  %v11963 = vpop.f32.mrf.mxu0
  %11964 = vdwg.mxu0
  %11965 = vmatprep.subr.bf16.mxu0 0
  %11966 = vmatpush1.bf16.msra.mxu0 %v11884
  %11967 = vmatprep.subr.bf16.mxu0 0
  %11968 = vmatpush1.bf16.msra.mxu0 %v11883
  %11969 = vmatprep.subr.bf16.mxu0 0
  %11970 = vmatpush1.bf16.msra.mxu0 %v11882
  %11971 = vmatprep.subr.bf16.mxu0 0
  %11972 = vmatpush1.bf16.msra.mxu0 %v11881
  %11973 = vmatprep.subr.bf16.mxu0 0
  %11974 = vmatpush1.bf16.msra.mxu0 %v11880
  %11975 = vmatprep.subr.bf16.mxu0 0
  %11976 = vmatpush1.bf16.msra.mxu0 %v11879
  %11977 = vmatprep.subr.bf16.mxu0 0
  %11978 = vmatpush1.bf16.msra.mxu0 %v11878
  %11979 = vmatprep.subr.bf16.mxu0 0
  %11980 = vmatpush1.bf16.msra.mxu0 %v11877
  %11981 = vmatprep.subr.bf16.mxu0 0
  %11982 = vmatpush2.bf16.msra.mxu0 %v11892
  %11983 = vmatprep.subr.bf16.mxu0 0
  %11984 = vmatpush2.bf16.msra.mxu0 %v11891
  %11985 = vmatprep.subr.bf16.mxu0 0
  %11986 = vmatpush2.bf16.msra.mxu0 %v11890
  %11987 = vmatprep.subr.bf16.mxu0 0
  %11988 = vmatpush2.bf16.msra.mxu0 %v11889
  %11989 = vmatprep.subr.bf16.mxu0 0
  %11990 = vmatpush2.bf16.msra.mxu0 %v11888
  %11991 = vmatprep.subr.bf16.mxu0 0
  %11992 = vmatpush2.bf16.msra.mxu0 %v11887
  %11993 = vmatprep.subr.bf16.mxu0 0
  %11994 = vmatpush2.bf16.msra.mxu0 %v11886
  %11995 = vmatprep.subr.bf16.mxu0 0
  %11996 = vmatpush2.bf16.msra.mxu0 %v11885
  %11997 = vmatprep.mubr.bf16.mxu0 %v11728
  %11998 = vmatmul.mubr.bf16.gmra.mxu0 %v11727
  %v11999 = vpop.f32.mrf.mxu0
  %v12000 = vadd.f32 %v11960, %v11999
  %v12001 = vpop.f32.mrf.mxu0
  %v12002 = vpop.f32.mrf.mxu0
  %v12003 = vpop.f32.mrf.mxu0
  %12004 = vdwg.mxu0
  %v12005 = vadd.f32 %v11603, %v12000
  %12006 = vst [vmem:[#allocation3] sm:$0xff] %v12005
  %v12007 = vld [vmem:[#allocation3] sm:$0xff]
  %s12008 = scalar_lea.vmem %s5, 512
  %v12009 = vld [vmem:[%s12008] sm:$0xf]
  %v12010 = vld [vmem:[%s12008 + $0x4] sm:$0xf]
  %v12011 = vld [vmem:[%s12008 + $0x8] sm:$0xf]
  %v12012 = vld [vmem:[%s12008 + $0xc] sm:$0xf]
  %v12013 = vld [vmem:[%s12008 + $0x10] sm:$0xf]
  %v12014 = vld [vmem:[%s12008 + $0x14] sm:$0xf]
  %v12015 = vld [vmem:[%s12008 + $0x18] sm:$0xf]
  %v12016 = vld [vmem:[%s12008 + $0x1c] sm:$0xf]
  %v12017 = vld [vmem:[%s12008 + $0x20] sm:$0xf]
  %v12018 = vld [vmem:[%s12008 + $0x24] sm:$0xf]
  %v12019 = vld [vmem:[%s12008 + $0x28] sm:$0xf]
  %v12020 = vld [vmem:[%s12008 + $0x2c] sm:$0xf]
  %v12021 = vld [vmem:[%s12008 + $0x30] sm:$0xf]
  %v12022 = vld [vmem:[%s12008 + $0x34] sm:$0xf]
  %v12023 = vld [vmem:[%s12008 + $0x38] sm:$0xf]
  %v12024 = vld [vmem:[%s12008 + $0x3c] sm:$0xf]
  %v12025 = vld [vmem:[%s12008 + $0x40] sm:$0xf]
  %v12026 = vld [vmem:[%s12008 + $0x44] sm:$0xf]
  %v12027 = vld [vmem:[%s12008 + $0x48] sm:$0xf]
  %v12028 = vld [vmem:[%s12008 + $0x4c] sm:$0xf]
  %v12029 = vld [vmem:[%s12008 + $0x50] sm:$0xf]
  %v12030 = vld [vmem:[%s12008 + $0x54] sm:$0xf]
  %v12031 = vld [vmem:[%s12008 + $0x58] sm:$0xf]
  %v12032 = vld [vmem:[%s12008 + $0x5c] sm:$0xf]
  %v12033 = vld [vmem:[%s12008 + $0x60] sm:$0xf]
  %v12034 = vld [vmem:[%s12008 + $0x64] sm:$0xf]
  %v12035 = vld [vmem:[%s12008 + $0x68] sm:$0xf]
  %v12036 = vld [vmem:[%s12008 + $0x6c] sm:$0xf]
  %v12037 = vld [vmem:[%s12008 + $0x70] sm:$0xf]
  %v12038 = vld [vmem:[%s12008 + $0x74] sm:$0xf]
  %v12039 = vld [vmem:[%s12008 + $0x78] sm:$0xf]
  %v12040 = vld [vmem:[%s12008 + $0x7c] sm:$0xf]
  %v12041 = vld [vmem:[%s12008 + $0x80] sm:$0xf]
  %v12042 = vld [vmem:[%s12008 + $0x84] sm:$0xf]
  %v12043 = vld [vmem:[%s12008 + $0x88] sm:$0xf]
  %v12044 = vld [vmem:[%s12008 + $0x8c] sm:$0xf]
  %v12045 = vld [vmem:[%s12008 + $0x90] sm:$0xf]
  %v12046 = vld [vmem:[%s12008 + $0x94] sm:$0xf]
  %v12047 = vld [vmem:[%s12008 + $0x98] sm:$0xf]
  %v12048 = vld [vmem:[%s12008 + $0x9c] sm:$0xf]
  %v12049 = vld [vmem:[%s12008 + $0xa0] sm:$0xf]
  %v12050 = vld [vmem:[%s12008 + $0xa4] sm:$0xf]
  %v12051 = vld [vmem:[%s12008 + $0xa8] sm:$0xf]
  %v12052 = vld [vmem:[%s12008 + $0xac] sm:$0xf]
  %v12053 = vld [vmem:[%s12008 + $0xb0] sm:$0xf]
  %v12054 = vld [vmem:[%s12008 + $0xb4] sm:$0xf]
  %v12055 = vld [vmem:[%s12008 + $0xb8] sm:$0xf]
  %v12056 = vld [vmem:[%s12008 + $0xbc] sm:$0xf]
  %v12057 = vld [vmem:[%s12008 + $0xc0] sm:$0xf]
  %v12058 = vld [vmem:[%s12008 + $0xc4] sm:$0xf]
  %v12059 = vld [vmem:[%s12008 + $0xc8] sm:$0xf]
  %v12060 = vld [vmem:[%s12008 + $0xcc] sm:$0xf]
  %v12061 = vld [vmem:[%s12008 + $0xd0] sm:$0xf]
  %v12062 = vld [vmem:[%s12008 + $0xd4] sm:$0xf]
  %v12063 = vld [vmem:[%s12008 + $0xd8] sm:$0xf]
  %v12064 = vld [vmem:[%s12008 + $0xdc] sm:$0xf]
  %v12065 = vld [vmem:[%s12008 + $0xe0] sm:$0xf]
  %v12066 = vld [vmem:[%s12008 + $0xe4] sm:$0xf]
  %v12067 = vld [vmem:[%s12008 + $0xe8] sm:$0xf]
  %v12068 = vld [vmem:[%s12008 + $0xec] sm:$0xf]
  %v12069 = vld [vmem:[%s12008 + $0xf0] sm:$0xf]
  %v12070 = vld [vmem:[%s12008 + $0xf4] sm:$0xf]
  %v12071 = vld [vmem:[%s12008 + $0xf8] sm:$0xf]
  %v12072 = vld [vmem:[%s12008 + $0xfc] sm:$0xf]
  %v12073 = vrot.slane %v11227, 2
  %v12074 = vrot.slane %v11231, 1
  %v12075 = vsel %vm11260, %v12074, %v12073
  %v12076 = vsel %vm11263, %v11235, %v12075
  %v12077 = vrot.slane %v11239, 7
  %v12078 = vsel %vm11266, %v12077, %v12076
  %v12079 = vrot.slane %v11243, 6
  %v12080 = vsel %vm11269, %v12079, %v12078
  %v12081 = vrot.slane %v11247, 5
  %v12082 = vsel %vm11272, %v12081, %v12080
  %v12083 = vrot.slane %v11251, 4
  %v12084 = vsel %vm11275, %v12083, %v12082
  %v12085 = vrot.slane %v11255, 3
  %v12086 = vsel %vm11278, %v12085, %v12084
  %v12087 = vrot.slane %v11228, 2
  %v12088 = vrot.slane %v11232, 1
  %v12089 = vsel %vm11260, %v12088, %v12087
  %v12090 = vsel %vm11263, %v11236, %v12089
  %v12091 = vrot.slane %v11240, 7
  %v12092 = vsel %vm11266, %v12091, %v12090
  %v12093 = vrot.slane %v11244, 6
  %v12094 = vsel %vm11269, %v12093, %v12092
  %v12095 = vrot.slane %v11248, 5
  %v12096 = vsel %vm11272, %v12095, %v12094
  %v12097 = vrot.slane %v11252, 4
  %v12098 = vsel %vm11275, %v12097, %v12096
  %v12099 = vrot.slane %v11256, 3
  %v12100 = vsel %vm11278, %v12099, %v12098
  %v12101 = vrot.slane %v11229, 2
  %v12102 = vrot.slane %v11233, 1
  %v12103 = vsel %vm11260, %v12102, %v12101
  %v12104 = vsel %vm11263, %v11237, %v12103
  %v12105 = vrot.slane %v11241, 7
  %v12106 = vsel %vm11266, %v12105, %v12104
  %v12107 = vrot.slane %v11245, 6
  %v12108 = vsel %vm11269, %v12107, %v12106
  %v12109 = vrot.slane %v11249, 5
  %v12110 = vsel %vm11272, %v12109, %v12108
  %v12111 = vrot.slane %v11253, 4
  %v12112 = vsel %vm11275, %v12111, %v12110
  %v12113 = vrot.slane %v11257, 3
  %v12114 = vsel %vm11278, %v12113, %v12112
  %v12115 = vrot.slane %v11230, 2
  %v12116 = vrot.slane %v11234, 1
  %v12117 = vsel %vm11260, %v12116, %v12115
  %v12118 = vsel %vm11263, %v11238, %v12117
  %v12119 = vrot.slane %v11242, 7
  %v12120 = vsel %vm11266, %v12119, %v12118
  %v12121 = vrot.slane %v11246, 6
  %v12122 = vsel %vm11269, %v12121, %v12120
  %v12123 = vrot.slane %v11250, 5
  %v12124 = vsel %vm11272, %v12123, %v12122
  %v12125 = vrot.slane %v11254, 4
  %v12126 = vsel %vm11275, %v12125, %v12124
  %v12127 = vrot.slane %v11258, 3
  %v12128 = vsel %vm11278, %v12127, %v12126
  %v12129 = vpack.c.b16 %v12086, %v12086
  %v12130 = vpack.c.b16 %v12100, %v12100
  %v12131 = vpack.c.b16 %v12114, %v12114
  %v12132 = vpack.c.b16 %v12128, %v12128
  %v12201 = vunpack.c.l.b16 %v12009
  %v12202 = vunpack.c.l.b16 %v12010
  %v12203 = vunpack.c.l.b16 %v12011
  %v12204 = vunpack.c.l.b16 %v12012
  %v12205 = vunpack.c.l.b16 %v12013
  %v12206 = vunpack.c.l.b16 %v12014
  %v12207 = vunpack.c.l.b16 %v12015
  %v12208 = vunpack.c.l.b16 %v12016
  %v12209 = vunpack.c.l.b16 %v12017
  %v12210 = vunpack.c.l.b16 %v12018
  %v12211 = vunpack.c.l.b16 %v12019
  %v12212 = vunpack.c.l.b16 %v12020
  %v12213 = vunpack.c.l.b16 %v12021
  %v12214 = vunpack.c.l.b16 %v12022
  %v12215 = vunpack.c.l.b16 %v12023
  %v12216 = vunpack.c.l.b16 %v12024
  %v12217 = vunpack.c.l.b16 %v12025
  %v12218 = vunpack.c.l.b16 %v12026
  %v12219 = vunpack.c.l.b16 %v12027
  %v12220 = vunpack.c.l.b16 %v12028
  %v12221 = vunpack.c.l.b16 %v12029
  %v12222 = vunpack.c.l.b16 %v12030
  %v12223 = vunpack.c.l.b16 %v12031
  %v12224 = vunpack.c.l.b16 %v12032
  %v12225 = vunpack.c.l.b16 %v12033
  %v12226 = vunpack.c.l.b16 %v12034
  %v12227 = vunpack.c.l.b16 %v12035
  %v12228 = vunpack.c.l.b16 %v12036
  %v12229 = vunpack.c.l.b16 %v12037
  %v12230 = vunpack.c.l.b16 %v12038
  %v12231 = vunpack.c.l.b16 %v12039
  %v12232 = vunpack.c.l.b16 %v12040
  %v12233 = vunpack.c.l.b16 %v12041
  %v12234 = vunpack.c.l.b16 %v12042
  %v12235 = vunpack.c.l.b16 %v12043
  %v12236 = vunpack.c.l.b16 %v12044
  %v12237 = vunpack.c.l.b16 %v12045
  %v12238 = vunpack.c.l.b16 %v12046
  %v12239 = vunpack.c.l.b16 %v12047
  %v12240 = vunpack.c.l.b16 %v12048
  %v12241 = vunpack.c.l.b16 %v12049
  %v12242 = vunpack.c.l.b16 %v12050
  %v12243 = vunpack.c.l.b16 %v12051
  %v12244 = vunpack.c.l.b16 %v12052
  %v12245 = vunpack.c.l.b16 %v12053
  %v12246 = vunpack.c.l.b16 %v12054
  %v12247 = vunpack.c.l.b16 %v12055
  %v12248 = vunpack.c.l.b16 %v12056
  %v12249 = vunpack.c.l.b16 %v12057
  %v12250 = vunpack.c.l.b16 %v12058
  %v12251 = vunpack.c.l.b16 %v12059
  %v12252 = vunpack.c.l.b16 %v12060
  %v12253 = vunpack.c.l.b16 %v12061
  %v12254 = vunpack.c.l.b16 %v12062
  %v12255 = vunpack.c.l.b16 %v12063
  %v12256 = vunpack.c.l.b16 %v12064
  %v12257 = vunpack.c.l.b16 %v12065
  %v12258 = vunpack.c.l.b16 %v12066
  %v12259 = vunpack.c.l.b16 %v12067
  %v12260 = vunpack.c.l.b16 %v12068
  %v12261 = vunpack.c.l.b16 %v12069
  %v12262 = vunpack.c.l.b16 %v12070
  %v12263 = vunpack.c.l.b16 %v12071
  %v12264 = vunpack.c.l.b16 %v12072
  %v12265 = vpack.c.b16 %v12202, %v12201
  %v12266 = vpack.c.b16 %v12204, %v12203
  %v12267 = vpack.c.b16 %v12206, %v12205
  %v12268 = vpack.c.b16 %v12208, %v12207
  %v12269 = vpack.c.b16 %v12210, %v12209
  %v12270 = vpack.c.b16 %v12212, %v12211
  %v12271 = vpack.c.b16 %v12214, %v12213
  %v12272 = vpack.c.b16 %v12216, %v12215
  %v12273 = vpack.c.b16 %v12218, %v12217
  %v12274 = vpack.c.b16 %v12220, %v12219
  %v12275 = vpack.c.b16 %v12222, %v12221
  %v12276 = vpack.c.b16 %v12224, %v12223
  %v12277 = vpack.c.b16 %v12226, %v12225
  %v12278 = vpack.c.b16 %v12228, %v12227
  %v12279 = vpack.c.b16 %v12230, %v12229
  %v12280 = vpack.c.b16 %v12232, %v12231
  %v12281 = vpack.c.b16 %v12234, %v12233
  %v12282 = vpack.c.b16 %v12236, %v12235
  %v12283 = vpack.c.b16 %v12238, %v12237
  %v12284 = vpack.c.b16 %v12240, %v12239
  %v12285 = vpack.c.b16 %v12242, %v12241
  %v12286 = vpack.c.b16 %v12244, %v12243
  %v12287 = vpack.c.b16 %v12246, %v12245
  %v12288 = vpack.c.b16 %v12248, %v12247
  %v12289 = vpack.c.b16 %v12250, %v12249
  %v12290 = vpack.c.b16 %v12252, %v12251
  %v12291 = vpack.c.b16 %v12254, %v12253
  %v12292 = vpack.c.b16 %v12256, %v12255
  %v12293 = vpack.c.b16 %v12258, %v12257
  %v12294 = vpack.c.b16 %v12260, %v12259
  %v12295 = vpack.c.b16 %v12262, %v12261
  %v12296 = vpack.c.b16 %v12264, %v12263
  %12329 = vmatprep.subr.bf16.mxu0 0
  %12330 = vmatpush1.bf16.msra.mxu0 %v12272
  %12331 = vmatprep.subr.bf16.mxu0 0
  %12332 = vmatpush1.bf16.msra.mxu0 %v12271
  %12333 = vmatprep.subr.bf16.mxu0 0
  %12334 = vmatpush1.bf16.msra.mxu0 %v12270
  %12335 = vmatprep.subr.bf16.mxu0 0
  %12336 = vmatpush1.bf16.msra.mxu0 %v12269
  %12337 = vmatprep.subr.bf16.mxu0 0
  %12338 = vmatpush1.bf16.msra.mxu0 %v12268
  %12339 = vmatprep.subr.bf16.mxu0 0
  %12340 = vmatpush1.bf16.msra.mxu0 %v12267
  %12341 = vmatprep.subr.bf16.mxu0 0
  %12342 = vmatpush1.bf16.msra.mxu0 %v12266
  %12343 = vmatprep.subr.bf16.mxu0 0
  %12344 = vmatpush1.bf16.msra.mxu0 %v12265
  %12345 = vmatprep.subr.bf16.mxu0 0
  %12346 = vmatpush2.bf16.msra.mxu0 %v12280
  %12347 = vmatprep.subr.bf16.mxu0 0
  %12348 = vmatpush2.bf16.msra.mxu0 %v12279
  %12349 = vmatprep.subr.bf16.mxu0 0
  %12350 = vmatpush2.bf16.msra.mxu0 %v12278
  %12351 = vmatprep.subr.bf16.mxu0 0
  %12352 = vmatpush2.bf16.msra.mxu0 %v12277
  %12353 = vmatprep.subr.bf16.mxu0 0
  %12354 = vmatpush2.bf16.msra.mxu0 %v12276
  %12355 = vmatprep.subr.bf16.mxu0 0
  %12356 = vmatpush2.bf16.msra.mxu0 %v12275
  %12357 = vmatprep.subr.bf16.mxu0 0
  %12358 = vmatpush2.bf16.msra.mxu0 %v12274
  %12359 = vmatprep.subr.bf16.mxu0 0
  %12360 = vmatpush2.bf16.msra.mxu0 %v12273
  %12361 = vmatprep.mubr.bf16.mxu0 %v12130
  %12362 = vmatmul.mubr.bf16.gmra.mxu0 %v12129
  %v12363 = vpop.f32.mrf.mxu0
  %v12364 = vadd.f32 0.0, %v12363
  %v12365 = vpop.f32.mrf.mxu0
  %v12366 = vpop.f32.mrf.mxu0
  %v12367 = vpop.f32.mrf.mxu0
  %12368 = vdwg.mxu0
  %12369 = vmatprep.subr.bf16.mxu0 0
  %12370 = vmatpush1.bf16.msra.mxu0 %v12288
  %12371 = vmatprep.subr.bf16.mxu0 0
  %12372 = vmatpush1.bf16.msra.mxu0 %v12287
  %12373 = vmatprep.subr.bf16.mxu0 0
  %12374 = vmatpush1.bf16.msra.mxu0 %v12286
  %12375 = vmatprep.subr.bf16.mxu0 0
  %12376 = vmatpush1.bf16.msra.mxu0 %v12285
  %12377 = vmatprep.subr.bf16.mxu0 0
  %12378 = vmatpush1.bf16.msra.mxu0 %v12284
  %12379 = vmatprep.subr.bf16.mxu0 0
  %12380 = vmatpush1.bf16.msra.mxu0 %v12283
  %12381 = vmatprep.subr.bf16.mxu0 0
  %12382 = vmatpush1.bf16.msra.mxu0 %v12282
  %12383 = vmatprep.subr.bf16.mxu0 0
  %12384 = vmatpush1.bf16.msra.mxu0 %v12281
  %12385 = vmatprep.subr.bf16.mxu0 0
  %12386 = vmatpush2.bf16.msra.mxu0 %v12296
  %12387 = vmatprep.subr.bf16.mxu0 0
  %12388 = vmatpush2.bf16.msra.mxu0 %v12295
  %12389 = vmatprep.subr.bf16.mxu0 0
  %12390 = vmatpush2.bf16.msra.mxu0 %v12294
  %12391 = vmatprep.subr.bf16.mxu0 0
  %12392 = vmatpush2.bf16.msra.mxu0 %v12293
  %12393 = vmatprep.subr.bf16.mxu0 0
  %12394 = vmatpush2.bf16.msra.mxu0 %v12292
  %12395 = vmatprep.subr.bf16.mxu0 0
  %12396 = vmatpush2.bf16.msra.mxu0 %v12291
  %12397 = vmatprep.subr.bf16.mxu0 0
  %12398 = vmatpush2.bf16.msra.mxu0 %v12290
  %12399 = vmatprep.subr.bf16.mxu0 0
  %12400 = vmatpush2.bf16.msra.mxu0 %v12289
  %12401 = vmatprep.mubr.bf16.mxu0 %v12132
  %12402 = vmatmul.mubr.bf16.gmra.mxu0 %v12131
  %v12403 = vpop.f32.mrf.mxu0
  %v12404 = vadd.f32 %v12364, %v12403
  %v12405 = vpop.f32.mrf.mxu0
  %v12406 = vpop.f32.mrf.mxu0
  %v12407 = vpop.f32.mrf.mxu0
  %12408 = vdwg.mxu0
  %v12409 = vadd.f32 %v12007, %v12404
  %12410 = vst [vmem:[#allocation3] sm:$0xff] %v12409
  %v12411 = vld [vmem:[#allocation3] sm:$0xff]
  %s12412 = scalar_lea.vmem %s5, 768
  %v12413 = vld [vmem:[%s12412] sm:$0xf]
  %v12414 = vld [vmem:[%s12412 + $0x4] sm:$0xf]
  %v12415 = vld [vmem:[%s12412 + $0x8] sm:$0xf]
  %v12416 = vld [vmem:[%s12412 + $0xc] sm:$0xf]
  %v12417 = vld [vmem:[%s12412 + $0x10] sm:$0xf]
  %v12418 = vld [vmem:[%s12412 + $0x14] sm:$0xf]
  %v12419 = vld [vmem:[%s12412 + $0x18] sm:$0xf]
  %v12420 = vld [vmem:[%s12412 + $0x1c] sm:$0xf]
  %v12421 = vld [vmem:[%s12412 + $0x20] sm:$0xf]
  %v12422 = vld [vmem:[%s12412 + $0x24] sm:$0xf]
  %v12423 = vld [vmem:[%s12412 + $0x28] sm:$0xf]
  %v12424 = vld [vmem:[%s12412 + $0x2c] sm:$0xf]
  %v12425 = vld [vmem:[%s12412 + $0x30] sm:$0xf]
  %v12426 = vld [vmem:[%s12412 + $0x34] sm:$0xf]
  %v12427 = vld [vmem:[%s12412 + $0x38] sm:$0xf]
  %v12428 = vld [vmem:[%s12412 + $0x3c] sm:$0xf]
  %v12429 = vld [vmem:[%s12412 + $0x40] sm:$0xf]
  %v12430 = vld [vmem:[%s12412 + $0x44] sm:$0xf]
  %v12431 = vld [vmem:[%s12412 + $0x48] sm:$0xf]
  %v12432 = vld [vmem:[%s12412 + $0x4c] sm:$0xf]
  %v12433 = vld [vmem:[%s12412 + $0x50] sm:$0xf]
  %v12434 = vld [vmem:[%s12412 + $0x54] sm:$0xf]
  %v12435 = vld [vmem:[%s12412 + $0x58] sm:$0xf]
  %v12436 = vld [vmem:[%s12412 + $0x5c] sm:$0xf]
  %v12437 = vld [vmem:[%s12412 + $0x60] sm:$0xf]
  %v12438 = vld [vmem:[%s12412 + $0x64] sm:$0xf]
  %v12439 = vld [vmem:[%s12412 + $0x68] sm:$0xf]
  %v12440 = vld [vmem:[%s12412 + $0x6c] sm:$0xf]
  %v12441 = vld [vmem:[%s12412 + $0x70] sm:$0xf]
  %v12442 = vld [vmem:[%s12412 + $0x74] sm:$0xf]
  %v12443 = vld [vmem:[%s12412 + $0x78] sm:$0xf]
  %v12444 = vld [vmem:[%s12412 + $0x7c] sm:$0xf]
  %v12445 = vld [vmem:[%s12412 + $0x80] sm:$0xf]
  %v12446 = vld [vmem:[%s12412 + $0x84] sm:$0xf]
  %v12447 = vld [vmem:[%s12412 + $0x88] sm:$0xf]
  %v12448 = vld [vmem:[%s12412 + $0x8c] sm:$0xf]
  %v12449 = vld [vmem:[%s12412 + $0x90] sm:$0xf]
  %v12450 = vld [vmem:[%s12412 + $0x94] sm:$0xf]
  %v12451 = vld [vmem:[%s12412 + $0x98] sm:$0xf]
  %v12452 = vld [vmem:[%s12412 + $0x9c] sm:$0xf]
  %v12453 = vld [vmem:[%s12412 + $0xa0] sm:$0xf]
  %v12454 = vld [vmem:[%s12412 + $0xa4] sm:$0xf]
  %v12455 = vld [vmem:[%s12412 + $0xa8] sm:$0xf]
  %v12456 = vld [vmem:[%s12412 + $0xac] sm:$0xf]
  %v12457 = vld [vmem:[%s12412 + $0xb0] sm:$0xf]
  %v12458 = vld [vmem:[%s12412 + $0xb4] sm:$0xf]
  %v12459 = vld [vmem:[%s12412 + $0xb8] sm:$0xf]
  %v12460 = vld [vmem:[%s12412 + $0xbc] sm:$0xf]
  %v12461 = vld [vmem:[%s12412 + $0xc0] sm:$0xf]
  %v12462 = vld [vmem:[%s12412 + $0xc4] sm:$0xf]
  %v12463 = vld [vmem:[%s12412 + $0xc8] sm:$0xf]
  %v12464 = vld [vmem:[%s12412 + $0xcc] sm:$0xf]
  %v12465 = vld [vmem:[%s12412 + $0xd0] sm:$0xf]
  %v12466 = vld [vmem:[%s12412 + $0xd4] sm:$0xf]
  %v12467 = vld [vmem:[%s12412 + $0xd8] sm:$0xf]
  %v12468 = vld [vmem:[%s12412 + $0xdc] sm:$0xf]
  %v12469 = vld [vmem:[%s12412 + $0xe0] sm:$0xf]
  %v12470 = vld [vmem:[%s12412 + $0xe4] sm:$0xf]
  %v12471 = vld [vmem:[%s12412 + $0xe8] sm:$0xf]
  %v12472 = vld [vmem:[%s12412 + $0xec] sm:$0xf]
  %v12473 = vld [vmem:[%s12412 + $0xf0] sm:$0xf]
  %v12474 = vld [vmem:[%s12412 + $0xf4] sm:$0xf]
  %v12475 = vld [vmem:[%s12412 + $0xf8] sm:$0xf]
  %v12476 = vld [vmem:[%s12412 + $0xfc] sm:$0xf]
  %v12477 = vrot.slane %v11227, 3
  %v12478 = vrot.slane %v11231, 2
  %v12479 = vsel %vm11260, %v12478, %v12477
  %v12480 = vrot.slane %v11235, 1
  %v12481 = vsel %vm11263, %v12480, %v12479
  %v12482 = vsel %vm11266, %v11239, %v12481
  %v12483 = vrot.slane %v11243, 7
  %v12484 = vsel %vm11269, %v12483, %v12482
  %v12485 = vrot.slane %v11247, 6
  %v12486 = vsel %vm11272, %v12485, %v12484
  %v12487 = vrot.slane %v11251, 5
  %v12488 = vsel %vm11275, %v12487, %v12486
  %v12489 = vrot.slane %v11255, 4
  %v12490 = vsel %vm11278, %v12489, %v12488
  %v12491 = vrot.slane %v11228, 3
  %v12492 = vrot.slane %v11232, 2
  %v12493 = vsel %vm11260, %v12492, %v12491
  %v12494 = vrot.slane %v11236, 1
  %v12495 = vsel %vm11263, %v12494, %v12493
  %v12496 = vsel %vm11266, %v11240, %v12495
  %v12497 = vrot.slane %v11244, 7
  %v12498 = vsel %vm11269, %v12497, %v12496
  %v12499 = vrot.slane %v11248, 6
  %v12500 = vsel %vm11272, %v12499, %v12498
  %v12501 = vrot.slane %v11252, 5
  %v12502 = vsel %vm11275, %v12501, %v12500
  %v12503 = vrot.slane %v11256, 4
  %v12504 = vsel %vm11278, %v12503, %v12502
  %v12505 = vrot.slane %v11229, 3
  %v12506 = vrot.slane %v11233, 2
  %v12507 = vsel %vm11260, %v12506, %v12505
  %v12508 = vrot.slane %v11237, 1
  %v12509 = vsel %vm11263, %v12508, %v12507
  %v12510 = vsel %vm11266, %v11241, %v12509
  %v12511 = vrot.slane %v11245, 7
  %v12512 = vsel %vm11269, %v12511, %v12510
  %v12513 = vrot.slane %v11249, 6
  %v12514 = vsel %vm11272, %v12513, %v12512
  %v12515 = vrot.slane %v11253, 5
  %v12516 = vsel %vm11275, %v12515, %v12514
  %v12517 = vrot.slane %v11257, 4
  %v12518 = vsel %vm11278, %v12517, %v12516
  %v12519 = vrot.slane %v11230, 3
  %v12520 = vrot.slane %v11234, 2
  %v12521 = vsel %vm11260, %v12520, %v12519
  %v12522 = vrot.slane %v11238, 1
  %v12523 = vsel %vm11263, %v12522, %v12521
  %v12524 = vsel %vm11266, %v11242, %v12523
  %v12525 = vrot.slane %v11246, 7
  %v12526 = vsel %vm11269, %v12525, %v12524
  %v12527 = vrot.slane %v11250, 6
  %v12528 = vsel %vm11272, %v12527, %v12526
  %v12529 = vrot.slane %v11254, 5
  %v12530 = vsel %vm11275, %v12529, %v12528
  %v12531 = vrot.slane %v11258, 4
  %v12532 = vsel %vm11278, %v12531, %v12530
  %v12533 = vpack.c.b16 %v12490, %v12490
  %v12534 = vpack.c.b16 %v12504, %v12504
  %v12535 = vpack.c.b16 %v12518, %v12518
  %v12536 = vpack.c.b16 %v12532, %v12532
  %v12605 = vunpack.c.l.b16 %v12413
  %v12606 = vunpack.c.l.b16 %v12414
  %v12607 = vunpack.c.l.b16 %v12415
  %v12608 = vunpack.c.l.b16 %v12416
  %v12609 = vunpack.c.l.b16 %v12417
  %v12610 = vunpack.c.l.b16 %v12418
  %v12611 = vunpack.c.l.b16 %v12419
  %v12612 = vunpack.c.l.b16 %v12420
  %v12613 = vunpack.c.l.b16 %v12421
  %v12614 = vunpack.c.l.b16 %v12422
  %v12615 = vunpack.c.l.b16 %v12423
  %v12616 = vunpack.c.l.b16 %v12424
  %v12617 = vunpack.c.l.b16 %v12425
  %v12618 = vunpack.c.l.b16 %v12426
  %v12619 = vunpack.c.l.b16 %v12427
  %v12620 = vunpack.c.l.b16 %v12428
  %v12621 = vunpack.c.l.b16 %v12429
  %v12622 = vunpack.c.l.b16 %v12430
  %v12623 = vunpack.c.l.b16 %v12431
  %v12624 = vunpack.c.l.b16 %v12432
  %v12625 = vunpack.c.l.b16 %v12433
  %v12626 = vunpack.c.l.b16 %v12434
  %v12627 = vunpack.c.l.b16 %v12435
  %v12628 = vunpack.c.l.b16 %v12436
  %v12629 = vunpack.c.l.b16 %v12437
  %v12630 = vunpack.c.l.b16 %v12438
  %v12631 = vunpack.c.l.b16 %v12439
  %v12632 = vunpack.c.l.b16 %v12440
  %v12633 = vunpack.c.l.b16 %v12441
  %v12634 = vunpack.c.l.b16 %v12442
  %v12635 = vunpack.c.l.b16 %v12443
  %v12636 = vunpack.c.l.b16 %v12444
  %v12637 = vunpack.c.l.b16 %v12445
  %v12638 = vunpack.c.l.b16 %v12446
  %v12639 = vunpack.c.l.b16 %v12447
  %v12640 = vunpack.c.l.b16 %v12448
  %v12641 = vunpack.c.l.b16 %v12449
  %v12642 = vunpack.c.l.b16 %v12450
  %v12643 = vunpack.c.l.b16 %v12451
  %v12644 = vunpack.c.l.b16 %v12452
  %v12645 = vunpack.c.l.b16 %v12453
  %v12646 = vunpack.c.l.b16 %v12454
  %v12647 = vunpack.c.l.b16 %v12455
  %v12648 = vunpack.c.l.b16 %v12456
  %v12649 = vunpack.c.l.b16 %v12457
  %v12650 = vunpack.c.l.b16 %v12458
  %v12651 = vunpack.c.l.b16 %v12459
  %v12652 = vunpack.c.l.b16 %v12460
  %v12653 = vunpack.c.l.b16 %v12461
  %v12654 = vunpack.c.l.b16 %v12462
  %v12655 = vunpack.c.l.b16 %v12463
  %v12656 = vunpack.c.l.b16 %v12464
  %v12657 = vunpack.c.l.b16 %v12465
  %v12658 = vunpack.c.l.b16 %v12466
  %v12659 = vunpack.c.l.b16 %v12467
  %v12660 = vunpack.c.l.b16 %v12468
  %v12661 = vunpack.c.l.b16 %v12469
  %v12662 = vunpack.c.l.b16 %v12470
  %v12663 = vunpack.c.l.b16 %v12471
  %v12664 = vunpack.c.l.b16 %v12472
  %v12665 = vunpack.c.l.b16 %v12473
  %v12666 = vunpack.c.l.b16 %v12474
  %v12667 = vunpack.c.l.b16 %v12475
  %v12668 = vunpack.c.l.b16 %v12476
  %v12669 = vpack.c.b16 %v12606, %v12605
  %v12670 = vpack.c.b16 %v12608, %v12607
  %v12671 = vpack.c.b16 %v12610, %v12609
  %v12672 = vpack.c.b16 %v12612, %v12611
  %v12673 = vpack.c.b16 %v12614, %v12613
  %v12674 = vpack.c.b16 %v12616, %v12615
  %v12675 = vpack.c.b16 %v12618, %v12617
  %v12676 = vpack.c.b16 %v12620, %v12619
  %v12677 = vpack.c.b16 %v12622, %v12621
  %v12678 = vpack.c.b16 %v12624, %v12623
  %v12679 = vpack.c.b16 %v12626, %v12625
  %v12680 = vpack.c.b16 %v12628, %v12627
  %v12681 = vpack.c.b16 %v12630, %v12629
  %v12682 = vpack.c.b16 %v12632, %v12631
  %v12683 = vpack.c.b16 %v12634, %v12633
  %v12684 = vpack.c.b16 %v12636, %v12635
  %v12685 = vpack.c.b16 %v12638, %v12637
  %v12686 = vpack.c.b16 %v12640, %v12639
  %v12687 = vpack.c.b16 %v12642, %v12641
  %v12688 = vpack.c.b16 %v12644, %v12643
  %v12689 = vpack.c.b16 %v12646, %v12645
  %v12690 = vpack.c.b16 %v12648, %v12647
  %v12691 = vpack.c.b16 %v12650, %v12649
  %v12692 = vpack.c.b16 %v12652, %v12651
  %v12693 = vpack.c.b16 %v12654, %v12653
  %v12694 = vpack.c.b16 %v12656, %v12655
  %v12695 = vpack.c.b16 %v12658, %v12657
  %v12696 = vpack.c.b16 %v12660, %v12659
  %v12697 = vpack.c.b16 %v12662, %v12661
  %v12698 = vpack.c.b16 %v12664, %v12663
  %v12699 = vpack.c.b16 %v12666, %v12665
  %v12700 = vpack.c.b16 %v12668, %v12667
  %12733 = vmatprep.subr.bf16.mxu0 0
  %12734 = vmatpush1.bf16.msra.mxu0 %v12676
  %12735 = vmatprep.subr.bf16.mxu0 0
  %12736 = vmatpush1.bf16.msra.mxu0 %v12675
  %12737 = vmatprep.subr.bf16.mxu0 0
  %12738 = vmatpush1.bf16.msra.mxu0 %v12674
  %12739 = vmatprep.subr.bf16.mxu0 0
  %12740 = vmatpush1.bf16.msra.mxu0 %v12673
  %12741 = vmatprep.subr.bf16.mxu0 0
  %12742 = vmatpush1.bf16.msra.mxu0 %v12672
  %12743 = vmatprep.subr.bf16.mxu0 0
  %12744 = vmatpush1.bf16.msra.mxu0 %v12671
  %12745 = vmatprep.subr.bf16.mxu0 0
  %12746 = vmatpush1.bf16.msra.mxu0 %v12670
  %12747 = vmatprep.subr.bf16.mxu0 0
  %12748 = vmatpush1.bf16.msra.mxu0 %v12669
  %12749 = vmatprep.subr.bf16.mxu0 0
  %12750 = vmatpush2.bf16.msra.mxu0 %v12684
  %12751 = vmatprep.subr.bf16.mxu0 0
  %12752 = vmatpush2.bf16.msra.mxu0 %v12683
  %12753 = vmatprep.subr.bf16.mxu0 0
  %12754 = vmatpush2.bf16.msra.mxu0 %v12682
  %12755 = vmatprep.subr.bf16.mxu0 0
  %12756 = vmatpush2.bf16.msra.mxu0 %v12681
  %12757 = vmatprep.subr.bf16.mxu0 0
  %12758 = vmatpush2.bf16.msra.mxu0 %v12680
  %12759 = vmatprep.subr.bf16.mxu0 0
  %12760 = vmatpush2.bf16.msra.mxu0 %v12679
  %12761 = vmatprep.subr.bf16.mxu0 0
  %12762 = vmatpush2.bf16.msra.mxu0 %v12678
  %12763 = vmatprep.subr.bf16.mxu0 0
  %12764 = vmatpush2.bf16.msra.mxu0 %v12677
  %12765 = vmatprep.mubr.bf16.mxu0 %v12534
  %12766 = vmatmul.mubr.bf16.gmra.mxu0 %v12533
  %v12767 = vpop.f32.mrf.mxu0
  %v12768 = vadd.f32 0.0, %v12767
  %v12769 = vpop.f32.mrf.mxu0
  %v12770 = vpop.f32.mrf.mxu0
  %v12771 = vpop.f32.mrf.mxu0
  %12772 = vdwg.mxu0
  %12773 = vmatprep.subr.bf16.mxu0 0
  %12774 = vmatpush1.bf16.msra.mxu0 %v12692
  %12775 = vmatprep.subr.bf16.mxu0 0
  %12776 = vmatpush1.bf16.msra.mxu0 %v12691
  %12777 = vmatprep.subr.bf16.mxu0 0
  %12778 = vmatpush1.bf16.msra.mxu0 %v12690
  %12779 = vmatprep.subr.bf16.mxu0 0
  %12780 = vmatpush1.bf16.msra.mxu0 %v12689
  %12781 = vmatprep.subr.bf16.mxu0 0
  %12782 = vmatpush1.bf16.msra.mxu0 %v12688
  %12783 = vmatprep.subr.bf16.mxu0 0
  %12784 = vmatpush1.bf16.msra.mxu0 %v12687
  %12785 = vmatprep.subr.bf16.mxu0 0
  %12786 = vmatpush1.bf16.msra.mxu0 %v12686
  %12787 = vmatprep.subr.bf16.mxu0 0
  %12788 = vmatpush1.bf16.msra.mxu0 %v12685
  %12789 = vmatprep.subr.bf16.mxu0 0
  %12790 = vmatpush2.bf16.msra.mxu0 %v12700
  %12791 = vmatprep.subr.bf16.mxu0 0
  %12792 = vmatpush2.bf16.msra.mxu0 %v12699
  %12793 = vmatprep.subr.bf16.mxu0 0
  %12794 = vmatpush2.bf16.msra.mxu0 %v12698
  %12795 = vmatprep.subr.bf16.mxu0 0
  %12796 = vmatpush2.bf16.msra.mxu0 %v12697
  %12797 = vmatprep.subr.bf16.mxu0 0
  %12798 = vmatpush2.bf16.msra.mxu0 %v12696
  %12799 = vmatprep.subr.bf16.mxu0 0
  %12800 = vmatpush2.bf16.msra.mxu0 %v12695
  %12801 = vmatprep.subr.bf16.mxu0 0
  %12802 = vmatpush2.bf16.msra.mxu0 %v12694
  %12803 = vmatprep.subr.bf16.mxu0 0
  %12804 = vmatpush2.bf16.msra.mxu0 %v12693
  %12805 = vmatprep.mubr.bf16.mxu0 %v12536
  %12806 = vmatmul.mubr.bf16.gmra.mxu0 %v12535
  %v12807 = vpop.f32.mrf.mxu0
  %v12808 = vadd.f32 %v12768, %v12807
  %v12809 = vpop.f32.mrf.mxu0
  %v12810 = vpop.f32.mrf.mxu0
  %v12811 = vpop.f32.mrf.mxu0
  %12812 = vdwg.mxu0
  %v12813 = vadd.f32 %v12411, %v12808
  %12814 = vst [vmem:[#allocation3] sm:$0xff] %v12813
  %v12815 = vld [vmem:[#allocation3] sm:$0xff]
  %s12816 = scalar_lea.vmem %s5, 1024
  %v12817 = vld [vmem:[%s12816] sm:$0xf]
  %v12818 = vld [vmem:[%s12816 + $0x4] sm:$0xf]
  %v12819 = vld [vmem:[%s12816 + $0x8] sm:$0xf]
  %v12820 = vld [vmem:[%s12816 + $0xc] sm:$0xf]
  %v12821 = vld [vmem:[%s12816 + $0x10] sm:$0xf]
  %v12822 = vld [vmem:[%s12816 + $0x14] sm:$0xf]
  %v12823 = vld [vmem:[%s12816 + $0x18] sm:$0xf]
  %v12824 = vld [vmem:[%s12816 + $0x1c] sm:$0xf]
  %v12825 = vld [vmem:[%s12816 + $0x20] sm:$0xf]
  %v12826 = vld [vmem:[%s12816 + $0x24] sm:$0xf]
  %v12827 = vld [vmem:[%s12816 + $0x28] sm:$0xf]
  %v12828 = vld [vmem:[%s12816 + $0x2c] sm:$0xf]
  %v12829 = vld [vmem:[%s12816 + $0x30] sm:$0xf]
  %v12830 = vld [vmem:[%s12816 + $0x34] sm:$0xf]
  %v12831 = vld [vmem:[%s12816 + $0x38] sm:$0xf]
  %v12832 = vld [vmem:[%s12816 + $0x3c] sm:$0xf]
  %v12833 = vld [vmem:[%s12816 + $0x40] sm:$0xf]
  %v12834 = vld [vmem:[%s12816 + $0x44] sm:$0xf]
  %v12835 = vld [vmem:[%s12816 + $0x48] sm:$0xf]
  %v12836 = vld [vmem:[%s12816 + $0x4c] sm:$0xf]
  %v12837 = vld [vmem:[%s12816 + $0x50] sm:$0xf]
  %v12838 = vld [vmem:[%s12816 + $0x54] sm:$0xf]
  %v12839 = vld [vmem:[%s12816 + $0x58] sm:$0xf]
  %v12840 = vld [vmem:[%s12816 + $0x5c] sm:$0xf]
  %v12841 = vld [vmem:[%s12816 + $0x60] sm:$0xf]
  %v12842 = vld [vmem:[%s12816 + $0x64] sm:$0xf]
  %v12843 = vld [vmem:[%s12816 + $0x68] sm:$0xf]
  %v12844 = vld [vmem:[%s12816 + $0x6c] sm:$0xf]
  %v12845 = vld [vmem:[%s12816 + $0x70] sm:$0xf]
  %v12846 = vld [vmem:[%s12816 + $0x74] sm:$0xf]
  %v12847 = vld [vmem:[%s12816 + $0x78] sm:$0xf]
  %v12848 = vld [vmem:[%s12816 + $0x7c] sm:$0xf]
  %v12849 = vld [vmem:[%s12816 + $0x80] sm:$0xf]
  %v12850 = vld [vmem:[%s12816 + $0x84] sm:$0xf]
  %v12851 = vld [vmem:[%s12816 + $0x88] sm:$0xf]
  %v12852 = vld [vmem:[%s12816 + $0x8c] sm:$0xf]
  %v12853 = vld [vmem:[%s12816 + $0x90] sm:$0xf]
  %v12854 = vld [vmem:[%s12816 + $0x94] sm:$0xf]
  %v12855 = vld [vmem:[%s12816 + $0x98] sm:$0xf]
  %v12856 = vld [vmem:[%s12816 + $0x9c] sm:$0xf]
  %v12857 = vld [vmem:[%s12816 + $0xa0] sm:$0xf]
  %v12858 = vld [vmem:[%s12816 + $0xa4] sm:$0xf]
  %v12859 = vld [vmem:[%s12816 + $0xa8] sm:$0xf]
  %v12860 = vld [vmem:[%s12816 + $0xac] sm:$0xf]
  %v12861 = vld [vmem:[%s12816 + $0xb0] sm:$0xf]
  %v12862 = vld [vmem:[%s12816 + $0xb4] sm:$0xf]
  %v12863 = vld [vmem:[%s12816 + $0xb8] sm:$0xf]
  %v12864 = vld [vmem:[%s12816 + $0xbc] sm:$0xf]
  %v12865 = vld [vmem:[%s12816 + $0xc0] sm:$0xf]
  %v12866 = vld [vmem:[%s12816 + $0xc4] sm:$0xf]
  %v12867 = vld [vmem:[%s12816 + $0xc8] sm:$0xf]
  %v12868 = vld [vmem:[%s12816 + $0xcc] sm:$0xf]
  %v12869 = vld [vmem:[%s12816 + $0xd0] sm:$0xf]
  %v12870 = vld [vmem:[%s12816 + $0xd4] sm:$0xf]
  %v12871 = vld [vmem:[%s12816 + $0xd8] sm:$0xf]
  %v12872 = vld [vmem:[%s12816 + $0xdc] sm:$0xf]
  %v12873 = vld [vmem:[%s12816 + $0xe0] sm:$0xf]
  %v12874 = vld [vmem:[%s12816 + $0xe4] sm:$0xf]
  %v12875 = vld [vmem:[%s12816 + $0xe8] sm:$0xf]
  %v12876 = vld [vmem:[%s12816 + $0xec] sm:$0xf]
  %v12877 = vld [vmem:[%s12816 + $0xf0] sm:$0xf]
  %v12878 = vld [vmem:[%s12816 + $0xf4] sm:$0xf]
  %v12879 = vld [vmem:[%s12816 + $0xf8] sm:$0xf]
  %v12880 = vld [vmem:[%s12816 + $0xfc] sm:$0xf]
  %v12881 = vrot.slane %v11227, 4
  %v12882 = vrot.slane %v11231, 3
  %v12883 = vsel %vm11260, %v12882, %v12881
  %v12884 = vrot.slane %v11235, 2
  %v12885 = vsel %vm11263, %v12884, %v12883
  %v12886 = vrot.slane %v11239, 1
  %v12887 = vsel %vm11266, %v12886, %v12885
  %v12888 = vsel %vm11269, %v11243, %v12887
  %v12889 = vrot.slane %v11247, 7
  %v12890 = vsel %vm11272, %v12889, %v12888
  %v12891 = vrot.slane %v11251, 6
  %v12892 = vsel %vm11275, %v12891, %v12890
  %v12893 = vrot.slane %v11255, 5
  %v12894 = vsel %vm11278, %v12893, %v12892
  %v12895 = vrot.slane %v11228, 4
  %v12896 = vrot.slane %v11232, 3
  %v12897 = vsel %vm11260, %v12896, %v12895
  %v12898 = vrot.slane %v11236, 2
  %v12899 = vsel %vm11263, %v12898, %v12897
  %v12900 = vrot.slane %v11240, 1
  %v12901 = vsel %vm11266, %v12900, %v12899
  %v12902 = vsel %vm11269, %v11244, %v12901
  %v12903 = vrot.slane %v11248, 7
  %v12904 = vsel %vm11272, %v12903, %v12902
  %v12905 = vrot.slane %v11252, 6
  %v12906 = vsel %vm11275, %v12905, %v12904
  %v12907 = vrot.slane %v11256, 5
  %v12908 = vsel %vm11278, %v12907, %v12906
  %v12909 = vrot.slane %v11229, 4
  %v12910 = vrot.slane %v11233, 3
  %v12911 = vsel %vm11260, %v12910, %v12909
  %v12912 = vrot.slane %v11237, 2
  %v12913 = vsel %vm11263, %v12912, %v12911
  %v12914 = vrot.slane %v11241, 1
  %v12915 = vsel %vm11266, %v12914, %v12913
  %v12916 = vsel %vm11269, %v11245, %v12915
  %v12917 = vrot.slane %v11249, 7
  %v12918 = vsel %vm11272, %v12917, %v12916
  %v12919 = vrot.slane %v11253, 6
  %v12920 = vsel %vm11275, %v12919, %v12918
  %v12921 = vrot.slane %v11257, 5
  %v12922 = vsel %vm11278, %v12921, %v12920
  %v12923 = vrot.slane %v11230, 4
  %v12924 = vrot.slane %v11234, 3
  %v12925 = vsel %vm11260, %v12924, %v12923
  %v12926 = vrot.slane %v11238, 2
  %v12927 = vsel %vm11263, %v12926, %v12925
  %v12928 = vrot.slane %v11242, 1
  %v12929 = vsel %vm11266, %v12928, %v12927
  %v12930 = vsel %vm11269, %v11246, %v12929
  %v12931 = vrot.slane %v11250, 7
  %v12932 = vsel %vm11272, %v12931, %v12930
  %v12933 = vrot.slane %v11254, 6
  %v12934 = vsel %vm11275, %v12933, %v12932
  %v12935 = vrot.slane %v11258, 5
  %v12936 = vsel %vm11278, %v12935, %v12934
  %v12937 = vpack.c.b16 %v12894, %v12894
  %v12938 = vpack.c.b16 %v12908, %v12908
  %v12939 = vpack.c.b16 %v12922, %v12922
  %v12940 = vpack.c.b16 %v12936, %v12936
  %v13009 = vunpack.c.l.b16 %v12817
  %v13010 = vunpack.c.l.b16 %v12818
  %v13011 = vunpack.c.l.b16 %v12819
  %v13012 = vunpack.c.l.b16 %v12820
  %v13013 = vunpack.c.l.b16 %v12821
  %v13014 = vunpack.c.l.b16 %v12822
  %v13015 = vunpack.c.l.b16 %v12823
  %v13016 = vunpack.c.l.b16 %v12824
  %v13017 = vunpack.c.l.b16 %v12825
  %v13018 = vunpack.c.l.b16 %v12826
  %v13019 = vunpack.c.l.b16 %v12827
  %v13020 = vunpack.c.l.b16 %v12828
  %v13021 = vunpack.c.l.b16 %v12829
  %v13022 = vunpack.c.l.b16 %v12830
  %v13023 = vunpack.c.l.b16 %v12831
  %v13024 = vunpack.c.l.b16 %v12832
  %v13025 = vunpack.c.l.b16 %v12833
  %v13026 = vunpack.c.l.b16 %v12834
  %v13027 = vunpack.c.l.b16 %v12835
  %v13028 = vunpack.c.l.b16 %v12836
  %v13029 = vunpack.c.l.b16 %v12837
  %v13030 = vunpack.c.l.b16 %v12838
  %v13031 = vunpack.c.l.b16 %v12839
  %v13032 = vunpack.c.l.b16 %v12840
  %v13033 = vunpack.c.l.b16 %v12841
  %v13034 = vunpack.c.l.b16 %v12842
  %v13035 = vunpack.c.l.b16 %v12843
  %v13036 = vunpack.c.l.b16 %v12844
  %v13037 = vunpack.c.l.b16 %v12845
  %v13038 = vunpack.c.l.b16 %v12846
  %v13039 = vunpack.c.l.b16 %v12847
  %v13040 = vunpack.c.l.b16 %v12848
  %v13041 = vunpack.c.l.b16 %v12849
  %v13042 = vunpack.c.l.b16 %v12850
  %v13043 = vunpack.c.l.b16 %v12851
  %v13044 = vunpack.c.l.b16 %v12852
  %v13045 = vunpack.c.l.b16 %v12853
  %v13046 = vunpack.c.l.b16 %v12854
  %v13047 = vunpack.c.l.b16 %v12855
  %v13048 = vunpack.c.l.b16 %v12856
  %v13049 = vunpack.c.l.b16 %v12857
  %v13050 = vunpack.c.l.b16 %v12858
  %v13051 = vunpack.c.l.b16 %v12859
  %v13052 = vunpack.c.l.b16 %v12860
  %v13053 = vunpack.c.l.b16 %v12861
  %v13054 = vunpack.c.l.b16 %v12862
  %v13055 = vunpack.c.l.b16 %v12863
  %v13056 = vunpack.c.l.b16 %v12864
  %v13057 = vunpack.c.l.b16 %v12865
  %v13058 = vunpack.c.l.b16 %v12866
  %v13059 = vunpack.c.l.b16 %v12867
  %v13060 = vunpack.c.l.b16 %v12868
  %v13061 = vunpack.c.l.b16 %v12869
  %v13062 = vunpack.c.l.b16 %v12870
  %v13063 = vunpack.c.l.b16 %v12871
  %v13064 = vunpack.c.l.b16 %v12872
  %v13065 = vunpack.c.l.b16 %v12873
  %v13066 = vunpack.c.l.b16 %v12874
  %v13067 = vunpack.c.l.b16 %v12875
  %v13068 = vunpack.c.l.b16 %v12876
  %v13069 = vunpack.c.l.b16 %v12877
  %v13070 = vunpack.c.l.b16 %v12878
  %v13071 = vunpack.c.l.b16 %v12879
  %v13072 = vunpack.c.l.b16 %v12880
  %v13073 = vpack.c.b16 %v13010, %v13009
  %v13074 = vpack.c.b16 %v13012, %v13011
  %v13075 = vpack.c.b16 %v13014, %v13013
  %v13076 = vpack.c.b16 %v13016, %v13015
  %v13077 = vpack.c.b16 %v13018, %v13017
  %v13078 = vpack.c.b16 %v13020, %v13019
  %v13079 = vpack.c.b16 %v13022, %v13021
  %v13080 = vpack.c.b16 %v13024, %v13023
  %v13081 = vpack.c.b16 %v13026, %v13025
  %v13082 = vpack.c.b16 %v13028, %v13027
  %v13083 = vpack.c.b16 %v13030, %v13029
  %v13084 = vpack.c.b16 %v13032, %v13031
  %v13085 = vpack.c.b16 %v13034, %v13033
  %v13086 = vpack.c.b16 %v13036, %v13035
  %v13087 = vpack.c.b16 %v13038, %v13037
  %v13088 = vpack.c.b16 %v13040, %v13039
  %v13089 = vpack.c.b16 %v13042, %v13041
  %v13090 = vpack.c.b16 %v13044, %v13043
  %v13091 = vpack.c.b16 %v13046, %v13045
  %v13092 = vpack.c.b16 %v13048, %v13047
  %v13093 = vpack.c.b16 %v13050, %v13049
  %v13094 = vpack.c.b16 %v13052, %v13051
  %v13095 = vpack.c.b16 %v13054, %v13053
  %v13096 = vpack.c.b16 %v13056, %v13055
  %v13097 = vpack.c.b16 %v13058, %v13057
  %v13098 = vpack.c.b16 %v13060, %v13059
  %v13099 = vpack.c.b16 %v13062, %v13061
  %v13100 = vpack.c.b16 %v13064, %v13063
  %v13101 = vpack.c.b16 %v13066, %v13065
  %v13102 = vpack.c.b16 %v13068, %v13067
  %v13103 = vpack.c.b16 %v13070, %v13069
  %v13104 = vpack.c.b16 %v13072, %v13071
  %13137 = vmatprep.subr.bf16.mxu0 0
  %13138 = vmatpush1.bf16.msra.mxu0 %v13080
  %13139 = vmatprep.subr.bf16.mxu0 0
  %13140 = vmatpush1.bf16.msra.mxu0 %v13079
  %13141 = vmatprep.subr.bf16.mxu0 0
  %13142 = vmatpush1.bf16.msra.mxu0 %v13078
  %13143 = vmatprep.subr.bf16.mxu0 0
  %13144 = vmatpush1.bf16.msra.mxu0 %v13077
  %13145 = vmatprep.subr.bf16.mxu0 0
  %13146 = vmatpush1.bf16.msra.mxu0 %v13076
  %13147 = vmatprep.subr.bf16.mxu0 0
  %13148 = vmatpush1.bf16.msra.mxu0 %v13075
  %13149 = vmatprep.subr.bf16.mxu0 0
  %13150 = vmatpush1.bf16.msra.mxu0 %v13074
  %13151 = vmatprep.subr.bf16.mxu0 0
  %13152 = vmatpush1.bf16.msra.mxu0 %v13073
  %13153 = vmatprep.subr.bf16.mxu0 0
  %13154 = vmatpush2.bf16.msra.mxu0 %v13088
  %13155 = vmatprep.subr.bf16.mxu0 0
  %13156 = vmatpush2.bf16.msra.mxu0 %v13087
  %13157 = vmatprep.subr.bf16.mxu0 0
  %13158 = vmatpush2.bf16.msra.mxu0 %v13086
  %13159 = vmatprep.subr.bf16.mxu0 0
  %13160 = vmatpush2.bf16.msra.mxu0 %v13085
  %13161 = vmatprep.subr.bf16.mxu0 0
  %13162 = vmatpush2.bf16.msra.mxu0 %v13084
  %13163 = vmatprep.subr.bf16.mxu0 0
  %13164 = vmatpush2.bf16.msra.mxu0 %v13083
  %13165 = vmatprep.subr.bf16.mxu0 0
  %13166 = vmatpush2.bf16.msra.mxu0 %v13082
  %13167 = vmatprep.subr.bf16.mxu0 0
  %13168 = vmatpush2.bf16.msra.mxu0 %v13081
  %13169 = vmatprep.mubr.bf16.mxu0 %v12938
  %13170 = vmatmul.mubr.bf16.gmra.mxu0 %v12937
  %v13171 = vpop.f32.mrf.mxu0
  %v13172 = vadd.f32 0.0, %v13171
  %v13173 = vpop.f32.mrf.mxu0
  %v13174 = vpop.f32.mrf.mxu0
  %v13175 = vpop.f32.mrf.mxu0
  %13176 = vdwg.mxu0
  %13177 = vmatprep.subr.bf16.mxu0 0
  %13178 = vmatpush1.bf16.msra.mxu0 %v13096
  %13179 = vmatprep.subr.bf16.mxu0 0
  %13180 = vmatpush1.bf16.msra.mxu0 %v13095
  %13181 = vmatprep.subr.bf16.mxu0 0
  %13182 = vmatpush1.bf16.msra.mxu0 %v13094
  %13183 = vmatprep.subr.bf16.mxu0 0
  %13184 = vmatpush1.bf16.msra.mxu0 %v13093
  %13185 = vmatprep.subr.bf16.mxu0 0
  %13186 = vmatpush1.bf16.msra.mxu0 %v13092
  %13187 = vmatprep.subr.bf16.mxu0 0
  %13188 = vmatpush1.bf16.msra.mxu0 %v13091
  %13189 = vmatprep.subr.bf16.mxu0 0
  %13190 = vmatpush1.bf16.msra.mxu0 %v13090
  %13191 = vmatprep.subr.bf16.mxu0 0
  %13192 = vmatpush1.bf16.msra.mxu0 %v13089
  %13193 = vmatprep.subr.bf16.mxu0 0
  %13194 = vmatpush2.bf16.msra.mxu0 %v13104
  %13195 = vmatprep.subr.bf16.mxu0 0
  %13196 = vmatpush2.bf16.msra.mxu0 %v13103
  %13197 = vmatprep.subr.bf16.mxu0 0
  %13198 = vmatpush2.bf16.msra.mxu0 %v13102
  %13199 = vmatprep.subr.bf16.mxu0 0
  %13200 = vmatpush2.bf16.msra.mxu0 %v13101
  %13201 = vmatprep.subr.bf16.mxu0 0
  %13202 = vmatpush2.bf16.msra.mxu0 %v13100
  %13203 = vmatprep.subr.bf16.mxu0 0
  %13204 = vmatpush2.bf16.msra.mxu0 %v13099
  %13205 = vmatprep.subr.bf16.mxu0 0
  %13206 = vmatpush2.bf16.msra.mxu0 %v13098
  %13207 = vmatprep.subr.bf16.mxu0 0
  %13208 = vmatpush2.bf16.msra.mxu0 %v13097
  %13209 = vmatprep.mubr.bf16.mxu0 %v12940
  %13210 = vmatmul.mubr.bf16.gmra.mxu0 %v12939
  %v13211 = vpop.f32.mrf.mxu0
  %v13212 = vadd.f32 %v13172, %v13211
  %v13213 = vpop.f32.mrf.mxu0
  %v13214 = vpop.f32.mrf.mxu0
  %v13215 = vpop.f32.mrf.mxu0
  %13216 = vdwg.mxu0
  %v13217 = vadd.f32 %v12815, %v13212
  %13218 = vst [vmem:[#allocation3] sm:$0xff] %v13217
  %v13219 = vld [vmem:[#allocation3] sm:$0xff]
  %s13220 = scalar_lea.vmem %s5, 1280
  %v13221 = vld [vmem:[%s13220] sm:$0xf]
  %v13222 = vld [vmem:[%s13220 + $0x4] sm:$0xf]
  %v13223 = vld [vmem:[%s13220 + $0x8] sm:$0xf]
  %v13224 = vld [vmem:[%s13220 + $0xc] sm:$0xf]
  %v13225 = vld [vmem:[%s13220 + $0x10] sm:$0xf]
  %v13226 = vld [vmem:[%s13220 + $0x14] sm:$0xf]
  %v13227 = vld [vmem:[%s13220 + $0x18] sm:$0xf]
  %v13228 = vld [vmem:[%s13220 + $0x1c] sm:$0xf]
  %v13229 = vld [vmem:[%s13220 + $0x20] sm:$0xf]
  %v13230 = vld [vmem:[%s13220 + $0x24] sm:$0xf]
  %v13231 = vld [vmem:[%s13220 + $0x28] sm:$0xf]
  %v13232 = vld [vmem:[%s13220 + $0x2c] sm:$0xf]
  %v13233 = vld [vmem:[%s13220 + $0x30] sm:$0xf]
  %v13234 = vld [vmem:[%s13220 + $0x34] sm:$0xf]
  %v13235 = vld [vmem:[%s13220 + $0x38] sm:$0xf]
  %v13236 = vld [vmem:[%s13220 + $0x3c] sm:$0xf]
  %v13237 = vld [vmem:[%s13220 + $0x40] sm:$0xf]
  %v13238 = vld [vmem:[%s13220 + $0x44] sm:$0xf]
  %v13239 = vld [vmem:[%s13220 + $0x48] sm:$0xf]
  %v13240 = vld [vmem:[%s13220 + $0x4c] sm:$0xf]
  %v13241 = vld [vmem:[%s13220 + $0x50] sm:$0xf]
  %v13242 = vld [vmem:[%s13220 + $0x54] sm:$0xf]
  %v13243 = vld [vmem:[%s13220 + $0x58] sm:$0xf]
  %v13244 = vld [vmem:[%s13220 + $0x5c] sm:$0xf]
  %v13245 = vld [vmem:[%s13220 + $0x60] sm:$0xf]
  %v13246 = vld [vmem:[%s13220 + $0x64] sm:$0xf]
  %v13247 = vld [vmem:[%s13220 + $0x68] sm:$0xf]
  %v13248 = vld [vmem:[%s13220 + $0x6c] sm:$0xf]
  %v13249 = vld [vmem:[%s13220 + $0x70] sm:$0xf]
  %v13250 = vld [vmem:[%s13220 + $0x74] sm:$0xf]
  %v13251 = vld [vmem:[%s13220 + $0x78] sm:$0xf]
  %v13252 = vld [vmem:[%s13220 + $0x7c] sm:$0xf]
  %v13253 = vld [vmem:[%s13220 + $0x80] sm:$0xf]
  %v13254 = vld [vmem:[%s13220 + $0x84] sm:$0xf]
  %v13255 = vld [vmem:[%s13220 + $0x88] sm:$0xf]
  %v13256 = vld [vmem:[%s13220 + $0x8c] sm:$0xf]
  %v13257 = vld [vmem:[%s13220 + $0x90] sm:$0xf]
  %v13258 = vld [vmem:[%s13220 + $0x94] sm:$0xf]
  %v13259 = vld [vmem:[%s13220 + $0x98] sm:$0xf]
  %v13260 = vld [vmem:[%s13220 + $0x9c] sm:$0xf]
  %v13261 = vld [vmem:[%s13220 + $0xa0] sm:$0xf]
  %v13262 = vld [vmem:[%s13220 + $0xa4] sm:$0xf]
  %v13263 = vld [vmem:[%s13220 + $0xa8] sm:$0xf]
  %v13264 = vld [vmem:[%s13220 + $0xac] sm:$0xf]
  %v13265 = vld [vmem:[%s13220 + $0xb0] sm:$0xf]
  %v13266 = vld [vmem:[%s13220 + $0xb4] sm:$0xf]
  %v13267 = vld [vmem:[%s13220 + $0xb8] sm:$0xf]
  %v13268 = vld [vmem:[%s13220 + $0xbc] sm:$0xf]
  %v13269 = vld [vmem:[%s13220 + $0xc0] sm:$0xf]
  %v13270 = vld [vmem:[%s13220 + $0xc4] sm:$0xf]
  %v13271 = vld [vmem:[%s13220 + $0xc8] sm:$0xf]
  %v13272 = vld [vmem:[%s13220 + $0xcc] sm:$0xf]
  %v13273 = vld [vmem:[%s13220 + $0xd0] sm:$0xf]
  %v13274 = vld [vmem:[%s13220 + $0xd4] sm:$0xf]
  %v13275 = vld [vmem:[%s13220 + $0xd8] sm:$0xf]
  %v13276 = vld [vmem:[%s13220 + $0xdc] sm:$0xf]
  %v13277 = vld [vmem:[%s13220 + $0xe0] sm:$0xf]
  %v13278 = vld [vmem:[%s13220 + $0xe4] sm:$0xf]
  %v13279 = vld [vmem:[%s13220 + $0xe8] sm:$0xf]
  %v13280 = vld [vmem:[%s13220 + $0xec] sm:$0xf]
  %v13281 = vld [vmem:[%s13220 + $0xf0] sm:$0xf]
  %v13282 = vld [vmem:[%s13220 + $0xf4] sm:$0xf]
  %v13283 = vld [vmem:[%s13220 + $0xf8] sm:$0xf]
  %v13284 = vld [vmem:[%s13220 + $0xfc] sm:$0xf]
  %v13285 = vrot.slane %v11227, 5
  %v13286 = vrot.slane %v11231, 4
  %v13287 = vsel %vm11260, %v13286, %v13285
  %v13288 = vrot.slane %v11235, 3
  %v13289 = vsel %vm11263, %v13288, %v13287
  %v13290 = vrot.slane %v11239, 2
  %v13291 = vsel %vm11266, %v13290, %v13289
  %v13292 = vrot.slane %v11243, 1
  %v13293 = vsel %vm11269, %v13292, %v13291
  %v13294 = vsel %vm11272, %v11247, %v13293
  %v13295 = vrot.slane %v11251, 7
  %v13296 = vsel %vm11275, %v13295, %v13294
  %v13297 = vrot.slane %v11255, 6
  %v13298 = vsel %vm11278, %v13297, %v13296
  %v13299 = vrot.slane %v11228, 5
  %v13300 = vrot.slane %v11232, 4
  %v13301 = vsel %vm11260, %v13300, %v13299
  %v13302 = vrot.slane %v11236, 3
  %v13303 = vsel %vm11263, %v13302, %v13301
  %v13304 = vrot.slane %v11240, 2
  %v13305 = vsel %vm11266, %v13304, %v13303
  %v13306 = vrot.slane %v11244, 1
  %v13307 = vsel %vm11269, %v13306, %v13305
  %v13308 = vsel %vm11272, %v11248, %v13307
  %v13309 = vrot.slane %v11252, 7
  %v13310 = vsel %vm11275, %v13309, %v13308
  %v13311 = vrot.slane %v11256, 6
  %v13312 = vsel %vm11278, %v13311, %v13310
  %v13313 = vrot.slane %v11229, 5
  %v13314 = vrot.slane %v11233, 4
  %v13315 = vsel %vm11260, %v13314, %v13313
  %v13316 = vrot.slane %v11237, 3
  %v13317 = vsel %vm11263, %v13316, %v13315
  %v13318 = vrot.slane %v11241, 2
  %v13319 = vsel %vm11266, %v13318, %v13317
  %v13320 = vrot.slane %v11245, 1
  %v13321 = vsel %vm11269, %v13320, %v13319
  %v13322 = vsel %vm11272, %v11249, %v13321
  %v13323 = vrot.slane %v11253, 7
  %v13324 = vsel %vm11275, %v13323, %v13322
  %v13325 = vrot.slane %v11257, 6
  %v13326 = vsel %vm11278, %v13325, %v13324
  %v13327 = vrot.slane %v11230, 5
  %v13328 = vrot.slane %v11234, 4
  %v13329 = vsel %vm11260, %v13328, %v13327
  %v13330 = vrot.slane %v11238, 3
  %v13331 = vsel %vm11263, %v13330, %v13329
  %v13332 = vrot.slane %v11242, 2
  %v13333 = vsel %vm11266, %v13332, %v13331
  %v13334 = vrot.slane %v11246, 1
  %v13335 = vsel %vm11269, %v13334, %v13333
  %v13336 = vsel %vm11272, %v11250, %v13335
  %v13337 = vrot.slane %v11254, 7
  %v13338 = vsel %vm11275, %v13337, %v13336
  %v13339 = vrot.slane %v11258, 6
  %v13340 = vsel %vm11278, %v13339, %v13338
  %v13341 = vpack.c.b16 %v13298, %v13298
  %v13342 = vpack.c.b16 %v13312, %v13312
  %v13343 = vpack.c.b16 %v13326, %v13326
  %v13344 = vpack.c.b16 %v13340, %v13340
  %v13413 = vunpack.c.l.b16 %v13221
  %v13414 = vunpack.c.l.b16 %v13222
  %v13415 = vunpack.c.l.b16 %v13223
  %v13416 = vunpack.c.l.b16 %v13224
  %v13417 = vunpack.c.l.b16 %v13225
  %v13418 = vunpack.c.l.b16 %v13226
  %v13419 = vunpack.c.l.b16 %v13227
  %v13420 = vunpack.c.l.b16 %v13228
  %v13421 = vunpack.c.l.b16 %v13229
  %v13422 = vunpack.c.l.b16 %v13230
  %v13423 = vunpack.c.l.b16 %v13231
  %v13424 = vunpack.c.l.b16 %v13232
  %v13425 = vunpack.c.l.b16 %v13233
  %v13426 = vunpack.c.l.b16 %v13234
  %v13427 = vunpack.c.l.b16 %v13235
  %v13428 = vunpack.c.l.b16 %v13236
  %v13429 = vunpack.c.l.b16 %v13237
  %v13430 = vunpack.c.l.b16 %v13238
  %v13431 = vunpack.c.l.b16 %v13239
  %v13432 = vunpack.c.l.b16 %v13240
  %v13433 = vunpack.c.l.b16 %v13241
  %v13434 = vunpack.c.l.b16 %v13242
  %v13435 = vunpack.c.l.b16 %v13243
  %v13436 = vunpack.c.l.b16 %v13244
  %v13437 = vunpack.c.l.b16 %v13245
  %v13438 = vunpack.c.l.b16 %v13246
  %v13439 = vunpack.c.l.b16 %v13247
  %v13440 = vunpack.c.l.b16 %v13248
  %v13441 = vunpack.c.l.b16 %v13249
  %v13442 = vunpack.c.l.b16 %v13250
  %v13443 = vunpack.c.l.b16 %v13251
  %v13444 = vunpack.c.l.b16 %v13252
  %v13445 = vunpack.c.l.b16 %v13253
  %v13446 = vunpack.c.l.b16 %v13254
  %v13447 = vunpack.c.l.b16 %v13255
  %v13448 = vunpack.c.l.b16 %v13256
  %v13449 = vunpack.c.l.b16 %v13257
  %v13450 = vunpack.c.l.b16 %v13258
  %v13451 = vunpack.c.l.b16 %v13259
  %v13452 = vunpack.c.l.b16 %v13260
  %v13453 = vunpack.c.l.b16 %v13261
  %v13454 = vunpack.c.l.b16 %v13262
  %v13455 = vunpack.c.l.b16 %v13263
  %v13456 = vunpack.c.l.b16 %v13264
  %v13457 = vunpack.c.l.b16 %v13265
  %v13458 = vunpack.c.l.b16 %v13266
  %v13459 = vunpack.c.l.b16 %v13267
  %v13460 = vunpack.c.l.b16 %v13268
  %v13461 = vunpack.c.l.b16 %v13269
  %v13462 = vunpack.c.l.b16 %v13270
  %v13463 = vunpack.c.l.b16 %v13271
  %v13464 = vunpack.c.l.b16 %v13272
  %v13465 = vunpack.c.l.b16 %v13273
  %v13466 = vunpack.c.l.b16 %v13274
  %v13467 = vunpack.c.l.b16 %v13275
  %v13468 = vunpack.c.l.b16 %v13276
  %v13469 = vunpack.c.l.b16 %v13277
  %v13470 = vunpack.c.l.b16 %v13278
  %v13471 = vunpack.c.l.b16 %v13279
  %v13472 = vunpack.c.l.b16 %v13280
  %v13473 = vunpack.c.l.b16 %v13281
  %v13474 = vunpack.c.l.b16 %v13282
  %v13475 = vunpack.c.l.b16 %v13283
  %v13476 = vunpack.c.l.b16 %v13284
  %v13477 = vpack.c.b16 %v13414, %v13413
  %v13478 = vpack.c.b16 %v13416, %v13415
  %v13479 = vpack.c.b16 %v13418, %v13417
  %v13480 = vpack.c.b16 %v13420, %v13419
  %v13481 = vpack.c.b16 %v13422, %v13421
  %v13482 = vpack.c.b16 %v13424, %v13423
  %v13483 = vpack.c.b16 %v13426, %v13425
  %v13484 = vpack.c.b16 %v13428, %v13427
  %v13485 = vpack.c.b16 %v13430, %v13429
  %v13486 = vpack.c.b16 %v13432, %v13431
  %v13487 = vpack.c.b16 %v13434, %v13433
  %v13488 = vpack.c.b16 %v13436, %v13435
  %v13489 = vpack.c.b16 %v13438, %v13437
  %v13490 = vpack.c.b16 %v13440, %v13439
  %v13491 = vpack.c.b16 %v13442, %v13441
  %v13492 = vpack.c.b16 %v13444, %v13443
  %v13493 = vpack.c.b16 %v13446, %v13445
  %v13494 = vpack.c.b16 %v13448, %v13447
  %v13495 = vpack.c.b16 %v13450, %v13449
  %v13496 = vpack.c.b16 %v13452, %v13451
  %v13497 = vpack.c.b16 %v13454, %v13453
  %v13498 = vpack.c.b16 %v13456, %v13455
  %v13499 = vpack.c.b16 %v13458, %v13457
  %v13500 = vpack.c.b16 %v13460, %v13459
  %v13501 = vpack.c.b16 %v13462, %v13461
  %v13502 = vpack.c.b16 %v13464, %v13463
  %v13503 = vpack.c.b16 %v13466, %v13465
  %v13504 = vpack.c.b16 %v13468, %v13467
  %v13505 = vpack.c.b16 %v13470, %v13469
  %v13506 = vpack.c.b16 %v13472, %v13471
  %v13507 = vpack.c.b16 %v13474, %v13473
  %v13508 = vpack.c.b16 %v13476, %v13475
  %13541 = vmatprep.subr.bf16.mxu0 0
  %13542 = vmatpush1.bf16.msra.mxu0 %v13484
  %13543 = vmatprep.subr.bf16.mxu0 0
  %13544 = vmatpush1.bf16.msra.mxu0 %v13483
  %13545 = vmatprep.subr.bf16.mxu0 0
  %13546 = vmatpush1.bf16.msra.mxu0 %v13482
  %13547 = vmatprep.subr.bf16.mxu0 0
  %13548 = vmatpush1.bf16.msra.mxu0 %v13481
  %13549 = vmatprep.subr.bf16.mxu0 0
  %13550 = vmatpush1.bf16.msra.mxu0 %v13480
  %13551 = vmatprep.subr.bf16.mxu0 0
  %13552 = vmatpush1.bf16.msra.mxu0 %v13479
  %13553 = vmatprep.subr.bf16.mxu0 0
  %13554 = vmatpush1.bf16.msra.mxu0 %v13478
  %13555 = vmatprep.subr.bf16.mxu0 0
  %13556 = vmatpush1.bf16.msra.mxu0 %v13477
  %13557 = vmatprep.subr.bf16.mxu0 0
  %13558 = vmatpush2.bf16.msra.mxu0 %v13492
  %13559 = vmatprep.subr.bf16.mxu0 0
  %13560 = vmatpush2.bf16.msra.mxu0 %v13491
  %13561 = vmatprep.subr.bf16.mxu0 0
  %13562 = vmatpush2.bf16.msra.mxu0 %v13490
  %13563 = vmatprep.subr.bf16.mxu0 0
  %13564 = vmatpush2.bf16.msra.mxu0 %v13489
  %13565 = vmatprep.subr.bf16.mxu0 0
  %13566 = vmatpush2.bf16.msra.mxu0 %v13488
  %13567 = vmatprep.subr.bf16.mxu0 0
  %13568 = vmatpush2.bf16.msra.mxu0 %v13487
  %13569 = vmatprep.subr.bf16.mxu0 0
  %13570 = vmatpush2.bf16.msra.mxu0 %v13486
  %13571 = vmatprep.subr.bf16.mxu0 0
  %13572 = vmatpush2.bf16.msra.mxu0 %v13485
  %13573 = vmatprep.mubr.bf16.mxu0 %v13342
  %13574 = vmatmul.mubr.bf16.gmra.mxu0 %v13341
  %v13575 = vpop.f32.mrf.mxu0
  %v13576 = vadd.f32 0.0, %v13575
  %v13577 = vpop.f32.mrf.mxu0
  %v13578 = vpop.f32.mrf.mxu0
  %v13579 = vpop.f32.mrf.mxu0
  %13580 = vdwg.mxu0
  %13581 = vmatprep.subr.bf16.mxu0 0
  %13582 = vmatpush1.bf16.msra.mxu0 %v13500
  %13583 = vmatprep.subr.bf16.mxu0 0
  %13584 = vmatpush1.bf16.msra.mxu0 %v13499
  %13585 = vmatprep.subr.bf16.mxu0 0
  %13586 = vmatpush1.bf16.msra.mxu0 %v13498
  %13587 = vmatprep.subr.bf16.mxu0 0
  %13588 = vmatpush1.bf16.msra.mxu0 %v13497
  %13589 = vmatprep.subr.bf16.mxu0 0
  %13590 = vmatpush1.bf16.msra.mxu0 %v13496
  %13591 = vmatprep.subr.bf16.mxu0 0
  %13592 = vmatpush1.bf16.msra.mxu0 %v13495
  %13593 = vmatprep.subr.bf16.mxu0 0
  %13594 = vmatpush1.bf16.msra.mxu0 %v13494
  %13595 = vmatprep.subr.bf16.mxu0 0
  %13596 = vmatpush1.bf16.msra.mxu0 %v13493
  %13597 = vmatprep.subr.bf16.mxu0 0
  %13598 = vmatpush2.bf16.msra.mxu0 %v13508
  %13599 = vmatprep.subr.bf16.mxu0 0
  %13600 = vmatpush2.bf16.msra.mxu0 %v13507
  %13601 = vmatprep.subr.bf16.mxu0 0
  %13602 = vmatpush2.bf16.msra.mxu0 %v13506
  %13603 = vmatprep.subr.bf16.mxu0 0
  %13604 = vmatpush2.bf16.msra.mxu0 %v13505
  %13605 = vmatprep.subr.bf16.mxu0 0
  %13606 = vmatpush2.bf16.msra.mxu0 %v13504
  %13607 = vmatprep.subr.bf16.mxu0 0
  %13608 = vmatpush2.bf16.msra.mxu0 %v13503
  %13609 = vmatprep.subr.bf16.mxu0 0
  %13610 = vmatpush2.bf16.msra.mxu0 %v13502
  %13611 = vmatprep.subr.bf16.mxu0 0
  %13612 = vmatpush2.bf16.msra.mxu0 %v13501
  %13613 = vmatprep.mubr.bf16.mxu0 %v13344
  %13614 = vmatmul.mubr.bf16.gmra.mxu0 %v13343
  %v13615 = vpop.f32.mrf.mxu0
  %v13616 = vadd.f32 %v13576, %v13615
  %v13617 = vpop.f32.mrf.mxu0
  %v13618 = vpop.f32.mrf.mxu0
  %v13619 = vpop.f32.mrf.mxu0
  %13620 = vdwg.mxu0
  %v13621 = vadd.f32 %v13219, %v13616
  %13622 = vst [vmem:[#allocation3] sm:$0xff] %v13621
  %v13623 = vld [vmem:[#allocation3] sm:$0xff]
  %s13624 = scalar_lea.vmem %s5, 1536
  %v13625 = vld [vmem:[%s13624] sm:$0xf]
  %v13626 = vld [vmem:[%s13624 + $0x4] sm:$0xf]
  %v13627 = vld [vmem:[%s13624 + $0x8] sm:$0xf]
  %v13628 = vld [vmem:[%s13624 + $0xc] sm:$0xf]
  %v13629 = vld [vmem:[%s13624 + $0x10] sm:$0xf]
  %v13630 = vld [vmem:[%s13624 + $0x14] sm:$0xf]
  %v13631 = vld [vmem:[%s13624 + $0x18] sm:$0xf]
  %v13632 = vld [vmem:[%s13624 + $0x1c] sm:$0xf]
  %v13633 = vld [vmem:[%s13624 + $0x20] sm:$0xf]
  %v13634 = vld [vmem:[%s13624 + $0x24] sm:$0xf]
  %v13635 = vld [vmem:[%s13624 + $0x28] sm:$0xf]
  %v13636 = vld [vmem:[%s13624 + $0x2c] sm:$0xf]
  %v13637 = vld [vmem:[%s13624 + $0x30] sm:$0xf]
  %v13638 = vld [vmem:[%s13624 + $0x34] sm:$0xf]
  %v13639 = vld [vmem:[%s13624 + $0x38] sm:$0xf]
  %v13640 = vld [vmem:[%s13624 + $0x3c] sm:$0xf]
  %v13641 = vld [vmem:[%s13624 + $0x40] sm:$0xf]
  %v13642 = vld [vmem:[%s13624 + $0x44] sm:$0xf]
  %v13643 = vld [vmem:[%s13624 + $0x48] sm:$0xf]
  %v13644 = vld [vmem:[%s13624 + $0x4c] sm:$0xf]
  %v13645 = vld [vmem:[%s13624 + $0x50] sm:$0xf]
  %v13646 = vld [vmem:[%s13624 + $0x54] sm:$0xf]
  %v13647 = vld [vmem:[%s13624 + $0x58] sm:$0xf]
  %v13648 = vld [vmem:[%s13624 + $0x5c] sm:$0xf]
  %v13649 = vld [vmem:[%s13624 + $0x60] sm:$0xf]
  %v13650 = vld [vmem:[%s13624 + $0x64] sm:$0xf]
  %v13651 = vld [vmem:[%s13624 + $0x68] sm:$0xf]
  %v13652 = vld [vmem:[%s13624 + $0x6c] sm:$0xf]
  %v13653 = vld [vmem:[%s13624 + $0x70] sm:$0xf]
  %v13654 = vld [vmem:[%s13624 + $0x74] sm:$0xf]
  %v13655 = vld [vmem:[%s13624 + $0x78] sm:$0xf]
  %v13656 = vld [vmem:[%s13624 + $0x7c] sm:$0xf]
  %v13657 = vld [vmem:[%s13624 + $0x80] sm:$0xf]
  %v13658 = vld [vmem:[%s13624 + $0x84] sm:$0xf]
  %v13659 = vld [vmem:[%s13624 + $0x88] sm:$0xf]
  %v13660 = vld [vmem:[%s13624 + $0x8c] sm:$0xf]
  %v13661 = vld [vmem:[%s13624 + $0x90] sm:$0xf]
  %v13662 = vld [vmem:[%s13624 + $0x94] sm:$0xf]
  %v13663 = vld [vmem:[%s13624 + $0x98] sm:$0xf]
  %v13664 = vld [vmem:[%s13624 + $0x9c] sm:$0xf]
  %v13665 = vld [vmem:[%s13624 + $0xa0] sm:$0xf]
  %v13666 = vld [vmem:[%s13624 + $0xa4] sm:$0xf]
  %v13667 = vld [vmem:[%s13624 + $0xa8] sm:$0xf]
  %v13668 = vld [vmem:[%s13624 + $0xac] sm:$0xf]
  %v13669 = vld [vmem:[%s13624 + $0xb0] sm:$0xf]
  %v13670 = vld [vmem:[%s13624 + $0xb4] sm:$0xf]
  %v13671 = vld [vmem:[%s13624 + $0xb8] sm:$0xf]
  %v13672 = vld [vmem:[%s13624 + $0xbc] sm:$0xf]
  %v13673 = vld [vmem:[%s13624 + $0xc0] sm:$0xf]
  %v13674 = vld [vmem:[%s13624 + $0xc4] sm:$0xf]
  %v13675 = vld [vmem:[%s13624 + $0xc8] sm:$0xf]
  %v13676 = vld [vmem:[%s13624 + $0xcc] sm:$0xf]
  %v13677 = vld [vmem:[%s13624 + $0xd0] sm:$0xf]
  %v13678 = vld [vmem:[%s13624 + $0xd4] sm:$0xf]
  %v13679 = vld [vmem:[%s13624 + $0xd8] sm:$0xf]
  %v13680 = vld [vmem:[%s13624 + $0xdc] sm:$0xf]
  %v13681 = vld [vmem:[%s13624 + $0xe0] sm:$0xf]
  %v13682 = vld [vmem:[%s13624 + $0xe4] sm:$0xf]
  %v13683 = vld [vmem:[%s13624 + $0xe8] sm:$0xf]
  %v13684 = vld [vmem:[%s13624 + $0xec] sm:$0xf]
  %v13685 = vld [vmem:[%s13624 + $0xf0] sm:$0xf]
  %v13686 = vld [vmem:[%s13624 + $0xf4] sm:$0xf]
  %v13687 = vld [vmem:[%s13624 + $0xf8] sm:$0xf]
  %v13688 = vld [vmem:[%s13624 + $0xfc] sm:$0xf]
  %v13689 = vrot.slane %v11227, 6
  %v13690 = vrot.slane %v11231, 5
  %v13691 = vsel %vm11260, %v13690, %v13689
  %v13692 = vrot.slane %v11235, 4
  %v13693 = vsel %vm11263, %v13692, %v13691
  %v13694 = vrot.slane %v11239, 3
  %v13695 = vsel %vm11266, %v13694, %v13693
  %v13696 = vrot.slane %v11243, 2
  %v13697 = vsel %vm11269, %v13696, %v13695
  %v13698 = vrot.slane %v11247, 1
  %v13699 = vsel %vm11272, %v13698, %v13697
  %v13700 = vsel %vm11275, %v11251, %v13699
  %v13701 = vrot.slane %v11255, 7
  %v13702 = vsel %vm11278, %v13701, %v13700
  %v13703 = vrot.slane %v11228, 6
  %v13704 = vrot.slane %v11232, 5
  %v13705 = vsel %vm11260, %v13704, %v13703
  %v13706 = vrot.slane %v11236, 4
  %v13707 = vsel %vm11263, %v13706, %v13705
  %v13708 = vrot.slane %v11240, 3
  %v13709 = vsel %vm11266, %v13708, %v13707
  %v13710 = vrot.slane %v11244, 2
  %v13711 = vsel %vm11269, %v13710, %v13709
  %v13712 = vrot.slane %v11248, 1
  %v13713 = vsel %vm11272, %v13712, %v13711
  %v13714 = vsel %vm11275, %v11252, %v13713
  %v13715 = vrot.slane %v11256, 7
  %v13716 = vsel %vm11278, %v13715, %v13714
  %v13717 = vrot.slane %v11229, 6
  %v13718 = vrot.slane %v11233, 5
  %v13719 = vsel %vm11260, %v13718, %v13717
  %v13720 = vrot.slane %v11237, 4
  %v13721 = vsel %vm11263, %v13720, %v13719
  %v13722 = vrot.slane %v11241, 3
  %v13723 = vsel %vm11266, %v13722, %v13721
  %v13724 = vrot.slane %v11245, 2
  %v13725 = vsel %vm11269, %v13724, %v13723
  %v13726 = vrot.slane %v11249, 1
  %v13727 = vsel %vm11272, %v13726, %v13725
  %v13728 = vsel %vm11275, %v11253, %v13727
  %v13729 = vrot.slane %v11257, 7
  %v13730 = vsel %vm11278, %v13729, %v13728
  %v13731 = vrot.slane %v11230, 6
  %v13732 = vrot.slane %v11234, 5
  %v13733 = vsel %vm11260, %v13732, %v13731
  %v13734 = vrot.slane %v11238, 4
  %v13735 = vsel %vm11263, %v13734, %v13733
  %v13736 = vrot.slane %v11242, 3
  %v13737 = vsel %vm11266, %v13736, %v13735
  %v13738 = vrot.slane %v11246, 2
  %v13739 = vsel %vm11269, %v13738, %v13737
  %v13740 = vrot.slane %v11250, 1
  %v13741 = vsel %vm11272, %v13740, %v13739
  %v13742 = vsel %vm11275, %v11254, %v13741
  %v13743 = vrot.slane %v11258, 7
  %v13744 = vsel %vm11278, %v13743, %v13742
  %v13745 = vpack.c.b16 %v13702, %v13702
  %v13746 = vpack.c.b16 %v13716, %v13716
  %v13747 = vpack.c.b16 %v13730, %v13730
  %v13748 = vpack.c.b16 %v13744, %v13744
  %v13817 = vunpack.c.l.b16 %v13625
  %v13818 = vunpack.c.l.b16 %v13626
  %v13819 = vunpack.c.l.b16 %v13627
  %v13820 = vunpack.c.l.b16 %v13628
  %v13821 = vunpack.c.l.b16 %v13629
  %v13822 = vunpack.c.l.b16 %v13630
  %v13823 = vunpack.c.l.b16 %v13631
  %v13824 = vunpack.c.l.b16 %v13632
  %v13825 = vunpack.c.l.b16 %v13633
  %v13826 = vunpack.c.l.b16 %v13634
  %v13827 = vunpack.c.l.b16 %v13635
  %v13828 = vunpack.c.l.b16 %v13636
  %v13829 = vunpack.c.l.b16 %v13637
  %v13830 = vunpack.c.l.b16 %v13638
  %v13831 = vunpack.c.l.b16 %v13639
  %v13832 = vunpack.c.l.b16 %v13640
  %v13833 = vunpack.c.l.b16 %v13641
  %v13834 = vunpack.c.l.b16 %v13642
  %v13835 = vunpack.c.l.b16 %v13643
  %v13836 = vunpack.c.l.b16 %v13644
  %v13837 = vunpack.c.l.b16 %v13645
  %v13838 = vunpack.c.l.b16 %v13646
  %v13839 = vunpack.c.l.b16 %v13647
  %v13840 = vunpack.c.l.b16 %v13648
  %v13841 = vunpack.c.l.b16 %v13649
  %v13842 = vunpack.c.l.b16 %v13650
  %v13843 = vunpack.c.l.b16 %v13651
  %v13844 = vunpack.c.l.b16 %v13652
  %v13845 = vunpack.c.l.b16 %v13653
  %v13846 = vunpack.c.l.b16 %v13654
  %v13847 = vunpack.c.l.b16 %v13655
  %v13848 = vunpack.c.l.b16 %v13656
  %v13849 = vunpack.c.l.b16 %v13657
  %v13850 = vunpack.c.l.b16 %v13658
  %v13851 = vunpack.c.l.b16 %v13659
  %v13852 = vunpack.c.l.b16 %v13660
  %v13853 = vunpack.c.l.b16 %v13661
  %v13854 = vunpack.c.l.b16 %v13662
  %v13855 = vunpack.c.l.b16 %v13663
  %v13856 = vunpack.c.l.b16 %v13664
  %v13857 = vunpack.c.l.b16 %v13665
  %v13858 = vunpack.c.l.b16 %v13666
  %v13859 = vunpack.c.l.b16 %v13667
  %v13860 = vunpack.c.l.b16 %v13668
  %v13861 = vunpack.c.l.b16 %v13669
  %v13862 = vunpack.c.l.b16 %v13670
  %v13863 = vunpack.c.l.b16 %v13671
  %v13864 = vunpack.c.l.b16 %v13672
  %v13865 = vunpack.c.l.b16 %v13673
  %v13866 = vunpack.c.l.b16 %v13674
  %v13867 = vunpack.c.l.b16 %v13675
  %v13868 = vunpack.c.l.b16 %v13676
  %v13869 = vunpack.c.l.b16 %v13677
  %v13870 = vunpack.c.l.b16 %v13678
  %v13871 = vunpack.c.l.b16 %v13679
  %v13872 = vunpack.c.l.b16 %v13680
  %v13873 = vunpack.c.l.b16 %v13681
  %v13874 = vunpack.c.l.b16 %v13682
  %v13875 = vunpack.c.l.b16 %v13683
  %v13876 = vunpack.c.l.b16 %v13684
  %v13877 = vunpack.c.l.b16 %v13685
  %v13878 = vunpack.c.l.b16 %v13686
  %v13879 = vunpack.c.l.b16 %v13687
  %v13880 = vunpack.c.l.b16 %v13688
  %v13881 = vpack.c.b16 %v13818, %v13817
  %v13882 = vpack.c.b16 %v13820, %v13819
  %v13883 = vpack.c.b16 %v13822, %v13821
  %v13884 = vpack.c.b16 %v13824, %v13823
  %v13885 = vpack.c.b16 %v13826, %v13825
  %v13886 = vpack.c.b16 %v13828, %v13827
  %v13887 = vpack.c.b16 %v13830, %v13829
  %v13888 = vpack.c.b16 %v13832, %v13831
  %v13889 = vpack.c.b16 %v13834, %v13833
  %v13890 = vpack.c.b16 %v13836, %v13835
  %v13891 = vpack.c.b16 %v13838, %v13837
  %v13892 = vpack.c.b16 %v13840, %v13839
  %v13893 = vpack.c.b16 %v13842, %v13841
  %v13894 = vpack.c.b16 %v13844, %v13843
  %v13895 = vpack.c.b16 %v13846, %v13845
  %v13896 = vpack.c.b16 %v13848, %v13847
  %v13897 = vpack.c.b16 %v13850, %v13849
  %v13898 = vpack.c.b16 %v13852, %v13851
  %v13899 = vpack.c.b16 %v13854, %v13853
  %v13900 = vpack.c.b16 %v13856, %v13855
  %v13901 = vpack.c.b16 %v13858, %v13857
  %v13902 = vpack.c.b16 %v13860, %v13859
  %v13903 = vpack.c.b16 %v13862, %v13861
  %v13904 = vpack.c.b16 %v13864, %v13863
  %v13905 = vpack.c.b16 %v13866, %v13865
  %v13906 = vpack.c.b16 %v13868, %v13867
  %v13907 = vpack.c.b16 %v13870, %v13869
  %v13908 = vpack.c.b16 %v13872, %v13871
  %v13909 = vpack.c.b16 %v13874, %v13873
  %v13910 = vpack.c.b16 %v13876, %v13875
  %v13911 = vpack.c.b16 %v13878, %v13877
  %v13912 = vpack.c.b16 %v13880, %v13879
  %13945 = vmatprep.subr.bf16.mxu0 0
  %13946 = vmatpush1.bf16.msra.mxu0 %v13888
  %13947 = vmatprep.subr.bf16.mxu0 0
  %13948 = vmatpush1.bf16.msra.mxu0 %v13887
  %13949 = vmatprep.subr.bf16.mxu0 0
  %13950 = vmatpush1.bf16.msra.mxu0 %v13886
  %13951 = vmatprep.subr.bf16.mxu0 0
  %13952 = vmatpush1.bf16.msra.mxu0 %v13885
  %13953 = vmatprep.subr.bf16.mxu0 0
  %13954 = vmatpush1.bf16.msra.mxu0 %v13884
  %13955 = vmatprep.subr.bf16.mxu0 0
  %13956 = vmatpush1.bf16.msra.mxu0 %v13883
  %13957 = vmatprep.subr.bf16.mxu0 0
  %13958 = vmatpush1.bf16.msra.mxu0 %v13882
  %13959 = vmatprep.subr.bf16.mxu0 0
  %13960 = vmatpush1.bf16.msra.mxu0 %v13881
  %13961 = vmatprep.subr.bf16.mxu0 0
  %13962 = vmatpush2.bf16.msra.mxu0 %v13896
  %13963 = vmatprep.subr.bf16.mxu0 0
  %13964 = vmatpush2.bf16.msra.mxu0 %v13895
  %13965 = vmatprep.subr.bf16.mxu0 0
  %13966 = vmatpush2.bf16.msra.mxu0 %v13894
  %13967 = vmatprep.subr.bf16.mxu0 0
  %13968 = vmatpush2.bf16.msra.mxu0 %v13893
  %13969 = vmatprep.subr.bf16.mxu0 0
  %13970 = vmatpush2.bf16.msra.mxu0 %v13892
  %13971 = vmatprep.subr.bf16.mxu0 0
  %13972 = vmatpush2.bf16.msra.mxu0 %v13891
  %13973 = vmatprep.subr.bf16.mxu0 0
  %13974 = vmatpush2.bf16.msra.mxu0 %v13890
  %13975 = vmatprep.subr.bf16.mxu0 0
  %13976 = vmatpush2.bf16.msra.mxu0 %v13889
  %13977 = vmatprep.mubr.bf16.mxu0 %v13746
  %13978 = vmatmul.mubr.bf16.gmra.mxu0 %v13745
  %v13979 = vpop.f32.mrf.mxu0
  %v13980 = vadd.f32 0.0, %v13979
  %v13981 = vpop.f32.mrf.mxu0
  %v13982 = vpop.f32.mrf.mxu0
  %v13983 = vpop.f32.mrf.mxu0
  %13984 = vdwg.mxu0
  %13985 = vmatprep.subr.bf16.mxu0 0
  %13986 = vmatpush1.bf16.msra.mxu0 %v13904
  %13987 = vmatprep.subr.bf16.mxu0 0
  %13988 = vmatpush1.bf16.msra.mxu0 %v13903
  %13989 = vmatprep.subr.bf16.mxu0 0
  %13990 = vmatpush1.bf16.msra.mxu0 %v13902
  %13991 = vmatprep.subr.bf16.mxu0 0
  %13992 = vmatpush1.bf16.msra.mxu0 %v13901
  %13993 = vmatprep.subr.bf16.mxu0 0
  %13994 = vmatpush1.bf16.msra.mxu0 %v13900
  %13995 = vmatprep.subr.bf16.mxu0 0
  %13996 = vmatpush1.bf16.msra.mxu0 %v13899
  %13997 = vmatprep.subr.bf16.mxu0 0
  %13998 = vmatpush1.bf16.msra.mxu0 %v13898
  %13999 = vmatprep.subr.bf16.mxu0 0
  %14000 = vmatpush1.bf16.msra.mxu0 %v13897
  %14001 = vmatprep.subr.bf16.mxu0 0
  %14002 = vmatpush2.bf16.msra.mxu0 %v13912
  %14003 = vmatprep.subr.bf16.mxu0 0
  %14004 = vmatpush2.bf16.msra.mxu0 %v13911
  %14005 = vmatprep.subr.bf16.mxu0 0
  %14006 = vmatpush2.bf16.msra.mxu0 %v13910
  %14007 = vmatprep.subr.bf16.mxu0 0
  %14008 = vmatpush2.bf16.msra.mxu0 %v13909
  %14009 = vmatprep.subr.bf16.mxu0 0
  %14010 = vmatpush2.bf16.msra.mxu0 %v13908
  %14011 = vmatprep.subr.bf16.mxu0 0
  %14012 = vmatpush2.bf16.msra.mxu0 %v13907
  %14013 = vmatprep.subr.bf16.mxu0 0
  %14014 = vmatpush2.bf16.msra.mxu0 %v13906
  %14015 = vmatprep.subr.bf16.mxu0 0
  %14016 = vmatpush2.bf16.msra.mxu0 %v13905
  %14017 = vmatprep.mubr.bf16.mxu0 %v13748
  %14018 = vmatmul.mubr.bf16.gmra.mxu0 %v13747
  %v14019 = vpop.f32.mrf.mxu0
  %v14020 = vadd.f32 %v13980, %v14019
  %v14021 = vpop.f32.mrf.mxu0
  %v14022 = vpop.f32.mrf.mxu0
  %v14023 = vpop.f32.mrf.mxu0
  %14024 = vdwg.mxu0
  %v14025 = vadd.f32 %v13623, %v14020
  %14026 = vst [vmem:[#allocation3] sm:$0xff] %v14025
  %v14027 = vld [vmem:[#allocation3] sm:$0xff]
  %s14028 = scalar_lea.vmem %s5, 1792
  %v14029 = vld [vmem:[%s14028] sm:$0xf]
  %v14030 = vld [vmem:[%s14028 + $0x4] sm:$0xf]
  %v14031 = vld [vmem:[%s14028 + $0x8] sm:$0xf]
  %v14032 = vld [vmem:[%s14028 + $0xc] sm:$0xf]
  %v14033 = vld [vmem:[%s14028 + $0x10] sm:$0xf]
  %v14034 = vld [vmem:[%s14028 + $0x14] sm:$0xf]
  %v14035 = vld [vmem:[%s14028 + $0x18] sm:$0xf]
  %v14036 = vld [vmem:[%s14028 + $0x1c] sm:$0xf]
  %v14037 = vld [vmem:[%s14028 + $0x20] sm:$0xf]
  %v14038 = vld [vmem:[%s14028 + $0x24] sm:$0xf]
  %v14039 = vld [vmem:[%s14028 + $0x28] sm:$0xf]
  %v14040 = vld [vmem:[%s14028 + $0x2c] sm:$0xf]
  %v14041 = vld [vmem:[%s14028 + $0x30] sm:$0xf]
  %v14042 = vld [vmem:[%s14028 + $0x34] sm:$0xf]
  %v14043 = vld [vmem:[%s14028 + $0x38] sm:$0xf]
  %v14044 = vld [vmem:[%s14028 + $0x3c] sm:$0xf]
  %v14045 = vld [vmem:[%s14028 + $0x40] sm:$0xf]
  %v14046 = vld [vmem:[%s14028 + $0x44] sm:$0xf]
  %v14047 = vld [vmem:[%s14028 + $0x48] sm:$0xf]
  %v14048 = vld [vmem:[%s14028 + $0x4c] sm:$0xf]
  %v14049 = vld [vmem:[%s14028 + $0x50] sm:$0xf]
  %v14050 = vld [vmem:[%s14028 + $0x54] sm:$0xf]
  %v14051 = vld [vmem:[%s14028 + $0x58] sm:$0xf]
  %v14052 = vld [vmem:[%s14028 + $0x5c] sm:$0xf]
  %v14053 = vld [vmem:[%s14028 + $0x60] sm:$0xf]
  %v14054 = vld [vmem:[%s14028 + $0x64] sm:$0xf]
  %v14055 = vld [vmem:[%s14028 + $0x68] sm:$0xf]
  %v14056 = vld [vmem:[%s14028 + $0x6c] sm:$0xf]
  %v14057 = vld [vmem:[%s14028 + $0x70] sm:$0xf]
  %v14058 = vld [vmem:[%s14028 + $0x74] sm:$0xf]
  %v14059 = vld [vmem:[%s14028 + $0x78] sm:$0xf]
  %v14060 = vld [vmem:[%s14028 + $0x7c] sm:$0xf]
  %v14061 = vld [vmem:[%s14028 + $0x80] sm:$0xf]
  %v14062 = vld [vmem:[%s14028 + $0x84] sm:$0xf]
  %v14063 = vld [vmem:[%s14028 + $0x88] sm:$0xf]
  %v14064 = vld [vmem:[%s14028 + $0x8c] sm:$0xf]
  %v14065 = vld [vmem:[%s14028 + $0x90] sm:$0xf]
  %v14066 = vld [vmem:[%s14028 + $0x94] sm:$0xf]
  %v14067 = vld [vmem:[%s14028 + $0x98] sm:$0xf]
  %v14068 = vld [vmem:[%s14028 + $0x9c] sm:$0xf]
  %v14069 = vld [vmem:[%s14028 + $0xa0] sm:$0xf]
  %v14070 = vld [vmem:[%s14028 + $0xa4] sm:$0xf]
  %v14071 = vld [vmem:[%s14028 + $0xa8] sm:$0xf]
  %v14072 = vld [vmem:[%s14028 + $0xac] sm:$0xf]
  %v14073 = vld [vmem:[%s14028 + $0xb0] sm:$0xf]
  %v14074 = vld [vmem:[%s14028 + $0xb4] sm:$0xf]
  %v14075 = vld [vmem:[%s14028 + $0xb8] sm:$0xf]
  %v14076 = vld [vmem:[%s14028 + $0xbc] sm:$0xf]
  %v14077 = vld [vmem:[%s14028 + $0xc0] sm:$0xf]
  %v14078 = vld [vmem:[%s14028 + $0xc4] sm:$0xf]
  %v14079 = vld [vmem:[%s14028 + $0xc8] sm:$0xf]
  %v14080 = vld [vmem:[%s14028 + $0xcc] sm:$0xf]
  %v14081 = vld [vmem:[%s14028 + $0xd0] sm:$0xf]
  %v14082 = vld [vmem:[%s14028 + $0xd4] sm:$0xf]
  %v14083 = vld [vmem:[%s14028 + $0xd8] sm:$0xf]
  %v14084 = vld [vmem:[%s14028 + $0xdc] sm:$0xf]
  %v14085 = vld [vmem:[%s14028 + $0xe0] sm:$0xf]
  %v14086 = vld [vmem:[%s14028 + $0xe4] sm:$0xf]
  %v14087 = vld [vmem:[%s14028 + $0xe8] sm:$0xf]
  %v14088 = vld [vmem:[%s14028 + $0xec] sm:$0xf]
  %v14089 = vld [vmem:[%s14028 + $0xf0] sm:$0xf]
  %v14090 = vld [vmem:[%s14028 + $0xf4] sm:$0xf]
  %v14091 = vld [vmem:[%s14028 + $0xf8] sm:$0xf]
  %v14092 = vld [vmem:[%s14028 + $0xfc] sm:$0xf]
  %v14093 = vrot.slane %v11227, 7
  %v14094 = vrot.slane %v11231, 6
  %v14095 = vsel %vm11260, %v14094, %v14093
  %v14096 = vrot.slane %v11235, 5
  %v14097 = vsel %vm11263, %v14096, %v14095
  %v14098 = vrot.slane %v11239, 4
  %v14099 = vsel %vm11266, %v14098, %v14097
  %v14100 = vrot.slane %v11243, 3
  %v14101 = vsel %vm11269, %v14100, %v14099
  %v14102 = vrot.slane %v11247, 2
  %v14103 = vsel %vm11272, %v14102, %v14101
  %v14104 = vrot.slane %v11251, 1
  %v14105 = vsel %vm11275, %v14104, %v14103
  %v14106 = vsel %vm11278, %v11255, %v14105
  %v14107 = vrot.slane %v11228, 7
  %v14108 = vrot.slane %v11232, 6
  %v14109 = vsel %vm11260, %v14108, %v14107
  %v14110 = vrot.slane %v11236, 5
  %v14111 = vsel %vm11263, %v14110, %v14109
  %v14112 = vrot.slane %v11240, 4
  %v14113 = vsel %vm11266, %v14112, %v14111
  %v14114 = vrot.slane %v11244, 3
  %v14115 = vsel %vm11269, %v14114, %v14113
  %v14116 = vrot.slane %v11248, 2
  %v14117 = vsel %vm11272, %v14116, %v14115
  %v14118 = vrot.slane %v11252, 1
  %v14119 = vsel %vm11275, %v14118, %v14117
  %v14120 = vsel %vm11278, %v11256, %v14119
  %v14121 = vrot.slane %v11229, 7
  %v14122 = vrot.slane %v11233, 6
  %v14123 = vsel %vm11260, %v14122, %v14121
  %v14124 = vrot.slane %v11237, 5
  %v14125 = vsel %vm11263, %v14124, %v14123
  %v14126 = vrot.slane %v11241, 4
  %v14127 = vsel %vm11266, %v14126, %v14125
  %v14128 = vrot.slane %v11245, 3
  %v14129 = vsel %vm11269, %v14128, %v14127
  %v14130 = vrot.slane %v11249, 2
  %v14131 = vsel %vm11272, %v14130, %v14129
  %v14132 = vrot.slane %v11253, 1
  %v14133 = vsel %vm11275, %v14132, %v14131
  %v14134 = vsel %vm11278, %v11257, %v14133
  %v14135 = vrot.slane %v11230, 7
  %v14136 = vrot.slane %v11234, 6
  %v14137 = vsel %vm11260, %v14136, %v14135
  %v14138 = vrot.slane %v11238, 5
  %v14139 = vsel %vm11263, %v14138, %v14137
  %v14140 = vrot.slane %v11242, 4
  %v14141 = vsel %vm11266, %v14140, %v14139
  %v14142 = vrot.slane %v11246, 3
  %v14143 = vsel %vm11269, %v14142, %v14141
  %v14144 = vrot.slane %v11250, 2
  %v14145 = vsel %vm11272, %v14144, %v14143
  %v14146 = vrot.slane %v11254, 1
  %v14147 = vsel %vm11275, %v14146, %v14145
  %v14148 = vsel %vm11278, %v11258, %v14147
  %v14149 = vpack.c.b16 %v14106, %v14106
  %v14150 = vpack.c.b16 %v14120, %v14120
  %v14151 = vpack.c.b16 %v14134, %v14134
  %v14152 = vpack.c.b16 %v14148, %v14148
  %v14221 = vunpack.c.l.b16 %v14029
  %v14222 = vunpack.c.l.b16 %v14030
  %v14223 = vunpack.c.l.b16 %v14031
  %v14224 = vunpack.c.l.b16 %v14032
  %v14225 = vunpack.c.l.b16 %v14033
  %v14226 = vunpack.c.l.b16 %v14034
  %v14227 = vunpack.c.l.b16 %v14035
  %v14228 = vunpack.c.l.b16 %v14036
  %v14229 = vunpack.c.l.b16 %v14037
  %v14230 = vunpack.c.l.b16 %v14038
  %v14231 = vunpack.c.l.b16 %v14039
  %v14232 = vunpack.c.l.b16 %v14040
  %v14233 = vunpack.c.l.b16 %v14041
  %v14234 = vunpack.c.l.b16 %v14042
  %v14235 = vunpack.c.l.b16 %v14043
  %v14236 = vunpack.c.l.b16 %v14044
  %v14237 = vunpack.c.l.b16 %v14045
  %v14238 = vunpack.c.l.b16 %v14046
  %v14239 = vunpack.c.l.b16 %v14047
  %v14240 = vunpack.c.l.b16 %v14048
  %v14241 = vunpack.c.l.b16 %v14049
  %v14242 = vunpack.c.l.b16 %v14050
  %v14243 = vunpack.c.l.b16 %v14051
  %v14244 = vunpack.c.l.b16 %v14052
  %v14245 = vunpack.c.l.b16 %v14053
  %v14246 = vunpack.c.l.b16 %v14054
  %v14247 = vunpack.c.l.b16 %v14055
  %v14248 = vunpack.c.l.b16 %v14056
  %v14249 = vunpack.c.l.b16 %v14057
  %v14250 = vunpack.c.l.b16 %v14058
  %v14251 = vunpack.c.l.b16 %v14059
  %v14252 = vunpack.c.l.b16 %v14060
  %v14253 = vunpack.c.l.b16 %v14061
  %v14254 = vunpack.c.l.b16 %v14062
  %v14255 = vunpack.c.l.b16 %v14063
  %v14256 = vunpack.c.l.b16 %v14064
  %v14257 = vunpack.c.l.b16 %v14065
  %v14258 = vunpack.c.l.b16 %v14066
  %v14259 = vunpack.c.l.b16 %v14067
  %v14260 = vunpack.c.l.b16 %v14068
  %v14261 = vunpack.c.l.b16 %v14069
  %v14262 = vunpack.c.l.b16 %v14070
  %v14263 = vunpack.c.l.b16 %v14071
  %v14264 = vunpack.c.l.b16 %v14072
  %v14265 = vunpack.c.l.b16 %v14073
  %v14266 = vunpack.c.l.b16 %v14074
  %v14267 = vunpack.c.l.b16 %v14075
  %v14268 = vunpack.c.l.b16 %v14076
  %v14269 = vunpack.c.l.b16 %v14077
  %v14270 = vunpack.c.l.b16 %v14078
  %v14271 = vunpack.c.l.b16 %v14079
  %v14272 = vunpack.c.l.b16 %v14080
  %v14273 = vunpack.c.l.b16 %v14081
  %v14274 = vunpack.c.l.b16 %v14082
  %v14275 = vunpack.c.l.b16 %v14083
  %v14276 = vunpack.c.l.b16 %v14084
  %v14277 = vunpack.c.l.b16 %v14085
  %v14278 = vunpack.c.l.b16 %v14086
  %v14279 = vunpack.c.l.b16 %v14087
  %v14280 = vunpack.c.l.b16 %v14088
  %v14281 = vunpack.c.l.b16 %v14089
  %v14282 = vunpack.c.l.b16 %v14090
  %v14283 = vunpack.c.l.b16 %v14091
  %v14284 = vunpack.c.l.b16 %v14092
  %v14285 = vpack.c.b16 %v14222, %v14221
  %v14286 = vpack.c.b16 %v14224, %v14223
  %v14287 = vpack.c.b16 %v14226, %v14225
  %v14288 = vpack.c.b16 %v14228, %v14227
  %v14289 = vpack.c.b16 %v14230, %v14229
  %v14290 = vpack.c.b16 %v14232, %v14231
  %v14291 = vpack.c.b16 %v14234, %v14233
  %v14292 = vpack.c.b16 %v14236, %v14235
  %v14293 = vpack.c.b16 %v14238, %v14237
  %v14294 = vpack.c.b16 %v14240, %v14239
  %v14295 = vpack.c.b16 %v14242, %v14241
  %v14296 = vpack.c.b16 %v14244, %v14243
  %v14297 = vpack.c.b16 %v14246, %v14245
  %v14298 = vpack.c.b16 %v14248, %v14247
  %v14299 = vpack.c.b16 %v14250, %v14249
  %v14300 = vpack.c.b16 %v14252, %v14251
  %v14301 = vpack.c.b16 %v14254, %v14253
  %v14302 = vpack.c.b16 %v14256, %v14255
  %v14303 = vpack.c.b16 %v14258, %v14257
  %v14304 = vpack.c.b16 %v14260, %v14259
  %v14305 = vpack.c.b16 %v14262, %v14261
  %v14306 = vpack.c.b16 %v14264, %v14263
  %v14307 = vpack.c.b16 %v14266, %v14265
  %v14308 = vpack.c.b16 %v14268, %v14267
  %v14309 = vpack.c.b16 %v14270, %v14269
  %v14310 = vpack.c.b16 %v14272, %v14271
  %v14311 = vpack.c.b16 %v14274, %v14273
  %v14312 = vpack.c.b16 %v14276, %v14275
  %v14313 = vpack.c.b16 %v14278, %v14277
  %v14314 = vpack.c.b16 %v14280, %v14279
  %v14315 = vpack.c.b16 %v14282, %v14281
  %v14316 = vpack.c.b16 %v14284, %v14283
  %14349 = vmatprep.subr.bf16.mxu0 0
  %14350 = vmatpush1.bf16.msra.mxu0 %v14292
  %14351 = vmatprep.subr.bf16.mxu0 0
  %14352 = vmatpush1.bf16.msra.mxu0 %v14291
  %14353 = vmatprep.subr.bf16.mxu0 0
  %14354 = vmatpush1.bf16.msra.mxu0 %v14290
  %14355 = vmatprep.subr.bf16.mxu0 0
  %14356 = vmatpush1.bf16.msra.mxu0 %v14289
  %14357 = vmatprep.subr.bf16.mxu0 0
  %14358 = vmatpush1.bf16.msra.mxu0 %v14288
  %14359 = vmatprep.subr.bf16.mxu0 0
  %14360 = vmatpush1.bf16.msra.mxu0 %v14287
  %14361 = vmatprep.subr.bf16.mxu0 0
  %14362 = vmatpush1.bf16.msra.mxu0 %v14286
  %14363 = vmatprep.subr.bf16.mxu0 0
  %14364 = vmatpush1.bf16.msra.mxu0 %v14285
  %14365 = vmatprep.subr.bf16.mxu0 0
  %14366 = vmatpush2.bf16.msra.mxu0 %v14300
  %14367 = vmatprep.subr.bf16.mxu0 0
  %14368 = vmatpush2.bf16.msra.mxu0 %v14299
  %14369 = vmatprep.subr.bf16.mxu0 0
  %14370 = vmatpush2.bf16.msra.mxu0 %v14298
  %14371 = vmatprep.subr.bf16.mxu0 0
  %14372 = vmatpush2.bf16.msra.mxu0 %v14297
  %14373 = vmatprep.subr.bf16.mxu0 0
  %14374 = vmatpush2.bf16.msra.mxu0 %v14296
  %14375 = vmatprep.subr.bf16.mxu0 0
  %14376 = vmatpush2.bf16.msra.mxu0 %v14295
  %14377 = vmatprep.subr.bf16.mxu0 0
  %14378 = vmatpush2.bf16.msra.mxu0 %v14294
  %14379 = vmatprep.subr.bf16.mxu0 0
  %14380 = vmatpush2.bf16.msra.mxu0 %v14293
  %14381 = vmatprep.mubr.bf16.mxu0 %v14150
  %14382 = vmatmul.mubr.bf16.gmra.mxu0 %v14149
  %v14383 = vpop.f32.mrf.mxu0
  %v14384 = vadd.f32 0.0, %v14383
  %v14385 = vpop.f32.mrf.mxu0
  %v14386 = vpop.f32.mrf.mxu0
  %v14387 = vpop.f32.mrf.mxu0
  %14388 = vdwg.mxu0
  %14389 = vmatprep.subr.bf16.mxu0 0
  %14390 = vmatpush1.bf16.msra.mxu0 %v14308
  %14391 = vmatprep.subr.bf16.mxu0 0
  %14392 = vmatpush1.bf16.msra.mxu0 %v14307
  %14393 = vmatprep.subr.bf16.mxu0 0
  %14394 = vmatpush1.bf16.msra.mxu0 %v14306
  %14395 = vmatprep.subr.bf16.mxu0 0
  %14396 = vmatpush1.bf16.msra.mxu0 %v14305
  %14397 = vmatprep.subr.bf16.mxu0 0
  %14398 = vmatpush1.bf16.msra.mxu0 %v14304
  %14399 = vmatprep.subr.bf16.mxu0 0
  %14400 = vmatpush1.bf16.msra.mxu0 %v14303
  %14401 = vmatprep.subr.bf16.mxu0 0
  %14402 = vmatpush1.bf16.msra.mxu0 %v14302
  %14403 = vmatprep.subr.bf16.mxu0 0
  %14404 = vmatpush1.bf16.msra.mxu0 %v14301
  %14405 = vmatprep.subr.bf16.mxu0 0
  %14406 = vmatpush2.bf16.msra.mxu0 %v14316
  %14407 = vmatprep.subr.bf16.mxu0 0
  %14408 = vmatpush2.bf16.msra.mxu0 %v14315
  %14409 = vmatprep.subr.bf16.mxu0 0
  %14410 = vmatpush2.bf16.msra.mxu0 %v14314
  %14411 = vmatprep.subr.bf16.mxu0 0
  %14412 = vmatpush2.bf16.msra.mxu0 %v14313
  %14413 = vmatprep.subr.bf16.mxu0 0
  %14414 = vmatpush2.bf16.msra.mxu0 %v14312
  %14415 = vmatprep.subr.bf16.mxu0 0
  %14416 = vmatpush2.bf16.msra.mxu0 %v14311
  %14417 = vmatprep.subr.bf16.mxu0 0
  %14418 = vmatpush2.bf16.msra.mxu0 %v14310
  %14419 = vmatprep.subr.bf16.mxu0 0
  %14420 = vmatpush2.bf16.msra.mxu0 %v14309
  %14421 = vmatprep.mubr.bf16.mxu0 %v14152
  %14422 = vmatmul.mubr.bf16.gmra.mxu0 %v14151
  %v14423 = vpop.f32.mrf.mxu0
  %v14424 = vadd.f32 %v14384, %v14423
  %v14425 = vpop.f32.mrf.mxu0
  %v14426 = vpop.f32.mrf.mxu0
  %v14427 = vpop.f32.mrf.mxu0
  %14428 = vdwg.mxu0
  %v14429 = vadd.f32 %v14027, %v14424
  %14430 = vst [vmem:[#allocation3] sm:$0xff] %v14429
  %v14431 = vld [vmem:[#allocation3] sm:$0xff]
  %v14432 = vld [vmem:[%s6] sm:$0x1]
  %v14434 = vlaneseq
  %v14435 = vshrl.u32 %v14434, 7
  %v14436 = vsub.s32 0, %v14435
  %v14437 = vrot.slane %v14432, %v14436
  %v14439 = vadd.f32 %v14431, %v14437
  %v14440 = vtanh.pop %v14439
  %14441 = vst [vmem:[%s7] sm:$0xff] %v14440
  // Predicated region
  $region30: #{_tnet_forward.1} parent=0 // pred_check
    _
  $region31: #{_tnet_forward.1} parent=0 // pred_check_branch
    %14443 = sbr.rel (0) target = $region33
  $region32: #{_tnet_forward.1} parent=0 // pred_region
    _
  $region33: #{_tnet_forward.1} parent=0 // pred_fallthru
    _
  // Predicated region
  $region34: #{_tnet_forward.1} parent=0 // pred_check
    _
  $region35: #{_tnet_forward.1} parent=0 // pred_check_branch
    %14445 = sbr.rel (0) target = $region37
  $region36: #{_tnet_forward.1} parent=0 // pred_region
    _
  $region37: #{_tnet_forward.1} parent=0 // pred_fallthru
    _

</llo_original>
